<compile_context>
chip_gen: v5e
topology: v5e:2x2
jax: 0.10.0
libtpu: 0.0.40
codegen_flags: <defaults>
</compile_context>

<pallas_src>
import functools

import jax
import jax.numpy as jnp
import numpy as np
from jax import lax
from jax.experimental import pallas as pl
from jax.experimental.pallas import tpu as pltpu


def _round_up(x, m):
    return (x + m - 1) // m * m


def _pick_vmem_limit():
    """Per-generation VMEM limit: ~3/4 of physical, capped at 100 MiB.
    v7x (64 MiB/TC) -> 48 MiB; v5e/v6e (128 MiB) -> 96 MiB."""
    cap = None
    try:
        info = pltpu.get_tpu_info()
        cap = getattr(info, "vmem_capacity_bytes", None)
    except Exception:
        cap = None
    if not cap:
        cap = 128 * 1024 * 1024
    return int(min(cap * 3 // 4, 100 * 1024 * 1024))


def _pick_time_chunk(T, B_pad, H_pad, vmem_limit):
    """Largest time chunk (<=128) whose streamed blocks fit in ~half the VMEM budget.
    Streamed per-step blocks: gates_x (t,B,4H) f32 + y (t,B,H) f32, double-buffered."""
    bytes_per_t = B_pad * H_pad * 5 * 4 * 2
    budget = vmem_limit // 2          # leave room for W_hh, h/c scratch, Mosaic internals
    return max(1, min(128, T, budget // bytes_per_t))


def _pad_gates_last(w, H, H_pad):
    """Pad trailing 4H gate axis to 4*H_pad, keeping PyTorch's [i|f|g|o] gate blocks at
    H_pad-aligned (lane-aligned) offsets.  w: (..., 4H) -> (..., 4*H_pad)."""
    if H_pad == H:
        return w
    pad = [(0, 0)] * (w.ndim - 1) + [(0, H_pad - H)]
    blocks = [jnp.pad(w[..., g * H:(g + 1) * H], pad) for g in range(4)]
    return jnp.concatenate(blocks, axis=-1)


def _lstm_recurrent_kernel(gx_ref, h0_ref, c0_ref, whh_ref,
                           y_ref, hn_ref, cn_ref, h_sc, c_sc,
                           *, t_chunk, seq_len, hidden_pad, need_mask, mxu_dtype):
    """Serial LSTM recurrence over one chunk of t_chunk timesteps.

    gx_ref : (t_chunk, B_pad, 4*H_pad) f32   precomputed x @ W_ih^T + (b_ih + b_hh)
    whh_ref: (H_pad, 4*H_pad) bf16           W_hh^T with gates [i|f|g|o] at H_pad offsets
    """
    chunk = pl.program_id(0)
    H = hidden_pad

    @pl.when(chunk == 0)
    def _():
        h_sc[...] = h0_ref[...].astype(jnp.float32)
        c_sc[...] = c0_ref[...].astype(jnp.float32)

    def sig(x):
        # 1 EUP push (tanh) + cheap VALU mul/add instead of exp + reciprocal (2 pushes).
        return 0.5 * jnp.tanh(0.5 * x) + 0.5

    def run(masked):
        def body(s, carry):
            h, c = carry
            # Stream W_hh from VMEM every step (vld is plentiful); hoisting it into vregs
            # would eat the whole register file and spill on the serial critical path.
            # bf16 x bf16 -> f32 on the MXU.
            gates = gx_ref[s] + jnp.dot(h.astype(mxu_dtype), whh_ref[...],
                                        preferred_element_type=jnp.float32)
            i_g = sig(gates[:, 0 * H:1 * H])
            f_g = sig(gates[:, 1 * H:2 * H])
            g_g = jnp.tanh(gates[:, 2 * H:3 * H])
            o_g = sig(gates[:, 3 * H:4 * H])
            c_new = f_g * c + i_g * g_g
            h_new = o_g * jnp.tanh(c_new)
            if masked:   # only traced for the last (ragged) chunk
                valid = (chunk * t_chunk + s) < seq_len
                h_new = jnp.where(valid, h_new, h)
                c_new = jnp.where(valid, c_new, c)
            y_ref[s] = h_new.astype(y_ref.dtype)
            return h_new, c_new

        h, c = lax.fori_loop(0, t_chunk, body, (h_sc[...], c_sc[...]),
                             unroll=max(1, min(8, t_chunk)))
        h_sc[...] = h
        c_sc[...] = c

    is_last = chunk == pl.num_programs(0) - 1
    if need_mask:
        # Padded timesteps exist only in the last chunk -> pay for the selects only there.
        @pl.when(jnp.logical_not(is_last))
        def _():
            run(False)

        @pl.when(is_last)
        def _():
            run(True)
    else:
        run(False)

    @pl.when(is_last)
    def _():
        hn_ref[...] = h_sc[...].astype(hn_ref.dtype)
        cn_ref[...] = c_sc[...].astype(cn_ref.dtype)


def _lstm_layer_recurrence(gates_x, h0_p, c0_p, whh_t_p, *, seq_len, t_chunk,
                           vmem_limit, single_buffer, mxu_dtype):
    """gates_x: (T_pad, B_pad, 4*H_pad) f32; returns (y (T_pad,B_pad,H_pad), h_n, c_n)."""
    T_pad, B_pad, G = gates_x.shape
    H_pad = whh_t_p.shape[0]
    assert G == 4 * H_pad and T_pad % t_chunk == 0
    num_chunks = T_pad // t_chunk

    kernel = functools.partial(
        _lstm_recurrent_kernel,
        t_chunk=t_chunk, seq_len=seq_len, hidden_pad=H_pad,
        need_mask=(T_pad != seq_len), mxu_dtype=mxu_dtype)

    # Loop-invariant inputs (constant index_map) do not need double-buffering.
    inv = dict(pipeline_mode=pl.Buffered(1)) if single_buffer else {}

    return pl.pallas_call(
        kernel,
        out_shape=(
            jax.ShapeDtypeStruct((T_pad, B_pad, H_pad), jnp.float32),  # y (next layer input)
            jax.ShapeDtypeStruct((B_pad, H_pad), jnp.float32),         # h_n
            jax.ShapeDtypeStruct((B_pad, H_pad), jnp.float32),         # c_n
        ),
        grid_spec=pltpu.PrefetchScalarGridSpec(
            num_scalar_prefetch=0,
            grid=(num_chunks,),
            in_specs=[
                pl.BlockSpec((t_chunk, B_pad, 4 * H_pad), lambda t: (t, 0, 0)),    # gates_x
                pl.BlockSpec((B_pad, H_pad), lambda t: (0, 0), **inv),             # h0
                pl.BlockSpec((B_pad, H_pad), lambda t: (0, 0), **inv),             # c0
                pl.BlockSpec((H_pad, 4 * H_pad), lambda t: (0, 0), **inv),         # W_hh^T (bf16)
            ],
            out_specs=[
                pl.BlockSpec((t_chunk, B_pad, H_pad), lambda t: (t, 0, 0)),        # y
                pl.BlockSpec((B_pad, H_pad), lambda t: (0, 0)),                    # h_n
                pl.BlockSpec((B_pad, H_pad), lambda t: (0, 0)),                    # c_n
            ],
            scratch_shapes=[
                pltpu.VMEM((B_pad, H_pad), jnp.float32),   # h carry
                pltpu.VMEM((B_pad, H_pad), jnp.float32),   # c carry
            ],
        ),
        compiler_params=pltpu.CompilerParams(
            dimension_semantics=("arbitrary",),        # time recurrence is sequential
            vmem_limit_bytes=vmem_limit,
        ),
    )(gates_x, h0_p, c0_p, whh_t_p)


@functools.partial(jax.jit,
                   static_argnames=("hidden_size", "num_layers", "single_buffer", "mxu_dtype"))
def _rnn_encoder_forward(params, x, h0, c0, *, hidden_size, num_layers,
                         single_buffer, mxu_dtype):
    # x: (B, T, input_size); h0/c0: (num_layers, B, hidden_size)
    B, T, _ = x.shape
    H = hidden_size
    B_pad = _round_up(max(B, 8), 8)        # sublane-aligned batch
    H_pad = _round_up(max(H, 128), 128)    # lane-aligned hidden
    vmem_limit = _pick_vmem_limit()
    t_chunk = _pick_time_chunk(T, B_pad, H_pad, vmem_limit)
    T_pad = _round_up(T, t_chunk)

    # Time-major; pad time + batch ONCE on the (small) input, before the hoisted
    # projection, instead of padding the full gates_x tensor afterwards.
    seq = jnp.transpose(x, (1, 0, 2))
    seq = jnp.pad(seq, ((0, T_pad - T), (0, B_pad - B), (0, 0)))

    hs, cs = [], []
    for layer in range(num_layers):
        w_ih, w_hh, b_ih, b_hh = params[layer]
        in_dim = seq.shape[-1]

        wih_t = _pad_gates_last(w_ih.T, H, H_pad)                      # (in_sz, 4*H_pad)
        wih_t = jnp.pad(wih_t, ((0, in_dim - wih_t.shape[0]), (0, 0)))
        # W_hh^T in bf16: MXU is natively bf16 on v5e/v6e/v7x; accumulation stays f32.
        whh_t = _pad_gates_last(w_hh.T, H, H_pad)                      # (H, 4*H_pad)
        whh_t = jnp.pad(whh_t, ((0, H_pad - H), (0, 0))).astype(mxu_dtype)
        bias = _pad_gates_last(b_ih + b_hh, H, H_pad)                  # (4*H_pad,)

        # Hoisted input projection for ALL timesteps: one big MXU-friendly matmul.
        gates_x = jnp.einsum('tbi,ig->tbg', seq, wih_t) + bias

        # NOTE: padded h/c lanes and batch rows MUST be zero: with zero-padded W columns
        # and bias, gates_pad = 0, so c_pad' = 0.5*c_pad and h_pad' = 0 — padded lanes
        # provably stay zero only because the initial padding is zero.
        h0_p = jnp.pad(h0[layer], ((0, B_pad - B), (0, H_pad - H)))
        c0_p = jnp.pad(c0[layer], ((0, B_pad - B), (0, H_pad - H)))

        y_pad, h_n, c_n = _lstm_layer_recurrence(
            gates_x, h0_p, c0_p, whh_t,
            seq_len=T, t_chunk=t_chunk, vmem_limit=vmem_limit,
            single_buffer=single_buffer, mxu_dtype=mxu_dtype)

        hs.append(h_n[:B, :H])
        cs.append(c_n[:B, :H])
        seq = y_pad   # (T_pad, B_pad, H_pad): next layer input; padding stays zero/masked
    return jnp.stack(hs, axis=0), jnp.stack(cs, axis=0)


class RNNEncoderPallas:
    """Pallas port of RNNEncoder: forward(x, h0, c0) -> (h_n, c_n)."""

    def __init__(self, input_size, hidden_size, num_layers, key, mxu_dtype=jnp.bfloat16):
        self.input_size = input_size
        self.hidden_size = hidden_size
        self.num_layers = num_layers
        self.mxu_dtype = mxu_dtype
        self._single_buffer = None   # probe pl.Buffered(1) support on first call
        self.params = []
        k = 1.0 / np.sqrt(hidden_size)
        for layer in range(num_layers):
            in_sz = input_size if layer == 0 else hidden_size
            key, k1, k2, k3, k4 = jax.random.split(key, 5)
            w_ih = jax.random.uniform(k1, (4 * hidden_size, in_sz), jnp.float32, -k, k)
            w_hh = jax.random.uniform(k2, (4 * hidden_size, hidden_size), jnp.float32, -k, k)
            b_ih = jax.random.uniform(k3, (4 * hidden_size,), jnp.float32, -k, k)
            b_hh = jax.random.uniform(k4, (4 * hidden_size,), jnp.float32, -k, k)
            self.params.append((w_ih, w_hh, b_ih, b_hh))

    def forward(self, x, h0, c0):
        if self._single_buffer is None:
            # Prefer single-buffered loop-invariant weights; fall back cleanly if this
            # JAX build rejects pipeline_mode=pl.Buffered(1) on pallas_call BlockSpecs.
            try:
                out = _rnn_encoder_forward(
                    self.params, x, h0, c0, hidden_size=self.hidden_size,
                    num_layers=self.num_layers, single_buffer=True,
                    mxu_dtype=self.mxu_dtype)
                jax.block_until_ready(out)
                self._single_buffer = True
                return out
            except Exception:
                self._single_buffer = False
        return _rnn_encoder_forward(
            self.params, x, h0, c0, hidden_size=self.hidden_size,
            num_layers=self.num_layers, single_buffer=self._single_buffer,
            mxu_dtype=self.mxu_dtype)


def _reference_lstm(x, h0, c0, params):
    """Pure-JAX f32 reference matching torch.nn.LSTM semantics."""
    x_tm = jnp.transpose(x, (1, 0, 2))
    hs, cs = [], []
    for layer, (w_ih, w_hh, b_ih, b_hh) in enumerate(params):
        H = h0.shape[-1]

        def step(carry, x_t):
            h, c = carry
            gates = x_t @ w_ih.T + h @ w_hh.T + b_ih + b_hh
            i = jax.nn.sigmoid(gates[:, 0 * H:1 * H])
            f = jax.nn.sigmoid(gates[:, 1 * H:2 * H])
            g = jnp.tanh(gates[:, 2 * H:3 * H])
            o = jax.nn.sigmoid(gates[:, 3 * H:4 * H])
            c_new = f * c + i * g
            h_new = o * jnp.tanh(c_new)
            return (h_new, c_new), h_new

        (h_n, c_n), y_tm = lax.scan(step, (h0[layer], c0[layer]), x_tm)
        hs.append(h_n)
        cs.append(c_n)
        x_tm = y_tm
    return jnp.stack(hs, 0), jnp.stack(cs, 0)


if __name__ == "__main__":
    input_size, hidden_size, num_layers = 16, 32, 2
    batch, seq_len = 2, 8

    key = jax.random.PRNGKey(0)
    kx, kh, kc, kp = jax.random.split(key, 4)
    x = jax.random.normal(kx, (batch, seq_len, input_size), jnp.float32)
    h0 = jax.random.normal(kh, (num_layers, batch, hidden_size), jnp.float32)
    c0 = jax.random.normal(kc, (num_layers, batch, hidden_size), jnp.float32)

    model = RNNEncoderPallas(input_size, hidden_size, num_layers, kp)

    h_n, c_n = model.forward(x, h0, c0)
    jax.block_until_ready((h_n, c_n))

    # Tolerance reflects the deliberate bf16 MXU recurrence (per perf review); typical
    # deviation from the strict-f32 reference at these sizes is ~1e-3.
    h_ref, c_ref = _reference_lstm(x, h0, c0, model.params)
    np.testing.assert_allclose(np.asarray(h_n), np.asarray(h_ref), rtol=2e-2, atol=2e-2)
    np.testing.assert_allclose(np.asarray(c_n), np.asarray(c_ref), rtol=2e-2, atol=2e-2)

    assert h_n.shape == (num_layers, batch, hidden_size)
    assert c_n.shape == (num_layers, batch, hidden_size)
    print("KERNEL_OK")
</pallas_src>

<mosaic_0001>
module attributes {stable_mosaic.version = 11 : i64} {
  func.func @_lstm_recurrent_kernel(%arg0: i32, %arg1: memref<8x8x512xf32, #tpu.memory_space<vmem>>, %arg2: memref<8x128xf32, #tpu.memory_space<vmem>>, %arg3: memref<8x128xf32, #tpu.memory_space<vmem>>, %arg4: memref<128x512xbf16, #tpu.memory_space<vmem>>, %arg5: memref<8x8x128xf32, #tpu.memory_space<vmem>>, %arg6: memref<8x128xf32, #tpu.memory_space<vmem>>, %arg7: memref<8x128xf32, #tpu.memory_space<vmem>>, %arg8: memref<8x128xf32, #tpu.memory_space<vmem>>, %arg9: memref<8x128xf32, #tpu.memory_space<vmem>>) attributes {dimension_semantics = [#tpu.dimension_semantics<arbitrary>], iteration_bounds = array<i64: 1>, scalar_prefetch = 0 : i64, scratch_operands = 2 : i64, tpu.core_type = #tpu.core_type<tc>, window_params = [{transform_indices = @transform_0, window_bounds = array<i64: 8, 8, 512>}, {pipeline_mode = #tpu.pipeline_mode<synchronous>, transform_indices = @transform_1, window_bounds = array<i64: 8, 128>}, {pipeline_mode = #tpu.pipeline_mode<synchronous>, transform_indices = @transform_2, window_bounds = array<i64: 8, 128>}, {pipeline_mode = #tpu.pipeline_mode<synchronous>, transform_indices = @transform_3, window_bounds = array<i64: 128, 512>}, {transform_indices = @transform_4, window_bounds = array<i64: 8, 8, 128>}, {pipeline_mode = #tpu.pipeline_mode<synchronous>, transform_indices = @transform_5, window_bounds = array<i64: 8, 128>}, {pipeline_mode = #tpu.pipeline_mode<synchronous>, transform_indices = @transform_6, window_bounds = array<i64: 8, 128>}]} {
    %c0_i32 = arith.constant 0 : i32
    %0 = arith.cmpi eq, %arg0, %c0_i32 : i32
    %1 = arith.extui %0 : i1 to i32
    %c0_i32_0 = arith.constant 0 : i32
    %2 = arith.cmpi ne, %1, %c0_i32_0 : i32
    scf.if %2 {
      %c0_138 = arith.constant 0 : index
      %c0_139 = arith.constant 0 : index
      %346 = vector.load %arg2[%c0_138, %c0_139] : memref<8x128xf32, #tpu.memory_space<vmem>>, vector<8x128xf32>
      %c0_140 = arith.constant 0 : index
      %c0_141 = arith.constant 0 : index
      %347 = vector.load %arg8[%c0_140, %c0_141] : memref<8x128xf32, #tpu.memory_space<vmem>>, vector<8x128xf32>
      tpu.vector_store %arg8[%c0_140, %c0_141], %346 {strides = array<i32>} : memref<8x128xf32, #tpu.memory_space<vmem>>, vector<8x128xf32>,
      %c0_142 = arith.constant 0 : index
      %c0_143 = arith.constant 0 : index
      %348 = vector.load %arg3[%c0_142, %c0_143] : memref<8x128xf32, #tpu.memory_space<vmem>>, vector<8x128xf32>
      %c0_144 = arith.constant 0 : index
      %c0_145 = arith.constant 0 : index
      %349 = vector.load %arg9[%c0_144, %c0_145] : memref<8x128xf32, #tpu.memory_space<vmem>>, vector<8x128xf32>
      tpu.vector_store %arg9[%c0_144, %c0_145], %348 {strides = array<i32>} : memref<8x128xf32, #tpu.memory_space<vmem>>, vector<8x128xf32>,
    } else {
    }
    %c0_i32_1 = arith.constant 0 : i32
    %3 = arith.cmpi eq, %arg0, %c0_i32_1 : i32
    %c0 = arith.constant 0 : index
    %c0_2 = arith.constant 0 : index
    %4 = vector.load %arg8[%c0, %c0_2] : memref<8x128xf32, #tpu.memory_space<vmem>>, vector<8x128xf32>
    %c0_3 = arith.constant 0 : index
    %c0_4 = arith.constant 0 : index
    %5 = vector.load %arg9[%c0_3, %c0_4] : memref<8x128xf32, #tpu.memory_space<vmem>>, vector<8x128xf32>
    %c0_i32_5 = arith.constant 0 : i32
    %6 = arith.index_cast %c0_i32_5 : i32 to index
    %c0_6 = arith.constant 0 : index
    %c0_7 = arith.constant 0 : index
    %7 = vector.load %arg1[%6, %c0_6, %c0_7] : memref<8x8x512xf32, #tpu.memory_space<vmem>>, vector<1x8x512xf32>
    %8 = vector.shape_cast %7 : vector<1x8x512xf32> to vector<8x512xf32>
    %9 = arith.truncf %4 : vector<8x128xf32> to vector<8x128xbf16>
    %c0_8 = arith.constant 0 : index
    %c0_9 = arith.constant 0 : index
    %10 = vector.load %arg4[%c0_8, %c0_9] : memref<128x512xbf16, #tpu.memory_space<vmem>>, vector<128x512xbf16>
    %cst = arith.constant dense<0.000000e+00> : vector<8x512xf32>
    %11 = tpu.matmul %9, %10, %cst {dimension_numbers = #tpu.dot_dimension_numbers<[1], [0], [0], [1], [0, 0, 1, 1], [], []>} : vector<8x128xbf16>, vector<128x512xbf16>, vector<8x512xf32> -> vector<8x512xf32>
    %12 = arith.addf %8, %11 : vector<8x512xf32>
    %13 = vector.extract_strided_slice %12 {offsets = [0, 0], sizes = [8, 128], strides = [1, 1]} : vector<8x512xf32> to vector<8x128xf32>
    %cst_10 = arith.constant 5.000000e-01 : f32
    %14 = vector.broadcast %cst_10 : f32 to vector<8x128xf32>
    %15 = arith.mulf %14, %13 : vector<8x128xf32>
    %16 = math.tanh %15 : vector<8x128xf32>
    %cst_11 = arith.constant 5.000000e-01 : f32
    %17 = vector.broadcast %cst_11 : f32 to vector<8x128xf32>
    %18 = arith.mulf %17, %16 : vector<8x128xf32>
    %cst_12 = arith.constant 5.000000e-01 : f32
    %19 = vector.broadcast %cst_12 : f32 to vector<8x128xf32>
    %20 = arith.addf %18, %19 : vector<8x128xf32>
    %21 = vector.extract_strided_slice %12 {offsets = [0, 128], sizes = [8, 128], strides = [1, 1]} : vector<8x512xf32> to vector<8x128xf32>
    %cst_13 = arith.constant 5.000000e-01 : f32
    %22 = vector.broadcast %cst_13 : f32 to vector<8x128xf32>
    %23 = arith.mulf %22, %21 : vector<8x128xf32>
    %24 = math.tanh %23 : vector<8x128xf32>
    %cst_14 = arith.constant 5.000000e-01 : f32
    %25 = vector.broadcast %cst_14 : f32 to vector<8x128xf32>
    %26 = arith.mulf %25, %24 : vector<8x128xf32>
    %cst_15 = arith.constant 5.000000e-01 : f32
    %27 = vector.broadcast %cst_15 : f32 to vector<8x128xf32>
    %28 = arith.addf %26, %27 : vector<8x128xf32>
    %29 = vector.extract_strided_slice %12 {offsets = [0, 256], sizes = [8, 128], strides = [1, 1]} : vector<8x512xf32> to vector<8x128xf32>
    %30 = math.tanh %29 : vector<8x128xf32>
    %31 = vector.extract_strided_slice %12 {offsets = [0, 384], sizes = [8, 128], strides = [1, 1]} : vector<8x512xf32> to vector<8x128xf32>
    %cst_16 = arith.constant 5.000000e-01 : f32
    %32 = vector.broadcast %cst_16 : f32 to vector<8x128xf32>
    %33 = arith.mulf %32, %31 : vector<8x128xf32>
    %34 = math.tanh %33 : vector<8x128xf32>
    %cst_17 = arith.constant 5.000000e-01 : f32
    %35 = vector.broadcast %cst_17 : f32 to vector<8x128xf32>
    %36 = arith.mulf %35, %34 : vector<8x128xf32>
    %cst_18 = arith.constant 5.000000e-01 : f32
    %37 = vector.broadcast %cst_18 : f32 to vector<8x128xf32>
    %38 = arith.addf %36, %37 : vector<8x128xf32>
    %39 = arith.mulf %28, %5 : vector<8x128xf32>
    %40 = arith.mulf %20, %30 : vector<8x128xf32>
    %41 = arith.addf %39, %40 : vector<8x128xf32>
    %42 = math.tanh %41 : vector<8x128xf32>
    %43 = arith.mulf %38, %42 : vector<8x128xf32>
    %44 = arith.index_cast %c0_i32_5 : i32 to index
    %c0_19 = arith.constant 0 : index
    %c0_20 = arith.constant 0 : index
    %45 = vector.load %arg5[%44, %c0_19, %c0_20] : memref<8x8x128xf32, #tpu.memory_space<vmem>>, vector<1x8x128xf32>
    %46 = vector.shape_cast %45 : vector<1x8x128xf32> to vector<8x128xf32>
    %47 = vector.shape_cast %43 : vector<8x128xf32> to vector<1x8x128xf32>
    tpu.vector_store %arg5[%44, %c0_19, %c0_20], %47 {strides = array<i32>} : memref<8x8x128xf32, #tpu.memory_space<vmem>>, vector<1x8x128xf32>,
    %c1_i32 = arith.constant 1 : i32
    %48 = arith.index_cast %c1_i32 : i32 to index
    %c0_21 = arith.constant 0 : index
    %c0_22 = arith.constant 0 : index
    %49 = vector.load %arg1[%48, %c0_21, %c0_22] : memref<8x8x512xf32, #tpu.memory_space<vmem>>, vector<1x8x512xf32>
    %50 = vector.shape_cast %49 : vector<1x8x512xf32> to vector<8x512xf32>
    %51 = arith.truncf %43 : vector<8x128xf32> to vector<8x128xbf16>
    %c0_23 = arith.constant 0 : index
    %c0_24 = arith.constant 0 : index
    %52 = vector.load %arg4[%c0_23, %c0_24] : memref<128x512xbf16, #tpu.memory_space<vmem>>, vector<128x512xbf16>
    %cst_25 = arith.constant dense<0.000000e+00> : vector<8x512xf32>
    %53 = tpu.matmul %51, %52, %cst_25 {dimension_numbers = #tpu.dot_dimension_numbers<[1], [0], [0], [1], [0, 0, 1, 1], [], []>} : vector<8x128xbf16>, vector<128x512xbf16>, vector<8x512xf32> -> vector<8x512xf32>
    %54 = arith.addf %50, %53 : vector<8x512xf32>
    %55 = vector.extract_strided_slice %54 {offsets = [0, 0], sizes = [8, 128], strides = [1, 1]} : vector<8x512xf32> to vector<8x128xf32>
    %cst_26 = arith.constant 5.000000e-01 : f32
    %56 = vector.broadcast %cst_26 : f32 to vector<8x128xf32>
    %57 = arith.mulf %56, %55 : vector<8x128xf32>
    %58 = math.tanh %57 : vector<8x128xf32>
    %cst_27 = arith.constant 5.000000e-01 : f32
    %59 = vector.broadcast %cst_27 : f32 to vector<8x128xf32>
    %60 = arith.mulf %59, %58 : vector<8x128xf32>
    %cst_28 = arith.constant 5.000000e-01 : f32
    %61 = vector.broadcast %cst_28 : f32 to vector<8x128xf32>
    %62 = arith.addf %60, %61 : vector<8x128xf32>
    %63 = vector.extract_strided_slice %54 {offsets = [0, 128], sizes = [8, 128], strides = [1, 1]} : vector<8x512xf32> to vector<8x128xf32>
    %cst_29 = arith.constant 5.000000e-01 : f32
    %64 = vector.broadcast %cst_29 : f32 to vector<8x128xf32>
    %65 = arith.mulf %64, %63 : vector<8x128xf32>
    %66 = math.tanh %65 : vector<8x128xf32>
    %cst_30 = arith.constant 5.000000e-01 : f32
    %67 = vector.broadcast %cst_30 : f32 to vector<8x128xf32>
    %68 = arith.mulf %67, %66 : vector<8x128xf32>
    %cst_31 = arith.constant 5.000000e-01 : f32
    %69 = vector.broadcast %cst_31 : f32 to vector<8x128xf32>
    %70 = arith.addf %68, %69 : vector<8x128xf32>
    %71 = vector.extract_strided_slice %54 {offsets = [0, 256], sizes = [8, 128], strides = [1, 1]} : vector<8x512xf32> to vector<8x128xf32>
    %72 = math.tanh %71 : vector<8x128xf32>
    %73 = vector.extract_strided_slice %54 {offsets = [0, 384], sizes = [8, 128], strides = [1, 1]} : vector<8x512xf32> to vector<8x128xf32>
    %cst_32 = arith.constant 5.000000e-01 : f32
    %74 = vector.broadcast %cst_32 : f32 to vector<8x128xf32>
    %75 = arith.mulf %74, %73 : vector<8x128xf32>
    %76 = math.tanh %75 : vector<8x128xf32>
    %cst_33 = arith.constant 5.000000e-01 : f32
    %77 = vector.broadcast %cst_33 : f32 to vector<8x128xf32>
    %78 = arith.mulf %77, %76 : vector<8x128xf32>
    %cst_34 = arith.constant 5.000000e-01 : f32
    %79 = vector.broadcast %cst_34 : f32 to vector<8x128xf32>
    %80 = arith.addf %78, %79 : vector<8x128xf32>
    %81 = arith.mulf %70, %41 : vector<8x128xf32>
    %82 = arith.mulf %62, %72 : vector<8x128xf32>
    %83 = arith.addf %81, %82 : vector<8x128xf32>
    %84 = math.tanh %83 : vector<8x128xf32>
    %85 = arith.mulf %80, %84 : vector<8x128xf32>
    %86 = arith.index_cast %c1_i32 : i32 to index
    %c0_35 = arith.constant 0 : index
    %c0_36 = arith.constant 0 : index
    %87 = vector.load %arg5[%86, %c0_35, %c0_36] : memref<8x8x128xf32, #tpu.memory_space<vmem>>, vector<1x8x128xf32>
    %88 = vector.shape_cast %87 : vector<1x8x128xf32> to vector<8x128xf32>
    %89 = vector.shape_cast %85 : vector<8x128xf32> to vector<1x8x128xf32>
    tpu.vector_store %arg5[%86, %c0_35, %c0_36], %89 {strides = array<i32>} : memref<8x8x128xf32, #tpu.memory_space<vmem>>, vector<1x8x128xf32>,
    %c2_i32 = arith.constant 2 : i32
    %90 = arith.index_cast %c2_i32 : i32 to index
    %c0_37 = arith.constant 0 : index
    %c0_38 = arith.constant 0 : index
    %91 = vector.load %arg1[%90, %c0_37, %c0_38] : memref<8x8x512xf32, #tpu.memory_space<vmem>>, vector<1x8x512xf32>
    %92 = vector.shape_cast %91 : vector<1x8x512xf32> to vector<8x512xf32>
    %93 = arith.truncf %85 : vector<8x128xf32> to vector<8x128xbf16>
    %c0_39 = arith.constant 0 : index
    %c0_40 = arith.constant 0 : index
    %94 = vector.load %arg4[%c0_39, %c0_40] : memref<128x512xbf16, #tpu.memory_space<vmem>>, vector<128x512xbf16>
    %cst_41 = arith.constant dense<0.000000e+00> : vector<8x512xf32>
    %95 = tpu.matmul %93, %94, %cst_41 {dimension_numbers = #tpu.dot_dimension_numbers<[1], [0], [0], [1], [0, 0, 1, 1], [], []>} : vector<8x128xbf16>, vector<128x512xbf16>, vector<8x512xf32> -> vector<8x512xf32>
    %96 = arith.addf %92, %95 : vector<8x512xf32>
    %97 = vector.extract_strided_slice %96 {offsets = [0, 0], sizes = [8, 128], strides = [1, 1]} : vector<8x512xf32> to vector<8x128xf32>
    %cst_42 = arith.constant 5.000000e-01 : f32
    %98 = vector.broadcast %cst_42 : f32 to vector<8x128xf32>
    %99 = arith.mulf %98, %97 : vector<8x128xf32>
    %100 = math.tanh %99 : vector<8x128xf32>
    %cst_43 = arith.constant 5.000000e-01 : f32
    %101 = vector.broadcast %cst_43 : f32 to vector<8x128xf32>
    %102 = arith.mulf %101, %100 : vector<8x128xf32>
    %cst_44 = arith.constant 5.000000e-01 : f32
    %103 = vector.broadcast %cst_44 : f32 to vector<8x128xf32>
    %104 = arith.addf %102, %103 : vector<8x128xf32>
    %105 = vector.extract_strided_slice %96 {offsets = [0, 128], sizes = [8, 128], strides = [1, 1]} : vector<8x512xf32> to vector<8x128xf32>
    %cst_45 = arith.constant 5.000000e-01 : f32
    %106 = vector.broadcast %cst_45 : f32 to vector<8x128xf32>
    %107 = arith.mulf %106, %105 : vector<8x128xf32>
    %108 = math.tanh %107 : vector<8x128xf32>
    %cst_46 = arith.constant 5.000000e-01 : f32
    %109 = vector.broadcast %cst_46 : f32 to vector<8x128xf32>
    %110 = arith.mulf %109, %108 : vector<8x128xf32>
    %cst_47 = arith.constant 5.000000e-01 : f32
    %111 = vector.broadcast %cst_47 : f32 to vector<8x128xf32>
    %112 = arith.addf %110, %111 : vector<8x128xf32>
    %113 = vector.extract_strided_slice %96 {offsets = [0, 256], sizes = [8, 128], strides = [1, 1]} : vector<8x512xf32> to vector<8x128xf32>
    %114 = math.tanh %113 : vector<8x128xf32>
    %115 = vector.extract_strided_slice %96 {offsets = [0, 384], sizes = [8, 128], strides = [1, 1]} : vector<8x512xf32> to vector<8x128xf32>
    %cst_48 = arith.constant 5.000000e-01 : f32
    %116 = vector.broadcast %cst_48 : f32 to vector<8x128xf32>
    %117 = arith.mulf %116, %115 : vector<8x128xf32>
    %118 = math.tanh %117 : vector<8x128xf32>
    %cst_49 = arith.constant 5.000000e-01 : f32
    %119 = vector.broadcast %cst_49 : f32 to vector<8x128xf32>
    %120 = arith.mulf %119, %118 : vector<8x128xf32>
    %cst_50 = arith.constant 5.000000e-01 : f32
    %121 = vector.broadcast %cst_50 : f32 to vector<8x128xf32>
    %122 = arith.addf %120, %121 : vector<8x128xf32>
    %123 = arith.mulf %112, %83 : vector<8x128xf32>
    %124 = arith.mulf %104, %114 : vector<8x128xf32>
    %125 = arith.addf %123, %124 : vector<8x128xf32>
    %126 = math.tanh %125 : vector<8x128xf32>
    %127 = arith.mulf %122, %126 : vector<8x128xf32>
    %128 = arith.index_cast %c2_i32 : i32 to index
    %c0_51 = arith.constant 0 : index
    %c0_52 = arith.constant 0 : index
    %129 = vector.load %arg5[%128, %c0_51, %c0_52] : memref<8x8x128xf32, #tpu.memory_space<vmem>>, vector<1x8x128xf32>
    %130 = vector.shape_cast %129 : vector<1x8x128xf32> to vector<8x128xf32>
    %131 = vector.shape_cast %127 : vector<8x128xf32> to vector<1x8x128xf32>
    tpu.vector_store %arg5[%128, %c0_51, %c0_52], %131 {strides = array<i32>} : memref<8x8x128xf32, #tpu.memory_space<vmem>>, vector<1x8x128xf32>,
    %c3_i32 = arith.constant 3 : i32
    %132 = arith.index_cast %c3_i32 : i32 to index
    %c0_53 = arith.constant 0 : index
    %c0_54 = arith.constant 0 : index
    %133 = vector.load %arg1[%132, %c0_53, %c0_54] : memref<8x8x512xf32, #tpu.memory_space<vmem>>, vector<1x8x512xf32>
    %134 = vector.shape_cast %133 : vector<1x8x512xf32> to vector<8x512xf32>
    %135 = arith.truncf %127 : vector<8x128xf32> to vector<8x128xbf16>
    %c0_55 = arith.constant 0 : index
    %c0_56 = arith.constant 0 : index
    %136 = vector.load %arg4[%c0_55, %c0_56] : memref<128x512xbf16, #tpu.memory_space<vmem>>, vector<128x512xbf16>
    %cst_57 = arith.constant dense<0.000000e+00> : vector<8x512xf32>
    %137 = tpu.matmul %135, %136, %cst_57 {dimension_numbers = #tpu.dot_dimension_numbers<[1], [0], [0], [1], [0, 0, 1, 1], [], []>} : vector<8x128xbf16>, vector<128x512xbf16>, vector<8x512xf32> -> vector<8x512xf32>
    %138 = arith.addf %134, %137 : vector<8x512xf32>
    %139 = vector.extract_strided_slice %138 {offsets = [0, 0], sizes = [8, 128], strides = [1, 1]} : vector<8x512xf32> to vector<8x128xf32>
    %cst_58 = arith.constant 5.000000e-01 : f32
    %140 = vector.broadcast %cst_58 : f32 to vector<8x128xf32>
    %141 = arith.mulf %140, %139 : vector<8x128xf32>
    %142 = math.tanh %141 : vector<8x128xf32>
    %cst_59 = arith.constant 5.000000e-01 : f32
    %143 = vector.broadcast %cst_59 : f32 to vector<8x128xf32>
    %144 = arith.mulf %143, %142 : vector<8x128xf32>
    %cst_60 = arith.constant 5.000000e-01 : f32
    %145 = vector.broadcast %cst_60 : f32 to vector<8x128xf32>
    %146 = arith.addf %144, %145 : vector<8x128xf32>
    %147 = vector.extract_strided_slice %138 {offsets = [0, 128], sizes = [8, 128], strides = [1, 1]} : vector<8x512xf32> to vector<8x128xf32>
    %cst_61 = arith.constant 5.000000e-01 : f32
    %148 = vector.broadcast %cst_61 : f32 to vector<8x128xf32>
    %149 = arith.mulf %148, %147 : vector<8x128xf32>
    %150 = math.tanh %149 : vector<8x128xf32>
    %cst_62 = arith.constant 5.000000e-01 : f32
    %151 = vector.broadcast %cst_62 : f32 to vector<8x128xf32>
    %152 = arith.mulf %151, %150 : vector<8x128xf32>
    %cst_63 = arith.constant 5.000000e-01 : f32
    %153 = vector.broadcast %cst_63 : f32 to vector<8x128xf32>
    %154 = arith.addf %152, %153 : vector<8x128xf32>
    %155 = vector.extract_strided_slice %138 {offsets = [0, 256], sizes = [8, 128], strides = [1, 1]} : vector<8x512xf32> to vector<8x128xf32>
    %156 = math.tanh %155 : vector<8x128xf32>
    %157 = vector.extract_strided_slice %138 {offsets = [0, 384], sizes = [8, 128], strides = [1, 1]} : vector<8x512xf32> to vector<8x128xf32>
    %cst_64 = arith.constant 5.000000e-01 : f32
    %158 = vector.broadcast %cst_64 : f32 to vector<8x128xf32>
    %159 = arith.mulf %158, %157 : vector<8x128xf32>
    %160 = math.tanh %159 : vector<8x128xf32>
    %cst_65 = arith.constant 5.000000e-01 : f32
    %161 = vector.broadcast %cst_65 : f32 to vector<8x128xf32>
    %162 = arith.mulf %161, %160 : vector<8x128xf32>
    %cst_66 = arith.constant 5.000000e-01 : f32
    %163 = vector.broadcast %cst_66 : f32 to vector<8x128xf32>
    %164 = arith.addf %162, %163 : vector<8x128xf32>
    %165 = arith.mulf %154, %125 : vector<8x128xf32>
    %166 = arith.mulf %146, %156 : vector<8x128xf32>
    %167 = arith.addf %165, %166 : vector<8x128xf32>
    %168 = math.tanh %167 : vector<8x128xf32>
    %169 = arith.mulf %164, %168 : vector<8x128xf32>
    %170 = arith.index_cast %c3_i32 : i32 to index
    %c0_67 = arith.constant 0 : index
    %c0_68 = arith.constant 0 : index
    %171 = vector.load %arg5[%170, %c0_67, %c0_68] : memref<8x8x128xf32, #tpu.memory_space<vmem>>, vector<1x8x128xf32>
    %172 = vector.shape_cast %171 : vector<1x8x128xf32> to vector<8x128xf32>
    %173 = vector.shape_cast %169 : vector<8x128xf32> to vector<1x8x128xf32>
    tpu.vector_store %arg5[%170, %c0_67, %c0_68], %173 {strides = array<i32>} : memref<8x8x128xf32, #tpu.memory_space<vmem>>, vector<1x8x128xf32>,
    %c4_i32 = arith.constant 4 : i32
    %174 = arith.index_cast %c4_i32 : i32 to index
    %c0_69 = arith.constant 0 : index
    %c0_70 = arith.constant 0 : index
    %175 = vector.load %arg1[%174, %c0_69, %c0_70] : memref<8x8x512xf32, #tpu.memory_space<vmem>>, vector<1x8x512xf32>
    %176 = vector.shape_cast %175 : vector<1x8x512xf32> to vector<8x512xf32>
    %177 = arith.truncf %169 : vector<8x128xf32> to vector<8x128xbf16>
    %c0_71 = arith.constant 0 : index
    %c0_72 = arith.constant 0 : index
    %178 = vector.load %arg4[%c0_71, %c0_72] : memref<128x512xbf16, #tpu.memory_space<vmem>>, vector<128x512xbf16>
    %cst_73 = arith.constant dense<0.000000e+00> : vector<8x512xf32>
    %179 = tpu.matmul %177, %178, %cst_73 {dimension_numbers = #tpu.dot_dimension_numbers<[1], [0], [0], [1], [0, 0, 1, 1], [], []>} : vector<8x128xbf16>, vector<128x512xbf16>, vector<8x512xf32> -> vector<8x512xf32>
    %180 = arith.addf %176, %179 : vector<8x512xf32>
    %181 = vector.extract_strided_slice %180 {offsets = [0, 0], sizes = [8, 128], strides = [1, 1]} : vector<8x512xf32> to vector<8x128xf32>
    %cst_74 = arith.constant 5.000000e-01 : f32
    %182 = vector.broadcast %cst_74 : f32 to vector<8x128xf32>
    %183 = arith.mulf %182, %181 : vector<8x128xf32>
    %184 = math.tanh %183 : vector<8x128xf32>
    %cst_75 = arith.constant 5.000000e-01 : f32
    %185 = vector.broadcast %cst_75 : f32 to vector<8x128xf32>
    %186 = arith.mulf %185, %184 : vector<8x128xf32>
    %cst_76 = arith.constant 5.000000e-01 : f32
    %187 = vector.broadcast %cst_76 : f32 to vector<8x128xf32>
    %188 = arith.addf %186, %187 : vector<8x128xf32>
    %189 = vector.extract_strided_slice %180 {offsets = [0, 128], sizes = [8, 128], strides = [1, 1]} : vector<8x512xf32> to vector<8x128xf32>
    %cst_77 = arith.constant 5.000000e-01 : f32
    %190 = vector.broadcast %cst_77 : f32 to vector<8x128xf32>
    %191 = arith.mulf %190, %189 : vector<8x128xf32>
    %192 = math.tanh %191 : vector<8x128xf32>
    %cst_78 = arith.constant 5.000000e-01 : f32
    %193 = vector.broadcast %cst_78 : f32 to vector<8x128xf32>
    %194 = arith.mulf %193, %192 : vector<8x128xf32>
    %cst_79 = arith.constant 5.000000e-01 : f32
    %195 = vector.broadcast %cst_79 : f32 to vector<8x128xf32>
    %196 = arith.addf %194, %195 : vector<8x128xf32>
    %197 = vector.extract_strided_slice %180 {offsets = [0, 256], sizes = [8, 128], strides = [1, 1]} : vector<8x512xf32> to vector<8x128xf32>
    %198 = math.tanh %197 : vector<8x128xf32>
    %199 = vector.extract_strided_slice %180 {offsets = [0, 384], sizes = [8, 128], strides = [1, 1]} : vector<8x512xf32> to vector<8x128xf32>
    %cst_80 = arith.constant 5.000000e-01 : f32
    %200 = vector.broadcast %cst_80 : f32 to vector<8x128xf32>
    %201 = arith.mulf %200, %199 : vector<8x128xf32>
    %202 = math.tanh %201 : vector<8x128xf32>
    %cst_81 = arith.constant 5.000000e-01 : f32
    %203 = vector.broadcast %cst_81 : f32 to vector<8x128xf32>
    %204 = arith.mulf %203, %202 : vector<8x128xf32>
    %cst_82 = arith.constant 5.000000e-01 : f32
    %205 = vector.broadcast %cst_82 : f32 to vector<8x128xf32>
    %206 = arith.addf %204, %205 : vector<8x128xf32>
    %207 = arith.mulf %196, %167 : vector<8x128xf32>
    %208 = arith.mulf %188, %198 : vector<8x128xf32>
    %209 = arith.addf %207, %208 : vector<8x128xf32>
    %210 = math.tanh %209 : vector<8x128xf32>
    %211 = arith.mulf %206, %210 : vector<8x128xf32>
    %212 = arith.index_cast %c4_i32 : i32 to index
    %c0_83 = arith.constant 0 : index
    %c0_84 = arith.constant 0 : index
    %213 = vector.load %arg5[%212, %c0_83, %c0_84] : memref<8x8x128xf32, #tpu.memory_space<vmem>>, vector<1x8x128xf32>
    %214 = vector.shape_cast %213 : vector<1x8x128xf32> to vector<8x128xf32>
    %215 = vector.shape_cast %211 : vector<8x128xf32> to vector<1x8x128xf32>
    tpu.vector_store %arg5[%212, %c0_83, %c0_84], %215 {strides = array<i32>} : memref<8x8x128xf32, #tpu.memory_space<vmem>>, vector<1x8x128xf32>,
    %c5_i32 = arith.constant 5 : i32
    %216 = arith.index_cast %c5_i32 : i32 to index
    %c0_85 = arith.constant 0 : index
    %c0_86 = arith.constant 0 : index
    %217 = vector.load %arg1[%216, %c0_85, %c0_86] : memref<8x8x512xf32, #tpu.memory_space<vmem>>, vector<1x8x512xf32>
    %218 = vector.shape_cast %217 : vector<1x8x512xf32> to vector<8x512xf32>
    %219 = arith.truncf %211 : vector<8x128xf32> to vector<8x128xbf16>
    %c0_87 = arith.constant 0 : index
    %c0_88 = arith.constant 0 : index
    %220 = vector.load %arg4[%c0_87, %c0_88] : memref<128x512xbf16, #tpu.memory_space<vmem>>, vector<128x512xbf16>
    %cst_89 = arith.constant dense<0.000000e+00> : vector<8x512xf32>
    %221 = tpu.matmul %219, %220, %cst_89 {dimension_numbers = #tpu.dot_dimension_numbers<[1], [0], [0], [1], [0, 0, 1, 1], [], []>} : vector<8x128xbf16>, vector<128x512xbf16>, vector<8x512xf32> -> vector<8x512xf32>
    %222 = arith.addf %218, %221 : vector<8x512xf32>
    %223 = vector.extract_strided_slice %222 {offsets = [0, 0], sizes = [8, 128], strides = [1, 1]} : vector<8x512xf32> to vector<8x128xf32>
    %cst_90 = arith.constant 5.000000e-01 : f32
    %224 = vector.broadcast %cst_90 : f32 to vector<8x128xf32>
    %225 = arith.mulf %224, %223 : vector<8x128xf32>
    %226 = math.tanh %225 : vector<8x128xf32>
    %cst_91 = arith.constant 5.000000e-01 : f32
    %227 = vector.broadcast %cst_91 : f32 to vector<8x128xf32>
    %228 = arith.mulf %227, %226 : vector<8x128xf32>
    %cst_92 = arith.constant 5.000000e-01 : f32
    %229 = vector.broadcast %cst_92 : f32 to vector<8x128xf32>
    %230 = arith.addf %228, %229 : vector<8x128xf32>
    %231 = vector.extract_strided_slice %222 {offsets = [0, 128], sizes = [8, 128], strides = [1, 1]} : vector<8x512xf32> to vector<8x128xf32>
    %cst_93 = arith.constant 5.000000e-01 : f32
    %232 = vector.broadcast %cst_93 : f32 to vector<8x128xf32>
    %233 = arith.mulf %232, %231 : vector<8x128xf32>
    %234 = math.tanh %233 : vector<8x128xf32>
    %cst_94 = arith.constant 5.000000e-01 : f32
    %235 = vector.broadcast %cst_94 : f32 to vector<8x128xf32>
    %236 = arith.mulf %235, %234 : vector<8x128xf32>
    %cst_95 = arith.constant 5.000000e-01 : f32
    %237 = vector.broadcast %cst_95 : f32 to vector<8x128xf32>
    %238 = arith.addf %236, %237 : vector<8x128xf32>
    %239 = vector.extract_strided_slice %222 {offsets = [0, 256], sizes = [8, 128], strides = [1, 1]} : vector<8x512xf32> to vector<8x128xf32>
    %240 = math.tanh %239 : vector<8x128xf32>
    %241 = vector.extract_strided_slice %222 {offsets = [0, 384], sizes = [8, 128], strides = [1, 1]} : vector<8x512xf32> to vector<8x128xf32>
    %cst_96 = arith.constant 5.000000e-01 : f32
    %242 = vector.broadcast %cst_96 : f32 to vector<8x128xf32>
    %243 = arith.mulf %242, %241 : vector<8x128xf32>
    %244 = math.tanh %243 : vector<8x128xf32>
    %cst_97 = arith.constant 5.000000e-01 : f32
    %245 = vector.broadcast %cst_97 : f32 to vector<8x128xf32>
    %246 = arith.mulf %245, %244 : vector<8x128xf32>
    %cst_98 = arith.constant 5.000000e-01 : f32
    %247 = vector.broadcast %cst_98 : f32 to vector<8x128xf32>
    %248 = arith.addf %246, %247 : vector<8x128xf32>
    %249 = arith.mulf %238, %209 : vector<8x128xf32>
    %250 = arith.mulf %230, %240 : vector<8x128xf32>
    %251 = arith.addf %249, %250 : vector<8x128xf32>
    %252 = math.tanh %251 : vector<8x128xf32>
    %253 = arith.mulf %248, %252 : vector<8x128xf32>
    %254 = arith.index_cast %c5_i32 : i32 to index
    %c0_99 = arith.constant 0 : index
    %c0_100 = arith.constant 0 : index
    %255 = vector.load %arg5[%254, %c0_99, %c0_100] : memref<8x8x128xf32, #tpu.memory_space<vmem>>, vector<1x8x128xf32>
    %256 = vector.shape_cast %255 : vector<1x8x128xf32> to vector<8x128xf32>
    %257 = vector.shape_cast %253 : vector<8x128xf32> to vector<1x8x128xf32>
    tpu.vector_store %arg5[%254, %c0_99, %c0_100], %257 {strides = array<i32>} : memref<8x8x128xf32, #tpu.memory_space<vmem>>, vector<1x8x128xf32>,
    %c6_i32 = arith.constant 6 : i32
    %258 = arith.index_cast %c6_i32 : i32 to index
    %c0_101 = arith.constant 0 : index
    %c0_102 = arith.constant 0 : index
    %259 = vector.load %arg1[%258, %c0_101, %c0_102] : memref<8x8x512xf32, #tpu.memory_space<vmem>>, vector<1x8x512xf32>
    %260 = vector.shape_cast %259 : vector<1x8x512xf32> to vector<8x512xf32>
    %261 = arith.truncf %253 : vector<8x128xf32> to vector<8x128xbf16>
    %c0_103 = arith.constant 0 : index
    %c0_104 = arith.constant 0 : index
    %262 = vector.load %arg4[%c0_103, %c0_104] : memref<128x512xbf16, #tpu.memory_space<vmem>>, vector<128x512xbf16>
    %cst_105 = arith.constant dense<0.000000e+00> : vector<8x512xf32>
    %263 = tpu.matmul %261, %262, %cst_105 {dimension_numbers = #tpu.dot_dimension_numbers<[1], [0], [0], [1], [0, 0, 1, 1], [], []>} : vector<8x128xbf16>, vector<128x512xbf16>, vector<8x512xf32> -> vector<8x512xf32>
    %264 = arith.addf %260, %263 : vector<8x512xf32>
    %265 = vector.extract_strided_slice %264 {offsets = [0, 0], sizes = [8, 128], strides = [1, 1]} : vector<8x512xf32> to vector<8x128xf32>
    %cst_106 = arith.constant 5.000000e-01 : f32
    %266 = vector.broadcast %cst_106 : f32 to vector<8x128xf32>
    %267 = arith.mulf %266, %265 : vector<8x128xf32>
    %268 = math.tanh %267 : vector<8x128xf32>
    %cst_107 = arith.constant 5.000000e-01 : f32
    %269 = vector.broadcast %cst_107 : f32 to vector<8x128xf32>
    %270 = arith.mulf %269, %268 : vector<8x128xf32>
    %cst_108 = arith.constant 5.000000e-01 : f32
    %271 = vector.broadcast %cst_108 : f32 to vector<8x128xf32>
    %272 = arith.addf %270, %271 : vector<8x128xf32>
    %273 = vector.extract_strided_slice %264 {offsets = [0, 128], sizes = [8, 128], strides = [1, 1]} : vector<8x512xf32> to vector<8x128xf32>
    %cst_109 = arith.constant 5.000000e-01 : f32
    %274 = vector.broadcast %cst_109 : f32 to vector<8x128xf32>
    %275 = arith.mulf %274, %273 : vector<8x128xf32>
    %276 = math.tanh %275 : vector<8x128xf32>
    %cst_110 = arith.constant 5.000000e-01 : f32
    %277 = vector.broadcast %cst_110 : f32 to vector<8x128xf32>
    %278 = arith.mulf %277, %276 : vector<8x128xf32>
    %cst_111 = arith.constant 5.000000e-01 : f32
    %279 = vector.broadcast %cst_111 : f32 to vector<8x128xf32>
    %280 = arith.addf %278, %279 : vector<8x128xf32>
    %281 = vector.extract_strided_slice %264 {offsets = [0, 256], sizes = [8, 128], strides = [1, 1]} : vector<8x512xf32> to vector<8x128xf32>
    %282 = math.tanh %281 : vector<8x128xf32>
    %283 = vector.extract_strided_slice %264 {offsets = [0, 384], sizes = [8, 128], strides = [1, 1]} : vector<8x512xf32> to vector<8x128xf32>
    %cst_112 = arith.constant 5.000000e-01 : f32
    %284 = vector.broadcast %cst_112 : f32 to vector<8x128xf32>
    %285 = arith.mulf %284, %283 : vector<8x128xf32>
    %286 = math.tanh %285 : vector<8x128xf32>
    %cst_113 = arith.constant 5.000000e-01 : f32
    %287 = vector.broadcast %cst_113 : f32 to vector<8x128xf32>
    %288 = arith.mulf %287, %286 : vector<8x128xf32>
    %cst_114 = arith.constant 5.000000e-01 : f32
    %289 = vector.broadcast %cst_114 : f32 to vector<8x128xf32>
    %290 = arith.addf %288, %289 : vector<8x128xf32>
    %291 = arith.mulf %280, %251 : vector<8x128xf32>
    %292 = arith.mulf %272, %282 : vector<8x128xf32>
    %293 = arith.addf %291, %292 : vector<8x128xf32>
    %294 = math.tanh %293 : vector<8x128xf32>
    %295 = arith.mulf %290, %294 : vector<8x128xf32>
    %296 = arith.index_cast %c6_i32 : i32 to index
    %c0_115 = arith.constant 0 : index
    %c0_116 = arith.constant 0 : index
    %297 = vector.load %arg5[%296, %c0_115, %c0_116] : memref<8x8x128xf32, #tpu.memory_space<vmem>>, vector<1x8x128xf32>
    %298 = vector.shape_cast %297 : vector<1x8x128xf32> to vector<8x128xf32>
    %299 = vector.shape_cast %295 : vector<8x128xf32> to vector<1x8x128xf32>
    tpu.vector_store %arg5[%296, %c0_115, %c0_116], %299 {strides = array<i32>} : memref<8x8x128xf32, #tpu.memory_space<vmem>>, vector<1x8x128xf32>,
    %c7_i32 = arith.constant 7 : i32
    %300 = arith.index_cast %c7_i32 : i32 to index
    %c0_117 = arith.constant 0 : index
    %c0_118 = arith.constant 0 : index
    %301 = vector.load %arg1[%300, %c0_117, %c0_118] : memref<8x8x512xf32, #tpu.memory_space<vmem>>, vector<1x8x512xf32>
    %302 = vector.shape_cast %301 : vector<1x8x512xf32> to vector<8x512xf32>
    %303 = arith.truncf %295 : vector<8x128xf32> to vector<8x128xbf16>
    %c0_119 = arith.constant 0 : index
    %c0_120 = arith.constant 0 : index
    %304 = vector.load %arg4[%c0_119, %c0_120] : memref<128x512xbf16, #tpu.memory_space<vmem>>, vector<128x512xbf16>
    %cst_121 = arith.constant dense<0.000000e+00> : vector<8x512xf32>
    %305 = tpu.matmul %303, %304, %cst_121 {dimension_numbers = #tpu.dot_dimension_numbers<[1], [0], [0], [1], [0, 0, 1, 1], [], []>} : vector<8x128xbf16>, vector<128x512xbf16>, vector<8x512xf32> -> vector<8x512xf32>
    %306 = arith.addf %302, %305 : vector<8x512xf32>
    %307 = vector.extract_strided_slice %306 {offsets = [0, 0], sizes = [8, 128], strides = [1, 1]} : vector<8x512xf32> to vector<8x128xf32>
    %cst_122 = arith.constant 5.000000e-01 : f32
    %308 = vector.broadcast %cst_122 : f32 to vector<8x128xf32>
    %309 = arith.mulf %308, %307 : vector<8x128xf32>
    %310 = math.tanh %309 : vector<8x128xf32>
    %cst_123 = arith.constant 5.000000e-01 : f32
    %311 = vector.broadcast %cst_123 : f32 to vector<8x128xf32>
    %312 = arith.mulf %311, %310 : vector<8x128xf32>
    %cst_124 = arith.constant 5.000000e-01 : f32
    %313 = vector.broadcast %cst_124 : f32 to vector<8x128xf32>
    %314 = arith.addf %312, %313 : vector<8x128xf32>
    %315 = vector.extract_strided_slice %306 {offsets = [0, 128], sizes = [8, 128], strides = [1, 1]} : vector<8x512xf32> to vector<8x128xf32>
    %cst_125 = arith.constant 5.000000e-01 : f32
    %316 = vector.broadcast %cst_125 : f32 to vector<8x128xf32>
    %317 = arith.mulf %316, %315 : vector<8x128xf32>
    %318 = math.tanh %317 : vector<8x128xf32>
    %cst_126 = arith.constant 5.000000e-01 : f32
    %319 = vector.broadcast %cst_126 : f32 to vector<8x128xf32>
    %320 = arith.mulf %319, %318 : vector<8x128xf32>
    %cst_127 = arith.constant 5.000000e-01 : f32
    %321 = vector.broadcast %cst_127 : f32 to vector<8x128xf32>
    %322 = arith.addf %320, %321 : vector<8x128xf32>
    %323 = vector.extract_strided_slice %306 {offsets = [0, 256], sizes = [8, 128], strides = [1, 1]} : vector<8x512xf32> to vector<8x128xf32>
    %324 = math.tanh %323 : vector<8x128xf32>
    %325 = vector.extract_strided_slice %306 {offsets = [0, 384], sizes = [8, 128], strides = [1, 1]} : vector<8x512xf32> to vector<8x128xf32>
    %cst_128 = arith.constant 5.000000e-01 : f32
    %326 = vector.broadcast %cst_128 : f32 to vector<8x128xf32>
    %327 = arith.mulf %326, %325 : vector<8x128xf32>
    %328 = math.tanh %327 : vector<8x128xf32>
    %cst_129 = arith.constant 5.000000e-01 : f32
    %329 = vector.broadcast %cst_129 : f32 to vector<8x128xf32>
    %330 = arith.mulf %329, %328 : vector<8x128xf32>
    %cst_130 = arith.constant 5.000000e-01 : f32
    %331 = vector.broadcast %cst_130 : f32 to vector<8x128xf32>
    %332 = arith.addf %330, %331 : vector<8x128xf32>
    %333 = arith.mulf %322, %293 : vector<8x128xf32>
    %334 = arith.mulf %314, %324 : vector<8x128xf32>
    %335 = arith.addf %333, %334 : vector<8x128xf32>
    %336 = math.tanh %335 : vector<8x128xf32>
    %337 = arith.mulf %332, %336 : vector<8x128xf32>
    %338 = arith.index_cast %c7_i32 : i32 to index
    %c0_131 = arith.constant 0 : index
    %c0_132 = arith.constant 0 : index
    %339 = vector.load %arg5[%338, %c0_131, %c0_132] : memref<8x8x128xf32, #tpu.memory_space<vmem>>, vector<1x8x128xf32>
    %340 = vector.shape_cast %339 : vector<1x8x128xf32> to vector<8x128xf32>
    %341 = vector.shape_cast %337 : vector<8x128xf32> to vector<1x8x128xf32>
    tpu.vector_store %arg5[%338, %c0_131, %c0_132], %341 {strides = array<i32>} : memref<8x8x128xf32, #tpu.memory_space<vmem>>, vector<1x8x128xf32>,
    %c8_i32 = arith.constant 8 : i32
    %c0_133 = arith.constant 0 : index
    %c0_134 = arith.constant 0 : index
    %342 = vector.load %arg8[%c0_133, %c0_134] : memref<8x128xf32, #tpu.memory_space<vmem>>, vector<8x128xf32>
    tpu.vector_store %arg8[%c0_133, %c0_134], %337 {strides = array<i32>} : memref<8x128xf32, #tpu.memory_space<vmem>>, vector<8x128xf32>,
    %c0_135 = arith.constant 0 : index
    %c0_136 = arith.constant 0 : index
    %343 = vector.load %arg9[%c0_135, %c0_136] : memref<8x128xf32, #tpu.memory_space<vmem>>, vector<8x128xf32>
    tpu.vector_store %arg9[%c0_135, %c0_136], %335 {strides = array<i32>} : memref<8x128xf32, #tpu.memory_space<vmem>>, vector<8x128xf32>,
    %344 = arith.extui %3 : i1 to i32
    %c0_i32_137 = arith.constant 0 : i32
    %345 = arith.cmpi ne, %344, %c0_i32_137 : i32
    scf.if %345 {
      %c0_138 = arith.constant 0 : index
      %c0_139 = arith.constant 0 : index
      %346 = vector.load %arg8[%c0_138, %c0_139] : memref<8x128xf32, #tpu.memory_space<vmem>>, vector<8x128xf32>
      %c0_140 = arith.constant 0 : index
      %c0_141 = arith.constant 0 : index
      %347 = vector.load %arg6[%c0_140, %c0_141] : memref<8x128xf32, #tpu.memory_space<vmem>>, vector<8x128xf32>
      tpu.vector_store %arg6[%c0_140, %c0_141], %346 {strides = array<i32>} : memref<8x128xf32, #tpu.memory_space<vmem>>, vector<8x128xf32>,
      %c0_142 = arith.constant 0 : index
      %c0_143 = arith.constant 0 : index
      %348 = vector.load %arg9[%c0_142, %c0_143] : memref<8x128xf32, #tpu.memory_space<vmem>>, vector<8x128xf32>
      %c0_144 = arith.constant 0 : index
      %c0_145 = arith.constant 0 : index
      %349 = vector.load %arg7[%c0_144, %c0_145] : memref<8x128xf32, #tpu.memory_space<vmem>>, vector<8x128xf32>
      tpu.vector_store %arg7[%c0_144, %c0_145], %348 {strides = array<i32>} : memref<8x128xf32, #tpu.memory_space<vmem>>, vector<8x128xf32>,
    } else {
    }
    return
  }
  func.func @transform_0(%arg0: i32) -> (i32, i32, i32) {
    %c0_i32 = arith.constant 0 : i32
    %c0_i32_0 = arith.constant 0 : i32
    %c0_i32_1 = arith.constant 0 : i32
    return %arg0, %c0_i32, %c0_i32_0 : i32, i32, i32
  }
  func.func @transform_1(%arg0: i32) -> (i32, i32) {
    %c0_i32 = arith.constant 0 : i32
    %c0_i32_0 = arith.constant 0 : i32
    %c0_i32_1 = arith.constant 0 : i32
    return %c0_i32, %c0_i32_0 : i32, i32
  }
  func.func @transform_2(%arg0: i32) -> (i32, i32) {
    %c0_i32 = arith.constant 0 : i32
    %c0_i32_0 = arith.constant 0 : i32
    %c0_i32_1 = arith.constant 0 : i32
    return %c0_i32, %c0_i32_0 : i32, i32
  }
  func.func @transform_3(%arg0: i32) -> (i32, i32) {
    %c0_i32 = arith.constant 0 : i32
    %c0_i32_0 = arith.constant 0 : i32
    %c0_i32_1 = arith.constant 0 : i32
    return %c0_i32, %c0_i32_0 : i32, i32
  }
  func.func @transform_4(%arg0: i32) -> (i32, i32, i32) {
    %c0_i32 = arith.constant 0 : i32
    %c0_i32_0 = arith.constant 0 : i32
    %c0_i32_1 = arith.constant 0 : i32
    return %arg0, %c0_i32, %c0_i32_0 : i32, i32, i32
  }
  func.func @transform_5(%arg0: i32) -> (i32, i32) {
    %c0_i32 = arith.constant 0 : i32
    %c0_i32_0 = arith.constant 0 : i32
    %c0_i32_1 = arith.constant 0 : i32
    return %c0_i32, %c0_i32_0 : i32, i32
  }
  func.func @transform_6(%arg0: i32) -> (i32, i32) {
    %c0_i32 = arith.constant 0 : i32
    %c0_i32_0 = arith.constant 0 : i32
    %c0_i32_1 = arith.constant 0 : i32
    return %c0_i32, %c0_i32_0 : i32, i32
  }
}

module attributes {stable_mosaic.version = 11 : i64} {
  func.func @_lstm_recurrent_kernel(%arg0: i32, %arg1: memref<8x8x512xf32, #tpu.memory_space<vmem>>, %arg2: memref<8x128xf32, #tpu.memory_space<vmem>>, %arg3: memref<8x128xf32, #tpu.memory_space<vmem>>, %arg4: memref<128x512xbf16, #tpu.memory_space<vmem>>, %arg5: memref<8x8x128xf32, #tpu.memory_space<vmem>>, %arg6: memref<8x128xf32, #tpu.memory_space<vmem>>, %arg7: memref<8x128xf32, #tpu.memory_space<vmem>>, %arg8: memref<8x128xf32, #tpu.memory_space<vmem>>, %arg9: memref<8x128xf32, #tpu.memory_space<vmem>>) attributes {dimension_semantics = [#tpu.dimension_semantics<arbitrary>], iteration_bounds = array<i64: 1>, scalar_prefetch = 0 : i64, scratch_operands = 2 : i64, tpu.core_type = #tpu.core_type<tc>, window_params = [{transform_indices = @transform_0, window_bounds = array<i64: 8, 8, 512>}, {pipeline_mode = #tpu.pipeline_mode<synchronous>, transform_indices = @transform_1, window_bounds = array<i64: 8, 128>}, {pipeline_mode = #tpu.pipeline_mode<synchronous>, transform_indices = @transform_2, window_bounds = array<i64: 8, 128>}, {pipeline_mode = #tpu.pipeline_mode<synchronous>, transform_indices = @transform_3, window_bounds = array<i64: 128, 512>}, {transform_indices = @transform_4, window_bounds = array<i64: 8, 8, 128>}, {pipeline_mode = #tpu.pipeline_mode<synchronous>, transform_indices = @transform_5, window_bounds = array<i64: 8, 128>}, {pipeline_mode = #tpu.pipeline_mode<synchronous>, transform_indices = @transform_6, window_bounds = array<i64: 8, 128>}]} {
    %c0_i32 = arith.constant 0 : i32
    %0 = arith.cmpi eq, %arg0, %c0_i32 : i32
    %1 = arith.extui %0 : i1 to i32
    %c0_i32_0 = arith.constant 0 : i32
    %2 = arith.cmpi ne, %1, %c0_i32_0 : i32
    scf.if %2 {
      %c0_138 = arith.constant 0 : index
      %c0_139 = arith.constant 0 : index
      %346 = vector.load %arg2[%c0_138, %c0_139] : memref<8x128xf32, #tpu.memory_space<vmem>>, vector<8x128xf32>
      %c0_140 = arith.constant 0 : index
      %c0_141 = arith.constant 0 : index
      %347 = vector.load %arg8[%c0_140, %c0_141] : memref<8x128xf32, #tpu.memory_space<vmem>>, vector<8x128xf32>
      tpu.vector_store %arg8[%c0_140, %c0_141], %346 {strides = array<i32>} : memref<8x128xf32, #tpu.memory_space<vmem>>, vector<8x128xf32>,
      %c0_142 = arith.constant 0 : index
      %c0_143 = arith.constant 0 : index
      %348 = vector.load %arg3[%c0_142, %c0_143] : memref<8x128xf32, #tpu.memory_space<vmem>>, vector<8x128xf32>
      %c0_144 = arith.constant 0 : index
      %c0_145 = arith.constant 0 : index
      %349 = vector.load %arg9[%c0_144, %c0_145] : memref<8x128xf32, #tpu.memory_space<vmem>>, vector<8x128xf32>
      tpu.vector_store %arg9[%c0_144, %c0_145], %348 {strides = array<i32>} : memref<8x128xf32, #tpu.memory_space<vmem>>, vector<8x128xf32>,
    } else {
    }
    %c0_i32_1 = arith.constant 0 : i32
    %3 = arith.cmpi eq, %arg0, %c0_i32_1 : i32
    %c0 = arith.constant 0 : index
    %c0_2 = arith.constant 0 : index
    %4 = vector.load %arg8[%c0, %c0_2] : memref<8x128xf32, #tpu.memory_space<vmem>>, vector<8x128xf32>
    %c0_3 = arith.constant 0 : index
    %c0_4 = arith.constant 0 : index
    %5 = vector.load %arg9[%c0_3, %c0_4] : memref<8x128xf32, #tpu.memory_space<vmem>>, vector<8x128xf32>
    %c0_i32_5 = arith.constant 0 : i32
    %6 = arith.index_cast %c0_i32_5 : i32 to index
    %c0_6 = arith.constant 0 : index
    %c0_7 = arith.constant 0 : index
    %7 = vector.load %arg1[%6, %c0_6, %c0_7] : memref<8x8x512xf32, #tpu.memory_space<vmem>>, vector<1x8x512xf32>
    %8 = vector.shape_cast %7 : vector<1x8x512xf32> to vector<8x512xf32>
    %9 = arith.truncf %4 : vector<8x128xf32> to vector<8x128xbf16>
    %c0_8 = arith.constant 0 : index
    %c0_9 = arith.constant 0 : index
    %10 = vector.load %arg4[%c0_8, %c0_9] : memref<128x512xbf16, #tpu.memory_space<vmem>>, vector<128x512xbf16>
    %cst = arith.constant dense<0.000000e+00> : vector<8x512xf32>
    %11 = tpu.matmul %9, %10, %cst {dimension_numbers = #tpu.dot_dimension_numbers<[1], [0], [0], [1], [0, 0, 1, 1], [], []>} : vector<8x128xbf16>, vector<128x512xbf16>, vector<8x512xf32> -> vector<8x512xf32>
    %12 = arith.addf %8, %11 : vector<8x512xf32>
    %13 = vector.extract_strided_slice %12 {offsets = [0, 0], sizes = [8, 128], strides = [1, 1]} : vector<8x512xf32> to vector<8x128xf32>
    %cst_10 = arith.constant 5.000000e-01 : f32
    %14 = vector.broadcast %cst_10 : f32 to vector<8x128xf32>
    %15 = arith.mulf %14, %13 : vector<8x128xf32>
    %16 = math.tanh %15 : vector<8x128xf32>
    %cst_11 = arith.constant 5.000000e-01 : f32
    %17 = vector.broadcast %cst_11 : f32 to vector<8x128xf32>
    %18 = arith.mulf %17, %16 : vector<8x128xf32>
    %cst_12 = arith.constant 5.000000e-01 : f32
    %19 = vector.broadcast %cst_12 : f32 to vector<8x128xf32>
    %20 = arith.addf %18, %19 : vector<8x128xf32>
    %21 = vector.extract_strided_slice %12 {offsets = [0, 128], sizes = [8, 128], strides = [1, 1]} : vector<8x512xf32> to vector<8x128xf32>
    %cst_13 = arith.constant 5.000000e-01 : f32
    %22 = vector.broadcast %cst_13 : f32 to vector<8x128xf32>
    %23 = arith.mulf %22, %21 : vector<8x128xf32>
    %24 = math.tanh %23 : vector<8x128xf32>
    %cst_14 = arith.constant 5.000000e-01 : f32
    %25 = vector.broadcast %cst_14 : f32 to vector<8x128xf32>
    %26 = arith.mulf %25, %24 : vector<8x128xf32>
    %cst_15 = arith.constant 5.000000e-01 : f32
    %27 = vector.broadcast %cst_15 : f32 to vector<8x128xf32>
    %28 = arith.addf %26, %27 : vector<8x128xf32>
    %29 = vector.extract_strided_slice %12 {offsets = [0, 256], sizes = [8, 128], strides = [1, 1]} : vector<8x512xf32> to vector<8x128xf32>
    %30 = math.tanh %29 : vector<8x128xf32>
    %31 = vector.extract_strided_slice %12 {offsets = [0, 384], sizes = [8, 128], strides = [1, 1]} : vector<8x512xf32> to vector<8x128xf32>
    %cst_16 = arith.constant 5.000000e-01 : f32
    %32 = vector.broadcast %cst_16 : f32 to vector<8x128xf32>
    %33 = arith.mulf %32, %31 : vector<8x128xf32>
    %34 = math.tanh %33 : vector<8x128xf32>
    %cst_17 = arith.constant 5.000000e-01 : f32
    %35 = vector.broadcast %cst_17 : f32 to vector<8x128xf32>
    %36 = arith.mulf %35, %34 : vector<8x128xf32>
    %cst_18 = arith.constant 5.000000e-01 : f32
    %37 = vector.broadcast %cst_18 : f32 to vector<8x128xf32>
    %38 = arith.addf %36, %37 : vector<8x128xf32>
    %39 = arith.mulf %28, %5 : vector<8x128xf32>
    %40 = arith.mulf %20, %30 : vector<8x128xf32>
    %41 = arith.addf %39, %40 : vector<8x128xf32>
    %42 = math.tanh %41 : vector<8x128xf32>
    %43 = arith.mulf %38, %42 : vector<8x128xf32>
    %44 = arith.index_cast %c0_i32_5 : i32 to index
    %c0_19 = arith.constant 0 : index
    %c0_20 = arith.constant 0 : index
    %45 = vector.load %arg5[%44, %c0_19, %c0_20] : memref<8x8x128xf32, #tpu.memory_space<vmem>>, vector<1x8x128xf32>
    %46 = vector.shape_cast %45 : vector<1x8x128xf32> to vector<8x128xf32>
    %47 = vector.shape_cast %43 : vector<8x128xf32> to vector<1x8x128xf32>
    tpu.vector_store %arg5[%44, %c0_19, %c0_20], %47 {strides = array<i32>} : memref<8x8x128xf32, #tpu.memory_space<vmem>>, vector<1x8x128xf32>,
    %c1_i32 = arith.constant 1 : i32
    %48 = arith.index_cast %c1_i32 : i32 to index
    %c0_21 = arith.constant 0 : index
    %c0_22 = arith.constant 0 : index
    %49 = vector.load %arg1[%48, %c0_21, %c0_22] : memref<8x8x512xf32, #tpu.memory_space<vmem>>, vector<1x8x512xf32>
    %50 = vector.shape_cast %49 : vector<1x8x512xf32> to vector<8x512xf32>
    %51 = arith.truncf %43 : vector<8x128xf32> to vector<8x128xbf16>
    %c0_23 = arith.constant 0 : index
    %c0_24 = arith.constant 0 : index
    %52 = vector.load %arg4[%c0_23, %c0_24] : memref<128x512xbf16, #tpu.memory_space<vmem>>, vector<128x512xbf16>
    %cst_25 = arith.constant dense<0.000000e+00> : vector<8x512xf32>
    %53 = tpu.matmul %51, %52, %cst_25 {dimension_numbers = #tpu.dot_dimension_numbers<[1], [0], [0], [1], [0, 0, 1, 1], [], []>} : vector<8x128xbf16>, vector<128x512xbf16>, vector<8x512xf32> -> vector<8x512xf32>
    %54 = arith.addf %50, %53 : vector<8x512xf32>
    %55 = vector.extract_strided_slice %54 {offsets = [0, 0], sizes = [8, 128], strides = [1, 1]} : vector<8x512xf32> to vector<8x128xf32>
    %cst_26 = arith.constant 5.000000e-01 : f32
    %56 = vector.broadcast %cst_26 : f32 to vector<8x128xf32>
    %57 = arith.mulf %56, %55 : vector<8x128xf32>
    %58 = math.tanh %57 : vector<8x128xf32>
    %cst_27 = arith.constant 5.000000e-01 : f32
    %59 = vector.broadcast %cst_27 : f32 to vector<8x128xf32>
    %60 = arith.mulf %59, %58 : vector<8x128xf32>
    %cst_28 = arith.constant 5.000000e-01 : f32
    %61 = vector.broadcast %cst_28 : f32 to vector<8x128xf32>
    %62 = arith.addf %60, %61 : vector<8x128xf32>
    %63 = vector.extract_strided_slice %54 {offsets = [0, 128], sizes = [8, 128], strides = [1, 1]} : vector<8x512xf32> to vector<8x128xf32>
    %cst_29 = arith.constant 5.000000e-01 : f32
    %64 = vector.broadcast %cst_29 : f32 to vector<8x128xf32>
    %65 = arith.mulf %64, %63 : vector<8x128xf32>
    %66 = math.tanh %65 : vector<8x128xf32>
    %cst_30 = arith.constant 5.000000e-01 : f32
    %67 = vector.broadcast %cst_30 : f32 to vector<8x128xf32>
    %68 = arith.mulf %67, %66 : vector<8x128xf32>
    %cst_31 = arith.constant 5.000000e-01 : f32
    %69 = vector.broadcast %cst_31 : f32 to vector<8x128xf32>
    %70 = arith.addf %68, %69 : vector<8x128xf32>
    %71 = vector.extract_strided_slice %54 {offsets = [0, 256], sizes = [8, 128], strides = [1, 1]} : vector<8x512xf32> to vector<8x128xf32>
    %72 = math.tanh %71 : vector<8x128xf32>
    %73 = vector.extract_strided_slice %54 {offsets = [0, 384], sizes = [8, 128], strides = [1, 1]} : vector<8x512xf32> to vector<8x128xf32>
    %cst_32 = arith.constant 5.000000e-01 : f32
    %74 = vector.broadcast %cst_32 : f32 to vector<8x128xf32>
    %75 = arith.mulf %74, %73 : vector<8x128xf32>
    %76 = math.tanh %75 : vector<8x128xf32>
    %cst_33 = arith.constant 5.000000e-01 : f32
    %77 = vector.broadcast %cst_33 : f32 to vector<8x128xf32>
    %78 = arith.mulf %77, %76 : vector<8x128xf32>
    %cst_34 = arith.constant 5.000000e-01 : f32
    %79 = vector.broadcast %cst_34 : f32 to vector<8x128xf32>
    %80 = arith.addf %78, %79 : vector<8x128xf32>
    %81 = arith.mulf %70, %41 : vector<8x128xf32>
    %82 = arith.mulf %62, %72 : vector<8x128xf32>
    %83 = arith.addf %81, %82 : vector<8x128xf32>
    %84 = math.tanh %83 : vector<8x128xf32>
    %85 = arith.mulf %80, %84 : vector<8x128xf32>
    %86 = arith.index_cast %c1_i32 : i32 to index
    %c0_35 = arith.constant 0 : index
    %c0_36 = arith.constant 0 : index
    %87 = vector.load %arg5[%86, %c0_35, %c0_36] : memref<8x8x128xf32, #tpu.memory_space<vmem>>, vector<1x8x128xf32>
    %88 = vector.shape_cast %87 : vector<1x8x128xf32> to vector<8x128xf32>
    %89 = vector.shape_cast %85 : vector<8x128xf32> to vector<1x8x128xf32>
    tpu.vector_store %arg5[%86, %c0_35, %c0_36], %89 {strides = array<i32>} : memref<8x8x128xf32, #tpu.memory_space<vmem>>, vector<1x8x128xf32>,
    %c2_i32 = arith.constant 2 : i32
    %90 = arith.index_cast %c2_i32 : i32 to index
    %c0_37 = arith.constant 0 : index
    %c0_38 = arith.constant 0 : index
    %91 = vector.load %arg1[%90, %c0_37, %c0_38] : memref<8x8x512xf32, #tpu.memory_space<vmem>>, vector<1x8x512xf32>
    %92 = vector.shape_cast %91 : vector<1x8x512xf32> to vector<8x512xf32>
    %93 = arith.truncf %85 : vector<8x128xf32> to vector<8x128xbf16>
    %c0_39 = arith.constant 0 : index
    %c0_40 = arith.constant 0 : index
    %94 = vector.load %arg4[%c0_39, %c0_40] : memref<128x512xbf16, #tpu.memory_space<vmem>>, vector<128x512xbf16>
    %cst_41 = arith.constant dense<0.000000e+00> : vector<8x512xf32>
    %95 = tpu.matmul %93, %94, %cst_41 {dimension_numbers = #tpu.dot_dimension_numbers<[1], [0], [0], [1], [0, 0, 1, 1], [], []>} : vector<8x128xbf16>, vector<128x512xbf16>, vector<8x512xf32> -> vector<8x512xf32>
    %96 = arith.addf %92, %95 : vector<8x512xf32>
    %97 = vector.extract_strided_slice %96 {offsets = [0, 0], sizes = [8, 128], strides = [1, 1]} : vector<8x512xf32> to vector<8x128xf32>
    %cst_42 = arith.constant 5.000000e-01 : f32
    %98 = vector.broadcast %cst_42 : f32 to vector<8x128xf32>
    %99 = arith.mulf %98, %97 : vector<8x128xf32>
    %100 = math.tanh %99 : vector<8x128xf32>
    %cst_43 = arith.constant 5.000000e-01 : f32
    %101 = vector.broadcast %cst_43 : f32 to vector<8x128xf32>
    %102 = arith.mulf %101, %100 : vector<8x128xf32>
    %cst_44 = arith.constant 5.000000e-01 : f32
    %103 = vector.broadcast %cst_44 : f32 to vector<8x128xf32>
    %104 = arith.addf %102, %103 : vector<8x128xf32>
    %105 = vector.extract_strided_slice %96 {offsets = [0, 128], sizes = [8, 128], strides = [1, 1]} : vector<8x512xf32> to vector<8x128xf32>
    %cst_45 = arith.constant 5.000000e-01 : f32
    %106 = vector.broadcast %cst_45 : f32 to vector<8x128xf32>
    %107 = arith.mulf %106, %105 : vector<8x128xf32>
    %108 = math.tanh %107 : vector<8x128xf32>
    %cst_46 = arith.constant 5.000000e-01 : f32
    %109 = vector.broadcast %cst_46 : f32 to vector<8x128xf32>
    %110 = arith.mulf %109, %108 : vector<8x128xf32>
    %cst_47 = arith.constant 5.000000e-01 : f32
    %111 = vector.broadcast %cst_47 : f32 to vector<8x128xf32>
    %112 = arith.addf %110, %111 : vector<8x128xf32>
    %113 = vector.extract_strided_slice %96 {offsets = [0, 256], sizes = [8, 128], strides = [1, 1]} : vector<8x512xf32> to vector<8x128xf32>
    %114 = math.tanh %113 : vector<8x128xf32>
    %115 = vector.extract_strided_slice %96 {offsets = [0, 384], sizes = [8, 128], strides = [1, 1]} : vector<8x512xf32> to vector<8x128xf32>
    %cst_48 = arith.constant 5.000000e-01 : f32
    %116 = vector.broadcast %cst_48 : f32 to vector<8x128xf32>
    %117 = arith.mulf %116, %115 : vector<8x128xf32>
    %118 = math.tanh %117 : vector<8x128xf32>
    %cst_49 = arith.constant 5.000000e-01 : f32
    %119 = vector.broadcast %cst_49 : f32 to vector<8x128xf32>
    %120 = arith.mulf %119, %118 : vector<8x128xf32>
    %cst_50 = arith.constant 5.000000e-01 : f32
    %121 = vector.broadcast %cst_50 : f32 to vector<8x128xf32>
    %122 = arith.addf %120, %121 : vector<8x128xf32>
    %123 = arith.mulf %112, %83 : vector<8x128xf32>
    %124 = arith.mulf %104, %114 : vector<8x128xf32>
    %125 = arith.addf %123, %124 : vector<8x128xf32>
    %126 = math.tanh %125 : vector<8x128xf32>
    %127 = arith.mulf %122, %126 : vector<8x128xf32>
    %128 = arith.index_cast %c2_i32 : i32 to index
    %c0_51 = arith.constant 0 : index
    %c0_52 = arith.constant 0 : index
    %129 = vector.load %arg5[%128, %c0_51, %c0_52] : memref<8x8x128xf32, #tpu.memory_space<vmem>>, vector<1x8x128xf32>
    %130 = vector.shape_cast %129 : vector<1x8x128xf32> to vector<8x128xf32>
    %131 = vector.shape_cast %127 : vector<8x128xf32> to vector<1x8x128xf32>
    tpu.vector_store %arg5[%128, %c0_51, %c0_52], %131 {strides = array<i32>} : memref<8x8x128xf32, #tpu.memory_space<vmem>>, vector<1x8x128xf32>,
    %c3_i32 = arith.constant 3 : i32
    %132 = arith.index_cast %c3_i32 : i32 to index
    %c0_53 = arith.constant 0 : index
    %c0_54 = arith.constant 0 : index
    %133 = vector.load %arg1[%132, %c0_53, %c0_54] : memref<8x8x512xf32, #tpu.memory_space<vmem>>, vector<1x8x512xf32>
    %134 = vector.shape_cast %133 : vector<1x8x512xf32> to vector<8x512xf32>
    %135 = arith.truncf %127 : vector<8x128xf32> to vector<8x128xbf16>
    %c0_55 = arith.constant 0 : index
    %c0_56 = arith.constant 0 : index
    %136 = vector.load %arg4[%c0_55, %c0_56] : memref<128x512xbf16, #tpu.memory_space<vmem>>, vector<128x512xbf16>
    %cst_57 = arith.constant dense<0.000000e+00> : vector<8x512xf32>
    %137 = tpu.matmul %135, %136, %cst_57 {dimension_numbers = #tpu.dot_dimension_numbers<[1], [0], [0], [1], [0, 0, 1, 1], [], []>} : vector<8x128xbf16>, vector<128x512xbf16>, vector<8x512xf32> -> vector<8x512xf32>
    %138 = arith.addf %134, %137 : vector<8x512xf32>
    %139 = vector.extract_strided_slice %138 {offsets = [0, 0], sizes = [8, 128], strides = [1, 1]} : vector<8x512xf32> to vector<8x128xf32>
    %cst_58 = arith.constant 5.000000e-01 : f32
    %140 = vector.broadcast %cst_58 : f32 to vector<8x128xf32>
    %141 = arith.mulf %140, %139 : vector<8x128xf32>
    %142 = math.tanh %141 : vector<8x128xf32>
    %cst_59 = arith.constant 5.000000e-01 : f32
    %143 = vector.broadcast %cst_59 : f32 to vector<8x128xf32>
    %144 = arith.mulf %143, %142 : vector<8x128xf32>
    %cst_60 = arith.constant 5.000000e-01 : f32
    %145 = vector.broadcast %cst_60 : f32 to vector<8x128xf32>
    %146 = arith.addf %144, %145 : vector<8x128xf32>
    %147 = vector.extract_strided_slice %138 {offsets = [0, 128], sizes = [8, 128], strides = [1, 1]} : vector<8x512xf32> to vector<8x128xf32>
    %cst_61 = arith.constant 5.000000e-01 : f32
    %148 = vector.broadcast %cst_61 : f32 to vector<8x128xf32>
    %149 = arith.mulf %148, %147 : vector<8x128xf32>
    %150 = math.tanh %149 : vector<8x128xf32>
    %cst_62 = arith.constant 5.000000e-01 : f32
    %151 = vector.broadcast %cst_62 : f32 to vector<8x128xf32>
    %152 = arith.mulf %151, %150 : vector<8x128xf32>
    %cst_63 = arith.constant 5.000000e-01 : f32
    %153 = vector.broadcast %cst_63 : f32 to vector<8x128xf32>
    %154 = arith.addf %152, %153 : vector<8x128xf32>
    %155 = vector.extract_strided_slice %138 {offsets = [0, 256], sizes = [8, 128], strides = [1, 1]} : vector<8x512xf32> to vector<8x128xf32>
    %156 = math.tanh %155 : vector<8x128xf32>
    %157 = vector.extract_strided_slice %138 {offsets = [0, 384], sizes = [8, 128], strides = [1, 1]} : vector<8x512xf32> to vector<8x128xf32>
    %cst_64 = arith.constant 5.000000e-01 : f32
    %158 = vector.broadcast %cst_64 : f32 to vector<8x128xf32>
    %159 = arith.mulf %158, %157 : vector<8x128xf32>
    %160 = math.tanh %159 : vector<8x128xf32>
    %cst_65 = arith.constant 5.000000e-01 : f32
    %161 = vector.broadcast %cst_65 : f32 to vector<8x128xf32>
    %162 = arith.mulf %161, %160 : vector<8x128xf32>
    %cst_66 = arith.constant 5.000000e-01 : f32
    %163 = vector.broadcast %cst_66 : f32 to vector<8x128xf32>
    %164 = arith.addf %162, %163 : vector<8x128xf32>
    %165 = arith.mulf %154, %125 : vector<8x128xf32>
    %166 = arith.mulf %146, %156 : vector<8x128xf32>
    %167 = arith.addf %165, %166 : vector<8x128xf32>
    %168 = math.tanh %167 : vector<8x128xf32>
    %169 = arith.mulf %164, %168 : vector<8x128xf32>
    %170 = arith.index_cast %c3_i32 : i32 to index
    %c0_67 = arith.constant 0 : index
    %c0_68 = arith.constant 0 : index
    %171 = vector.load %arg5[%170, %c0_67, %c0_68] : memref<8x8x128xf32, #tpu.memory_space<vmem>>, vector<1x8x128xf32>
    %172 = vector.shape_cast %171 : vector<1x8x128xf32> to vector<8x128xf32>
    %173 = vector.shape_cast %169 : vector<8x128xf32> to vector<1x8x128xf32>
    tpu.vector_store %arg5[%170, %c0_67, %c0_68], %173 {strides = array<i32>} : memref<8x8x128xf32, #tpu.memory_space<vmem>>, vector<1x8x128xf32>,
    %c4_i32 = arith.constant 4 : i32
    %174 = arith.index_cast %c4_i32 : i32 to index
    %c0_69 = arith.constant 0 : index
    %c0_70 = arith.constant 0 : index
    %175 = vector.load %arg1[%174, %c0_69, %c0_70] : memref<8x8x512xf32, #tpu.memory_space<vmem>>, vector<1x8x512xf32>
    %176 = vector.shape_cast %175 : vector<1x8x512xf32> to vector<8x512xf32>
    %177 = arith.truncf %169 : vector<8x128xf32> to vector<8x128xbf16>
    %c0_71 = arith.constant 0 : index
    %c0_72 = arith.constant 0 : index
    %178 = vector.load %arg4[%c0_71, %c0_72] : memref<128x512xbf16, #tpu.memory_space<vmem>>, vector<128x512xbf16>
    %cst_73 = arith.constant dense<0.000000e+00> : vector<8x512xf32>
    %179 = tpu.matmul %177, %178, %cst_73 {dimension_numbers = #tpu.dot_dimension_numbers<[1], [0], [0], [1], [0, 0, 1, 1], [], []>} : vector<8x128xbf16>, vector<128x512xbf16>, vector<8x512xf32> -> vector<8x512xf32>
    %180 = arith.addf %176, %179 : vector<8x512xf32>
    %181 = vector.extract_strided_slice %180 {offsets = [0, 0], sizes = [8, 128], strides = [1, 1]} : vector<8x512xf32> to vector<8x128xf32>
    %cst_74 = arith.constant 5.000000e-01 : f32
    %182 = vector.broadcast %cst_74 : f32 to vector<8x128xf32>
    %183 = arith.mulf %182, %181 : vector<8x128xf32>
    %184 = math.tanh %183 : vector<8x128xf32>
    %cst_75 = arith.constant 5.000000e-01 : f32
    %185 = vector.broadcast %cst_75 : f32 to vector<8x128xf32>
    %186 = arith.mulf %185, %184 : vector<8x128xf32>
    %cst_76 = arith.constant 5.000000e-01 : f32
    %187 = vector.broadcast %cst_76 : f32 to vector<8x128xf32>
    %188 = arith.addf %186, %187 : vector<8x128xf32>
    %189 = vector.extract_strided_slice %180 {offsets = [0, 128], sizes = [8, 128], strides = [1, 1]} : vector<8x512xf32> to vector<8x128xf32>
    %cst_77 = arith.constant 5.000000e-01 : f32
    %190 = vector.broadcast %cst_77 : f32 to vector<8x128xf32>
    %191 = arith.mulf %190, %189 : vector<8x128xf32>
    %192 = math.tanh %191 : vector<8x128xf32>
    %cst_78 = arith.constant 5.000000e-01 : f32
    %193 = vector.broadcast %cst_78 : f32 to vector<8x128xf32>
    %194 = arith.mulf %193, %192 : vector<8x128xf32>
    %cst_79 = arith.constant 5.000000e-01 : f32
    %195 = vector.broadcast %cst_79 : f32 to vector<8x128xf32>
    %196 = arith.addf %194, %195 : vector<8x128xf32>
    %197 = vector.extract_strided_slice %180 {offsets = [0, 256], sizes = [8, 128], strides = [1, 1]} : vector<8x512xf32> to vector<8x128xf32>
    %198 = math.tanh %197 : vector<8x128xf32>
    %199 = vector.extract_strided_slice %180 {offsets = [0, 384], sizes = [8, 128], strides = [1, 1]} : vector<8x512xf32> to vector<8x128xf32>
    %cst_80 = arith.constant 5.000000e-01 : f32
    %200 = vector.broadcast %cst_80 : f32 to vector<8x128xf32>
    %201 = arith.mulf %200, %199 : vector<8x128xf32>
    %202 = math.tanh %201 : vector<8x128xf32>
    %cst_81 = arith.constant 5.000000e-01 : f32
    %203 = vector.broadcast %cst_81 : f32 to vector<8x128xf32>
    %204 = arith.mulf %203, %202 : vector<8x128xf32>
    %cst_82 = arith.constant 5.000000e-01 : f32
    %205 = vector.broadcast %cst_82 : f32 to vector<8x128xf32>
    %206 = arith.addf %204, %205 : vector<8x128xf32>
    %207 = arith.mulf %196, %167 : vector<8x128xf32>
    %208 = arith.mulf %188, %198 : vector<8x128xf32>
    %209 = arith.addf %207, %208 : vector<8x128xf32>
    %210 = math.tanh %209 : vector<8x128xf32>
    %211 = arith.mulf %206, %210 : vector<8x128xf32>
    %212 = arith.index_cast %c4_i32 : i32 to index
    %c0_83 = arith.constant 0 : index
    %c0_84 = arith.constant 0 : index
    %213 = vector.load %arg5[%212, %c0_83, %c0_84] : memref<8x8x128xf32, #tpu.memory_space<vmem>>, vector<1x8x128xf32>
    %214 = vector.shape_cast %213 : vector<1x8x128xf32> to vector<8x128xf32>
    %215 = vector.shape_cast %211 : vector<8x128xf32> to vector<1x8x128xf32>
    tpu.vector_store %arg5[%212, %c0_83, %c0_84], %215 {strides = array<i32>} : memref<8x8x128xf32, #tpu.memory_space<vmem>>, vector<1x8x128xf32>,
    %c5_i32 = arith.constant 5 : i32
    %216 = arith.index_cast %c5_i32 : i32 to index
    %c0_85 = arith.constant 0 : index
    %c0_86 = arith.constant 0 : index
    %217 = vector.load %arg1[%216, %c0_85, %c0_86] : memref<8x8x512xf32, #tpu.memory_space<vmem>>, vector<1x8x512xf32>
    %218 = vector.shape_cast %217 : vector<1x8x512xf32> to vector<8x512xf32>
    %219 = arith.truncf %211 : vector<8x128xf32> to vector<8x128xbf16>
    %c0_87 = arith.constant 0 : index
    %c0_88 = arith.constant 0 : index
    %220 = vector.load %arg4[%c0_87, %c0_88] : memref<128x512xbf16, #tpu.memory_space<vmem>>, vector<128x512xbf16>
    %cst_89 = arith.constant dense<0.000000e+00> : vector<8x512xf32>
    %221 = tpu.matmul %219, %220, %cst_89 {dimension_numbers = #tpu.dot_dimension_numbers<[1], [0], [0], [1], [0, 0, 1, 1], [], []>} : vector<8x128xbf16>, vector<128x512xbf16>, vector<8x512xf32> -> vector<8x512xf32>
    %222 = arith.addf %218, %221 : vector<8x512xf32>
    %223 = vector.extract_strided_slice %222 {offsets = [0, 0], sizes = [8, 128], strides = [1, 1]} : vector<8x512xf32> to vector<8x128xf32>
    %cst_90 = arith.constant 5.000000e-01 : f32
    %224 = vector.broadcast %cst_90 : f32 to vector<8x128xf32>
    %225 = arith.mulf %224, %223 : vector<8x128xf32>
    %226 = math.tanh %225 : vector<8x128xf32>
    %cst_91 = arith.constant 5.000000e-01 : f32
    %227 = vector.broadcast %cst_91 : f32 to vector<8x128xf32>
    %228 = arith.mulf %227, %226 : vector<8x128xf32>
    %cst_92 = arith.constant 5.000000e-01 : f32
    %229 = vector.broadcast %cst_92 : f32 to vector<8x128xf32>
    %230 = arith.addf %228, %229 : vector<8x128xf32>
    %231 = vector.extract_strided_slice %222 {offsets = [0, 128], sizes = [8, 128], strides = [1, 1]} : vector<8x512xf32> to vector<8x128xf32>
    %cst_93 = arith.constant 5.000000e-01 : f32
    %232 = vector.broadcast %cst_93 : f32 to vector<8x128xf32>
    %233 = arith.mulf %232, %231 : vector<8x128xf32>
    %234 = math.tanh %233 : vector<8x128xf32>
    %cst_94 = arith.constant 5.000000e-01 : f32
    %235 = vector.broadcast %cst_94 : f32 to vector<8x128xf32>
    %236 = arith.mulf %235, %234 : vector<8x128xf32>
    %cst_95 = arith.constant 5.000000e-01 : f32
    %237 = vector.broadcast %cst_95 : f32 to vector<8x128xf32>
    %238 = arith.addf %236, %237 : vector<8x128xf32>
    %239 = vector.extract_strided_slice %222 {offsets = [0, 256], sizes = [8, 128], strides = [1, 1]} : vector<8x512xf32> to vector<8x128xf32>
    %240 = math.tanh %239 : vector<8x128xf32>
    %241 = vector.extract_strided_slice %222 {offsets = [0, 384], sizes = [8, 128], strides = [1, 1]} : vector<8x512xf32> to vector<8x128xf32>
    %cst_96 = arith.constant 5.000000e-01 : f32
    %242 = vector.broadcast %cst_96 : f32 to vector<8x128xf32>
    %243 = arith.mulf %242, %241 : vector<8x128xf32>
    %244 = math.tanh %243 : vector<8x128xf32>
    %cst_97 = arith.constant 5.000000e-01 : f32
    %245 = vector.broadcast %cst_97 : f32 to vector<8x128xf32>
    %246 = arith.mulf %245, %244 : vector<8x128xf32>
    %cst_98 = arith.constant 5.000000e-01 : f32
    %247 = vector.broadcast %cst_98 : f32 to vector<8x128xf32>
    %248 = arith.addf %246, %247 : vector<8x128xf32>
    %249 = arith.mulf %238, %209 : vector<8x128xf32>
    %250 = arith.mulf %230, %240 : vector<8x128xf32>
    %251 = arith.addf %249, %250 : vector<8x128xf32>
    %252 = math.tanh %251 : vector<8x128xf32>
    %253 = arith.mulf %248, %252 : vector<8x128xf32>
    %254 = arith.index_cast %c5_i32 : i32 to index
    %c0_99 = arith.constant 0 : index
    %c0_100 = arith.constant 0 : index
    %255 = vector.load %arg5[%254, %c0_99, %c0_100] : memref<8x8x128xf32, #tpu.memory_space<vmem>>, vector<1x8x128xf32>
    %256 = vector.shape_cast %255 : vector<1x8x128xf32> to vector<8x128xf32>
    %257 = vector.shape_cast %253 : vector<8x128xf32> to vector<1x8x128xf32>
    tpu.vector_store %arg5[%254, %c0_99, %c0_100], %257 {strides = array<i32>} : memref<8x8x128xf32, #tpu.memory_space<vmem>>, vector<1x8x128xf32>,
    %c6_i32 = arith.constant 6 : i32
    %258 = arith.index_cast %c6_i32 : i32 to index
    %c0_101 = arith.constant 0 : index
    %c0_102 = arith.constant 0 : index
    %259 = vector.load %arg1[%258, %c0_101, %c0_102] : memref<8x8x512xf32, #tpu.memory_space<vmem>>, vector<1x8x512xf32>
    %260 = vector.shape_cast %259 : vector<1x8x512xf32> to vector<8x512xf32>
    %261 = arith.truncf %253 : vector<8x128xf32> to vector<8x128xbf16>
    %c0_103 = arith.constant 0 : index
    %c0_104 = arith.constant 0 : index
    %262 = vector.load %arg4[%c0_103, %c0_104] : memref<128x512xbf16, #tpu.memory_space<vmem>>, vector<128x512xbf16>
    %cst_105 = arith.constant dense<0.000000e+00> : vector<8x512xf32>
    %263 = tpu.matmul %261, %262, %cst_105 {dimension_numbers = #tpu.dot_dimension_numbers<[1], [0], [0], [1], [0, 0, 1, 1], [], []>} : vector<8x128xbf16>, vector<128x512xbf16>, vector<8x512xf32> -> vector<8x512xf32>
    %264 = arith.addf %260, %263 : vector<8x512xf32>
    %265 = vector.extract_strided_slice %264 {offsets = [0, 0], sizes = [8, 128], strides = [1, 1]} : vector<8x512xf32> to vector<8x128xf32>
    %cst_106 = arith.constant 5.000000e-01 : f32
    %266 = vector.broadcast %cst_106 : f32 to vector<8x128xf32>
    %267 = arith.mulf %266, %265 : vector<8x128xf32>
    %268 = math.tanh %267 : vector<8x128xf32>
    %cst_107 = arith.constant 5.000000e-01 : f32
    %269 = vector.broadcast %cst_107 : f32 to vector<8x128xf32>
    %270 = arith.mulf %269, %268 : vector<8x128xf32>
    %cst_108 = arith.constant 5.000000e-01 : f32
    %271 = vector.broadcast %cst_108 : f32 to vector<8x128xf32>
    %272 = arith.addf %270, %271 : vector<8x128xf32>
    %273 = vector.extract_strided_slice %264 {offsets = [0, 128], sizes = [8, 128], strides = [1, 1]} : vector<8x512xf32> to vector<8x128xf32>
    %cst_109 = arith.constant 5.000000e-01 : f32
    %274 = vector.broadcast %cst_109 : f32 to vector<8x128xf32>
    %275 = arith.mulf %274, %273 : vector<8x128xf32>
    %276 = math.tanh %275 : vector<8x128xf32>
    %cst_110 = arith.constant 5.000000e-01 : f32
    %277 = vector.broadcast %cst_110 : f32 to vector<8x128xf32>
    %278 = arith.mulf %277, %276 : vector<8x128xf32>
    %cst_111 = arith.constant 5.000000e-01 : f32
    %279 = vector.broadcast %cst_111 : f32 to vector<8x128xf32>
    %280 = arith.addf %278, %279 : vector<8x128xf32>
    %281 = vector.extract_strided_slice %264 {offsets = [0, 256], sizes = [8, 128], strides = [1, 1]} : vector<8x512xf32> to vector<8x128xf32>
    %282 = math.tanh %281 : vector<8x128xf32>
    %283 = vector.extract_strided_slice %264 {offsets = [0, 384], sizes = [8, 128], strides = [1, 1]} : vector<8x512xf32> to vector<8x128xf32>
    %cst_112 = arith.constant 5.000000e-01 : f32
    %284 = vector.broadcast %cst_112 : f32 to vector<8x128xf32>
    %285 = arith.mulf %284, %283 : vector<8x128xf32>
    %286 = math.tanh %285 : vector<8x128xf32>
    %cst_113 = arith.constant 5.000000e-01 : f32
    %287 = vector.broadcast %cst_113 : f32 to vector<8x128xf32>
    %288 = arith.mulf %287, %286 : vector<8x128xf32>
    %cst_114 = arith.constant 5.000000e-01 : f32
    %289 = vector.broadcast %cst_114 : f32 to vector<8x128xf32>
    %290 = arith.addf %288, %289 : vector<8x128xf32>
    %291 = arith.mulf %280, %251 : vector<8x128xf32>
    %292 = arith.mulf %272, %282 : vector<8x128xf32>
    %293 = arith.addf %291, %292 : vector<8x128xf32>
    %294 = math.tanh %293 : vector<8x128xf32>
    %295 = arith.mulf %290, %294 : vector<8x128xf32>
    %296 = arith.index_cast %c6_i32 : i32 to index
    %c0_115 = arith.constant 0 : index
    %c0_116 = arith.constant 0 : index
    %297 = vector.load %arg5[%296, %c0_115, %c0_116] : memref<8x8x128xf32, #tpu.memory_space<vmem>>, vector<1x8x128xf32>
    %298 = vector.shape_cast %297 : vector<1x8x128xf32> to vector<8x128xf32>
    %299 = vector.shape_cast %295 : vector<8x128xf32> to vector<1x8x128xf32>
    tpu.vector_store %arg5[%296, %c0_115, %c0_116], %299 {strides = array<i32>} : memref<8x8x128xf32, #tpu.memory_space<vmem>>, vector<1x8x128xf32>,
    %c7_i32 = arith.constant 7 : i32
    %300 = arith.index_cast %c7_i32 : i32 to index
    %c0_117 = arith.constant 0 : index
    %c0_118 = arith.constant 0 : index
    %301 = vector.load %arg1[%300, %c0_117, %c0_118] : memref<8x8x512xf32, #tpu.memory_space<vmem>>, vector<1x8x512xf32>
    %302 = vector.shape_cast %301 : vector<1x8x512xf32> to vector<8x512xf32>
    %303 = arith.truncf %295 : vector<8x128xf32> to vector<8x128xbf16>
    %c0_119 = arith.constant 0 : index
    %c0_120 = arith.constant 0 : index
    %304 = vector.load %arg4[%c0_119, %c0_120] : memref<128x512xbf16, #tpu.memory_space<vmem>>, vector<128x512xbf16>
    %cst_121 = arith.constant dense<0.000000e+00> : vector<8x512xf32>
    %305 = tpu.matmul %303, %304, %cst_121 {dimension_numbers = #tpu.dot_dimension_numbers<[1], [0], [0], [1], [0, 0, 1, 1], [], []>} : vector<8x128xbf16>, vector<128x512xbf16>, vector<8x512xf32> -> vector<8x512xf32>
    %306 = arith.addf %302, %305 : vector<8x512xf32>
    %307 = vector.extract_strided_slice %306 {offsets = [0, 0], sizes = [8, 128], strides = [1, 1]} : vector<8x512xf32> to vector<8x128xf32>
    %cst_122 = arith.constant 5.000000e-01 : f32
    %308 = vector.broadcast %cst_122 : f32 to vector<8x128xf32>
    %309 = arith.mulf %308, %307 : vector<8x128xf32>
    %310 = math.tanh %309 : vector<8x128xf32>
    %cst_123 = arith.constant 5.000000e-01 : f32
    %311 = vector.broadcast %cst_123 : f32 to vector<8x128xf32>
    %312 = arith.mulf %311, %310 : vector<8x128xf32>
    %cst_124 = arith.constant 5.000000e-01 : f32
    %313 = vector.broadcast %cst_124 : f32 to vector<8x128xf32>
    %314 = arith.addf %312, %313 : vector<8x128xf32>
    %315 = vector.extract_strided_slice %306 {offsets = [0, 128], sizes = [8, 128], strides = [1, 1]} : vector<8x512xf32> to vector<8x128xf32>
    %cst_125 = arith.constant 5.000000e-01 : f32
    %316 = vector.broadcast %cst_125 : f32 to vector<8x128xf32>
    %317 = arith.mulf %316, %315 : vector<8x128xf32>
    %318 = math.tanh %317 : vector<8x128xf32>
    %cst_126 = arith.constant 5.000000e-01 : f32
    %319 = vector.broadcast %cst_126 : f32 to vector<8x128xf32>
    %320 = arith.mulf %319, %318 : vector<8x128xf32>
    %cst_127 = arith.constant 5.000000e-01 : f32
    %321 = vector.broadcast %cst_127 : f32 to vector<8x128xf32>
    %322 = arith.addf %320, %321 : vector<8x128xf32>
    %323 = vector.extract_strided_slice %306 {offsets = [0, 256], sizes = [8, 128], strides = [1, 1]} : vector<8x512xf32> to vector<8x128xf32>
    %324 = math.tanh %323 : vector<8x128xf32>
    %325 = vector.extract_strided_slice %306 {offsets = [0, 384], sizes = [8, 128], strides = [1, 1]} : vector<8x512xf32> to vector<8x128xf32>
    %cst_128 = arith.constant 5.000000e-01 : f32
    %326 = vector.broadcast %cst_128 : f32 to vector<8x128xf32>
    %327 = arith.mulf %326, %325 : vector<8x128xf32>
    %328 = math.tanh %327 : vector<8x128xf32>
    %cst_129 = arith.constant 5.000000e-01 : f32
    %329 = vector.broadcast %cst_129 : f32 to vector<8x128xf32>
    %330 = arith.mulf %329, %328 : vector<8x128xf32>
    %cst_130 = arith.constant 5.000000e-01 : f32
    %331 = vector.broadcast %cst_130 : f32 to vector<8x128xf32>
    %332 = arith.addf %330, %331 : vector<8x128xf32>
    %333 = arith.mulf %322, %293 : vector<8x128xf32>
    %334 = arith.mulf %314, %324 : vector<8x128xf32>
    %335 = arith.addf %333, %334 : vector<8x128xf32>
    %336 = math.tanh %335 : vector<8x128xf32>
    %337 = arith.mulf %332, %336 : vector<8x128xf32>
    %338 = arith.index_cast %c7_i32 : i32 to index
    %c0_131 = arith.constant 0 : index
    %c0_132 = arith.constant 0 : index
    %339 = vector.load %arg5[%338, %c0_131, %c0_132] : memref<8x8x128xf32, #tpu.memory_space<vmem>>, vector<1x8x128xf32>
    %340 = vector.shape_cast %339 : vector<1x8x128xf32> to vector<8x128xf32>
    %341 = vector.shape_cast %337 : vector<8x128xf32> to vector<1x8x128xf32>
    tpu.vector_store %arg5[%338, %c0_131, %c0_132], %341 {strides = array<i32>} : memref<8x8x128xf32, #tpu.memory_space<vmem>>, vector<1x8x128xf32>,
    %c8_i32 = arith.constant 8 : i32
    %c0_133 = arith.constant 0 : index
    %c0_134 = arith.constant 0 : index
    %342 = vector.load %arg8[%c0_133, %c0_134] : memref<8x128xf32, #tpu.memory_space<vmem>>, vector<8x128xf32>
    tpu.vector_store %arg8[%c0_133, %c0_134], %337 {strides = array<i32>} : memref<8x128xf32, #tpu.memory_space<vmem>>, vector<8x128xf32>,
    %c0_135 = arith.constant 0 : index
    %c0_136 = arith.constant 0 : index
    %343 = vector.load %arg9[%c0_135, %c0_136] : memref<8x128xf32, #tpu.memory_space<vmem>>, vector<8x128xf32>
    tpu.vector_store %arg9[%c0_135, %c0_136], %335 {strides = array<i32>} : memref<8x128xf32, #tpu.memory_space<vmem>>, vector<8x128xf32>,
    %344 = arith.extui %3 : i1 to i32
    %c0_i32_137 = arith.constant 0 : i32
    %345 = arith.cmpi ne, %344, %c0_i32_137 : i32
    scf.if %345 {
      %c0_138 = arith.constant 0 : index
      %c0_139 = arith.constant 0 : index
      %346 = vector.load %arg8[%c0_138, %c0_139] : memref<8x128xf32, #tpu.memory_space<vmem>>, vector<8x128xf32>
      %c0_140 = arith.constant 0 : index
      %c0_141 = arith.constant 0 : index
      %347 = vector.load %arg6[%c0_140, %c0_141] : memref<8x128xf32, #tpu.memory_space<vmem>>, vector<8x128xf32>
      tpu.vector_store %arg6[%c0_140, %c0_141], %346 {strides = array<i32>} : memref<8x128xf32, #tpu.memory_space<vmem>>, vector<8x128xf32>,
      %c0_142 = arith.constant 0 : index
      %c0_143 = arith.constant 0 : index
      %348 = vector.load %arg9[%c0_142, %c0_143] : memref<8x128xf32, #tpu.memory_space<vmem>>, vector<8x128xf32>
      %c0_144 = arith.constant 0 : index
      %c0_145 = arith.constant 0 : index
      %349 = vector.load %arg7[%c0_144, %c0_145] : memref<8x128xf32, #tpu.memory_space<vmem>>, vector<8x128xf32>
      tpu.vector_store %arg7[%c0_144, %c0_145], %348 {strides = array<i32>} : memref<8x128xf32, #tpu.memory_space<vmem>>, vector<8x128xf32>,
    } else {
    }
    return
  }
  func.func @transform_0(%arg0: i32) -> (i32, i32, i32) {
    %c0_i32 = arith.constant 0 : i32
    %c0_i32_0 = arith.constant 0 : i32
    %c0_i32_1 = arith.constant 0 : i32
    return %arg0, %c0_i32, %c0_i32_0 : i32, i32, i32
  }
  func.func @transform_1(%arg0: i32) -> (i32, i32) {
    %c0_i32 = arith.constant 0 : i32
    %c0_i32_0 = arith.constant 0 : i32
    %c0_i32_1 = arith.constant 0 : i32
    return %c0_i32, %c0_i32_0 : i32, i32
  }
  func.func @transform_2(%arg0: i32) -> (i32, i32) {
    %c0_i32 = arith.constant 0 : i32
    %c0_i32_0 = arith.constant 0 : i32
    %c0_i32_1 = arith.constant 0 : i32
    return %c0_i32, %c0_i32_0 : i32, i32
  }
  func.func @transform_3(%arg0: i32) -> (i32, i32) {
    %c0_i32 = arith.constant 0 : i32
    %c0_i32_0 = arith.constant 0 : i32
    %c0_i32_1 = arith.constant 0 : i32
    return %c0_i32, %c0_i32_0 : i32, i32
  }
  func.func @transform_4(%arg0: i32) -> (i32, i32, i32) {
    %c0_i32 = arith.constant 0 : i32
    %c0_i32_0 = arith.constant 0 : i32
    %c0_i32_1 = arith.constant 0 : i32
    return %arg0, %c0_i32, %c0_i32_0 : i32, i32, i32
  }
  func.func @transform_5(%arg0: i32) -> (i32, i32) {
    %c0_i32 = arith.constant 0 : i32
    %c0_i32_0 = arith.constant 0 : i32
    %c0_i32_1 = arith.constant 0 : i32
    return %c0_i32, %c0_i32_0 : i32, i32
  }
  func.func @transform_6(%arg0: i32) -> (i32, i32) {
    %c0_i32 = arith.constant 0 : i32
    %c0_i32_0 = arith.constant 0 : i32
    %c0_i32_1 = arith.constant 0 : i32
    return %c0_i32, %c0_i32_0 : i32, i32
  }
}

module attributes {stable_mosaic.version = 11 : i64} {
  func.func @_lstm_recurrent_kernel(%arg0: i32, %arg1: memref<8x8x512xf32, #tpu.memory_space<vmem>>, %arg2: memref<8x128xf32, #tpu.memory_space<vmem>>, %arg3: memref<8x128xf32, #tpu.memory_space<vmem>>, %arg4: memref<128x512xbf16, #tpu.memory_space<vmem>>, %arg5: memref<8x8x128xf32, #tpu.memory_space<vmem>>, %arg6: memref<8x128xf32, #tpu.memory_space<vmem>>, %arg7: memref<8x128xf32, #tpu.memory_space<vmem>>, %arg8: memref<8x128xf32, #tpu.memory_space<vmem>>, %arg9: memref<8x128xf32, #tpu.memory_space<vmem>>) attributes {dimension_semantics = [#tpu.dimension_semantics<arbitrary>], iteration_bounds = array<i64: 1>, scalar_prefetch = 0 : i64, scratch_operands = 2 : i64, tpu.core_type = #tpu.core_type<tc>, window_params = [{transform_indices = @transform_0, window_bounds = array<i64: 8, 8, 512>}, {pipeline_mode = #tpu.pipeline_mode<synchronous>, transform_indices = @transform_1, window_bounds = array<i64: 8, 128>}, {pipeline_mode = #tpu.pipeline_mode<synchronous>, transform_indices = @transform_2, window_bounds = array<i64: 8, 128>}, {pipeline_mode = #tpu.pipeline_mode<synchronous>, transform_indices = @transform_3, window_bounds = array<i64: 128, 512>}, {transform_indices = @transform_4, window_bounds = array<i64: 8, 8, 128>}, {pipeline_mode = #tpu.pipeline_mode<synchronous>, transform_indices = @transform_5, window_bounds = array<i64: 8, 128>}, {pipeline_mode = #tpu.pipeline_mode<synchronous>, transform_indices = @transform_6, window_bounds = array<i64: 8, 128>}]} {
    %c0_i32 = arith.constant 0 : i32
    %0 = arith.cmpi eq, %arg0, %c0_i32 : i32
    %1 = arith.extui %0 : i1 to i32
    %c0_i32_0 = arith.constant 0 : i32
    %2 = arith.cmpi ne, %1, %c0_i32_0 : i32
    scf.if %2 {
      %c0_138 = arith.constant 0 : index
      %c0_139 = arith.constant 0 : index
      %346 = vector.load %arg2[%c0_138, %c0_139] : memref<8x128xf32, #tpu.memory_space<vmem>>, vector<8x128xf32>
      %c0_140 = arith.constant 0 : index
      %c0_141 = arith.constant 0 : index
      %347 = vector.load %arg8[%c0_140, %c0_141] : memref<8x128xf32, #tpu.memory_space<vmem>>, vector<8x128xf32>
      tpu.vector_store %arg8[%c0_140, %c0_141], %346 {strides = array<i32>} : memref<8x128xf32, #tpu.memory_space<vmem>>, vector<8x128xf32>,
      %c0_142 = arith.constant 0 : index
      %c0_143 = arith.constant 0 : index
      %348 = vector.load %arg3[%c0_142, %c0_143] : memref<8x128xf32, #tpu.memory_space<vmem>>, vector<8x128xf32>
      %c0_144 = arith.constant 0 : index
      %c0_145 = arith.constant 0 : index
      %349 = vector.load %arg9[%c0_144, %c0_145] : memref<8x128xf32, #tpu.memory_space<vmem>>, vector<8x128xf32>
      tpu.vector_store %arg9[%c0_144, %c0_145], %348 {strides = array<i32>} : memref<8x128xf32, #tpu.memory_space<vmem>>, vector<8x128xf32>,
    } else {
    }
    %c0_i32_1 = arith.constant 0 : i32
    %3 = arith.cmpi eq, %arg0, %c0_i32_1 : i32
    %c0 = arith.constant 0 : index
    %c0_2 = arith.constant 0 : index
    %4 = vector.load %arg8[%c0, %c0_2] : memref<8x128xf32, #tpu.memory_space<vmem>>, vector<8x128xf32>
    %c0_3 = arith.constant 0 : index
    %c0_4 = arith.constant 0 : index
    %5 = vector.load %arg9[%c0_3, %c0_4] : memref<8x128xf32, #tpu.memory_space<vmem>>, vector<8x128xf32>
    %c0_i32_5 = arith.constant 0 : i32
    %6 = arith.index_cast %c0_i32_5 : i32 to index
    %c0_6 = arith.constant 0 : index
    %c0_7 = arith.constant 0 : index
    %7 = vector.load %arg1[%6, %c0_6, %c0_7] : memref<8x8x512xf32, #tpu.memory_space<vmem>>, vector<1x8x512xf32>
    %8 = vector.shape_cast %7 : vector<1x8x512xf32> to vector<8x512xf32>
    %9 = arith.truncf %4 : vector<8x128xf32> to vector<8x128xbf16>
    %c0_8 = arith.constant 0 : index
    %c0_9 = arith.constant 0 : index
    %10 = vector.load %arg4[%c0_8, %c0_9] : memref<128x512xbf16, #tpu.memory_space<vmem>>, vector<128x512xbf16>
    %cst = arith.constant dense<0.000000e+00> : vector<8x512xf32>
    %11 = tpu.matmul %9, %10, %cst {dimension_numbers = #tpu.dot_dimension_numbers<[1], [0], [0], [1], [0, 0, 1, 1], [], []>} : vector<8x128xbf16>, vector<128x512xbf16>, vector<8x512xf32> -> vector<8x512xf32>
    %12 = arith.addf %8, %11 : vector<8x512xf32>
    %13 = vector.extract_strided_slice %12 {offsets = [0, 0], sizes = [8, 128], strides = [1, 1]} : vector<8x512xf32> to vector<8x128xf32>
    %cst_10 = arith.constant 5.000000e-01 : f32
    %14 = vector.broadcast %cst_10 : f32 to vector<8x128xf32>
    %15 = arith.mulf %14, %13 : vector<8x128xf32>
    %16 = math.tanh %15 : vector<8x128xf32>
    %cst_11 = arith.constant 5.000000e-01 : f32
    %17 = vector.broadcast %cst_11 : f32 to vector<8x128xf32>
    %18 = arith.mulf %17, %16 : vector<8x128xf32>
    %cst_12 = arith.constant 5.000000e-01 : f32
    %19 = vector.broadcast %cst_12 : f32 to vector<8x128xf32>
    %20 = arith.addf %18, %19 : vector<8x128xf32>
    %21 = vector.extract_strided_slice %12 {offsets = [0, 128], sizes = [8, 128], strides = [1, 1]} : vector<8x512xf32> to vector<8x128xf32>
    %cst_13 = arith.constant 5.000000e-01 : f32
    %22 = vector.broadcast %cst_13 : f32 to vector<8x128xf32>
    %23 = arith.mulf %22, %21 : vector<8x128xf32>
    %24 = math.tanh %23 : vector<8x128xf32>
    %cst_14 = arith.constant 5.000000e-01 : f32
    %25 = vector.broadcast %cst_14 : f32 to vector<8x128xf32>
    %26 = arith.mulf %25, %24 : vector<8x128xf32>
    %cst_15 = arith.constant 5.000000e-01 : f32
    %27 = vector.broadcast %cst_15 : f32 to vector<8x128xf32>
    %28 = arith.addf %26, %27 : vector<8x128xf32>
    %29 = vector.extract_strided_slice %12 {offsets = [0, 256], sizes = [8, 128], strides = [1, 1]} : vector<8x512xf32> to vector<8x128xf32>
    %30 = math.tanh %29 : vector<8x128xf32>
    %31 = vector.extract_strided_slice %12 {offsets = [0, 384], sizes = [8, 128], strides = [1, 1]} : vector<8x512xf32> to vector<8x128xf32>
    %cst_16 = arith.constant 5.000000e-01 : f32
    %32 = vector.broadcast %cst_16 : f32 to vector<8x128xf32>
    %33 = arith.mulf %32, %31 : vector<8x128xf32>
    %34 = math.tanh %33 : vector<8x128xf32>
    %cst_17 = arith.constant 5.000000e-01 : f32
    %35 = vector.broadcast %cst_17 : f32 to vector<8x128xf32>
    %36 = arith.mulf %35, %34 : vector<8x128xf32>
    %cst_18 = arith.constant 5.000000e-01 : f32
    %37 = vector.broadcast %cst_18 : f32 to vector<8x128xf32>
    %38 = arith.addf %36, %37 : vector<8x128xf32>
    %39 = arith.mulf %28, %5 : vector<8x128xf32>
    %40 = arith.mulf %20, %30 : vector<8x128xf32>
    %41 = arith.addf %39, %40 : vector<8x128xf32>
    %42 = math.tanh %41 : vector<8x128xf32>
    %43 = arith.mulf %38, %42 : vector<8x128xf32>
    %44 = arith.index_cast %c0_i32_5 : i32 to index
    %c0_19 = arith.constant 0 : index
    %c0_20 = arith.constant 0 : index
    %45 = vector.load %arg5[%44, %c0_19, %c0_20] : memref<8x8x128xf32, #tpu.memory_space<vmem>>, vector<1x8x128xf32>
    %46 = vector.shape_cast %45 : vector<1x8x128xf32> to vector<8x128xf32>
    %47 = vector.shape_cast %43 : vector<8x128xf32> to vector<1x8x128xf32>
    tpu.vector_store %arg5[%44, %c0_19, %c0_20], %47 {strides = array<i32>} : memref<8x8x128xf32, #tpu.memory_space<vmem>>, vector<1x8x128xf32>,
    %c1_i32 = arith.constant 1 : i32
    %48 = arith.index_cast %c1_i32 : i32 to index
    %c0_21 = arith.constant 0 : index
    %c0_22 = arith.constant 0 : index
    %49 = vector.load %arg1[%48, %c0_21, %c0_22] : memref<8x8x512xf32, #tpu.memory_space<vmem>>, vector<1x8x512xf32>
    %50 = vector.shape_cast %49 : vector<1x8x512xf32> to vector<8x512xf32>
    %51 = arith.truncf %43 : vector<8x128xf32> to vector<8x128xbf16>
    %c0_23 = arith.constant 0 : index
    %c0_24 = arith.constant 0 : index
    %52 = vector.load %arg4[%c0_23, %c0_24] : memref<128x512xbf16, #tpu.memory_space<vmem>>, vector<128x512xbf16>
    %cst_25 = arith.constant dense<0.000000e+00> : vector<8x512xf32>
    %53 = tpu.matmul %51, %52, %cst_25 {dimension_numbers = #tpu.dot_dimension_numbers<[1], [0], [0], [1], [0, 0, 1, 1], [], []>} : vector<8x128xbf16>, vector<128x512xbf16>, vector<8x512xf32> -> vector<8x512xf32>
    %54 = arith.addf %50, %53 : vector<8x512xf32>
    %55 = vector.extract_strided_slice %54 {offsets = [0, 0], sizes = [8, 128], strides = [1, 1]} : vector<8x512xf32> to vector<8x128xf32>
    %cst_26 = arith.constant 5.000000e-01 : f32
    %56 = vector.broadcast %cst_26 : f32 to vector<8x128xf32>
    %57 = arith.mulf %56, %55 : vector<8x128xf32>
    %58 = math.tanh %57 : vector<8x128xf32>
    %cst_27 = arith.constant 5.000000e-01 : f32
    %59 = vector.broadcast %cst_27 : f32 to vector<8x128xf32>
    %60 = arith.mulf %59, %58 : vector<8x128xf32>
    %cst_28 = arith.constant 5.000000e-01 : f32
    %61 = vector.broadcast %cst_28 : f32 to vector<8x128xf32>
    %62 = arith.addf %60, %61 : vector<8x128xf32>
    %63 = vector.extract_strided_slice %54 {offsets = [0, 128], sizes = [8, 128], strides = [1, 1]} : vector<8x512xf32> to vector<8x128xf32>
    %cst_29 = arith.constant 5.000000e-01 : f32
    %64 = vector.broadcast %cst_29 : f32 to vector<8x128xf32>
    %65 = arith.mulf %64, %63 : vector<8x128xf32>
    %66 = math.tanh %65 : vector<8x128xf32>
    %cst_30 = arith.constant 5.000000e-01 : f32
    %67 = vector.broadcast %cst_30 : f32 to vector<8x128xf32>
    %68 = arith.mulf %67, %66 : vector<8x128xf32>
    %cst_31 = arith.constant 5.000000e-01 : f32
    %69 = vector.broadcast %cst_31 : f32 to vector<8x128xf32>
    %70 = arith.addf %68, %69 : vector<8x128xf32>
    %71 = vector.extract_strided_slice %54 {offsets = [0, 256], sizes = [8, 128], strides = [1, 1]} : vector<8x512xf32> to vector<8x128xf32>
    %72 = math.tanh %71 : vector<8x128xf32>
    %73 = vector.extract_strided_slice %54 {offsets = [0, 384], sizes = [8, 128], strides = [1, 1]} : vector<8x512xf32> to vector<8x128xf32>
    %cst_32 = arith.constant 5.000000e-01 : f32
    %74 = vector.broadcast %cst_32 : f32 to vector<8x128xf32>
    %75 = arith.mulf %74, %73 : vector<8x128xf32>
    %76 = math.tanh %75 : vector<8x128xf32>
    %cst_33 = arith.constant 5.000000e-01 : f32
    %77 = vector.broadcast %cst_33 : f32 to vector<8x128xf32>
    %78 = arith.mulf %77, %76 : vector<8x128xf32>
    %cst_34 = arith.constant 5.000000e-01 : f32
    %79 = vector.broadcast %cst_34 : f32 to vector<8x128xf32>
    %80 = arith.addf %78, %79 : vector<8x128xf32>
    %81 = arith.mulf %70, %41 : vector<8x128xf32>
    %82 = arith.mulf %62, %72 : vector<8x128xf32>
    %83 = arith.addf %81, %82 : vector<8x128xf32>
    %84 = math.tanh %83 : vector<8x128xf32>
    %85 = arith.mulf %80, %84 : vector<8x128xf32>
    %86 = arith.index_cast %c1_i32 : i32 to index
    %c0_35 = arith.constant 0 : index
    %c0_36 = arith.constant 0 : index
    %87 = vector.load %arg5[%86, %c0_35, %c0_36] : memref<8x8x128xf32, #tpu.memory_space<vmem>>, vector<1x8x128xf32>
    %88 = vector.shape_cast %87 : vector<1x8x128xf32> to vector<8x128xf32>
    %89 = vector.shape_cast %85 : vector<8x128xf32> to vector<1x8x128xf32>
    tpu.vector_store %arg5[%86, %c0_35, %c0_36], %89 {strides = array<i32>} : memref<8x8x128xf32, #tpu.memory_space<vmem>>, vector<1x8x128xf32>,
    %c2_i32 = arith.constant 2 : i32
    %90 = arith.index_cast %c2_i32 : i32 to index
    %c0_37 = arith.constant 0 : index
    %c0_38 = arith.constant 0 : index
    %91 = vector.load %arg1[%90, %c0_37, %c0_38] : memref<8x8x512xf32, #tpu.memory_space<vmem>>, vector<1x8x512xf32>
    %92 = vector.shape_cast %91 : vector<1x8x512xf32> to vector<8x512xf32>
    %93 = arith.truncf %85 : vector<8x128xf32> to vector<8x128xbf16>
    %c0_39 = arith.constant 0 : index
    %c0_40 = arith.constant 0 : index
    %94 = vector.load %arg4[%c0_39, %c0_40] : memref<128x512xbf16, #tpu.memory_space<vmem>>, vector<128x512xbf16>
    %cst_41 = arith.constant dense<0.000000e+00> : vector<8x512xf32>
    %95 = tpu.matmul %93, %94, %cst_41 {dimension_numbers = #tpu.dot_dimension_numbers<[1], [0], [0], [1], [0, 0, 1, 1], [], []>} : vector<8x128xbf16>, vector<128x512xbf16>, vector<8x512xf32> -> vector<8x512xf32>
    %96 = arith.addf %92, %95 : vector<8x512xf32>
    %97 = vector.extract_strided_slice %96 {offsets = [0, 0], sizes = [8, 128], strides = [1, 1]} : vector<8x512xf32> to vector<8x128xf32>
    %cst_42 = arith.constant 5.000000e-01 : f32
    %98 = vector.broadcast %cst_42 : f32 to vector<8x128xf32>
    %99 = arith.mulf %98, %97 : vector<8x128xf32>
    %100 = math.tanh %99 : vector<8x128xf32>
    %cst_43 = arith.constant 5.000000e-01 : f32
    %101 = vector.broadcast %cst_43 : f32 to vector<8x128xf32>
    %102 = arith.mulf %101, %100 : vector<8x128xf32>
    %cst_44 = arith.constant 5.000000e-01 : f32
    %103 = vector.broadcast %cst_44 : f32 to vector<8x128xf32>
    %104 = arith.addf %102, %103 : vector<8x128xf32>
    %105 = vector.extract_strided_slice %96 {offsets = [0, 128], sizes = [8, 128], strides = [1, 1]} : vector<8x512xf32> to vector<8x128xf32>
    %cst_45 = arith.constant 5.000000e-01 : f32
    %106 = vector.broadcast %cst_45 : f32 to vector<8x128xf32>
    %107 = arith.mulf %106, %105 : vector<8x128xf32>
    %108 = math.tanh %107 : vector<8x128xf32>
    %cst_46 = arith.constant 5.000000e-01 : f32
    %109 = vector.broadcast %cst_46 : f32 to vector<8x128xf32>
    %110 = arith.mulf %109, %108 : vector<8x128xf32>
    %cst_47 = arith.constant 5.000000e-01 : f32
    %111 = vector.broadcast %cst_47 : f32 to vector<8x128xf32>
    %112 = arith.addf %110, %111 : vector<8x128xf32>
    %113 = vector.extract_strided_slice %96 {offsets = [0, 256], sizes = [8, 128], strides = [1, 1]} : vector<8x512xf32> to vector<8x128xf32>
    %114 = math.tanh %113 : vector<8x128xf32>
    %115 = vector.extract_strided_slice %96 {offsets = [0, 384], sizes = [8, 128], strides = [1, 1]} : vector<8x512xf32> to vector<8x128xf32>
    %cst_48 = arith.constant 5.000000e-01 : f32
    %116 = vector.broadcast %cst_48 : f32 to vector<8x128xf32>
    %117 = arith.mulf %116, %115 : vector<8x128xf32>
    %118 = math.tanh %117 : vector<8x128xf32>
    %cst_49 = arith.constant 5.000000e-01 : f32
    %119 = vector.broadcast %cst_49 : f32 to vector<8x128xf32>
    %120 = arith.mulf %119, %118 : vector<8x128xf32>
    %cst_50 = arith.constant 5.000000e-01 : f32
    %121 = vector.broadcast %cst_50 : f32 to vector<8x128xf32>
    %122 = arith.addf %120, %121 : vector<8x128xf32>
    %123 = arith.mulf %112, %83 : vector<8x128xf32>
    %124 = arith.mulf %104, %114 : vector<8x128xf32>
    %125 = arith.addf %123, %124 : vector<8x128xf32>
    %126 = math.tanh %125 : vector<8x128xf32>
    %127 = arith.mulf %122, %126 : vector<8x128xf32>
    %128 = arith.index_cast %c2_i32 : i32 to index
    %c0_51 = arith.constant 0 : index
    %c0_52 = arith.constant 0 : index
    %129 = vector.load %arg5[%128, %c0_51, %c0_52] : memref<8x8x128xf32, #tpu.memory_space<vmem>>, vector<1x8x128xf32>
    %130 = vector.shape_cast %129 : vector<1x8x128xf32> to vector<8x128xf32>
    %131 = vector.shape_cast %127 : vector<8x128xf32> to vector<1x8x128xf32>
    tpu.vector_store %arg5[%128, %c0_51, %c0_52], %131 {strides = array<i32>} : memref<8x8x128xf32, #tpu.memory_space<vmem>>, vector<1x8x128xf32>,
    %c3_i32 = arith.constant 3 : i32
    %132 = arith.index_cast %c3_i32 : i32 to index
    %c0_53 = arith.constant 0 : index
    %c0_54 = arith.constant 0 : index
    %133 = vector.load %arg1[%132, %c0_53, %c0_54] : memref<8x8x512xf32, #tpu.memory_space<vmem>>, vector<1x8x512xf32>
    %134 = vector.shape_cast %133 : vector<1x8x512xf32> to vector<8x512xf32>
    %135 = arith.truncf %127 : vector<8x128xf32> to vector<8x128xbf16>
    %c0_55 = arith.constant 0 : index
    %c0_56 = arith.constant 0 : index
    %136 = vector.load %arg4[%c0_55, %c0_56] : memref<128x512xbf16, #tpu.memory_space<vmem>>, vector<128x512xbf16>
    %cst_57 = arith.constant dense<0.000000e+00> : vector<8x512xf32>
    %137 = tpu.matmul %135, %136, %cst_57 {dimension_numbers = #tpu.dot_dimension_numbers<[1], [0], [0], [1], [0, 0, 1, 1], [], []>} : vector<8x128xbf16>, vector<128x512xbf16>, vector<8x512xf32> -> vector<8x512xf32>
    %138 = arith.addf %134, %137 : vector<8x512xf32>
    %139 = vector.extract_strided_slice %138 {offsets = [0, 0], sizes = [8, 128], strides = [1, 1]} : vector<8x512xf32> to vector<8x128xf32>
    %cst_58 = arith.constant 5.000000e-01 : f32
    %140 = vector.broadcast %cst_58 : f32 to vector<8x128xf32>
    %141 = arith.mulf %140, %139 : vector<8x128xf32>
    %142 = math.tanh %141 : vector<8x128xf32>
    %cst_59 = arith.constant 5.000000e-01 : f32
    %143 = vector.broadcast %cst_59 : f32 to vector<8x128xf32>
    %144 = arith.mulf %143, %142 : vector<8x128xf32>
    %cst_60 = arith.constant 5.000000e-01 : f32
    %145 = vector.broadcast %cst_60 : f32 to vector<8x128xf32>
    %146 = arith.addf %144, %145 : vector<8x128xf32>
    %147 = vector.extract_strided_slice %138 {offsets = [0, 128], sizes = [8, 128], strides = [1, 1]} : vector<8x512xf32> to vector<8x128xf32>
    %cst_61 = arith.constant 5.000000e-01 : f32
    %148 = vector.broadcast %cst_61 : f32 to vector<8x128xf32>
    %149 = arith.mulf %148, %147 : vector<8x128xf32>
    %150 = math.tanh %149 : vector<8x128xf32>
    %cst_62 = arith.constant 5.000000e-01 : f32
    %151 = vector.broadcast %cst_62 : f32 to vector<8x128xf32>
    %152 = arith.mulf %151, %150 : vector<8x128xf32>
    %cst_63 = arith.constant 5.000000e-01 : f32
    %153 = vector.broadcast %cst_63 : f32 to vector<8x128xf32>
    %154 = arith.addf %152, %153 : vector<8x128xf32>
    %155 = vector.extract_strided_slice %138 {offsets = [0, 256], sizes = [8, 128], strides = [1, 1]} : vector<8x512xf32> to vector<8x128xf32>
    %156 = math.tanh %155 : vector<8x128xf32>
    %157 = vector.extract_strided_slice %138 {offsets = [0, 384], sizes = [8, 128], strides = [1, 1]} : vector<8x512xf32> to vector<8x128xf32>
    %cst_64 = arith.constant 5.000000e-01 : f32
    %158 = vector.broadcast %cst_64 : f32 to vector<8x128xf32>
    %159 = arith.mulf %158, %157 : vector<8x128xf32>
    %160 = math.tanh %159 : vector<8x128xf32>
    %cst_65 = arith.constant 5.000000e-01 : f32
    %161 = vector.broadcast %cst_65 : f32 to vector<8x128xf32>
    %162 = arith.mulf %161, %160 : vector<8x128xf32>
    %cst_66 = arith.constant 5.000000e-01 : f32
    %163 = vector.broadcast %cst_66 : f32 to vector<8x128xf32>
    %164 = arith.addf %162, %163 : vector<8x128xf32>
    %165 = arith.mulf %154, %125 : vector<8x128xf32>
    %166 = arith.mulf %146, %156 : vector<8x128xf32>
    %167 = arith.addf %165, %166 : vector<8x128xf32>
    %168 = math.tanh %167 : vector<8x128xf32>
    %169 = arith.mulf %164, %168 : vector<8x128xf32>
    %170 = arith.index_cast %c3_i32 : i32 to index
    %c0_67 = arith.constant 0 : index
    %c0_68 = arith.constant 0 : index
    %171 = vector.load %arg5[%170, %c0_67, %c0_68] : memref<8x8x128xf32, #tpu.memory_space<vmem>>, vector<1x8x128xf32>
    %172 = vector.shape_cast %171 : vector<1x8x128xf32> to vector<8x128xf32>
    %173 = vector.shape_cast %169 : vector<8x128xf32> to vector<1x8x128xf32>
    tpu.vector_store %arg5[%170, %c0_67, %c0_68], %173 {strides = array<i32>} : memref<8x8x128xf32, #tpu.memory_space<vmem>>, vector<1x8x128xf32>,
    %c4_i32 = arith.constant 4 : i32
    %174 = arith.index_cast %c4_i32 : i32 to index
    %c0_69 = arith.constant 0 : index
    %c0_70 = arith.constant 0 : index
    %175 = vector.load %arg1[%174, %c0_69, %c0_70] : memref<8x8x512xf32, #tpu.memory_space<vmem>>, vector<1x8x512xf32>
    %176 = vector.shape_cast %175 : vector<1x8x512xf32> to vector<8x512xf32>
    %177 = arith.truncf %169 : vector<8x128xf32> to vector<8x128xbf16>
    %c0_71 = arith.constant 0 : index
    %c0_72 = arith.constant 0 : index
    %178 = vector.load %arg4[%c0_71, %c0_72] : memref<128x512xbf16, #tpu.memory_space<vmem>>, vector<128x512xbf16>
    %cst_73 = arith.constant dense<0.000000e+00> : vector<8x512xf32>
    %179 = tpu.matmul %177, %178, %cst_73 {dimension_numbers = #tpu.dot_dimension_numbers<[1], [0], [0], [1], [0, 0, 1, 1], [], []>} : vector<8x128xbf16>, vector<128x512xbf16>, vector<8x512xf32> -> vector<8x512xf32>
    %180 = arith.addf %176, %179 : vector<8x512xf32>
    %181 = vector.extract_strided_slice %180 {offsets = [0, 0], sizes = [8, 128], strides = [1, 1]} : vector<8x512xf32> to vector<8x128xf32>
    %cst_74 = arith.constant 5.000000e-01 : f32
    %182 = vector.broadcast %cst_74 : f32 to vector<8x128xf32>
    %183 = arith.mulf %182, %181 : vector<8x128xf32>
    %184 = math.tanh %183 : vector<8x128xf32>
    %cst_75 = arith.constant 5.000000e-01 : f32
    %185 = vector.broadcast %cst_75 : f32 to vector<8x128xf32>
    %186 = arith.mulf %185, %184 : vector<8x128xf32>
    %cst_76 = arith.constant 5.000000e-01 : f32
    %187 = vector.broadcast %cst_76 : f32 to vector<8x128xf32>
    %188 = arith.addf %186, %187 : vector<8x128xf32>
    %189 = vector.extract_strided_slice %180 {offsets = [0, 128], sizes = [8, 128], strides = [1, 1]} : vector<8x512xf32> to vector<8x128xf32>
    %cst_77 = arith.constant 5.000000e-01 : f32
    %190 = vector.broadcast %cst_77 : f32 to vector<8x128xf32>
    %191 = arith.mulf %190, %189 : vector<8x128xf32>
    %192 = math.tanh %191 : vector<8x128xf32>
    %cst_78 = arith.constant 5.000000e-01 : f32
    %193 = vector.broadcast %cst_78 : f32 to vector<8x128xf32>
    %194 = arith.mulf %193, %192 : vector<8x128xf32>
    %cst_79 = arith.constant 5.000000e-01 : f32
    %195 = vector.broadcast %cst_79 : f32 to vector<8x128xf32>
    %196 = arith.addf %194, %195 : vector<8x128xf32>
    %197 = vector.extract_strided_slice %180 {offsets = [0, 256], sizes = [8, 128], strides = [1, 1]} : vector<8x512xf32> to vector<8x128xf32>
    %198 = math.tanh %197 : vector<8x128xf32>
    %199 = vector.extract_strided_slice %180 {offsets = [0, 384], sizes = [8, 128], strides = [1, 1]} : vector<8x512xf32> to vector<8x128xf32>
    %cst_80 = arith.constant 5.000000e-01 : f32
    %200 = vector.broadcast %cst_80 : f32 to vector<8x128xf32>
    %201 = arith.mulf %200, %199 : vector<8x128xf32>
    %202 = math.tanh %201 : vector<8x128xf32>
    %cst_81 = arith.constant 5.000000e-01 : f32
    %203 = vector.broadcast %cst_81 : f32 to vector<8x128xf32>
    %204 = arith.mulf %203, %202 : vector<8x128xf32>
    %cst_82 = arith.constant 5.000000e-01 : f32
    %205 = vector.broadcast %cst_82 : f32 to vector<8x128xf32>
    %206 = arith.addf %204, %205 : vector<8x128xf32>
    %207 = arith.mulf %196, %167 : vector<8x128xf32>
    %208 = arith.mulf %188, %198 : vector<8x128xf32>
    %209 = arith.addf %207, %208 : vector<8x128xf32>
    %210 = math.tanh %209 : vector<8x128xf32>
    %211 = arith.mulf %206, %210 : vector<8x128xf32>
    %212 = arith.index_cast %c4_i32 : i32 to index
    %c0_83 = arith.constant 0 : index
    %c0_84 = arith.constant 0 : index
    %213 = vector.load %arg5[%212, %c0_83, %c0_84] : memref<8x8x128xf32, #tpu.memory_space<vmem>>, vector<1x8x128xf32>
    %214 = vector.shape_cast %213 : vector<1x8x128xf32> to vector<8x128xf32>
    %215 = vector.shape_cast %211 : vector<8x128xf32> to vector<1x8x128xf32>
    tpu.vector_store %arg5[%212, %c0_83, %c0_84], %215 {strides = array<i32>} : memref<8x8x128xf32, #tpu.memory_space<vmem>>, vector<1x8x128xf32>,
    %c5_i32 = arith.constant 5 : i32
    %216 = arith.index_cast %c5_i32 : i32 to index
    %c0_85 = arith.constant 0 : index
    %c0_86 = arith.constant 0 : index
    %217 = vector.load %arg1[%216, %c0_85, %c0_86] : memref<8x8x512xf32, #tpu.memory_space<vmem>>, vector<1x8x512xf32>
    %218 = vector.shape_cast %217 : vector<1x8x512xf32> to vector<8x512xf32>
    %219 = arith.truncf %211 : vector<8x128xf32> to vector<8x128xbf16>
    %c0_87 = arith.constant 0 : index
    %c0_88 = arith.constant 0 : index
    %220 = vector.load %arg4[%c0_87, %c0_88] : memref<128x512xbf16, #tpu.memory_space<vmem>>, vector<128x512xbf16>
    %cst_89 = arith.constant dense<0.000000e+00> : vector<8x512xf32>
    %221 = tpu.matmul %219, %220, %cst_89 {dimension_numbers = #tpu.dot_dimension_numbers<[1], [0], [0], [1], [0, 0, 1, 1], [], []>} : vector<8x128xbf16>, vector<128x512xbf16>, vector<8x512xf32> -> vector<8x512xf32>
    %222 = arith.addf %218, %221 : vector<8x512xf32>
    %223 = vector.extract_strided_slice %222 {offsets = [0, 0], sizes = [8, 128], strides = [1, 1]} : vector<8x512xf32> to vector<8x128xf32>
    %cst_90 = arith.constant 5.000000e-01 : f32
    %224 = vector.broadcast %cst_90 : f32 to vector<8x128xf32>
    %225 = arith.mulf %224, %223 : vector<8x128xf32>
    %226 = math.tanh %225 : vector<8x128xf32>
    %cst_91 = arith.constant 5.000000e-01 : f32
    %227 = vector.broadcast %cst_91 : f32 to vector<8x128xf32>
    %228 = arith.mulf %227, %226 : vector<8x128xf32>
    %cst_92 = arith.constant 5.000000e-01 : f32
    %229 = vector.broadcast %cst_92 : f32 to vector<8x128xf32>
    %230 = arith.addf %228, %229 : vector<8x128xf32>
    %231 = vector.extract_strided_slice %222 {offsets = [0, 128], sizes = [8, 128], strides = [1, 1]} : vector<8x512xf32> to vector<8x128xf32>
    %cst_93 = arith.constant 5.000000e-01 : f32
    %232 = vector.broadcast %cst_93 : f32 to vector<8x128xf32>
    %233 = arith.mulf %232, %231 : vector<8x128xf32>
    %234 = math.tanh %233 : vector<8x128xf32>
    %cst_94 = arith.constant 5.000000e-01 : f32
    %235 = vector.broadcast %cst_94 : f32 to vector<8x128xf32>
    %236 = arith.mulf %235, %234 : vector<8x128xf32>
    %cst_95 = arith.constant 5.000000e-01 : f32
    %237 = vector.broadcast %cst_95 : f32 to vector<8x128xf32>
    %238 = arith.addf %236, %237 : vector<8x128xf32>
    %239 = vector.extract_strided_slice %222 {offsets = [0, 256], sizes = [8, 128], strides = [1, 1]} : vector<8x512xf32> to vector<8x128xf32>
    %240 = math.tanh %239 : vector<8x128xf32>
    %241 = vector.extract_strided_slice %222 {offsets = [0, 384], sizes = [8, 128], strides = [1, 1]} : vector<8x512xf32> to vector<8x128xf32>
    %cst_96 = arith.constant 5.000000e-01 : f32
    %242 = vector.broadcast %cst_96 : f32 to vector<8x128xf32>
    %243 = arith.mulf %242, %241 : vector<8x128xf32>
    %244 = math.tanh %243 : vector<8x128xf32>
    %cst_97 = arith.constant 5.000000e-01 : f32
    %245 = vector.broadcast %cst_97 : f32 to vector<8x128xf32>
    %246 = arith.mulf %245, %244 : vector<8x128xf32>
    %cst_98 = arith.constant 5.000000e-01 : f32
    %247 = vector.broadcast %cst_98 : f32 to vector<8x128xf32>
    %248 = arith.addf %246, %247 : vector<8x128xf32>
    %249 = arith.mulf %238, %209 : vector<8x128xf32>
    %250 = arith.mulf %230, %240 : vector<8x128xf32>
    %251 = arith.addf %249, %250 : vector<8x128xf32>
    %252 = math.tanh %251 : vector<8x128xf32>
    %253 = arith.mulf %248, %252 : vector<8x128xf32>
    %254 = arith.index_cast %c5_i32 : i32 to index
    %c0_99 = arith.constant 0 : index
    %c0_100 = arith.constant 0 : index
    %255 = vector.load %arg5[%254, %c0_99, %c0_100] : memref<8x8x128xf32, #tpu.memory_space<vmem>>, vector<1x8x128xf32>
    %256 = vector.shape_cast %255 : vector<1x8x128xf32> to vector<8x128xf32>
    %257 = vector.shape_cast %253 : vector<8x128xf32> to vector<1x8x128xf32>
    tpu.vector_store %arg5[%254, %c0_99, %c0_100], %257 {strides = array<i32>} : memref<8x8x128xf32, #tpu.memory_space<vmem>>, vector<1x8x128xf32>,
    %c6_i32 = arith.constant 6 : i32
    %258 = arith.index_cast %c6_i32 : i32 to index
    %c0_101 = arith.constant 0 : index
    %c0_102 = arith.constant 0 : index
    %259 = vector.load %arg1[%258, %c0_101, %c0_102] : memref<8x8x512xf32, #tpu.memory_space<vmem>>, vector<1x8x512xf32>
    %260 = vector.shape_cast %259 : vector<1x8x512xf32> to vector<8x512xf32>
    %261 = arith.truncf %253 : vector<8x128xf32> to vector<8x128xbf16>
    %c0_103 = arith.constant 0 : index
    %c0_104 = arith.constant 0 : index
    %262 = vector.load %arg4[%c0_103, %c0_104] : memref<128x512xbf16, #tpu.memory_space<vmem>>, vector<128x512xbf16>
    %cst_105 = arith.constant dense<0.000000e+00> : vector<8x512xf32>
    %263 = tpu.matmul %261, %262, %cst_105 {dimension_numbers = #tpu.dot_dimension_numbers<[1], [0], [0], [1], [0, 0, 1, 1], [], []>} : vector<8x128xbf16>, vector<128x512xbf16>, vector<8x512xf32> -> vector<8x512xf32>
    %264 = arith.addf %260, %263 : vector<8x512xf32>
    %265 = vector.extract_strided_slice %264 {offsets = [0, 0], sizes = [8, 128], strides = [1, 1]} : vector<8x512xf32> to vector<8x128xf32>
    %cst_106 = arith.constant 5.000000e-01 : f32
    %266 = vector.broadcast %cst_106 : f32 to vector<8x128xf32>
    %267 = arith.mulf %266, %265 : vector<8x128xf32>
    %268 = math.tanh %267 : vector<8x128xf32>
    %cst_107 = arith.constant 5.000000e-01 : f32
    %269 = vector.broadcast %cst_107 : f32 to vector<8x128xf32>
    %270 = arith.mulf %269, %268 : vector<8x128xf32>
    %cst_108 = arith.constant 5.000000e-01 : f32
    %271 = vector.broadcast %cst_108 : f32 to vector<8x128xf32>
    %272 = arith.addf %270, %271 : vector<8x128xf32>
    %273 = vector.extract_strided_slice %264 {offsets = [0, 128], sizes = [8, 128], strides = [1, 1]} : vector<8x512xf32> to vector<8x128xf32>
    %cst_109 = arith.constant 5.000000e-01 : f32
    %274 = vector.broadcast %cst_109 : f32 to vector<8x128xf32>
    %275 = arith.mulf %274, %273 : vector<8x128xf32>
    %276 = math.tanh %275 : vector<8x128xf32>
    %cst_110 = arith.constant 5.000000e-01 : f32
    %277 = vector.broadcast %cst_110 : f32 to vector<8x128xf32>
    %278 = arith.mulf %277, %276 : vector<8x128xf32>
    %cst_111 = arith.constant 5.000000e-01 : f32
    %279 = vector.broadcast %cst_111 : f32 to vector<8x128xf32>
    %280 = arith.addf %278, %279 : vector<8x128xf32>
    %281 = vector.extract_strided_slice %264 {offsets = [0, 256], sizes = [8, 128], strides = [1, 1]} : vector<8x512xf32> to vector<8x128xf32>
    %282 = math.tanh %281 : vector<8x128xf32>
    %283 = vector.extract_strided_slice %264 {offsets = [0, 384], sizes = [8, 128], strides = [1, 1]} : vector<8x512xf32> to vector<8x128xf32>
    %cst_112 = arith.constant 5.000000e-01 : f32
    %284 = vector.broadcast %cst_112 : f32 to vector<8x128xf32>
    %285 = arith.mulf %284, %283 : vector<8x128xf32>
    %286 = math.tanh %285 : vector<8x128xf32>
    %cst_113 = arith.constant 5.000000e-01 : f32
    %287 = vector.broadcast %cst_113 : f32 to vector<8x128xf32>
    %288 = arith.mulf %287, %286 : vector<8x128xf32>
    %cst_114 = arith.constant 5.000000e-01 : f32
    %289 = vector.broadcast %cst_114 : f32 to vector<8x128xf32>
    %290 = arith.addf %288, %289 : vector<8x128xf32>
    %291 = arith.mulf %280, %251 : vector<8x128xf32>
    %292 = arith.mulf %272, %282 : vector<8x128xf32>
    %293 = arith.addf %291, %292 : vector<8x128xf32>
    %294 = math.tanh %293 : vector<8x128xf32>
    %295 = arith.mulf %290, %294 : vector<8x128xf32>
    %296 = arith.index_cast %c6_i32 : i32 to index
    %c0_115 = arith.constant 0 : index
    %c0_116 = arith.constant 0 : index
    %297 = vector.load %arg5[%296, %c0_115, %c0_116] : memref<8x8x128xf32, #tpu.memory_space<vmem>>, vector<1x8x128xf32>
    %298 = vector.shape_cast %297 : vector<1x8x128xf32> to vector<8x128xf32>
    %299 = vector.shape_cast %295 : vector<8x128xf32> to vector<1x8x128xf32>
    tpu.vector_store %arg5[%296, %c0_115, %c0_116], %299 {strides = array<i32>} : memref<8x8x128xf32, #tpu.memory_space<vmem>>, vector<1x8x128xf32>,
    %c7_i32 = arith.constant 7 : i32
    %300 = arith.index_cast %c7_i32 : i32 to index
    %c0_117 = arith.constant 0 : index
    %c0_118 = arith.constant 0 : index
    %301 = vector.load %arg1[%300, %c0_117, %c0_118] : memref<8x8x512xf32, #tpu.memory_space<vmem>>, vector<1x8x512xf32>
    %302 = vector.shape_cast %301 : vector<1x8x512xf32> to vector<8x512xf32>
    %303 = arith.truncf %295 : vector<8x128xf32> to vector<8x128xbf16>
    %c0_119 = arith.constant 0 : index
    %c0_120 = arith.constant 0 : index
    %304 = vector.load %arg4[%c0_119, %c0_120] : memref<128x512xbf16, #tpu.memory_space<vmem>>, vector<128x512xbf16>
    %cst_121 = arith.constant dense<0.000000e+00> : vector<8x512xf32>
    %305 = tpu.matmul %303, %304, %cst_121 {dimension_numbers = #tpu.dot_dimension_numbers<[1], [0], [0], [1], [0, 0, 1, 1], [], []>} : vector<8x128xbf16>, vector<128x512xbf16>, vector<8x512xf32> -> vector<8x512xf32>
    %306 = arith.addf %302, %305 : vector<8x512xf32>
    %307 = vector.extract_strided_slice %306 {offsets = [0, 0], sizes = [8, 128], strides = [1, 1]} : vector<8x512xf32> to vector<8x128xf32>
    %cst_122 = arith.constant 5.000000e-01 : f32
    %308 = vector.broadcast %cst_122 : f32 to vector<8x128xf32>
    %309 = arith.mulf %308, %307 : vector<8x128xf32>
    %310 = math.tanh %309 : vector<8x128xf32>
    %cst_123 = arith.constant 5.000000e-01 : f32
    %311 = vector.broadcast %cst_123 : f32 to vector<8x128xf32>
    %312 = arith.mulf %311, %310 : vector<8x128xf32>
    %cst_124 = arith.constant 5.000000e-01 : f32
    %313 = vector.broadcast %cst_124 : f32 to vector<8x128xf32>
    %314 = arith.addf %312, %313 : vector<8x128xf32>
    %315 = vector.extract_strided_slice %306 {offsets = [0, 128], sizes = [8, 128], strides = [1, 1]} : vector<8x512xf32> to vector<8x128xf32>
    %cst_125 = arith.constant 5.000000e-01 : f32
    %316 = vector.broadcast %cst_125 : f32 to vector<8x128xf32>
    %317 = arith.mulf %316, %315 : vector<8x128xf32>
    %318 = math.tanh %317 : vector<8x128xf32>
    %cst_126 = arith.constant 5.000000e-01 : f32
    %319 = vector.broadcast %cst_126 : f32 to vector<8x128xf32>
    %320 = arith.mulf %319, %318 : vector<8x128xf32>
    %cst_127 = arith.constant 5.000000e-01 : f32
    %321 = vector.broadcast %cst_127 : f32 to vector<8x128xf32>
    %322 = arith.addf %320, %321 : vector<8x128xf32>
    %323 = vector.extract_strided_slice %306 {offsets = [0, 256], sizes = [8, 128], strides = [1, 1]} : vector<8x512xf32> to vector<8x128xf32>
    %324 = math.tanh %323 : vector<8x128xf32>
    %325 = vector.extract_strided_slice %306 {offsets = [0, 384], sizes = [8, 128], strides = [1, 1]} : vector<8x512xf32> to vector<8x128xf32>
    %cst_128 = arith.constant 5.000000e-01 : f32
    %326 = vector.broadcast %cst_128 : f32 to vector<8x128xf32>
    %327 = arith.mulf %326, %325 : vector<8x128xf32>
    %328 = math.tanh %327 : vector<8x128xf32>
    %cst_129 = arith.constant 5.000000e-01 : f32
    %329 = vector.broadcast %cst_129 : f32 to vector<8x128xf32>
    %330 = arith.mulf %329, %328 : vector<8x128xf32>
    %cst_130 = arith.constant 5.000000e-01 : f32
    %331 = vector.broadcast %cst_130 : f32 to vector<8x128xf32>
    %332 = arith.addf %330, %331 : vector<8x128xf32>
    %333 = arith.mulf %322, %293 : vector<8x128xf32>
    %334 = arith.mulf %314, %324 : vector<8x128xf32>
    %335 = arith.addf %333, %334 : vector<8x128xf32>
    %336 = math.tanh %335 : vector<8x128xf32>
    %337 = arith.mulf %332, %336 : vector<8x128xf32>
    %338 = arith.index_cast %c7_i32 : i32 to index
    %c0_131 = arith.constant 0 : index
    %c0_132 = arith.constant 0 : index
    %339 = vector.load %arg5[%338, %c0_131, %c0_132] : memref<8x8x128xf32, #tpu.memory_space<vmem>>, vector<1x8x128xf32>
    %340 = vector.shape_cast %339 : vector<1x8x128xf32> to vector<8x128xf32>
    %341 = vector.shape_cast %337 : vector<8x128xf32> to vector<1x8x128xf32>
    tpu.vector_store %arg5[%338, %c0_131, %c0_132], %341 {strides = array<i32>} : memref<8x8x128xf32, #tpu.memory_space<vmem>>, vector<1x8x128xf32>,
    %c8_i32 = arith.constant 8 : i32
    %c0_133 = arith.constant 0 : index
    %c0_134 = arith.constant 0 : index
    %342 = vector.load %arg8[%c0_133, %c0_134] : memref<8x128xf32, #tpu.memory_space<vmem>>, vector<8x128xf32>
    tpu.vector_store %arg8[%c0_133, %c0_134], %337 {strides = array<i32>} : memref<8x128xf32, #tpu.memory_space<vmem>>, vector<8x128xf32>,
    %c0_135 = arith.constant 0 : index
    %c0_136 = arith.constant 0 : index
    %343 = vector.load %arg9[%c0_135, %c0_136] : memref<8x128xf32, #tpu.memory_space<vmem>>, vector<8x128xf32>
    tpu.vector_store %arg9[%c0_135, %c0_136], %335 {strides = array<i32>} : memref<8x128xf32, #tpu.memory_space<vmem>>, vector<8x128xf32>,
    %344 = arith.extui %3 : i1 to i32
    %c0_i32_137 = arith.constant 0 : i32
    %345 = arith.cmpi ne, %344, %c0_i32_137 : i32
    scf.if %345 {
      %c0_138 = arith.constant 0 : index
      %c0_139 = arith.constant 0 : index
      %346 = vector.load %arg8[%c0_138, %c0_139] : memref<8x128xf32, #tpu.memory_space<vmem>>, vector<8x128xf32>
      %c0_140 = arith.constant 0 : index
      %c0_141 = arith.constant 0 : index
      %347 = vector.load %arg6[%c0_140, %c0_141] : memref<8x128xf32, #tpu.memory_space<vmem>>, vector<8x128xf32>
      tpu.vector_store %arg6[%c0_140, %c0_141], %346 {strides = array<i32>} : memref<8x128xf32, #tpu.memory_space<vmem>>, vector<8x128xf32>,
      %c0_142 = arith.constant 0 : index
      %c0_143 = arith.constant 0 : index
      %348 = vector.load %arg9[%c0_142, %c0_143] : memref<8x128xf32, #tpu.memory_space<vmem>>, vector<8x128xf32>
      %c0_144 = arith.constant 0 : index
      %c0_145 = arith.constant 0 : index
      %349 = vector.load %arg7[%c0_144, %c0_145] : memref<8x128xf32, #tpu.memory_space<vmem>>, vector<8x128xf32>
      tpu.vector_store %arg7[%c0_144, %c0_145], %348 {strides = array<i32>} : memref<8x128xf32, #tpu.memory_space<vmem>>, vector<8x128xf32>,
    } else {
    }
    return
  }
  func.func @transform_0(%arg0: i32) -> (i32, i32, i32) {
    %c0_i32 = arith.constant 0 : i32
    %c0_i32_0 = arith.constant 0 : i32
    %c0_i32_1 = arith.constant 0 : i32
    return %arg0, %c0_i32, %c0_i32_0 : i32, i32, i32
  }
  func.func @transform_1(%arg0: i32) -> (i32, i32) {
    %c0_i32 = arith.constant 0 : i32
    %c0_i32_0 = arith.constant 0 : i32
    %c0_i32_1 = arith.constant 0 : i32
    return %c0_i32, %c0_i32_0 : i32, i32
  }
  func.func @transform_2(%arg0: i32) -> (i32, i32) {
    %c0_i32 = arith.constant 0 : i32
    %c0_i32_0 = arith.constant 0 : i32
    %c0_i32_1 = arith.constant 0 : i32
    return %c0_i32, %c0_i32_0 : i32, i32
  }
  func.func @transform_3(%arg0: i32) -> (i32, i32) {
    %c0_i32 = arith.constant 0 : i32
    %c0_i32_0 = arith.constant 0 : i32
    %c0_i32_1 = arith.constant 0 : i32
    return %c0_i32, %c0_i32_0 : i32, i32
  }
  func.func @transform_4(%arg0: i32) -> (i32, i32, i32) {
    %c0_i32 = arith.constant 0 : i32
    %c0_i32_0 = arith.constant 0 : i32
    %c0_i32_1 = arith.constant 0 : i32
    return %arg0, %c0_i32, %c0_i32_0 : i32, i32, i32
  }
  func.func @transform_5(%arg0: i32) -> (i32, i32) {
    %c0_i32 = arith.constant 0 : i32
    %c0_i32_0 = arith.constant 0 : i32
    %c0_i32_1 = arith.constant 0 : i32
    return %c0_i32, %c0_i32_0 : i32, i32
  }
  func.func @transform_6(%arg0: i32) -> (i32, i32) {
    %c0_i32 = arith.constant 0 : i32
    %c0_i32_0 = arith.constant 0 : i32
    %c0_i32_1 = arith.constant 0 : i32
    return %c0_i32, %c0_i32_0 : i32, i32
  }
}

module attributes {stable_mosaic.version = 11 : i64} {
  func.func @_lstm_recurrent_kernel(%arg0: i32, %arg1: memref<8x8x512xf32, #tpu.memory_space<vmem>>, %arg2: memref<8x128xf32, #tpu.memory_space<vmem>>, %arg3: memref<8x128xf32, #tpu.memory_space<vmem>>, %arg4: memref<128x512xbf16, #tpu.memory_space<vmem>>, %arg5: memref<8x8x128xf32, #tpu.memory_space<vmem>>, %arg6: memref<8x128xf32, #tpu.memory_space<vmem>>, %arg7: memref<8x128xf32, #tpu.memory_space<vmem>>, %arg8: memref<8x128xf32, #tpu.memory_space<vmem>>, %arg9: memref<8x128xf32, #tpu.memory_space<vmem>>) attributes {dimension_semantics = [#tpu.dimension_semantics<arbitrary>], iteration_bounds = array<i64: 1>, scalar_prefetch = 0 : i64, scratch_operands = 2 : i64, tpu.core_type = #tpu.core_type<tc>, window_params = [{transform_indices = @transform_0, window_bounds = array<i64: 8, 8, 512>}, {pipeline_mode = #tpu.pipeline_mode<synchronous>, transform_indices = @transform_1, window_bounds = array<i64: 8, 128>}, {pipeline_mode = #tpu.pipeline_mode<synchronous>, transform_indices = @transform_2, window_bounds = array<i64: 8, 128>}, {pipeline_mode = #tpu.pipeline_mode<synchronous>, transform_indices = @transform_3, window_bounds = array<i64: 128, 512>}, {transform_indices = @transform_4, window_bounds = array<i64: 8, 8, 128>}, {pipeline_mode = #tpu.pipeline_mode<synchronous>, transform_indices = @transform_5, window_bounds = array<i64: 8, 128>}, {pipeline_mode = #tpu.pipeline_mode<synchronous>, transform_indices = @transform_6, window_bounds = array<i64: 8, 128>}]} {
    %c0_i32 = arith.constant 0 : i32
    %0 = arith.cmpi eq, %arg0, %c0_i32 : i32
    %1 = arith.extui %0 : i1 to i32
    %c0_i32_0 = arith.constant 0 : i32
    %2 = arith.cmpi ne, %1, %c0_i32_0 : i32
    scf.if %2 {
      %c0_138 = arith.constant 0 : index
      %c0_139 = arith.constant 0 : index
      %346 = vector.load %arg2[%c0_138, %c0_139] : memref<8x128xf32, #tpu.memory_space<vmem>>, vector<8x128xf32>
      %c0_140 = arith.constant 0 : index
      %c0_141 = arith.constant 0 : index
      %347 = vector.load %arg8[%c0_140, %c0_141] : memref<8x128xf32, #tpu.memory_space<vmem>>, vector<8x128xf32>
      tpu.vector_store %arg8[%c0_140, %c0_141], %346 {strides = array<i32>} : memref<8x128xf32, #tpu.memory_space<vmem>>, vector<8x128xf32>,
      %c0_142 = arith.constant 0 : index
      %c0_143 = arith.constant 0 : index
      %348 = vector.load %arg3[%c0_142, %c0_143] : memref<8x128xf32, #tpu.memory_space<vmem>>, vector<8x128xf32>
      %c0_144 = arith.constant 0 : index
      %c0_145 = arith.constant 0 : index
      %349 = vector.load %arg9[%c0_144, %c0_145] : memref<8x128xf32, #tpu.memory_space<vmem>>, vector<8x128xf32>
      tpu.vector_store %arg9[%c0_144, %c0_145], %348 {strides = array<i32>} : memref<8x128xf32, #tpu.memory_space<vmem>>, vector<8x128xf32>,
    } else {
    }
    %c0_i32_1 = arith.constant 0 : i32
    %3 = arith.cmpi eq, %arg0, %c0_i32_1 : i32
    %c0 = arith.constant 0 : index
    %c0_2 = arith.constant 0 : index
    %4 = vector.load %arg8[%c0, %c0_2] : memref<8x128xf32, #tpu.memory_space<vmem>>, vector<8x128xf32>
    %c0_3 = arith.constant 0 : index
    %c0_4 = arith.constant 0 : index
    %5 = vector.load %arg9[%c0_3, %c0_4] : memref<8x128xf32, #tpu.memory_space<vmem>>, vector<8x128xf32>
    %c0_i32_5 = arith.constant 0 : i32
    %6 = arith.index_cast %c0_i32_5 : i32 to index
    %c0_6 = arith.constant 0 : index
    %c0_7 = arith.constant 0 : index
    %7 = vector.load %arg1[%6, %c0_6, %c0_7] : memref<8x8x512xf32, #tpu.memory_space<vmem>>, vector<1x8x512xf32>
    %8 = vector.shape_cast %7 : vector<1x8x512xf32> to vector<8x512xf32>
    %9 = arith.truncf %4 : vector<8x128xf32> to vector<8x128xbf16>
    %c0_8 = arith.constant 0 : index
    %c0_9 = arith.constant 0 : index
    %10 = vector.load %arg4[%c0_8, %c0_9] : memref<128x512xbf16, #tpu.memory_space<vmem>>, vector<128x512xbf16>
    %cst = arith.constant dense<0.000000e+00> : vector<8x512xf32>
    %11 = tpu.matmul %9, %10, %cst {dimension_numbers = #tpu.dot_dimension_numbers<[1], [0], [0], [1], [0, 0, 1, 1], [], []>} : vector<8x128xbf16>, vector<128x512xbf16>, vector<8x512xf32> -> vector<8x512xf32>
    %12 = arith.addf %8, %11 : vector<8x512xf32>
    %13 = vector.extract_strided_slice %12 {offsets = [0, 0], sizes = [8, 128], strides = [1, 1]} : vector<8x512xf32> to vector<8x128xf32>
    %cst_10 = arith.constant 5.000000e-01 : f32
    %14 = vector.broadcast %cst_10 : f32 to vector<8x128xf32>
    %15 = arith.mulf %14, %13 : vector<8x128xf32>
    %16 = math.tanh %15 : vector<8x128xf32>
    %cst_11 = arith.constant 5.000000e-01 : f32
    %17 = vector.broadcast %cst_11 : f32 to vector<8x128xf32>
    %18 = arith.mulf %17, %16 : vector<8x128xf32>
    %cst_12 = arith.constant 5.000000e-01 : f32
    %19 = vector.broadcast %cst_12 : f32 to vector<8x128xf32>
    %20 = arith.addf %18, %19 : vector<8x128xf32>
    %21 = vector.extract_strided_slice %12 {offsets = [0, 128], sizes = [8, 128], strides = [1, 1]} : vector<8x512xf32> to vector<8x128xf32>
    %cst_13 = arith.constant 5.000000e-01 : f32
    %22 = vector.broadcast %cst_13 : f32 to vector<8x128xf32>
    %23 = arith.mulf %22, %21 : vector<8x128xf32>
    %24 = math.tanh %23 : vector<8x128xf32>
    %cst_14 = arith.constant 5.000000e-01 : f32
    %25 = vector.broadcast %cst_14 : f32 to vector<8x128xf32>
    %26 = arith.mulf %25, %24 : vector<8x128xf32>
    %cst_15 = arith.constant 5.000000e-01 : f32
    %27 = vector.broadcast %cst_15 : f32 to vector<8x128xf32>
    %28 = arith.addf %26, %27 : vector<8x128xf32>
    %29 = vector.extract_strided_slice %12 {offsets = [0, 256], sizes = [8, 128], strides = [1, 1]} : vector<8x512xf32> to vector<8x128xf32>
    %30 = math.tanh %29 : vector<8x128xf32>
    %31 = vector.extract_strided_slice %12 {offsets = [0, 384], sizes = [8, 128], strides = [1, 1]} : vector<8x512xf32> to vector<8x128xf32>
    %cst_16 = arith.constant 5.000000e-01 : f32
    %32 = vector.broadcast %cst_16 : f32 to vector<8x128xf32>
    %33 = arith.mulf %32, %31 : vector<8x128xf32>
    %34 = math.tanh %33 : vector<8x128xf32>
    %cst_17 = arith.constant 5.000000e-01 : f32
    %35 = vector.broadcast %cst_17 : f32 to vector<8x128xf32>
    %36 = arith.mulf %35, %34 : vector<8x128xf32>
    %cst_18 = arith.constant 5.000000e-01 : f32
    %37 = vector.broadcast %cst_18 : f32 to vector<8x128xf32>
    %38 = arith.addf %36, %37 : vector<8x128xf32>
    %39 = arith.mulf %28, %5 : vector<8x128xf32>
    %40 = arith.mulf %20, %30 : vector<8x128xf32>
    %41 = arith.addf %39, %40 : vector<8x128xf32>
    %42 = math.tanh %41 : vector<8x128xf32>
    %43 = arith.mulf %38, %42 : vector<8x128xf32>
    %44 = arith.index_cast %c0_i32_5 : i32 to index
    %c0_19 = arith.constant 0 : index
    %c0_20 = arith.constant 0 : index
    %45 = vector.load %arg5[%44, %c0_19, %c0_20] : memref<8x8x128xf32, #tpu.memory_space<vmem>>, vector<1x8x128xf32>
    %46 = vector.shape_cast %45 : vector<1x8x128xf32> to vector<8x128xf32>
    %47 = vector.shape_cast %43 : vector<8x128xf32> to vector<1x8x128xf32>
    tpu.vector_store %arg5[%44, %c0_19, %c0_20], %47 {strides = array<i32>} : memref<8x8x128xf32, #tpu.memory_space<vmem>>, vector<1x8x128xf32>,
    %c1_i32 = arith.constant 1 : i32
    %48 = arith.index_cast %c1_i32 : i32 to index
    %c0_21 = arith.constant 0 : index
    %c0_22 = arith.constant 0 : index
    %49 = vector.load %arg1[%48, %c0_21, %c0_22] : memref<8x8x512xf32, #tpu.memory_space<vmem>>, vector<1x8x512xf32>
    %50 = vector.shape_cast %49 : vector<1x8x512xf32> to vector<8x512xf32>
    %51 = arith.truncf %43 : vector<8x128xf32> to vector<8x128xbf16>
    %c0_23 = arith.constant 0 : index
    %c0_24 = arith.constant 0 : index
    %52 = vector.load %arg4[%c0_23, %c0_24] : memref<128x512xbf16, #tpu.memory_space<vmem>>, vector<128x512xbf16>
    %cst_25 = arith.constant dense<0.000000e+00> : vector<8x512xf32>
    %53 = tpu.matmul %51, %52, %cst_25 {dimension_numbers = #tpu.dot_dimension_numbers<[1], [0], [0], [1], [0, 0, 1, 1], [], []>} : vector<8x128xbf16>, vector<128x512xbf16>, vector<8x512xf32> -> vector<8x512xf32>
    %54 = arith.addf %50, %53 : vector<8x512xf32>
    %55 = vector.extract_strided_slice %54 {offsets = [0, 0], sizes = [8, 128], strides = [1, 1]} : vector<8x512xf32> to vector<8x128xf32>
    %cst_26 = arith.constant 5.000000e-01 : f32
    %56 = vector.broadcast %cst_26 : f32 to vector<8x128xf32>
    %57 = arith.mulf %56, %55 : vector<8x128xf32>
    %58 = math.tanh %57 : vector<8x128xf32>
    %cst_27 = arith.constant 5.000000e-01 : f32
    %59 = vector.broadcast %cst_27 : f32 to vector<8x128xf32>
    %60 = arith.mulf %59, %58 : vector<8x128xf32>
    %cst_28 = arith.constant 5.000000e-01 : f32
    %61 = vector.broadcast %cst_28 : f32 to vector<8x128xf32>
    %62 = arith.addf %60, %61 : vector<8x128xf32>
    %63 = vector.extract_strided_slice %54 {offsets = [0, 128], sizes = [8, 128], strides = [1, 1]} : vector<8x512xf32> to vector<8x128xf32>
    %cst_29 = arith.constant 5.000000e-01 : f32
    %64 = vector.broadcast %cst_29 : f32 to vector<8x128xf32>
    %65 = arith.mulf %64, %63 : vector<8x128xf32>
    %66 = math.tanh %65 : vector<8x128xf32>
    %cst_30 = arith.constant 5.000000e-01 : f32
    %67 = vector.broadcast %cst_30 : f32 to vector<8x128xf32>
    %68 = arith.mulf %67, %66 : vector<8x128xf32>
    %cst_31 = arith.constant 5.000000e-01 : f32
    %69 = vector.broadcast %cst_31 : f32 to vector<8x128xf32>
    %70 = arith.addf %68, %69 : vector<8x128xf32>
    %71 = vector.extract_strided_slice %54 {offsets = [0, 256], sizes = [8, 128], strides = [1, 1]} : vector<8x512xf32> to vector<8x128xf32>
    %72 = math.tanh %71 : vector<8x128xf32>
    %73 = vector.extract_strided_slice %54 {offsets = [0, 384], sizes = [8, 128], strides = [1, 1]} : vector<8x512xf32> to vector<8x128xf32>
    %cst_32 = arith.constant 5.000000e-01 : f32
    %74 = vector.broadcast %cst_32 : f32 to vector<8x128xf32>
    %75 = arith.mulf %74, %73 : vector<8x128xf32>
    %76 = math.tanh %75 : vector<8x128xf32>
    %cst_33 = arith.constant 5.000000e-01 : f32
    %77 = vector.broadcast %cst_33 : f32 to vector<8x128xf32>
    %78 = arith.mulf %77, %76 : vector<8x128xf32>
    %cst_34 = arith.constant 5.000000e-01 : f32
    %79 = vector.broadcast %cst_34 : f32 to vector<8x128xf32>
    %80 = arith.addf %78, %79 : vector<8x128xf32>
    %81 = arith.mulf %70, %41 : vector<8x128xf32>
    %82 = arith.mulf %62, %72 : vector<8x128xf32>
    %83 = arith.addf %81, %82 : vector<8x128xf32>
    %84 = math.tanh %83 : vector<8x128xf32>
    %85 = arith.mulf %80, %84 : vector<8x128xf32>
    %86 = arith.index_cast %c1_i32 : i32 to index
    %c0_35 = arith.constant 0 : index
    %c0_36 = arith.constant 0 : index
    %87 = vector.load %arg5[%86, %c0_35, %c0_36] : memref<8x8x128xf32, #tpu.memory_space<vmem>>, vector<1x8x128xf32>
    %88 = vector.shape_cast %87 : vector<1x8x128xf32> to vector<8x128xf32>
    %89 = vector.shape_cast %85 : vector<8x128xf32> to vector<1x8x128xf32>
    tpu.vector_store %arg5[%86, %c0_35, %c0_36], %89 {strides = array<i32>} : memref<8x8x128xf32, #tpu.memory_space<vmem>>, vector<1x8x128xf32>,
    %c2_i32 = arith.constant 2 : i32
    %90 = arith.index_cast %c2_i32 : i32 to index
    %c0_37 = arith.constant 0 : index
    %c0_38 = arith.constant 0 : index
    %91 = vector.load %arg1[%90, %c0_37, %c0_38] : memref<8x8x512xf32, #tpu.memory_space<vmem>>, vector<1x8x512xf32>
    %92 = vector.shape_cast %91 : vector<1x8x512xf32> to vector<8x512xf32>
    %93 = arith.truncf %85 : vector<8x128xf32> to vector<8x128xbf16>
    %c0_39 = arith.constant 0 : index
    %c0_40 = arith.constant 0 : index
    %94 = vector.load %arg4[%c0_39, %c0_40] : memref<128x512xbf16, #tpu.memory_space<vmem>>, vector<128x512xbf16>
    %cst_41 = arith.constant dense<0.000000e+00> : vector<8x512xf32>
    %95 = tpu.matmul %93, %94, %cst_41 {dimension_numbers = #tpu.dot_dimension_numbers<[1], [0], [0], [1], [0, 0, 1, 1], [], []>} : vector<8x128xbf16>, vector<128x512xbf16>, vector<8x512xf32> -> vector<8x512xf32>
    %96 = arith.addf %92, %95 : vector<8x512xf32>
    %97 = vector.extract_strided_slice %96 {offsets = [0, 0], sizes = [8, 128], strides = [1, 1]} : vector<8x512xf32> to vector<8x128xf32>
    %cst_42 = arith.constant 5.000000e-01 : f32
    %98 = vector.broadcast %cst_42 : f32 to vector<8x128xf32>
    %99 = arith.mulf %98, %97 : vector<8x128xf32>
    %100 = math.tanh %99 : vector<8x128xf32>
    %cst_43 = arith.constant 5.000000e-01 : f32
    %101 = vector.broadcast %cst_43 : f32 to vector<8x128xf32>
    %102 = arith.mulf %101, %100 : vector<8x128xf32>
    %cst_44 = arith.constant 5.000000e-01 : f32
    %103 = vector.broadcast %cst_44 : f32 to vector<8x128xf32>
    %104 = arith.addf %102, %103 : vector<8x128xf32>
    %105 = vector.extract_strided_slice %96 {offsets = [0, 128], sizes = [8, 128], strides = [1, 1]} : vector<8x512xf32> to vector<8x128xf32>
    %cst_45 = arith.constant 5.000000e-01 : f32
    %106 = vector.broadcast %cst_45 : f32 to vector<8x128xf32>
    %107 = arith.mulf %106, %105 : vector<8x128xf32>
    %108 = math.tanh %107 : vector<8x128xf32>
    %cst_46 = arith.constant 5.000000e-01 : f32
    %109 = vector.broadcast %cst_46 : f32 to vector<8x128xf32>
    %110 = arith.mulf %109, %108 : vector<8x128xf32>
    %cst_47 = arith.constant 5.000000e-01 : f32
    %111 = vector.broadcast %cst_47 : f32 to vector<8x128xf32>
    %112 = arith.addf %110, %111 : vector<8x128xf32>
    %113 = vector.extract_strided_slice %96 {offsets = [0, 256], sizes = [8, 128], strides = [1, 1]} : vector<8x512xf32> to vector<8x128xf32>
    %114 = math.tanh %113 : vector<8x128xf32>
    %115 = vector.extract_strided_slice %96 {offsets = [0, 384], sizes = [8, 128], strides = [1, 1]} : vector<8x512xf32> to vector<8x128xf32>
    %cst_48 = arith.constant 5.000000e-01 : f32
    %116 = vector.broadcast %cst_48 : f32 to vector<8x128xf32>
    %117 = arith.mulf %116, %115 : vector<8x128xf32>
    %118 = math.tanh %117 : vector<8x128xf32>
    %cst_49 = arith.constant 5.000000e-01 : f32
    %119 = vector.broadcast %cst_49 : f32 to vector<8x128xf32>
    %120 = arith.mulf %119, %118 : vector<8x128xf32>
    %cst_50 = arith.constant 5.000000e-01 : f32
    %121 = vector.broadcast %cst_50 : f32 to vector<8x128xf32>
    %122 = arith.addf %120, %121 : vector<8x128xf32>
    %123 = arith.mulf %112, %83 : vector<8x128xf32>
    %124 = arith.mulf %104, %114 : vector<8x128xf32>
    %125 = arith.addf %123, %124 : vector<8x128xf32>
    %126 = math.tanh %125 : vector<8x128xf32>
    %127 = arith.mulf %122, %126 : vector<8x128xf32>
    %128 = arith.index_cast %c2_i32 : i32 to index
    %c0_51 = arith.constant 0 : index
    %c0_52 = arith.constant 0 : index
    %129 = vector.load %arg5[%128, %c0_51, %c0_52] : memref<8x8x128xf32, #tpu.memory_space<vmem>>, vector<1x8x128xf32>
    %130 = vector.shape_cast %129 : vector<1x8x128xf32> to vector<8x128xf32>
    %131 = vector.shape_cast %127 : vector<8x128xf32> to vector<1x8x128xf32>
    tpu.vector_store %arg5[%128, %c0_51, %c0_52], %131 {strides = array<i32>} : memref<8x8x128xf32, #tpu.memory_space<vmem>>, vector<1x8x128xf32>,
    %c3_i32 = arith.constant 3 : i32
    %132 = arith.index_cast %c3_i32 : i32 to index
    %c0_53 = arith.constant 0 : index
    %c0_54 = arith.constant 0 : index
    %133 = vector.load %arg1[%132, %c0_53, %c0_54] : memref<8x8x512xf32, #tpu.memory_space<vmem>>, vector<1x8x512xf32>
    %134 = vector.shape_cast %133 : vector<1x8x512xf32> to vector<8x512xf32>
    %135 = arith.truncf %127 : vector<8x128xf32> to vector<8x128xbf16>
    %c0_55 = arith.constant 0 : index
    %c0_56 = arith.constant 0 : index
    %136 = vector.load %arg4[%c0_55, %c0_56] : memref<128x512xbf16, #tpu.memory_space<vmem>>, vector<128x512xbf16>
    %cst_57 = arith.constant dense<0.000000e+00> : vector<8x512xf32>
    %137 = tpu.matmul %135, %136, %cst_57 {dimension_numbers = #tpu.dot_dimension_numbers<[1], [0], [0], [1], [0, 0, 1, 1], [], []>} : vector<8x128xbf16>, vector<128x512xbf16>, vector<8x512xf32> -> vector<8x512xf32>
    %138 = arith.addf %134, %137 : vector<8x512xf32>
    %139 = vector.extract_strided_slice %138 {offsets = [0, 0], sizes = [8, 128], strides = [1, 1]} : vector<8x512xf32> to vector<8x128xf32>
    %cst_58 = arith.constant 5.000000e-01 : f32
    %140 = vector.broadcast %cst_58 : f32 to vector<8x128xf32>
    %141 = arith.mulf %140, %139 : vector<8x128xf32>
    %142 = math.tanh %141 : vector<8x128xf32>
    %cst_59 = arith.constant 5.000000e-01 : f32
    %143 = vector.broadcast %cst_59 : f32 to vector<8x128xf32>
    %144 = arith.mulf %143, %142 : vector<8x128xf32>
    %cst_60 = arith.constant 5.000000e-01 : f32
    %145 = vector.broadcast %cst_60 : f32 to vector<8x128xf32>
    %146 = arith.addf %144, %145 : vector<8x128xf32>
    %147 = vector.extract_strided_slice %138 {offsets = [0, 128], sizes = [8, 128], strides = [1, 1]} : vector<8x512xf32> to vector<8x128xf32>
    %cst_61 = arith.constant 5.000000e-01 : f32
    %148 = vector.broadcast %cst_61 : f32 to vector<8x128xf32>
    %149 = arith.mulf %148, %147 : vector<8x128xf32>
    %150 = math.tanh %149 : vector<8x128xf32>
    %cst_62 = arith.constant 5.000000e-01 : f32
    %151 = vector.broadcast %cst_62 : f32 to vector<8x128xf32>
    %152 = arith.mulf %151, %150 : vector<8x128xf32>
    %cst_63 = arith.constant 5.000000e-01 : f32
    %153 = vector.broadcast %cst_63 : f32 to vector<8x128xf32>
    %154 = arith.addf %152, %153 : vector<8x128xf32>
    %155 = vector.extract_strided_slice %138 {offsets = [0, 256], sizes = [8, 128], strides = [1, 1]} : vector<8x512xf32> to vector<8x128xf32>
    %156 = math.tanh %155 : vector<8x128xf32>
    %157 = vector.extract_strided_slice %138 {offsets = [0, 384], sizes = [8, 128], strides = [1, 1]} : vector<8x512xf32> to vector<8x128xf32>
    %cst_64 = arith.constant 5.000000e-01 : f32
    %158 = vector.broadcast %cst_64 : f32 to vector<8x128xf32>
    %159 = arith.mulf %158, %157 : vector<8x128xf32>
    %160 = math.tanh %159 : vector<8x128xf32>
    %cst_65 = arith.constant 5.000000e-01 : f32
    %161 = vector.broadcast %cst_65 : f32 to vector<8x128xf32>
    %162 = arith.mulf %161, %160 : vector<8x128xf32>
    %cst_66 = arith.constant 5.000000e-01 : f32
    %163 = vector.broadcast %cst_66 : f32 to vector<8x128xf32>
    %164 = arith.addf %162, %163 : vector<8x128xf32>
    %165 = arith.mulf %154, %125 : vector<8x128xf32>
    %166 = arith.mulf %146, %156 : vector<8x128xf32>
    %167 = arith.addf %165, %166 : vector<8x128xf32>
    %168 = math.tanh %167 : vector<8x128xf32>
    %169 = arith.mulf %164, %168 : vector<8x128xf32>
    %170 = arith.index_cast %c3_i32 : i32 to index
    %c0_67 = arith.constant 0 : index
    %c0_68 = arith.constant 0 : index
    %171 = vector.load %arg5[%170, %c0_67, %c0_68] : memref<8x8x128xf32, #tpu.memory_space<vmem>>, vector<1x8x128xf32>
    %172 = vector.shape_cast %171 : vector<1x8x128xf32> to vector<8x128xf32>
    %173 = vector.shape_cast %169 : vector<8x128xf32> to vector<1x8x128xf32>
    tpu.vector_store %arg5[%170, %c0_67, %c0_68], %173 {strides = array<i32>} : memref<8x8x128xf32, #tpu.memory_space<vmem>>, vector<1x8x128xf32>,
    %c4_i32 = arith.constant 4 : i32
    %174 = arith.index_cast %c4_i32 : i32 to index
    %c0_69 = arith.constant 0 : index
    %c0_70 = arith.constant 0 : index
    %175 = vector.load %arg1[%174, %c0_69, %c0_70] : memref<8x8x512xf32, #tpu.memory_space<vmem>>, vector<1x8x512xf32>
    %176 = vector.shape_cast %175 : vector<1x8x512xf32> to vector<8x512xf32>
    %177 = arith.truncf %169 : vector<8x128xf32> to vector<8x128xbf16>
    %c0_71 = arith.constant 0 : index
    %c0_72 = arith.constant 0 : index
    %178 = vector.load %arg4[%c0_71, %c0_72] : memref<128x512xbf16, #tpu.memory_space<vmem>>, vector<128x512xbf16>
    %cst_73 = arith.constant dense<0.000000e+00> : vector<8x512xf32>
    %179 = tpu.matmul %177, %178, %cst_73 {dimension_numbers = #tpu.dot_dimension_numbers<[1], [0], [0], [1], [0, 0, 1, 1], [], []>} : vector<8x128xbf16>, vector<128x512xbf16>, vector<8x512xf32> -> vector<8x512xf32>
    %180 = arith.addf %176, %179 : vector<8x512xf32>
    %181 = vector.extract_strided_slice %180 {offsets = [0, 0], sizes = [8, 128], strides = [1, 1]} : vector<8x512xf32> to vector<8x128xf32>
    %cst_74 = arith.constant 5.000000e-01 : f32
    %182 = vector.broadcast %cst_74 : f32 to vector<8x128xf32>
    %183 = arith.mulf %182, %181 : vector<8x128xf32>
    %184 = math.tanh %183 : vector<8x128xf32>
    %cst_75 = arith.constant 5.000000e-01 : f32
    %185 = vector.broadcast %cst_75 : f32 to vector<8x128xf32>
    %186 = arith.mulf %185, %184 : vector<8x128xf32>
    %cst_76 = arith.constant 5.000000e-01 : f32
    %187 = vector.broadcast %cst_76 : f32 to vector<8x128xf32>
    %188 = arith.addf %186, %187 : vector<8x128xf32>
    %189 = vector.extract_strided_slice %180 {offsets = [0, 128], sizes = [8, 128], strides = [1, 1]} : vector<8x512xf32> to vector<8x128xf32>
    %cst_77 = arith.constant 5.000000e-01 : f32
    %190 = vector.broadcast %cst_77 : f32 to vector<8x128xf32>
    %191 = arith.mulf %190, %189 : vector<8x128xf32>
    %192 = math.tanh %191 : vector<8x128xf32>
    %cst_78 = arith.constant 5.000000e-01 : f32
    %193 = vector.broadcast %cst_78 : f32 to vector<8x128xf32>
    %194 = arith.mulf %193, %192 : vector<8x128xf32>
    %cst_79 = arith.constant 5.000000e-01 : f32
    %195 = vector.broadcast %cst_79 : f32 to vector<8x128xf32>
    %196 = arith.addf %194, %195 : vector<8x128xf32>
    %197 = vector.extract_strided_slice %180 {offsets = [0, 256], sizes = [8, 128], strides = [1, 1]} : vector<8x512xf32> to vector<8x128xf32>
    %198 = math.tanh %197 : vector<8x128xf32>
    %199 = vector.extract_strided_slice %180 {offsets = [0, 384], sizes = [8, 128], strides = [1, 1]} : vector<8x512xf32> to vector<8x128xf32>
    %cst_80 = arith.constant 5.000000e-01 : f32
    %200 = vector.broadcast %cst_80 : f32 to vector<8x128xf32>
    %201 = arith.mulf %200, %199 : vector<8x128xf32>
    %202 = math.tanh %201 : vector<8x128xf32>
    %cst_81 = arith.constant 5.000000e-01 : f32
    %203 = vector.broadcast %cst_81 : f32 to vector<8x128xf32>
    %204 = arith.mulf %203, %202 : vector<8x128xf32>
    %cst_82 = arith.constant 5.000000e-01 : f32
    %205 = vector.broadcast %cst_82 : f32 to vector<8x128xf32>
    %206 = arith.addf %204, %205 : vector<8x128xf32>
    %207 = arith.mulf %196, %167 : vector<8x128xf32>
    %208 = arith.mulf %188, %198 : vector<8x128xf32>
    %209 = arith.addf %207, %208 : vector<8x128xf32>
    %210 = math.tanh %209 : vector<8x128xf32>
    %211 = arith.mulf %206, %210 : vector<8x128xf32>
    %212 = arith.index_cast %c4_i32 : i32 to index
    %c0_83 = arith.constant 0 : index
    %c0_84 = arith.constant 0 : index
    %213 = vector.load %arg5[%212, %c0_83, %c0_84] : memref<8x8x128xf32, #tpu.memory_space<vmem>>, vector<1x8x128xf32>
    %214 = vector.shape_cast %213 : vector<1x8x128xf32> to vector<8x128xf32>
    %215 = vector.shape_cast %211 : vector<8x128xf32> to vector<1x8x128xf32>
    tpu.vector_store %arg5[%212, %c0_83, %c0_84], %215 {strides = array<i32>} : memref<8x8x128xf32, #tpu.memory_space<vmem>>, vector<1x8x128xf32>,
    %c5_i32 = arith.constant 5 : i32
    %216 = arith.index_cast %c5_i32 : i32 to index
    %c0_85 = arith.constant 0 : index
    %c0_86 = arith.constant 0 : index
    %217 = vector.load %arg1[%216, %c0_85, %c0_86] : memref<8x8x512xf32, #tpu.memory_space<vmem>>, vector<1x8x512xf32>
    %218 = vector.shape_cast %217 : vector<1x8x512xf32> to vector<8x512xf32>
    %219 = arith.truncf %211 : vector<8x128xf32> to vector<8x128xbf16>
    %c0_87 = arith.constant 0 : index
    %c0_88 = arith.constant 0 : index
    %220 = vector.load %arg4[%c0_87, %c0_88] : memref<128x512xbf16, #tpu.memory_space<vmem>>, vector<128x512xbf16>
    %cst_89 = arith.constant dense<0.000000e+00> : vector<8x512xf32>
    %221 = tpu.matmul %219, %220, %cst_89 {dimension_numbers = #tpu.dot_dimension_numbers<[1], [0], [0], [1], [0, 0, 1, 1], [], []>} : vector<8x128xbf16>, vector<128x512xbf16>, vector<8x512xf32> -> vector<8x512xf32>
    %222 = arith.addf %218, %221 : vector<8x512xf32>
    %223 = vector.extract_strided_slice %222 {offsets = [0, 0], sizes = [8, 128], strides = [1, 1]} : vector<8x512xf32> to vector<8x128xf32>
    %cst_90 = arith.constant 5.000000e-01 : f32
    %224 = vector.broadcast %cst_90 : f32 to vector<8x128xf32>
    %225 = arith.mulf %224, %223 : vector<8x128xf32>
    %226 = math.tanh %225 : vector<8x128xf32>
    %cst_91 = arith.constant 5.000000e-01 : f32
    %227 = vector.broadcast %cst_91 : f32 to vector<8x128xf32>
    %228 = arith.mulf %227, %226 : vector<8x128xf32>
    %cst_92 = arith.constant 5.000000e-01 : f32
    %229 = vector.broadcast %cst_92 : f32 to vector<8x128xf32>
    %230 = arith.addf %228, %229 : vector<8x128xf32>
    %231 = vector.extract_strided_slice %222 {offsets = [0, 128], sizes = [8, 128], strides = [1, 1]} : vector<8x512xf32> to vector<8x128xf32>
    %cst_93 = arith.constant 5.000000e-01 : f32
    %232 = vector.broadcast %cst_93 : f32 to vector<8x128xf32>
    %233 = arith.mulf %232, %231 : vector<8x128xf32>
    %234 = math.tanh %233 : vector<8x128xf32>
    %cst_94 = arith.constant 5.000000e-01 : f32
    %235 = vector.broadcast %cst_94 : f32 to vector<8x128xf32>
    %236 = arith.mulf %235, %234 : vector<8x128xf32>
    %cst_95 = arith.constant 5.000000e-01 : f32
    %237 = vector.broadcast %cst_95 : f32 to vector<8x128xf32>
    %238 = arith.addf %236, %237 : vector<8x128xf32>
    %239 = vector.extract_strided_slice %222 {offsets = [0, 256], sizes = [8, 128], strides = [1, 1]} : vector<8x512xf32> to vector<8x128xf32>
    %240 = math.tanh %239 : vector<8x128xf32>
    %241 = vector.extract_strided_slice %222 {offsets = [0, 384], sizes = [8, 128], strides = [1, 1]} : vector<8x512xf32> to vector<8x128xf32>
    %cst_96 = arith.constant 5.000000e-01 : f32
    %242 = vector.broadcast %cst_96 : f32 to vector<8x128xf32>
    %243 = arith.mulf %242, %241 : vector<8x128xf32>
    %244 = math.tanh %243 : vector<8x128xf32>
    %cst_97 = arith.constant 5.000000e-01 : f32
    %245 = vector.broadcast %cst_97 : f32 to vector<8x128xf32>
    %246 = arith.mulf %245, %244 : vector<8x128xf32>
    %cst_98 = arith.constant 5.000000e-01 : f32
    %247 = vector.broadcast %cst_98 : f32 to vector<8x128xf32>
    %248 = arith.addf %246, %247 : vector<8x128xf32>
    %249 = arith.mulf %238, %209 : vector<8x128xf32>
    %250 = arith.mulf %230, %240 : vector<8x128xf32>
    %251 = arith.addf %249, %250 : vector<8x128xf32>
    %252 = math.tanh %251 : vector<8x128xf32>
    %253 = arith.mulf %248, %252 : vector<8x128xf32>
    %254 = arith.index_cast %c5_i32 : i32 to index
    %c0_99 = arith.constant 0 : index
    %c0_100 = arith.constant 0 : index
    %255 = vector.load %arg5[%254, %c0_99, %c0_100] : memref<8x8x128xf32, #tpu.memory_space<vmem>>, vector<1x8x128xf32>
    %256 = vector.shape_cast %255 : vector<1x8x128xf32> to vector<8x128xf32>
    %257 = vector.shape_cast %253 : vector<8x128xf32> to vector<1x8x128xf32>
    tpu.vector_store %arg5[%254, %c0_99, %c0_100], %257 {strides = array<i32>} : memref<8x8x128xf32, #tpu.memory_space<vmem>>, vector<1x8x128xf32>,
    %c6_i32 = arith.constant 6 : i32
    %258 = arith.index_cast %c6_i32 : i32 to index
    %c0_101 = arith.constant 0 : index
    %c0_102 = arith.constant 0 : index
    %259 = vector.load %arg1[%258, %c0_101, %c0_102] : memref<8x8x512xf32, #tpu.memory_space<vmem>>, vector<1x8x512xf32>
    %260 = vector.shape_cast %259 : vector<1x8x512xf32> to vector<8x512xf32>
    %261 = arith.truncf %253 : vector<8x128xf32> to vector<8x128xbf16>
    %c0_103 = arith.constant 0 : index
    %c0_104 = arith.constant 0 : index
    %262 = vector.load %arg4[%c0_103, %c0_104] : memref<128x512xbf16, #tpu.memory_space<vmem>>, vector<128x512xbf16>
    %cst_105 = arith.constant dense<0.000000e+00> : vector<8x512xf32>
    %263 = tpu.matmul %261, %262, %cst_105 {dimension_numbers = #tpu.dot_dimension_numbers<[1], [0], [0], [1], [0, 0, 1, 1], [], []>} : vector<8x128xbf16>, vector<128x512xbf16>, vector<8x512xf32> -> vector<8x512xf32>
    %264 = arith.addf %260, %263 : vector<8x512xf32>
    %265 = vector.extract_strided_slice %264 {offsets = [0, 0], sizes = [8, 128], strides = [1, 1]} : vector<8x512xf32> to vector<8x128xf32>
    %cst_106 = arith.constant 5.000000e-01 : f32
    %266 = vector.broadcast %cst_106 : f32 to vector<8x128xf32>
    %267 = arith.mulf %266, %265 : vector<8x128xf32>
    %268 = math.tanh %267 : vector<8x128xf32>
    %cst_107 = arith.constant 5.000000e-01 : f32
    %269 = vector.broadcast %cst_107 : f32 to vector<8x128xf32>
    %270 = arith.mulf %269, %268 : vector<8x128xf32>
    %cst_108 = arith.constant 5.000000e-01 : f32
    %271 = vector.broadcast %cst_108 : f32 to vector<8x128xf32>
    %272 = arith.addf %270, %271 : vector<8x128xf32>
    %273 = vector.extract_strided_slice %264 {offsets = [0, 128], sizes = [8, 128], strides = [1, 1]} : vector<8x512xf32> to vector<8x128xf32>
    %cst_109 = arith.constant 5.000000e-01 : f32
    %274 = vector.broadcast %cst_109 : f32 to vector<8x128xf32>
    %275 = arith.mulf %274, %273 : vector<8x128xf32>
    %276 = math.tanh %275 : vector<8x128xf32>
    %cst_110 = arith.constant 5.000000e-01 : f32
    %277 = vector.broadcast %cst_110 : f32 to vector<8x128xf32>
    %278 = arith.mulf %277, %276 : vector<8x128xf32>
    %cst_111 = arith.constant 5.000000e-01 : f32
    %279 = vector.broadcast %cst_111 : f32 to vector<8x128xf32>
    %280 = arith.addf %278, %279 : vector<8x128xf32>
    %281 = vector.extract_strided_slice %264 {offsets = [0, 256], sizes = [8, 128], strides = [1, 1]} : vector<8x512xf32> to vector<8x128xf32>
    %282 = math.tanh %281 : vector<8x128xf32>
    %283 = vector.extract_strided_slice %264 {offsets = [0, 384], sizes = [8, 128], strides = [1, 1]} : vector<8x512xf32> to vector<8x128xf32>
    %cst_112 = arith.constant 5.000000e-01 : f32
    %284 = vector.broadcast %cst_112 : f32 to vector<8x128xf32>
    %285 = arith.mulf %284, %283 : vector<8x128xf32>
    %286 = math.tanh %285 : vector<8x128xf32>
    %cst_113 = arith.constant 5.000000e-01 : f32
    %287 = vector.broadcast %cst_113 : f32 to vector<8x128xf32>
    %288 = arith.mulf %287, %286 : vector<8x128xf32>
    %cst_114 = arith.constant 5.000000e-01 : f32
    %289 = vector.broadcast %cst_114 : f32 to vector<8x128xf32>
    %290 = arith.addf %288, %289 : vector<8x128xf32>
    %291 = arith.mulf %280, %251 : vector<8x128xf32>
    %292 = arith.mulf %272, %282 : vector<8x128xf32>
    %293 = arith.addf %291, %292 : vector<8x128xf32>
    %294 = math.tanh %293 : vector<8x128xf32>
    %295 = arith.mulf %290, %294 : vector<8x128xf32>
    %296 = arith.index_cast %c6_i32 : i32 to index
    %c0_115 = arith.constant 0 : index
    %c0_116 = arith.constant 0 : index
    %297 = vector.load %arg5[%296, %c0_115, %c0_116] : memref<8x8x128xf32, #tpu.memory_space<vmem>>, vector<1x8x128xf32>
    %298 = vector.shape_cast %297 : vector<1x8x128xf32> to vector<8x128xf32>
    %299 = vector.shape_cast %295 : vector<8x128xf32> to vector<1x8x128xf32>
    tpu.vector_store %arg5[%296, %c0_115, %c0_116], %299 {strides = array<i32>} : memref<8x8x128xf32, #tpu.memory_space<vmem>>, vector<1x8x128xf32>,
    %c7_i32 = arith.constant 7 : i32
    %300 = arith.index_cast %c7_i32 : i32 to index
    %c0_117 = arith.constant 0 : index
    %c0_118 = arith.constant 0 : index
    %301 = vector.load %arg1[%300, %c0_117, %c0_118] : memref<8x8x512xf32, #tpu.memory_space<vmem>>, vector<1x8x512xf32>
    %302 = vector.shape_cast %301 : vector<1x8x512xf32> to vector<8x512xf32>
    %303 = arith.truncf %295 : vector<8x128xf32> to vector<8x128xbf16>
    %c0_119 = arith.constant 0 : index
    %c0_120 = arith.constant 0 : index
    %304 = vector.load %arg4[%c0_119, %c0_120] : memref<128x512xbf16, #tpu.memory_space<vmem>>, vector<128x512xbf16>
    %cst_121 = arith.constant dense<0.000000e+00> : vector<8x512xf32>
    %305 = tpu.matmul %303, %304, %cst_121 {dimension_numbers = #tpu.dot_dimension_numbers<[1], [0], [0], [1], [0, 0, 1, 1], [], []>} : vector<8x128xbf16>, vector<128x512xbf16>, vector<8x512xf32> -> vector<8x512xf32>
    %306 = arith.addf %302, %305 : vector<8x512xf32>
    %307 = vector.extract_strided_slice %306 {offsets = [0, 0], sizes = [8, 128], strides = [1, 1]} : vector<8x512xf32> to vector<8x128xf32>
    %cst_122 = arith.constant 5.000000e-01 : f32
    %308 = vector.broadcast %cst_122 : f32 to vector<8x128xf32>
    %309 = arith.mulf %308, %307 : vector<8x128xf32>
    %310 = math.tanh %309 : vector<8x128xf32>
    %cst_123 = arith.constant 5.000000e-01 : f32
    %311 = vector.broadcast %cst_123 : f32 to vector<8x128xf32>
    %312 = arith.mulf %311, %310 : vector<8x128xf32>
    %cst_124 = arith.constant 5.000000e-01 : f32
    %313 = vector.broadcast %cst_124 : f32 to vector<8x128xf32>
    %314 = arith.addf %312, %313 : vector<8x128xf32>
    %315 = vector.extract_strided_slice %306 {offsets = [0, 128], sizes = [8, 128], strides = [1, 1]} : vector<8x512xf32> to vector<8x128xf32>
    %cst_125 = arith.constant 5.000000e-01 : f32
    %316 = vector.broadcast %cst_125 : f32 to vector<8x128xf32>
    %317 = arith.mulf %316, %315 : vector<8x128xf32>
    %318 = math.tanh %317 : vector<8x128xf32>
    %cst_126 = arith.constant 5.000000e-01 : f32
    %319 = vector.broadcast %cst_126 : f32 to vector<8x128xf32>
    %320 = arith.mulf %319, %318 : vector<8x128xf32>
    %cst_127 = arith.constant 5.000000e-01 : f32
    %321 = vector.broadcast %cst_127 : f32 to vector<8x128xf32>
    %322 = arith.addf %320, %321 : vector<8x128xf32>
    %323 = vector.extract_strided_slice %306 {offsets = [0, 256], sizes = [8, 128], strides = [1, 1]} : vector<8x512xf32> to vector<8x128xf32>
    %324 = math.tanh %323 : vector<8x128xf32>
    %325 = vector.extract_strided_slice %306 {offsets = [0, 384], sizes = [8, 128], strides = [1, 1]} : vector<8x512xf32> to vector<8x128xf32>
    %cst_128 = arith.constant 5.000000e-01 : f32
    %326 = vector.broadcast %cst_128 : f32 to vector<8x128xf32>
    %327 = arith.mulf %326, %325 : vector<8x128xf32>
    %328 = math.tanh %327 : vector<8x128xf32>
    %cst_129 = arith.constant 5.000000e-01 : f32
    %329 = vector.broadcast %cst_129 : f32 to vector<8x128xf32>
    %330 = arith.mulf %329, %328 : vector<8x128xf32>
    %cst_130 = arith.constant 5.000000e-01 : f32
    %331 = vector.broadcast %cst_130 : f32 to vector<8x128xf32>
    %332 = arith.addf %330, %331 : vector<8x128xf32>
    %333 = arith.mulf %322, %293 : vector<8x128xf32>
    %334 = arith.mulf %314, %324 : vector<8x128xf32>
    %335 = arith.addf %333, %334 : vector<8x128xf32>
    %336 = math.tanh %335 : vector<8x128xf32>
    %337 = arith.mulf %332, %336 : vector<8x128xf32>
    %338 = arith.index_cast %c7_i32 : i32 to index
    %c0_131 = arith.constant 0 : index
    %c0_132 = arith.constant 0 : index
    %339 = vector.load %arg5[%338, %c0_131, %c0_132] : memref<8x8x128xf32, #tpu.memory_space<vmem>>, vector<1x8x128xf32>
    %340 = vector.shape_cast %339 : vector<1x8x128xf32> to vector<8x128xf32>
    %341 = vector.shape_cast %337 : vector<8x128xf32> to vector<1x8x128xf32>
    tpu.vector_store %arg5[%338, %c0_131, %c0_132], %341 {strides = array<i32>} : memref<8x8x128xf32, #tpu.memory_space<vmem>>, vector<1x8x128xf32>,
    %c8_i32 = arith.constant 8 : i32
    %c0_133 = arith.constant 0 : index
    %c0_134 = arith.constant 0 : index
    %342 = vector.load %arg8[%c0_133, %c0_134] : memref<8x128xf32, #tpu.memory_space<vmem>>, vector<8x128xf32>
    tpu.vector_store %arg8[%c0_133, %c0_134], %337 {strides = array<i32>} : memref<8x128xf32, #tpu.memory_space<vmem>>, vector<8x128xf32>,
    %c0_135 = arith.constant 0 : index
    %c0_136 = arith.constant 0 : index
    %343 = vector.load %arg9[%c0_135, %c0_136] : memref<8x128xf32, #tpu.memory_space<vmem>>, vector<8x128xf32>
    tpu.vector_store %arg9[%c0_135, %c0_136], %335 {strides = array<i32>} : memref<8x128xf32, #tpu.memory_space<vmem>>, vector<8x128xf32>,
    %344 = arith.extui %3 : i1 to i32
    %c0_i32_137 = arith.constant 0 : i32
    %345 = arith.cmpi ne, %344, %c0_i32_137 : i32
    scf.if %345 {
      %c0_138 = arith.constant 0 : index
      %c0_139 = arith.constant 0 : index
      %346 = vector.load %arg8[%c0_138, %c0_139] : memref<8x128xf32, #tpu.memory_space<vmem>>, vector<8x128xf32>
      %c0_140 = arith.constant 0 : index
      %c0_141 = arith.constant 0 : index
      %347 = vector.load %arg6[%c0_140, %c0_141] : memref<8x128xf32, #tpu.memory_space<vmem>>, vector<8x128xf32>
      tpu.vector_store %arg6[%c0_140, %c0_141], %346 {strides = array<i32>} : memref<8x128xf32, #tpu.memory_space<vmem>>, vector<8x128xf32>,
      %c0_142 = arith.constant 0 : index
      %c0_143 = arith.constant 0 : index
      %348 = vector.load %arg9[%c0_142, %c0_143] : memref<8x128xf32, #tpu.memory_space<vmem>>, vector<8x128xf32>
      %c0_144 = arith.constant 0 : index
      %c0_145 = arith.constant 0 : index
      %349 = vector.load %arg7[%c0_144, %c0_145] : memref<8x128xf32, #tpu.memory_space<vmem>>, vector<8x128xf32>
      tpu.vector_store %arg7[%c0_144, %c0_145], %348 {strides = array<i32>} : memref<8x128xf32, #tpu.memory_space<vmem>>, vector<8x128xf32>,
    } else {
    }
    return
  }
  func.func @transform_0(%arg0: i32) -> (i32, i32, i32) {
    %c0_i32 = arith.constant 0 : i32
    %c0_i32_0 = arith.constant 0 : i32
    %c0_i32_1 = arith.constant 0 : i32
    return %arg0, %c0_i32, %c0_i32_0 : i32, i32, i32
  }
  func.func @transform_1(%arg0: i32) -> (i32, i32) {
    %c0_i32 = arith.constant 0 : i32
    %c0_i32_0 = arith.constant 0 : i32
    %c0_i32_1 = arith.constant 0 : i32
    return %c0_i32, %c0_i32_0 : i32, i32
  }
  func.func @transform_2(%arg0: i32) -> (i32, i32) {
    %c0_i32 = arith.constant 0 : i32
    %c0_i32_0 = arith.constant 0 : i32
    %c0_i32_1 = arith.constant 0 : i32
    return %c0_i32, %c0_i32_0 : i32, i32
  }
  func.func @transform_3(%arg0: i32) -> (i32, i32) {
    %c0_i32 = arith.constant 0 : i32
    %c0_i32_0 = arith.constant 0 : i32
    %c0_i32_1 = arith.constant 0 : i32
    return %c0_i32, %c0_i32_0 : i32, i32
  }
  func.func @transform_4(%arg0: i32) -> (i32, i32, i32) {
    %c0_i32 = arith.constant 0 : i32
    %c0_i32_0 = arith.constant 0 : i32
    %c0_i32_1 = arith.constant 0 : i32
    return %arg0, %c0_i32, %c0_i32_0 : i32, i32, i32
  }
  func.func @transform_5(%arg0: i32) -> (i32, i32) {
    %c0_i32 = arith.constant 0 : i32
    %c0_i32_0 = arith.constant 0 : i32
    %c0_i32_1 = arith.constant 0 : i32
    return %c0_i32, %c0_i32_0 : i32, i32
  }
  func.func @transform_6(%arg0: i32) -> (i32, i32) {
    %c0_i32 = arith.constant 0 : i32
    %c0_i32_0 = arith.constant 0 : i32
    %c0_i32_1 = arith.constant 0 : i32
    return %c0_i32, %c0_i32_0 : i32, i32
  }
}

</mosaic_0001>

<llo_original>
// kernel: _rnn_encoder_forward.2
$region0: #{_rnn_encoder_forward.2}
  #allocation0 [shape = 'u32[]', space=smem, size = 0x4, offset = 0x4, fixed_abs, tag = 'smem constant byte address 0x4 - core index']
  #allocation1 [shape = 'u32[72,128]{1,0:T(1,128)}', space=vmem, size = 0x9000, scoped, tag = 'internal scratch']
  #allocation2 [shape = 'f32[8,128]{1,0:T(8,128)}', space=vmem, size = 0x1000, scoped, tag = 'scratch operand']
  #allocation3 [shape = 'f32[8,128]{1,0:T(8,128)}', space=vmem, size = 0x1000, scoped, tag = 'scratch operand']
  %s0 = inlined_call_operand.vmem [shape: f32[8,8,512], index: 0, kind: input, shape index: {}]
  %s1 = inlined_call_operand.vmem [shape: f32[8,128], index: 1, kind: input, shape index: {}]
  %s2 = inlined_call_operand.vmem [shape: f32[8,128], index: 2, kind: input, shape index: {}]
  %s3 = inlined_call_operand.vmem [shape: bf16[128,512], index: 3, kind: input, shape index: {}]
  %s4 = inlined_call_operand.vmem [shape: f32[8,8,128], index: 4, kind: output, shape index: {0}]
  %s5 = inlined_call_operand.vmem [shape: f32[8,128], index: 5, kind: output, shape index: {1}]
  %s6 = inlined_call_operand.vmem [shape: f32[8,128], index: 6, kind: output, shape index: {2}]
  %7 = xla_tuple %s4, %s5, %s6
  %s8 = sld [smem:[#allocation0]]
  $region50: #{_rnn_encoder_forward.2} parent=0
    _
  %s10 = ssub.s32 1, %s8
  %s11 = scalar_select 0, %s10, %s8
  // Predicated region
  $region2: #{_rnn_encoder_forward.2} parent=0 // pred_check
    _
  $region3: #{_rnn_encoder_forward.2} parent=0 // pred_check_branch
    %13 = sbr.rel (0) target = $region5
  $region4: #{_rnn_encoder_forward.2} parent=0 // pred_region
    _
  $region5: #{_rnn_encoder_forward.2} parent=0 // pred_fallthru
    _
  // Predicated region
  $region6: #{_rnn_encoder_forward.2} parent=0 // pred_check
    _
  $region7: #{_rnn_encoder_forward.2} parent=0 // pred_check_branch
    %15 = sbr.rel (0) target = $region9
  $region8: #{_rnn_encoder_forward.2} parent=0 // pred_region
    _
  $region9: #{_rnn_encoder_forward.2} parent=0 // pred_fallthru
    _
  // Predicated region
  $region10: #{_rnn_encoder_forward.2} parent=0 // pred_check
    _
  $region11: #{_rnn_encoder_forward.2} parent=0 // pred_check_branch
    %17 = sbr.rel (0) target = $region13
  $region12: #{_rnn_encoder_forward.2} parent=0 // pred_region
    _
  $region13: #{_rnn_encoder_forward.2} parent=0 // pred_fallthru
    _
  // Predicated region
  $region14: #{_rnn_encoder_forward.2} parent=0 // pred_check
    _
  $region15: #{_rnn_encoder_forward.2} parent=0 // pred_check_branch
    %19 = sbr.rel (0) target = $region17
  $region16: #{_rnn_encoder_forward.2} parent=0 // pred_region
    _
  $region17: #{_rnn_encoder_forward.2} parent=0 // pred_fallthru
    _
  %p20 = scmp.eq.s32.totalorder 0, 0
  // Predicated region
  $region18: #{_rnn_encoder_forward.2} parent=0 // pred_check
    %p21 = pneg %p20
  $region19: #{_rnn_encoder_forward.2} parent=0 // pred_check_branch
    %23 = sbr.rel (%p21) target = $region21
  $region20: #{_rnn_encoder_forward.2} parent=0 // pred_region
    %v24 = vld [vmem:[%s1] sm:$0xff]
    %25 = vst [vmem:[#allocation2] sm:$0xff] %v24
    %v26 = vld [vmem:[%s2] sm:$0xff]
    %27 = vst [vmem:[#allocation3] sm:$0xff] %v26
  $region21: #{_rnn_encoder_forward.2} parent=0 // pred_fallthru
    _
  %v28 = vld [vmem:[#allocation2] sm:$0xff]
  %v29 = vld [vmem:[#allocation3] sm:$0xff]
  %v30 = vld [vmem:[%s0] sm:$0xff]
  %v31 = vld [vmem:[%s0 + $0x8] sm:$0xff]
  %v32 = vld [vmem:[%s0 + $0x10] sm:$0xff]
  %v33 = vld [vmem:[%s0 + $0x18] sm:$0xff]
  %v34 = vpack.c.bf16 %v28, %v28
  %v35 = vld [vmem:[%s3] sm:$0xff]
  %v36 = vld [vmem:[%s3 + $0x8] sm:$0xff]
  %v37 = vld [vmem:[%s3 + $0x10] sm:$0xff]
  %v38 = vld [vmem:[%s3 + $0x18] sm:$0xff]
  %v39 = vld [vmem:[%s3 + $0x20] sm:$0xff]
  %v40 = vld [vmem:[%s3 + $0x28] sm:$0xff]
  %v41 = vld [vmem:[%s3 + $0x30] sm:$0xff]
  %v42 = vld [vmem:[%s3 + $0x38] sm:$0xff]
  %v43 = vld [vmem:[%s3 + $0x40] sm:$0xff]
  %v44 = vld [vmem:[%s3 + $0x48] sm:$0xff]
  %v45 = vld [vmem:[%s3 + $0x50] sm:$0xff]
  %v46 = vld [vmem:[%s3 + $0x58] sm:$0xff]
  %v47 = vld [vmem:[%s3 + $0x60] sm:$0xff]
  %v48 = vld [vmem:[%s3 + $0x68] sm:$0xff]
  %v49 = vld [vmem:[%s3 + $0x70] sm:$0xff]
  %v50 = vld [vmem:[%s3 + $0x78] sm:$0xff]
  %v51 = vld [vmem:[%s3 + $0x80] sm:$0xff]
  %v52 = vld [vmem:[%s3 + $0x88] sm:$0xff]
  %v53 = vld [vmem:[%s3 + $0x90] sm:$0xff]
  %v54 = vld [vmem:[%s3 + $0x98] sm:$0xff]
  %v55 = vld [vmem:[%s3 + $0xa0] sm:$0xff]
  %v56 = vld [vmem:[%s3 + $0xa8] sm:$0xff]
  %v57 = vld [vmem:[%s3 + $0xb0] sm:$0xff]
  %v58 = vld [vmem:[%s3 + $0xb8] sm:$0xff]
  %v59 = vld [vmem:[%s3 + $0xc0] sm:$0xff]
  %v60 = vld [vmem:[%s3 + $0xc8] sm:$0xff]
  %v61 = vld [vmem:[%s3 + $0xd0] sm:$0xff]
  %v62 = vld [vmem:[%s3 + $0xd8] sm:$0xff]
  %v63 = vld [vmem:[%s3 + $0xe0] sm:$0xff]
  %v64 = vld [vmem:[%s3 + $0xe8] sm:$0xff]
  %v65 = vld [vmem:[%s3 + $0xf0] sm:$0xff]
  %v66 = vld [vmem:[%s3 + $0xf8] sm:$0xff]
  %v99 = vunpack.c.l.b16 %v35
  %v100 = vunpack.c.h.b16 %v35
  %v101 = vunpack.c.l.b16 %v36
  %v102 = vunpack.c.h.b16 %v36
  %v103 = vunpack.c.l.b16 %v37
  %v104 = vunpack.c.h.b16 %v37
  %v105 = vunpack.c.l.b16 %v38
  %v106 = vunpack.c.h.b16 %v38
  %v107 = vunpack.c.l.b16 %v39
  %v108 = vunpack.c.h.b16 %v39
  %v109 = vunpack.c.l.b16 %v40
  %v110 = vunpack.c.h.b16 %v40
  %v111 = vunpack.c.l.b16 %v41
  %v112 = vunpack.c.h.b16 %v41
  %v113 = vunpack.c.l.b16 %v42
  %v114 = vunpack.c.h.b16 %v42
  %v115 = vunpack.c.l.b16 %v43
  %v116 = vunpack.c.h.b16 %v43
  %v117 = vunpack.c.l.b16 %v44
  %v118 = vunpack.c.h.b16 %v44
  %v119 = vunpack.c.l.b16 %v45
  %v120 = vunpack.c.h.b16 %v45
  %v121 = vunpack.c.l.b16 %v46
  %v122 = vunpack.c.h.b16 %v46
  %v123 = vunpack.c.l.b16 %v47
  %v124 = vunpack.c.h.b16 %v47
  %v125 = vunpack.c.l.b16 %v48
  %v126 = vunpack.c.h.b16 %v48
  %v127 = vunpack.c.l.b16 %v49
  %v128 = vunpack.c.h.b16 %v49
  %v129 = vunpack.c.l.b16 %v50
  %v130 = vunpack.c.h.b16 %v50
  %v131 = vunpack.c.l.b16 %v51
  %v132 = vunpack.c.h.b16 %v51
  %v133 = vunpack.c.l.b16 %v52
  %v134 = vunpack.c.h.b16 %v52
  %v135 = vunpack.c.l.b16 %v53
  %v136 = vunpack.c.h.b16 %v53
  %v137 = vunpack.c.l.b16 %v54
  %v138 = vunpack.c.h.b16 %v54
  %v139 = vunpack.c.l.b16 %v55
  %v140 = vunpack.c.h.b16 %v55
  %v141 = vunpack.c.l.b16 %v56
  %v142 = vunpack.c.h.b16 %v56
  %v143 = vunpack.c.l.b16 %v57
  %v144 = vunpack.c.h.b16 %v57
  %v145 = vunpack.c.l.b16 %v58
  %v146 = vunpack.c.h.b16 %v58
  %v147 = vunpack.c.l.b16 %v59
  %v148 = vunpack.c.h.b16 %v59
  %v149 = vunpack.c.l.b16 %v60
  %v150 = vunpack.c.h.b16 %v60
  %v151 = vunpack.c.l.b16 %v61
  %v152 = vunpack.c.h.b16 %v61
  %v153 = vunpack.c.l.b16 %v62
  %v154 = vunpack.c.h.b16 %v62
  %v155 = vunpack.c.l.b16 %v63
  %v156 = vunpack.c.h.b16 %v63
  %v157 = vunpack.c.l.b16 %v64
  %v158 = vunpack.c.h.b16 %v64
  %v159 = vunpack.c.l.b16 %v65
  %v160 = vunpack.c.h.b16 %v65
  %v161 = vunpack.c.l.b16 %v66
  %v162 = vunpack.c.h.b16 %v66
  %v163 = vpack.c.b16 %v103, %v99
  %v164 = vpack.c.b16 %v104, %v100
  %v165 = vpack.c.b16 %v105, %v101
  %v166 = vpack.c.b16 %v106, %v102
  %v167 = vpack.c.b16 %v111, %v107
  %v168 = vpack.c.b16 %v112, %v108
  %v169 = vpack.c.b16 %v113, %v109
  %v170 = vpack.c.b16 %v114, %v110
  %v171 = vpack.c.b16 %v119, %v115
  %v172 = vpack.c.b16 %v120, %v116
  %v173 = vpack.c.b16 %v121, %v117
  %v174 = vpack.c.b16 %v122, %v118
  %v175 = vpack.c.b16 %v127, %v123
  %v176 = vpack.c.b16 %v128, %v124
  %v177 = vpack.c.b16 %v129, %v125
  %v178 = vpack.c.b16 %v130, %v126
  %v179 = vpack.c.b16 %v135, %v131
  %v180 = vpack.c.b16 %v136, %v132
  %v181 = vpack.c.b16 %v137, %v133
  %v182 = vpack.c.b16 %v138, %v134
  %v183 = vpack.c.b16 %v143, %v139
  %v184 = vpack.c.b16 %v144, %v140
  %v185 = vpack.c.b16 %v145, %v141
  %v186 = vpack.c.b16 %v146, %v142
  %v187 = vpack.c.b16 %v151, %v147
  %v188 = vpack.c.b16 %v152, %v148
  %v189 = vpack.c.b16 %v153, %v149
  %v190 = vpack.c.b16 %v154, %v150
  %v191 = vpack.c.b16 %v159, %v155
  %v192 = vpack.c.b16 %v160, %v156
  %v193 = vpack.c.b16 %v161, %v157
  %v194 = vpack.c.b16 %v162, %v158
  %227 = vmatpush.bf16.msra.mxu0 %v191
  %228 = vmatpush.bf16.msra.mxu0 %v187
  %229 = vmatpush.bf16.msra.mxu0 %v183
  %230 = vmatpush.bf16.msra.mxu0 %v179
  %231 = vmatpush.bf16.msra.mxu0 %v175
  %232 = vmatpush.bf16.msra.mxu0 %v171
  %233 = vmatpush.bf16.msra.mxu0 %v167
  %234 = vmatpush.bf16.msra.mxu0 %v163
  %235 = vmatmul.bf16.gmra.mxu0 %v34
  %v236 = vpop.f32.mrf.mxu0
  %v237 = vadd.f32 0.0, %v236
  %v238 = vpop.f32.mrf.mxu0
  %239 = vdwg.mxu0
  %240 = vmatpush.bf16.msra.mxu0 %v192
  %241 = vmatpush.bf16.msra.mxu0 %v188
  %242 = vmatpush.bf16.msra.mxu0 %v184
  %243 = vmatpush.bf16.msra.mxu0 %v180
  %244 = vmatpush.bf16.msra.mxu0 %v176
  %245 = vmatpush.bf16.msra.mxu0 %v172
  %246 = vmatpush.bf16.msra.mxu0 %v168
  %247 = vmatpush.bf16.msra.mxu0 %v164
  %248 = vmatmul.bf16.gmra.mxu0 %v34
  %v249 = vpop.f32.mrf.mxu0
  %v250 = vadd.f32 0.0, %v249
  %v251 = vpop.f32.mrf.mxu0
  %252 = vdwg.mxu0
  %253 = vmatpush.bf16.msra.mxu0 %v193
  %254 = vmatpush.bf16.msra.mxu0 %v189
  %255 = vmatpush.bf16.msra.mxu0 %v185
  %256 = vmatpush.bf16.msra.mxu0 %v181
  %257 = vmatpush.bf16.msra.mxu0 %v177
  %258 = vmatpush.bf16.msra.mxu0 %v173
  %259 = vmatpush.bf16.msra.mxu0 %v169
  %260 = vmatpush.bf16.msra.mxu0 %v165
  %261 = vmatmul.bf16.gmra.mxu0 %v34
  %v262 = vpop.f32.mrf.mxu0
  %v263 = vadd.f32 0.0, %v262
  %v264 = vpop.f32.mrf.mxu0
  %265 = vdwg.mxu0
  %266 = vmatpush.bf16.msra.mxu0 %v194
  %267 = vmatpush.bf16.msra.mxu0 %v190
  %268 = vmatpush.bf16.msra.mxu0 %v186
  %269 = vmatpush.bf16.msra.mxu0 %v182
  %270 = vmatpush.bf16.msra.mxu0 %v178
  %271 = vmatpush.bf16.msra.mxu0 %v174
  %272 = vmatpush.bf16.msra.mxu0 %v170
  %273 = vmatpush.bf16.msra.mxu0 %v166
  %274 = vmatmul.bf16.gmra.mxu0 %v34
  %v275 = vpop.f32.mrf.mxu0
  %v276 = vadd.f32 0.0, %v275
  %v277 = vpop.f32.mrf.mxu0
  %278 = vdwg.mxu0
  %v279 = vadd.f32 %v30, %v237
  %v280 = vadd.f32 %v31, %v250
  %v281 = vadd.f32 %v32, %v263
  %v282 = vadd.f32 %v33, %v276
  %v283 = vmul.f32 %v279, 0.5
  %v284 = vtanh.pop %v283
  %v285 = vmul.f32 %v284, 0.5
  %v286 = vadd.f32 %v285, 0.5
  %v287 = vmul.f32 %v280, 0.5
  %v288 = vtanh.pop %v287
  %v289 = vmul.f32 %v288, 0.5
  %v290 = vadd.f32 %v289, 0.5
  %v291 = vtanh.pop %v281
  %v292 = vmul.f32 %v282, 0.5
  %v293 = vtanh.pop %v292
  %v294 = vmul.f32 %v293, 0.5
  %v295 = vadd.f32 %v294, 0.5
  %v296 = vmul.f32 %v290, %v29
  %v297 = vmul.f32 %v286, %v291
  %v298 = vadd.f32 %v296, %v297
  %v299 = vtanh.pop %v298
  %v300 = vmul.f32 %v295, %v299
  %301 = vst [vmem:[%s4] sm:$0xff] %v300
  %s302 = scalar_lea.vmem %s0, 32
  %v303 = vld [vmem:[%s302] sm:$0xff]
  %v304 = vld [vmem:[%s302 + $0x8] sm:$0xff]
  %v305 = vld [vmem:[%s302 + $0x10] sm:$0xff]
  %v306 = vld [vmem:[%s302 + $0x18] sm:$0xff]
  %v307 = vpack.c.bf16 %v300, %v300
  %v308 = vld [vmem:[%s3] sm:$0xff]
  %v309 = vld [vmem:[%s3 + $0x8] sm:$0xff]
  %v310 = vld [vmem:[%s3 + $0x10] sm:$0xff]
  %v311 = vld [vmem:[%s3 + $0x18] sm:$0xff]
  %v312 = vld [vmem:[%s3 + $0x20] sm:$0xff]
  %v313 = vld [vmem:[%s3 + $0x28] sm:$0xff]
  %v314 = vld [vmem:[%s3 + $0x30] sm:$0xff]
  %v315 = vld [vmem:[%s3 + $0x38] sm:$0xff]
  %v316 = vld [vmem:[%s3 + $0x40] sm:$0xff]
  %v317 = vld [vmem:[%s3 + $0x48] sm:$0xff]
  %v318 = vld [vmem:[%s3 + $0x50] sm:$0xff]
  %v319 = vld [vmem:[%s3 + $0x58] sm:$0xff]
  %v320 = vld [vmem:[%s3 + $0x60] sm:$0xff]
  %v321 = vld [vmem:[%s3 + $0x68] sm:$0xff]
  %v322 = vld [vmem:[%s3 + $0x70] sm:$0xff]
  %v323 = vld [vmem:[%s3 + $0x78] sm:$0xff]
  %v324 = vld [vmem:[%s3 + $0x80] sm:$0xff]
  %v325 = vld [vmem:[%s3 + $0x88] sm:$0xff]
  %v326 = vld [vmem:[%s3 + $0x90] sm:$0xff]
  %v327 = vld [vmem:[%s3 + $0x98] sm:$0xff]
  %v328 = vld [vmem:[%s3 + $0xa0] sm:$0xff]
  %v329 = vld [vmem:[%s3 + $0xa8] sm:$0xff]
  %v330 = vld [vmem:[%s3 + $0xb0] sm:$0xff]
  %v331 = vld [vmem:[%s3 + $0xb8] sm:$0xff]
  %v332 = vld [vmem:[%s3 + $0xc0] sm:$0xff]
  %v333 = vld [vmem:[%s3 + $0xc8] sm:$0xff]
  %v334 = vld [vmem:[%s3 + $0xd0] sm:$0xff]
  %v335 = vld [vmem:[%s3 + $0xd8] sm:$0xff]
  %v336 = vld [vmem:[%s3 + $0xe0] sm:$0xff]
  %v337 = vld [vmem:[%s3 + $0xe8] sm:$0xff]
  %v338 = vld [vmem:[%s3 + $0xf0] sm:$0xff]
  %v339 = vld [vmem:[%s3 + $0xf8] sm:$0xff]
  %v372 = vunpack.c.l.b16 %v308
  %v373 = vunpack.c.h.b16 %v308
  %v374 = vunpack.c.l.b16 %v309
  %v375 = vunpack.c.h.b16 %v309
  %v376 = vunpack.c.l.b16 %v310
  %v377 = vunpack.c.h.b16 %v310
  %v378 = vunpack.c.l.b16 %v311
  %v379 = vunpack.c.h.b16 %v311
  %v380 = vunpack.c.l.b16 %v312
  %v381 = vunpack.c.h.b16 %v312
  %v382 = vunpack.c.l.b16 %v313
  %v383 = vunpack.c.h.b16 %v313
  %v384 = vunpack.c.l.b16 %v314
  %v385 = vunpack.c.h.b16 %v314
  %v386 = vunpack.c.l.b16 %v315
  %v387 = vunpack.c.h.b16 %v315
  %v388 = vunpack.c.l.b16 %v316
  %v389 = vunpack.c.h.b16 %v316
  %v390 = vunpack.c.l.b16 %v317
  %v391 = vunpack.c.h.b16 %v317
  %v392 = vunpack.c.l.b16 %v318
  %v393 = vunpack.c.h.b16 %v318
  %v394 = vunpack.c.l.b16 %v319
  %v395 = vunpack.c.h.b16 %v319
  %v396 = vunpack.c.l.b16 %v320
  %v397 = vunpack.c.h.b16 %v320
  %v398 = vunpack.c.l.b16 %v321
  %v399 = vunpack.c.h.b16 %v321
  %v400 = vunpack.c.l.b16 %v322
  %v401 = vunpack.c.h.b16 %v322
  %v402 = vunpack.c.l.b16 %v323
  %v403 = vunpack.c.h.b16 %v323
  %v404 = vunpack.c.l.b16 %v324
  %v405 = vunpack.c.h.b16 %v324
  %v406 = vunpack.c.l.b16 %v325
  %v407 = vunpack.c.h.b16 %v325
  %v408 = vunpack.c.l.b16 %v326
  %v409 = vunpack.c.h.b16 %v326
  %v410 = vunpack.c.l.b16 %v327
  %v411 = vunpack.c.h.b16 %v327
  %v412 = vunpack.c.l.b16 %v328
  %v413 = vunpack.c.h.b16 %v328
  %v414 = vunpack.c.l.b16 %v329
  %v415 = vunpack.c.h.b16 %v329
  %v416 = vunpack.c.l.b16 %v330
  %v417 = vunpack.c.h.b16 %v330
  %v418 = vunpack.c.l.b16 %v331
  %v419 = vunpack.c.h.b16 %v331
  %v420 = vunpack.c.l.b16 %v332
  %v421 = vunpack.c.h.b16 %v332
  %v422 = vunpack.c.l.b16 %v333
  %v423 = vunpack.c.h.b16 %v333
  %v424 = vunpack.c.l.b16 %v334
  %v425 = vunpack.c.h.b16 %v334
  %v426 = vunpack.c.l.b16 %v335
  %v427 = vunpack.c.h.b16 %v335
  %v428 = vunpack.c.l.b16 %v336
  %v429 = vunpack.c.h.b16 %v336
  %v430 = vunpack.c.l.b16 %v337
  %v431 = vunpack.c.h.b16 %v337
  %v432 = vunpack.c.l.b16 %v338
  %v433 = vunpack.c.h.b16 %v338
  %v434 = vunpack.c.l.b16 %v339
  %v435 = vunpack.c.h.b16 %v339
  %v436 = vpack.c.b16 %v376, %v372
  %v437 = vpack.c.b16 %v377, %v373
  %v438 = vpack.c.b16 %v378, %v374
  %v439 = vpack.c.b16 %v379, %v375
  %v440 = vpack.c.b16 %v384, %v380
  %v441 = vpack.c.b16 %v385, %v381
  %v442 = vpack.c.b16 %v386, %v382
  %v443 = vpack.c.b16 %v387, %v383
  %v444 = vpack.c.b16 %v392, %v388
  %v445 = vpack.c.b16 %v393, %v389
  %v446 = vpack.c.b16 %v394, %v390
  %v447 = vpack.c.b16 %v395, %v391
  %v448 = vpack.c.b16 %v400, %v396
  %v449 = vpack.c.b16 %v401, %v397
  %v450 = vpack.c.b16 %v402, %v398
  %v451 = vpack.c.b16 %v403, %v399
  %v452 = vpack.c.b16 %v408, %v404
  %v453 = vpack.c.b16 %v409, %v405
  %v454 = vpack.c.b16 %v410, %v406
  %v455 = vpack.c.b16 %v411, %v407
  %v456 = vpack.c.b16 %v416, %v412
  %v457 = vpack.c.b16 %v417, %v413
  %v458 = vpack.c.b16 %v418, %v414
  %v459 = vpack.c.b16 %v419, %v415
  %v460 = vpack.c.b16 %v424, %v420
  %v461 = vpack.c.b16 %v425, %v421
  %v462 = vpack.c.b16 %v426, %v422
  %v463 = vpack.c.b16 %v427, %v423
  %v464 = vpack.c.b16 %v432, %v428
  %v465 = vpack.c.b16 %v433, %v429
  %v466 = vpack.c.b16 %v434, %v430
  %v467 = vpack.c.b16 %v435, %v431
  %500 = vmatpush.bf16.msra.mxu0 %v464
  %501 = vmatpush.bf16.msra.mxu0 %v460
  %502 = vmatpush.bf16.msra.mxu0 %v456
  %503 = vmatpush.bf16.msra.mxu0 %v452
  %504 = vmatpush.bf16.msra.mxu0 %v448
  %505 = vmatpush.bf16.msra.mxu0 %v444
  %506 = vmatpush.bf16.msra.mxu0 %v440
  %507 = vmatpush.bf16.msra.mxu0 %v436
  %508 = vmatmul.bf16.gmra.mxu0 %v307
  %v509 = vpop.f32.mrf.mxu0
  %v510 = vadd.f32 0.0, %v509
  %v511 = vpop.f32.mrf.mxu0
  %512 = vdwg.mxu0
  %513 = vmatpush.bf16.msra.mxu0 %v465
  %514 = vmatpush.bf16.msra.mxu0 %v461
  %515 = vmatpush.bf16.msra.mxu0 %v457
  %516 = vmatpush.bf16.msra.mxu0 %v453
  %517 = vmatpush.bf16.msra.mxu0 %v449
  %518 = vmatpush.bf16.msra.mxu0 %v445
  %519 = vmatpush.bf16.msra.mxu0 %v441
  %520 = vmatpush.bf16.msra.mxu0 %v437
  %521 = vmatmul.bf16.gmra.mxu0 %v307
  %v522 = vpop.f32.mrf.mxu0
  %v523 = vadd.f32 0.0, %v522
  %v524 = vpop.f32.mrf.mxu0
  %525 = vdwg.mxu0
  %526 = vmatpush.bf16.msra.mxu0 %v466
  %527 = vmatpush.bf16.msra.mxu0 %v462
  %528 = vmatpush.bf16.msra.mxu0 %v458
  %529 = vmatpush.bf16.msra.mxu0 %v454
  %530 = vmatpush.bf16.msra.mxu0 %v450
  %531 = vmatpush.bf16.msra.mxu0 %v446
  %532 = vmatpush.bf16.msra.mxu0 %v442
  %533 = vmatpush.bf16.msra.mxu0 %v438
  %534 = vmatmul.bf16.gmra.mxu0 %v307
  %v535 = vpop.f32.mrf.mxu0
  %v536 = vadd.f32 0.0, %v535
  %v537 = vpop.f32.mrf.mxu0
  %538 = vdwg.mxu0
  %539 = vmatpush.bf16.msra.mxu0 %v467
  %540 = vmatpush.bf16.msra.mxu0 %v463
  %541 = vmatpush.bf16.msra.mxu0 %v459
  %542 = vmatpush.bf16.msra.mxu0 %v455
  %543 = vmatpush.bf16.msra.mxu0 %v451
  %544 = vmatpush.bf16.msra.mxu0 %v447
  %545 = vmatpush.bf16.msra.mxu0 %v443
  %546 = vmatpush.bf16.msra.mxu0 %v439
  %547 = vmatmul.bf16.gmra.mxu0 %v307
  %v548 = vpop.f32.mrf.mxu0
  %v549 = vadd.f32 0.0, %v548
  %v550 = vpop.f32.mrf.mxu0
  %551 = vdwg.mxu0
  %v552 = vadd.f32 %v303, %v510
  %v553 = vadd.f32 %v304, %v523
  %v554 = vadd.f32 %v305, %v536
  %v555 = vadd.f32 %v306, %v549
  %v556 = vmul.f32 %v552, 0.5
  %v557 = vtanh.pop %v556
  %v558 = vmul.f32 %v557, 0.5
  %v559 = vadd.f32 %v558, 0.5
  %v560 = vmul.f32 %v553, 0.5
  %v561 = vtanh.pop %v560
  %v562 = vmul.f32 %v561, 0.5
  %v563 = vadd.f32 %v562, 0.5
  %v564 = vtanh.pop %v554
  %v565 = vmul.f32 %v555, 0.5
  %v566 = vtanh.pop %v565
  %v567 = vmul.f32 %v566, 0.5
  %v568 = vadd.f32 %v567, 0.5
  %v569 = vmul.f32 %v563, %v298
  %v570 = vmul.f32 %v559, %v564
  %v571 = vadd.f32 %v569, %v570
  %v572 = vtanh.pop %v571
  %v573 = vmul.f32 %v568, %v572
  %s574 = scalar_lea.vmem %s4, 8
  %575 = vst [vmem:[%s574] sm:$0xff] %v573
  %s576 = scalar_lea.vmem %s0, 64
  %v577 = vld [vmem:[%s576] sm:$0xff]
  %v578 = vld [vmem:[%s576 + $0x8] sm:$0xff]
  %v579 = vld [vmem:[%s576 + $0x10] sm:$0xff]
  %v580 = vld [vmem:[%s576 + $0x18] sm:$0xff]
  %v581 = vpack.c.bf16 %v573, %v573
  %v582 = vld [vmem:[%s3] sm:$0xff]
  %v583 = vld [vmem:[%s3 + $0x8] sm:$0xff]
  %v584 = vld [vmem:[%s3 + $0x10] sm:$0xff]
  %v585 = vld [vmem:[%s3 + $0x18] sm:$0xff]
  %v586 = vld [vmem:[%s3 + $0x20] sm:$0xff]
  %v587 = vld [vmem:[%s3 + $0x28] sm:$0xff]
  %v588 = vld [vmem:[%s3 + $0x30] sm:$0xff]
  %v589 = vld [vmem:[%s3 + $0x38] sm:$0xff]
  %v590 = vld [vmem:[%s3 + $0x40] sm:$0xff]
  %v591 = vld [vmem:[%s3 + $0x48] sm:$0xff]
  %v592 = vld [vmem:[%s3 + $0x50] sm:$0xff]
  %v593 = vld [vmem:[%s3 + $0x58] sm:$0xff]
  %v594 = vld [vmem:[%s3 + $0x60] sm:$0xff]
  %v595 = vld [vmem:[%s3 + $0x68] sm:$0xff]
  %v596 = vld [vmem:[%s3 + $0x70] sm:$0xff]
  %v597 = vld [vmem:[%s3 + $0x78] sm:$0xff]
  %v598 = vld [vmem:[%s3 + $0x80] sm:$0xff]
  %v599 = vld [vmem:[%s3 + $0x88] sm:$0xff]
  %v600 = vld [vmem:[%s3 + $0x90] sm:$0xff]
  %v601 = vld [vmem:[%s3 + $0x98] sm:$0xff]
  %v602 = vld [vmem:[%s3 + $0xa0] sm:$0xff]
  %v603 = vld [vmem:[%s3 + $0xa8] sm:$0xff]
  %v604 = vld [vmem:[%s3 + $0xb0] sm:$0xff]
  %v605 = vld [vmem:[%s3 + $0xb8] sm:$0xff]
  %v606 = vld [vmem:[%s3 + $0xc0] sm:$0xff]
  %v607 = vld [vmem:[%s3 + $0xc8] sm:$0xff]
  %v608 = vld [vmem:[%s3 + $0xd0] sm:$0xff]
  %v609 = vld [vmem:[%s3 + $0xd8] sm:$0xff]
  %v610 = vld [vmem:[%s3 + $0xe0] sm:$0xff]
  %v611 = vld [vmem:[%s3 + $0xe8] sm:$0xff]
  %v612 = vld [vmem:[%s3 + $0xf0] sm:$0xff]
  %v613 = vld [vmem:[%s3 + $0xf8] sm:$0xff]
  %v646 = vunpack.c.l.b16 %v582
  %v647 = vunpack.c.h.b16 %v582
  %v648 = vunpack.c.l.b16 %v583
  %v649 = vunpack.c.h.b16 %v583
  %v650 = vunpack.c.l.b16 %v584
  %v651 = vunpack.c.h.b16 %v584
  %v652 = vunpack.c.l.b16 %v585
  %v653 = vunpack.c.h.b16 %v585
  %v654 = vunpack.c.l.b16 %v586
  %v655 = vunpack.c.h.b16 %v586
  %v656 = vunpack.c.l.b16 %v587
  %v657 = vunpack.c.h.b16 %v587
  %v658 = vunpack.c.l.b16 %v588
  %v659 = vunpack.c.h.b16 %v588
  %v660 = vunpack.c.l.b16 %v589
  %v661 = vunpack.c.h.b16 %v589
  %v662 = vunpack.c.l.b16 %v590
  %v663 = vunpack.c.h.b16 %v590
  %v664 = vunpack.c.l.b16 %v591
  %v665 = vunpack.c.h.b16 %v591
  %v666 = vunpack.c.l.b16 %v592
  %v667 = vunpack.c.h.b16 %v592
  %v668 = vunpack.c.l.b16 %v593
  %v669 = vunpack.c.h.b16 %v593
  %v670 = vunpack.c.l.b16 %v594
  %v671 = vunpack.c.h.b16 %v594
  %v672 = vunpack.c.l.b16 %v595
  %v673 = vunpack.c.h.b16 %v595
  %v674 = vunpack.c.l.b16 %v596
  %v675 = vunpack.c.h.b16 %v596
  %v676 = vunpack.c.l.b16 %v597
  %v677 = vunpack.c.h.b16 %v597
  %v678 = vunpack.c.l.b16 %v598
  %v679 = vunpack.c.h.b16 %v598
  %v680 = vunpack.c.l.b16 %v599
  %v681 = vunpack.c.h.b16 %v599
  %v682 = vunpack.c.l.b16 %v600
  %v683 = vunpack.c.h.b16 %v600
  %v684 = vunpack.c.l.b16 %v601
  %v685 = vunpack.c.h.b16 %v601
  %v686 = vunpack.c.l.b16 %v602
  %v687 = vunpack.c.h.b16 %v602
  %v688 = vunpack.c.l.b16 %v603
  %v689 = vunpack.c.h.b16 %v603
  %v690 = vunpack.c.l.b16 %v604
  %v691 = vunpack.c.h.b16 %v604
  %v692 = vunpack.c.l.b16 %v605
  %v693 = vunpack.c.h.b16 %v605
  %v694 = vunpack.c.l.b16 %v606
  %v695 = vunpack.c.h.b16 %v606
  %v696 = vunpack.c.l.b16 %v607
  %v697 = vunpack.c.h.b16 %v607
  %v698 = vunpack.c.l.b16 %v608
  %v699 = vunpack.c.h.b16 %v608
  %v700 = vunpack.c.l.b16 %v609
  %v701 = vunpack.c.h.b16 %v609
  %v702 = vunpack.c.l.b16 %v610
  %v703 = vunpack.c.h.b16 %v610
  %v704 = vunpack.c.l.b16 %v611
  %v705 = vunpack.c.h.b16 %v611
  %v706 = vunpack.c.l.b16 %v612
  %v707 = vunpack.c.h.b16 %v612
  %v708 = vunpack.c.l.b16 %v613
  %v709 = vunpack.c.h.b16 %v613
  %v710 = vpack.c.b16 %v650, %v646
  %v711 = vpack.c.b16 %v651, %v647
  %v712 = vpack.c.b16 %v652, %v648
  %v713 = vpack.c.b16 %v653, %v649
  %v714 = vpack.c.b16 %v658, %v654
  %v715 = vpack.c.b16 %v659, %v655
  %v716 = vpack.c.b16 %v660, %v656
  %v717 = vpack.c.b16 %v661, %v657
  %v718 = vpack.c.b16 %v666, %v662
  %v719 = vpack.c.b16 %v667, %v663
  %v720 = vpack.c.b16 %v668, %v664
  %v721 = vpack.c.b16 %v669, %v665
  %v722 = vpack.c.b16 %v674, %v670
  %v723 = vpack.c.b16 %v675, %v671
  %v724 = vpack.c.b16 %v676, %v672
  %v725 = vpack.c.b16 %v677, %v673
  %v726 = vpack.c.b16 %v682, %v678
  %v727 = vpack.c.b16 %v683, %v679
  %v728 = vpack.c.b16 %v684, %v680
  %v729 = vpack.c.b16 %v685, %v681
  %v730 = vpack.c.b16 %v690, %v686
  %v731 = vpack.c.b16 %v691, %v687
  %v732 = vpack.c.b16 %v692, %v688
  %v733 = vpack.c.b16 %v693, %v689
  %v734 = vpack.c.b16 %v698, %v694
  %v735 = vpack.c.b16 %v699, %v695
  %v736 = vpack.c.b16 %v700, %v696
  %v737 = vpack.c.b16 %v701, %v697
  %v738 = vpack.c.b16 %v706, %v702
  %v739 = vpack.c.b16 %v707, %v703
  %v740 = vpack.c.b16 %v708, %v704
  %v741 = vpack.c.b16 %v709, %v705
  %774 = vmatpush.bf16.msra.mxu0 %v738
  %775 = vmatpush.bf16.msra.mxu0 %v734
  %776 = vmatpush.bf16.msra.mxu0 %v730
  %777 = vmatpush.bf16.msra.mxu0 %v726
  %778 = vmatpush.bf16.msra.mxu0 %v722
  %779 = vmatpush.bf16.msra.mxu0 %v718
  %780 = vmatpush.bf16.msra.mxu0 %v714
  %781 = vmatpush.bf16.msra.mxu0 %v710
  %782 = vmatmul.bf16.gmra.mxu0 %v581
  %v783 = vpop.f32.mrf.mxu0
  %v784 = vadd.f32 0.0, %v783
  %v785 = vpop.f32.mrf.mxu0
  %786 = vdwg.mxu0
  %787 = vmatpush.bf16.msra.mxu0 %v739
  %788 = vmatpush.bf16.msra.mxu0 %v735
  %789 = vmatpush.bf16.msra.mxu0 %v731
  %790 = vmatpush.bf16.msra.mxu0 %v727
  %791 = vmatpush.bf16.msra.mxu0 %v723
  %792 = vmatpush.bf16.msra.mxu0 %v719
  %793 = vmatpush.bf16.msra.mxu0 %v715
  %794 = vmatpush.bf16.msra.mxu0 %v711
  %795 = vmatmul.bf16.gmra.mxu0 %v581
  %v796 = vpop.f32.mrf.mxu0
  %v797 = vadd.f32 0.0, %v796
  %v798 = vpop.f32.mrf.mxu0
  %799 = vdwg.mxu0
  %800 = vmatpush.bf16.msra.mxu0 %v740
  %801 = vmatpush.bf16.msra.mxu0 %v736
  %802 = vmatpush.bf16.msra.mxu0 %v732
  %803 = vmatpush.bf16.msra.mxu0 %v728
  %804 = vmatpush.bf16.msra.mxu0 %v724
  %805 = vmatpush.bf16.msra.mxu0 %v720
  %806 = vmatpush.bf16.msra.mxu0 %v716
  %807 = vmatpush.bf16.msra.mxu0 %v712
  %808 = vmatmul.bf16.gmra.mxu0 %v581
  %v809 = vpop.f32.mrf.mxu0
  %v810 = vadd.f32 0.0, %v809
  %v811 = vpop.f32.mrf.mxu0
  %812 = vdwg.mxu0
  %813 = vmatpush.bf16.msra.mxu0 %v741
  %814 = vmatpush.bf16.msra.mxu0 %v737
  %815 = vmatpush.bf16.msra.mxu0 %v733
  %816 = vmatpush.bf16.msra.mxu0 %v729
  %817 = vmatpush.bf16.msra.mxu0 %v725
  %818 = vmatpush.bf16.msra.mxu0 %v721
  %819 = vmatpush.bf16.msra.mxu0 %v717
  %820 = vmatpush.bf16.msra.mxu0 %v713
  %821 = vmatmul.bf16.gmra.mxu0 %v581
  %v822 = vpop.f32.mrf.mxu0
  %v823 = vadd.f32 0.0, %v822
  %v824 = vpop.f32.mrf.mxu0
  %825 = vdwg.mxu0
  %v826 = vadd.f32 %v577, %v784
  %v827 = vadd.f32 %v578, %v797
  %v828 = vadd.f32 %v579, %v810
  %v829 = vadd.f32 %v580, %v823
  %v830 = vmul.f32 %v826, 0.5
  %v831 = vtanh.pop %v830
  %v832 = vmul.f32 %v831, 0.5
  %v833 = vadd.f32 %v832, 0.5
  %v834 = vmul.f32 %v827, 0.5
  %v835 = vtanh.pop %v834
  %v836 = vmul.f32 %v835, 0.5
  %v837 = vadd.f32 %v836, 0.5
  %v838 = vtanh.pop %v828
  %v839 = vmul.f32 %v829, 0.5
  %v840 = vtanh.pop %v839
  %v841 = vmul.f32 %v840, 0.5
  %v842 = vadd.f32 %v841, 0.5
  %v843 = vmul.f32 %v837, %v571
  %v844 = vmul.f32 %v833, %v838
  %v845 = vadd.f32 %v843, %v844
  %v846 = vtanh.pop %v845
  %v847 = vmul.f32 %v842, %v846
  %s848 = scalar_lea.vmem %s4, 16
  %849 = vst [vmem:[%s848] sm:$0xff] %v847
  %s850 = scalar_lea.vmem %s0, 96
  %v851 = vld [vmem:[%s850] sm:$0xff]
  %v852 = vld [vmem:[%s850 + $0x8] sm:$0xff]
  %v853 = vld [vmem:[%s850 + $0x10] sm:$0xff]
  %v854 = vld [vmem:[%s850 + $0x18] sm:$0xff]
  %v855 = vpack.c.bf16 %v847, %v847
  %v856 = vld [vmem:[%s3] sm:$0xff]
  %v857 = vld [vmem:[%s3 + $0x8] sm:$0xff]
  %v858 = vld [vmem:[%s3 + $0x10] sm:$0xff]
  %v859 = vld [vmem:[%s3 + $0x18] sm:$0xff]
  %v860 = vld [vmem:[%s3 + $0x20] sm:$0xff]
  %v861 = vld [vmem:[%s3 + $0x28] sm:$0xff]
  %v862 = vld [vmem:[%s3 + $0x30] sm:$0xff]
  %v863 = vld [vmem:[%s3 + $0x38] sm:$0xff]
  %v864 = vld [vmem:[%s3 + $0x40] sm:$0xff]
  %v865 = vld [vmem:[%s3 + $0x48] sm:$0xff]
  %v866 = vld [vmem:[%s3 + $0x50] sm:$0xff]
  %v867 = vld [vmem:[%s3 + $0x58] sm:$0xff]
  %v868 = vld [vmem:[%s3 + $0x60] sm:$0xff]
  %v869 = vld [vmem:[%s3 + $0x68] sm:$0xff]
  %v870 = vld [vmem:[%s3 + $0x70] sm:$0xff]
  %v871 = vld [vmem:[%s3 + $0x78] sm:$0xff]
  %v872 = vld [vmem:[%s3 + $0x80] sm:$0xff]
  %v873 = vld [vmem:[%s3 + $0x88] sm:$0xff]
  %v874 = vld [vmem:[%s3 + $0x90] sm:$0xff]
  %v875 = vld [vmem:[%s3 + $0x98] sm:$0xff]
  %v876 = vld [vmem:[%s3 + $0xa0] sm:$0xff]
  %v877 = vld [vmem:[%s3 + $0xa8] sm:$0xff]
  %v878 = vld [vmem:[%s3 + $0xb0] sm:$0xff]
  %v879 = vld [vmem:[%s3 + $0xb8] sm:$0xff]
  %v880 = vld [vmem:[%s3 + $0xc0] sm:$0xff]
  %v881 = vld [vmem:[%s3 + $0xc8] sm:$0xff]
  %v882 = vld [vmem:[%s3 + $0xd0] sm:$0xff]
  %v883 = vld [vmem:[%s3 + $0xd8] sm:$0xff]
  %v884 = vld [vmem:[%s3 + $0xe0] sm:$0xff]
  %v885 = vld [vmem:[%s3 + $0xe8] sm:$0xff]
  %v886 = vld [vmem:[%s3 + $0xf0] sm:$0xff]
  %v887 = vld [vmem:[%s3 + $0xf8] sm:$0xff]
  %v920 = vunpack.c.l.b16 %v856
  %v921 = vunpack.c.h.b16 %v856
  %v922 = vunpack.c.l.b16 %v857
  %v923 = vunpack.c.h.b16 %v857
  %v924 = vunpack.c.l.b16 %v858
  %v925 = vunpack.c.h.b16 %v858
  %v926 = vunpack.c.l.b16 %v859
  %v927 = vunpack.c.h.b16 %v859
  %v928 = vunpack.c.l.b16 %v860
  %v929 = vunpack.c.h.b16 %v860
  %v930 = vunpack.c.l.b16 %v861
  %v931 = vunpack.c.h.b16 %v861
  %v932 = vunpack.c.l.b16 %v862
  %v933 = vunpack.c.h.b16 %v862
  %v934 = vunpack.c.l.b16 %v863
  %v935 = vunpack.c.h.b16 %v863
  %v936 = vunpack.c.l.b16 %v864
  %v937 = vunpack.c.h.b16 %v864
  %v938 = vunpack.c.l.b16 %v865
  %v939 = vunpack.c.h.b16 %v865
  %v940 = vunpack.c.l.b16 %v866
  %v941 = vunpack.c.h.b16 %v866
  %v942 = vunpack.c.l.b16 %v867
  %v943 = vunpack.c.h.b16 %v867
  %v944 = vunpack.c.l.b16 %v868
  %v945 = vunpack.c.h.b16 %v868
  %v946 = vunpack.c.l.b16 %v869
  %v947 = vunpack.c.h.b16 %v869
  %v948 = vunpack.c.l.b16 %v870
  %v949 = vunpack.c.h.b16 %v870
  %v950 = vunpack.c.l.b16 %v871
  %v951 = vunpack.c.h.b16 %v871
  %v952 = vunpack.c.l.b16 %v872
  %v953 = vunpack.c.h.b16 %v872
  %v954 = vunpack.c.l.b16 %v873
  %v955 = vunpack.c.h.b16 %v873
  %v956 = vunpack.c.l.b16 %v874
  %v957 = vunpack.c.h.b16 %v874
  %v958 = vunpack.c.l.b16 %v875
  %v959 = vunpack.c.h.b16 %v875
  %v960 = vunpack.c.l.b16 %v876
  %v961 = vunpack.c.h.b16 %v876
  %v962 = vunpack.c.l.b16 %v877
  %v963 = vunpack.c.h.b16 %v877
  %v964 = vunpack.c.l.b16 %v878
  %v965 = vunpack.c.h.b16 %v878
  %v966 = vunpack.c.l.b16 %v879
  %v967 = vunpack.c.h.b16 %v879
  %v968 = vunpack.c.l.b16 %v880
  %v969 = vunpack.c.h.b16 %v880
  %v970 = vunpack.c.l.b16 %v881
  %v971 = vunpack.c.h.b16 %v881
  %v972 = vunpack.c.l.b16 %v882
  %v973 = vunpack.c.h.b16 %v882
  %v974 = vunpack.c.l.b16 %v883
  %v975 = vunpack.c.h.b16 %v883
  %v976 = vunpack.c.l.b16 %v884
  %v977 = vunpack.c.h.b16 %v884
  %v978 = vunpack.c.l.b16 %v885
  %v979 = vunpack.c.h.b16 %v885
  %v980 = vunpack.c.l.b16 %v886
  %v981 = vunpack.c.h.b16 %v886
  %v982 = vunpack.c.l.b16 %v887
  %v983 = vunpack.c.h.b16 %v887
  %v984 = vpack.c.b16 %v924, %v920
  %v985 = vpack.c.b16 %v925, %v921
  %v986 = vpack.c.b16 %v926, %v922
  %v987 = vpack.c.b16 %v927, %v923
  %v988 = vpack.c.b16 %v932, %v928
  %v989 = vpack.c.b16 %v933, %v929
  %v990 = vpack.c.b16 %v934, %v930
  %v991 = vpack.c.b16 %v935, %v931
  %v992 = vpack.c.b16 %v940, %v936
  %v993 = vpack.c.b16 %v941, %v937
  %v994 = vpack.c.b16 %v942, %v938
  %v995 = vpack.c.b16 %v943, %v939
  %v996 = vpack.c.b16 %v948, %v944
  %v997 = vpack.c.b16 %v949, %v945
  %v998 = vpack.c.b16 %v950, %v946
  %v999 = vpack.c.b16 %v951, %v947
  %v1000 = vpack.c.b16 %v956, %v952
  %v1001 = vpack.c.b16 %v957, %v953
  %v1002 = vpack.c.b16 %v958, %v954
  %v1003 = vpack.c.b16 %v959, %v955
  %v1004 = vpack.c.b16 %v964, %v960
  %v1005 = vpack.c.b16 %v965, %v961
  %v1006 = vpack.c.b16 %v966, %v962
  %v1007 = vpack.c.b16 %v967, %v963
  %v1008 = vpack.c.b16 %v972, %v968
  %v1009 = vpack.c.b16 %v973, %v969
  %v1010 = vpack.c.b16 %v974, %v970
  %v1011 = vpack.c.b16 %v975, %v971
  %v1012 = vpack.c.b16 %v980, %v976
  %v1013 = vpack.c.b16 %v981, %v977
  %v1014 = vpack.c.b16 %v982, %v978
  %v1015 = vpack.c.b16 %v983, %v979
  %1048 = vmatpush.bf16.msra.mxu0 %v1012
  %1049 = vmatpush.bf16.msra.mxu0 %v1008
  %1050 = vmatpush.bf16.msra.mxu0 %v1004
  %1051 = vmatpush.bf16.msra.mxu0 %v1000
  %1052 = vmatpush.bf16.msra.mxu0 %v996
  %1053 = vmatpush.bf16.msra.mxu0 %v992
  %1054 = vmatpush.bf16.msra.mxu0 %v988
  %1055 = vmatpush.bf16.msra.mxu0 %v984
  %1056 = vmatmul.bf16.gmra.mxu0 %v855
  %v1057 = vpop.f32.mrf.mxu0
  %v1058 = vadd.f32 0.0, %v1057
  %v1059 = vpop.f32.mrf.mxu0
  %1060 = vdwg.mxu0
  %1061 = vmatpush.bf16.msra.mxu0 %v1013
  %1062 = vmatpush.bf16.msra.mxu0 %v1009
  %1063 = vmatpush.bf16.msra.mxu0 %v1005
  %1064 = vmatpush.bf16.msra.mxu0 %v1001
  %1065 = vmatpush.bf16.msra.mxu0 %v997
  %1066 = vmatpush.bf16.msra.mxu0 %v993
  %1067 = vmatpush.bf16.msra.mxu0 %v989
  %1068 = vmatpush.bf16.msra.mxu0 %v985
  %1069 = vmatmul.bf16.gmra.mxu0 %v855
  %v1070 = vpop.f32.mrf.mxu0
  %v1071 = vadd.f32 0.0, %v1070
  %v1072 = vpop.f32.mrf.mxu0
  %1073 = vdwg.mxu0
  %1074 = vmatpush.bf16.msra.mxu0 %v1014
  %1075 = vmatpush.bf16.msra.mxu0 %v1010
  %1076 = vmatpush.bf16.msra.mxu0 %v1006
  %1077 = vmatpush.bf16.msra.mxu0 %v1002
  %1078 = vmatpush.bf16.msra.mxu0 %v998
  %1079 = vmatpush.bf16.msra.mxu0 %v994
  %1080 = vmatpush.bf16.msra.mxu0 %v990
  %1081 = vmatpush.bf16.msra.mxu0 %v986
  %1082 = vmatmul.bf16.gmra.mxu0 %v855
  %v1083 = vpop.f32.mrf.mxu0
  %v1084 = vadd.f32 0.0, %v1083
  %v1085 = vpop.f32.mrf.mxu0
  %1086 = vdwg.mxu0
  %1087 = vmatpush.bf16.msra.mxu0 %v1015
  %1088 = vmatpush.bf16.msra.mxu0 %v1011
  %1089 = vmatpush.bf16.msra.mxu0 %v1007
  %1090 = vmatpush.bf16.msra.mxu0 %v1003
  %1091 = vmatpush.bf16.msra.mxu0 %v999
  %1092 = vmatpush.bf16.msra.mxu0 %v995
  %1093 = vmatpush.bf16.msra.mxu0 %v991
  %1094 = vmatpush.bf16.msra.mxu0 %v987
  %1095 = vmatmul.bf16.gmra.mxu0 %v855
  %v1096 = vpop.f32.mrf.mxu0
  %v1097 = vadd.f32 0.0, %v1096
  %v1098 = vpop.f32.mrf.mxu0
  %1099 = vdwg.mxu0
  %v1100 = vadd.f32 %v851, %v1058
  %v1101 = vadd.f32 %v852, %v1071
  %v1102 = vadd.f32 %v853, %v1084
  %v1103 = vadd.f32 %v854, %v1097
  %v1104 = vmul.f32 %v1100, 0.5
  %v1105 = vtanh.pop %v1104
  %v1106 = vmul.f32 %v1105, 0.5
  %v1107 = vadd.f32 %v1106, 0.5
  %v1108 = vmul.f32 %v1101, 0.5
  %v1109 = vtanh.pop %v1108
  %v1110 = vmul.f32 %v1109, 0.5
  %v1111 = vadd.f32 %v1110, 0.5
  %v1112 = vtanh.pop %v1102
  %v1113 = vmul.f32 %v1103, 0.5
  %v1114 = vtanh.pop %v1113
  %v1115 = vmul.f32 %v1114, 0.5
  %v1116 = vadd.f32 %v1115, 0.5
  %v1117 = vmul.f32 %v1111, %v845
  %v1118 = vmul.f32 %v1107, %v1112
  %v1119 = vadd.f32 %v1117, %v1118
  %v1120 = vtanh.pop %v1119
  %v1121 = vmul.f32 %v1116, %v1120
  %s1122 = scalar_lea.vmem %s4, 24
  %1123 = vst [vmem:[%s1122] sm:$0xff] %v1121
  %s1124 = scalar_lea.vmem %s0, 128
  %v1125 = vld [vmem:[%s1124] sm:$0xff]
  %v1126 = vld [vmem:[%s1124 + $0x8] sm:$0xff]
  %v1127 = vld [vmem:[%s1124 + $0x10] sm:$0xff]
  %v1128 = vld [vmem:[%s1124 + $0x18] sm:$0xff]
  %v1129 = vpack.c.bf16 %v1121, %v1121
  %v1130 = vld [vmem:[%s3] sm:$0xff]
  %v1131 = vld [vmem:[%s3 + $0x8] sm:$0xff]
  %v1132 = vld [vmem:[%s3 + $0x10] sm:$0xff]
  %v1133 = vld [vmem:[%s3 + $0x18] sm:$0xff]
  %v1134 = vld [vmem:[%s3 + $0x20] sm:$0xff]
  %v1135 = vld [vmem:[%s3 + $0x28] sm:$0xff]
  %v1136 = vld [vmem:[%s3 + $0x30] sm:$0xff]
  %v1137 = vld [vmem:[%s3 + $0x38] sm:$0xff]
  %v1138 = vld [vmem:[%s3 + $0x40] sm:$0xff]
  %v1139 = vld [vmem:[%s3 + $0x48] sm:$0xff]
  %v1140 = vld [vmem:[%s3 + $0x50] sm:$0xff]
  %v1141 = vld [vmem:[%s3 + $0x58] sm:$0xff]
  %v1142 = vld [vmem:[%s3 + $0x60] sm:$0xff]
  %v1143 = vld [vmem:[%s3 + $0x68] sm:$0xff]
  %v1144 = vld [vmem:[%s3 + $0x70] sm:$0xff]
  %v1145 = vld [vmem:[%s3 + $0x78] sm:$0xff]
  %v1146 = vld [vmem:[%s3 + $0x80] sm:$0xff]
  %v1147 = vld [vmem:[%s3 + $0x88] sm:$0xff]
  %v1148 = vld [vmem:[%s3 + $0x90] sm:$0xff]
  %v1149 = vld [vmem:[%s3 + $0x98] sm:$0xff]
  %v1150 = vld [vmem:[%s3 + $0xa0] sm:$0xff]
  %v1151 = vld [vmem:[%s3 + $0xa8] sm:$0xff]
  %v1152 = vld [vmem:[%s3 + $0xb0] sm:$0xff]
  %v1153 = vld [vmem:[%s3 + $0xb8] sm:$0xff]
  %v1154 = vld [vmem:[%s3 + $0xc0] sm:$0xff]
  %v1155 = vld [vmem:[%s3 + $0xc8] sm:$0xff]
  %v1156 = vld [vmem:[%s3 + $0xd0] sm:$0xff]
  %v1157 = vld [vmem:[%s3 + $0xd8] sm:$0xff]
  %v1158 = vld [vmem:[%s3 + $0xe0] sm:$0xff]
  %v1159 = vld [vmem:[%s3 + $0xe8] sm:$0xff]
  %v1160 = vld [vmem:[%s3 + $0xf0] sm:$0xff]
  %v1161 = vld [vmem:[%s3 + $0xf8] sm:$0xff]
  %v1194 = vunpack.c.l.b16 %v1130
  %v1195 = vunpack.c.h.b16 %v1130
  %v1196 = vunpack.c.l.b16 %v1131
  %v1197 = vunpack.c.h.b16 %v1131
  %v1198 = vunpack.c.l.b16 %v1132
  %v1199 = vunpack.c.h.b16 %v1132
  %v1200 = vunpack.c.l.b16 %v1133
  %v1201 = vunpack.c.h.b16 %v1133
  %v1202 = vunpack.c.l.b16 %v1134
  %v1203 = vunpack.c.h.b16 %v1134
  %v1204 = vunpack.c.l.b16 %v1135
  %v1205 = vunpack.c.h.b16 %v1135
  %v1206 = vunpack.c.l.b16 %v1136
  %v1207 = vunpack.c.h.b16 %v1136
  %v1208 = vunpack.c.l.b16 %v1137
  %v1209 = vunpack.c.h.b16 %v1137
  %v1210 = vunpack.c.l.b16 %v1138
  %v1211 = vunpack.c.h.b16 %v1138
  %v1212 = vunpack.c.l.b16 %v1139
  %v1213 = vunpack.c.h.b16 %v1139
  %v1214 = vunpack.c.l.b16 %v1140
  %v1215 = vunpack.c.h.b16 %v1140
  %v1216 = vunpack.c.l.b16 %v1141
  %v1217 = vunpack.c.h.b16 %v1141
  %v1218 = vunpack.c.l.b16 %v1142
  %v1219 = vunpack.c.h.b16 %v1142
  %v1220 = vunpack.c.l.b16 %v1143
  %v1221 = vunpack.c.h.b16 %v1143
  %v1222 = vunpack.c.l.b16 %v1144
  %v1223 = vunpack.c.h.b16 %v1144
  %v1224 = vunpack.c.l.b16 %v1145
  %v1225 = vunpack.c.h.b16 %v1145
  %v1226 = vunpack.c.l.b16 %v1146
  %v1227 = vunpack.c.h.b16 %v1146
  %v1228 = vunpack.c.l.b16 %v1147
  %v1229 = vunpack.c.h.b16 %v1147
  %v1230 = vunpack.c.l.b16 %v1148
  %v1231 = vunpack.c.h.b16 %v1148
  %v1232 = vunpack.c.l.b16 %v1149
  %v1233 = vunpack.c.h.b16 %v1149
  %v1234 = vunpack.c.l.b16 %v1150
  %v1235 = vunpack.c.h.b16 %v1150
  %v1236 = vunpack.c.l.b16 %v1151
  %v1237 = vunpack.c.h.b16 %v1151
  %v1238 = vunpack.c.l.b16 %v1152
  %v1239 = vunpack.c.h.b16 %v1152
  %v1240 = vunpack.c.l.b16 %v1153
  %v1241 = vunpack.c.h.b16 %v1153
  %v1242 = vunpack.c.l.b16 %v1154
  %v1243 = vunpack.c.h.b16 %v1154
  %v1244 = vunpack.c.l.b16 %v1155
  %v1245 = vunpack.c.h.b16 %v1155
  %v1246 = vunpack.c.l.b16 %v1156
  %v1247 = vunpack.c.h.b16 %v1156
  %v1248 = vunpack.c.l.b16 %v1157
  %v1249 = vunpack.c.h.b16 %v1157
  %v1250 = vunpack.c.l.b16 %v1158
  %v1251 = vunpack.c.h.b16 %v1158
  %v1252 = vunpack.c.l.b16 %v1159
  %v1253 = vunpack.c.h.b16 %v1159
  %v1254 = vunpack.c.l.b16 %v1160
  %v1255 = vunpack.c.h.b16 %v1160
  %v1256 = vunpack.c.l.b16 %v1161
  %v1257 = vunpack.c.h.b16 %v1161
  %v1258 = vpack.c.b16 %v1198, %v1194
  %v1259 = vpack.c.b16 %v1199, %v1195
  %v1260 = vpack.c.b16 %v1200, %v1196
  %v1261 = vpack.c.b16 %v1201, %v1197
  %v1262 = vpack.c.b16 %v1206, %v1202
  %v1263 = vpack.c.b16 %v1207, %v1203
  %v1264 = vpack.c.b16 %v1208, %v1204
  %v1265 = vpack.c.b16 %v1209, %v1205
  %v1266 = vpack.c.b16 %v1214, %v1210
  %v1267 = vpack.c.b16 %v1215, %v1211
  %v1268 = vpack.c.b16 %v1216, %v1212
  %v1269 = vpack.c.b16 %v1217, %v1213
  %v1270 = vpack.c.b16 %v1222, %v1218
  %v1271 = vpack.c.b16 %v1223, %v1219
  %v1272 = vpack.c.b16 %v1224, %v1220
  %v1273 = vpack.c.b16 %v1225, %v1221
  %v1274 = vpack.c.b16 %v1230, %v1226
  %v1275 = vpack.c.b16 %v1231, %v1227
  %v1276 = vpack.c.b16 %v1232, %v1228
  %v1277 = vpack.c.b16 %v1233, %v1229
  %v1278 = vpack.c.b16 %v1238, %v1234
  %v1279 = vpack.c.b16 %v1239, %v1235
  %v1280 = vpack.c.b16 %v1240, %v1236
  %v1281 = vpack.c.b16 %v1241, %v1237
  %v1282 = vpack.c.b16 %v1246, %v1242
  %v1283 = vpack.c.b16 %v1247, %v1243
  %v1284 = vpack.c.b16 %v1248, %v1244
  %v1285 = vpack.c.b16 %v1249, %v1245
  %v1286 = vpack.c.b16 %v1254, %v1250
  %v1287 = vpack.c.b16 %v1255, %v1251
  %v1288 = vpack.c.b16 %v1256, %v1252
  %v1289 = vpack.c.b16 %v1257, %v1253
  %1322 = vmatpush.bf16.msra.mxu0 %v1286
  %1323 = vmatpush.bf16.msra.mxu0 %v1282
  %1324 = vmatpush.bf16.msra.mxu0 %v1278
  %1325 = vmatpush.bf16.msra.mxu0 %v1274
  %1326 = vmatpush.bf16.msra.mxu0 %v1270
  %1327 = vmatpush.bf16.msra.mxu0 %v1266
  %1328 = vmatpush.bf16.msra.mxu0 %v1262
  %1329 = vmatpush.bf16.msra.mxu0 %v1258
  %1330 = vmatmul.bf16.gmra.mxu0 %v1129
  %v1331 = vpop.f32.mrf.mxu0
  %v1332 = vadd.f32 0.0, %v1331
  %v1333 = vpop.f32.mrf.mxu0
  %1334 = vdwg.mxu0
  %1335 = vmatpush.bf16.msra.mxu0 %v1287
  %1336 = vmatpush.bf16.msra.mxu0 %v1283
  %1337 = vmatpush.bf16.msra.mxu0 %v1279
  %1338 = vmatpush.bf16.msra.mxu0 %v1275
  %1339 = vmatpush.bf16.msra.mxu0 %v1271
  %1340 = vmatpush.bf16.msra.mxu0 %v1267
  %1341 = vmatpush.bf16.msra.mxu0 %v1263
  %1342 = vmatpush.bf16.msra.mxu0 %v1259
  %1343 = vmatmul.bf16.gmra.mxu0 %v1129
  %v1344 = vpop.f32.mrf.mxu0
  %v1345 = vadd.f32 0.0, %v1344
  %v1346 = vpop.f32.mrf.mxu0
  %1347 = vdwg.mxu0
  %1348 = vmatpush.bf16.msra.mxu0 %v1288
  %1349 = vmatpush.bf16.msra.mxu0 %v1284
  %1350 = vmatpush.bf16.msra.mxu0 %v1280
  %1351 = vmatpush.bf16.msra.mxu0 %v1276
  %1352 = vmatpush.bf16.msra.mxu0 %v1272
  %1353 = vmatpush.bf16.msra.mxu0 %v1268
  %1354 = vmatpush.bf16.msra.mxu0 %v1264
  %1355 = vmatpush.bf16.msra.mxu0 %v1260
  %1356 = vmatmul.bf16.gmra.mxu0 %v1129
  %v1357 = vpop.f32.mrf.mxu0
  %v1358 = vadd.f32 0.0, %v1357
  %v1359 = vpop.f32.mrf.mxu0
  %1360 = vdwg.mxu0
  %1361 = vmatpush.bf16.msra.mxu0 %v1289
  %1362 = vmatpush.bf16.msra.mxu0 %v1285
  %1363 = vmatpush.bf16.msra.mxu0 %v1281
  %1364 = vmatpush.bf16.msra.mxu0 %v1277
  %1365 = vmatpush.bf16.msra.mxu0 %v1273
  %1366 = vmatpush.bf16.msra.mxu0 %v1269
  %1367 = vmatpush.bf16.msra.mxu0 %v1265
  %1368 = vmatpush.bf16.msra.mxu0 %v1261
  %1369 = vmatmul.bf16.gmra.mxu0 %v1129
  %v1370 = vpop.f32.mrf.mxu0
  %v1371 = vadd.f32 0.0, %v1370
  %v1372 = vpop.f32.mrf.mxu0
  %1373 = vdwg.mxu0
  %v1374 = vadd.f32 %v1125, %v1332
  %v1375 = vadd.f32 %v1126, %v1345
  %v1376 = vadd.f32 %v1127, %v1358
  %v1377 = vadd.f32 %v1128, %v1371
  %v1378 = vmul.f32 %v1374, 0.5
  %v1379 = vtanh.pop %v1378
  %v1380 = vmul.f32 %v1379, 0.5
  %v1381 = vadd.f32 %v1380, 0.5
  %v1382 = vmul.f32 %v1375, 0.5
  %v1383 = vtanh.pop %v1382
  %v1384 = vmul.f32 %v1383, 0.5
  %v1385 = vadd.f32 %v1384, 0.5
  %v1386 = vtanh.pop %v1376
  %v1387 = vmul.f32 %v1377, 0.5
  %v1388 = vtanh.pop %v1387
  %v1389 = vmul.f32 %v1388, 0.5
  %v1390 = vadd.f32 %v1389, 0.5
  %v1391 = vmul.f32 %v1385, %v1119
  %v1392 = vmul.f32 %v1381, %v1386
  %v1393 = vadd.f32 %v1391, %v1392
  %v1394 = vtanh.pop %v1393
  %v1395 = vmul.f32 %v1390, %v1394
  %s1396 = scalar_lea.vmem %s4, 32
  %1397 = vst [vmem:[%s1396] sm:$0xff] %v1395
  %s1398 = scalar_lea.vmem %s0, 160
  %v1399 = vld [vmem:[%s1398] sm:$0xff]
  %v1400 = vld [vmem:[%s1398 + $0x8] sm:$0xff]
  %v1401 = vld [vmem:[%s1398 + $0x10] sm:$0xff]
  %v1402 = vld [vmem:[%s1398 + $0x18] sm:$0xff]
  %v1403 = vpack.c.bf16 %v1395, %v1395
  %v1404 = vld [vmem:[%s3] sm:$0xff]
  %v1405 = vld [vmem:[%s3 + $0x8] sm:$0xff]
  %v1406 = vld [vmem:[%s3 + $0x10] sm:$0xff]
  %v1407 = vld [vmem:[%s3 + $0x18] sm:$0xff]
  %v1408 = vld [vmem:[%s3 + $0x20] sm:$0xff]
  %v1409 = vld [vmem:[%s3 + $0x28] sm:$0xff]
  %v1410 = vld [vmem:[%s3 + $0x30] sm:$0xff]
  %v1411 = vld [vmem:[%s3 + $0x38] sm:$0xff]
  %v1412 = vld [vmem:[%s3 + $0x40] sm:$0xff]
  %v1413 = vld [vmem:[%s3 + $0x48] sm:$0xff]
  %v1414 = vld [vmem:[%s3 + $0x50] sm:$0xff]
  %v1415 = vld [vmem:[%s3 + $0x58] sm:$0xff]
  %v1416 = vld [vmem:[%s3 + $0x60] sm:$0xff]
  %v1417 = vld [vmem:[%s3 + $0x68] sm:$0xff]
  %v1418 = vld [vmem:[%s3 + $0x70] sm:$0xff]
  %v1419 = vld [vmem:[%s3 + $0x78] sm:$0xff]
  %v1420 = vld [vmem:[%s3 + $0x80] sm:$0xff]
  %v1421 = vld [vmem:[%s3 + $0x88] sm:$0xff]
  %v1422 = vld [vmem:[%s3 + $0x90] sm:$0xff]
  %v1423 = vld [vmem:[%s3 + $0x98] sm:$0xff]
  %v1424 = vld [vmem:[%s3 + $0xa0] sm:$0xff]
  %v1425 = vld [vmem:[%s3 + $0xa8] sm:$0xff]
  %v1426 = vld [vmem:[%s3 + $0xb0] sm:$0xff]
  %v1427 = vld [vmem:[%s3 + $0xb8] sm:$0xff]
  %v1428 = vld [vmem:[%s3 + $0xc0] sm:$0xff]
  %v1429 = vld [vmem:[%s3 + $0xc8] sm:$0xff]
  %v1430 = vld [vmem:[%s3 + $0xd0] sm:$0xff]
  %v1431 = vld [vmem:[%s3 + $0xd8] sm:$0xff]
  %v1432 = vld [vmem:[%s3 + $0xe0] sm:$0xff]
  %v1433 = vld [vmem:[%s3 + $0xe8] sm:$0xff]
  %v1434 = vld [vmem:[%s3 + $0xf0] sm:$0xff]
  %v1435 = vld [vmem:[%s3 + $0xf8] sm:$0xff]
  %v1468 = vunpack.c.l.b16 %v1404
  %v1469 = vunpack.c.h.b16 %v1404
  %v1470 = vunpack.c.l.b16 %v1405
  %v1471 = vunpack.c.h.b16 %v1405
  %v1472 = vunpack.c.l.b16 %v1406
  %v1473 = vunpack.c.h.b16 %v1406
  %v1474 = vunpack.c.l.b16 %v1407
  %v1475 = vunpack.c.h.b16 %v1407
  %v1476 = vunpack.c.l.b16 %v1408
  %v1477 = vunpack.c.h.b16 %v1408
  %v1478 = vunpack.c.l.b16 %v1409
  %v1479 = vunpack.c.h.b16 %v1409
  %v1480 = vunpack.c.l.b16 %v1410
  %v1481 = vunpack.c.h.b16 %v1410
  %v1482 = vunpack.c.l.b16 %v1411
  %v1483 = vunpack.c.h.b16 %v1411
  %v1484 = vunpack.c.l.b16 %v1412
  %v1485 = vunpack.c.h.b16 %v1412
  %v1486 = vunpack.c.l.b16 %v1413
  %v1487 = vunpack.c.h.b16 %v1413
  %v1488 = vunpack.c.l.b16 %v1414
  %v1489 = vunpack.c.h.b16 %v1414
  %v1490 = vunpack.c.l.b16 %v1415
  %v1491 = vunpack.c.h.b16 %v1415
  %v1492 = vunpack.c.l.b16 %v1416
  %v1493 = vunpack.c.h.b16 %v1416
  %v1494 = vunpack.c.l.b16 %v1417
  %v1495 = vunpack.c.h.b16 %v1417
  %v1496 = vunpack.c.l.b16 %v1418
  %v1497 = vunpack.c.h.b16 %v1418
  %v1498 = vunpack.c.l.b16 %v1419
  %v1499 = vunpack.c.h.b16 %v1419
  %v1500 = vunpack.c.l.b16 %v1420
  %v1501 = vunpack.c.h.b16 %v1420
  %v1502 = vunpack.c.l.b16 %v1421
  %v1503 = vunpack.c.h.b16 %v1421
  %v1504 = vunpack.c.l.b16 %v1422
  %v1505 = vunpack.c.h.b16 %v1422
  %v1506 = vunpack.c.l.b16 %v1423
  %v1507 = vunpack.c.h.b16 %v1423
  %v1508 = vunpack.c.l.b16 %v1424
  %v1509 = vunpack.c.h.b16 %v1424
  %v1510 = vunpack.c.l.b16 %v1425
  %v1511 = vunpack.c.h.b16 %v1425
  %v1512 = vunpack.c.l.b16 %v1426
  %v1513 = vunpack.c.h.b16 %v1426
  %v1514 = vunpack.c.l.b16 %v1427
  %v1515 = vunpack.c.h.b16 %v1427
  %v1516 = vunpack.c.l.b16 %v1428
  %v1517 = vunpack.c.h.b16 %v1428
  %v1518 = vunpack.c.l.b16 %v1429
  %v1519 = vunpack.c.h.b16 %v1429
  %v1520 = vunpack.c.l.b16 %v1430
  %v1521 = vunpack.c.h.b16 %v1430
  %v1522 = vunpack.c.l.b16 %v1431
  %v1523 = vunpack.c.h.b16 %v1431
  %v1524 = vunpack.c.l.b16 %v1432
  %v1525 = vunpack.c.h.b16 %v1432
  %v1526 = vunpack.c.l.b16 %v1433
  %v1527 = vunpack.c.h.b16 %v1433
  %v1528 = vunpack.c.l.b16 %v1434
  %v1529 = vunpack.c.h.b16 %v1434
  %v1530 = vunpack.c.l.b16 %v1435
  %v1531 = vunpack.c.h.b16 %v1435
  %v1532 = vpack.c.b16 %v1472, %v1468
  %v1533 = vpack.c.b16 %v1473, %v1469
  %v1534 = vpack.c.b16 %v1474, %v1470
  %v1535 = vpack.c.b16 %v1475, %v1471
  %v1536 = vpack.c.b16 %v1480, %v1476
  %v1537 = vpack.c.b16 %v1481, %v1477
  %v1538 = vpack.c.b16 %v1482, %v1478
  %v1539 = vpack.c.b16 %v1483, %v1479
  %v1540 = vpack.c.b16 %v1488, %v1484
  %v1541 = vpack.c.b16 %v1489, %v1485
  %v1542 = vpack.c.b16 %v1490, %v1486
  %v1543 = vpack.c.b16 %v1491, %v1487
  %v1544 = vpack.c.b16 %v1496, %v1492
  %v1545 = vpack.c.b16 %v1497, %v1493
  %v1546 = vpack.c.b16 %v1498, %v1494
  %v1547 = vpack.c.b16 %v1499, %v1495
  %v1548 = vpack.c.b16 %v1504, %v1500
  %v1549 = vpack.c.b16 %v1505, %v1501
  %v1550 = vpack.c.b16 %v1506, %v1502
  %v1551 = vpack.c.b16 %v1507, %v1503
  %v1552 = vpack.c.b16 %v1512, %v1508
  %v1553 = vpack.c.b16 %v1513, %v1509
  %v1554 = vpack.c.b16 %v1514, %v1510
  %v1555 = vpack.c.b16 %v1515, %v1511
  %v1556 = vpack.c.b16 %v1520, %v1516
  %v1557 = vpack.c.b16 %v1521, %v1517
  %v1558 = vpack.c.b16 %v1522, %v1518
  %v1559 = vpack.c.b16 %v1523, %v1519
  %v1560 = vpack.c.b16 %v1528, %v1524
  %v1561 = vpack.c.b16 %v1529, %v1525
  %v1562 = vpack.c.b16 %v1530, %v1526
  %v1563 = vpack.c.b16 %v1531, %v1527
  %1596 = vmatpush.bf16.msra.mxu0 %v1560
  %1597 = vmatpush.bf16.msra.mxu0 %v1556
  %1598 = vmatpush.bf16.msra.mxu0 %v1552
  %1599 = vmatpush.bf16.msra.mxu0 %v1548
  %1600 = vmatpush.bf16.msra.mxu0 %v1544
  %1601 = vmatpush.bf16.msra.mxu0 %v1540
  %1602 = vmatpush.bf16.msra.mxu0 %v1536
  %1603 = vmatpush.bf16.msra.mxu0 %v1532
  %1604 = vmatmul.bf16.gmra.mxu0 %v1403
  %v1605 = vpop.f32.mrf.mxu0
  %v1606 = vadd.f32 0.0, %v1605
  %v1607 = vpop.f32.mrf.mxu0
  %1608 = vdwg.mxu0
  %1609 = vmatpush.bf16.msra.mxu0 %v1561
  %1610 = vmatpush.bf16.msra.mxu0 %v1557
  %1611 = vmatpush.bf16.msra.mxu0 %v1553
  %1612 = vmatpush.bf16.msra.mxu0 %v1549
  %1613 = vmatpush.bf16.msra.mxu0 %v1545
  %1614 = vmatpush.bf16.msra.mxu0 %v1541
  %1615 = vmatpush.bf16.msra.mxu0 %v1537
  %1616 = vmatpush.bf16.msra.mxu0 %v1533
  %1617 = vmatmul.bf16.gmra.mxu0 %v1403
  %v1618 = vpop.f32.mrf.mxu0
  %v1619 = vadd.f32 0.0, %v1618
  %v1620 = vpop.f32.mrf.mxu0
  %1621 = vdwg.mxu0
  %1622 = vmatpush.bf16.msra.mxu0 %v1562
  %1623 = vmatpush.bf16.msra.mxu0 %v1558
  %1624 = vmatpush.bf16.msra.mxu0 %v1554
  %1625 = vmatpush.bf16.msra.mxu0 %v1550
  %1626 = vmatpush.bf16.msra.mxu0 %v1546
  %1627 = vmatpush.bf16.msra.mxu0 %v1542
  %1628 = vmatpush.bf16.msra.mxu0 %v1538
  %1629 = vmatpush.bf16.msra.mxu0 %v1534
  %1630 = vmatmul.bf16.gmra.mxu0 %v1403
  %v1631 = vpop.f32.mrf.mxu0
  %v1632 = vadd.f32 0.0, %v1631
  %v1633 = vpop.f32.mrf.mxu0
  %1634 = vdwg.mxu0
  %1635 = vmatpush.bf16.msra.mxu0 %v1563
  %1636 = vmatpush.bf16.msra.mxu0 %v1559
  %1637 = vmatpush.bf16.msra.mxu0 %v1555
  %1638 = vmatpush.bf16.msra.mxu0 %v1551
  %1639 = vmatpush.bf16.msra.mxu0 %v1547
  %1640 = vmatpush.bf16.msra.mxu0 %v1543
  %1641 = vmatpush.bf16.msra.mxu0 %v1539
  %1642 = vmatpush.bf16.msra.mxu0 %v1535
  %1643 = vmatmul.bf16.gmra.mxu0 %v1403
  %v1644 = vpop.f32.mrf.mxu0
  %v1645 = vadd.f32 0.0, %v1644
  %v1646 = vpop.f32.mrf.mxu0
  %1647 = vdwg.mxu0
  %v1648 = vadd.f32 %v1399, %v1606
  %v1649 = vadd.f32 %v1400, %v1619
  %v1650 = vadd.f32 %v1401, %v1632
  %v1651 = vadd.f32 %v1402, %v1645
  %v1652 = vmul.f32 %v1648, 0.5
  %v1653 = vtanh.pop %v1652
  %v1654 = vmul.f32 %v1653, 0.5
  %v1655 = vadd.f32 %v1654, 0.5
  %v1656 = vmul.f32 %v1649, 0.5
  %v1657 = vtanh.pop %v1656
  %v1658 = vmul.f32 %v1657, 0.5
  %v1659 = vadd.f32 %v1658, 0.5
  %v1660 = vtanh.pop %v1650
  %v1661 = vmul.f32 %v1651, 0.5
  %v1662 = vtanh.pop %v1661
  %v1663 = vmul.f32 %v1662, 0.5
  %v1664 = vadd.f32 %v1663, 0.5
  %v1665 = vmul.f32 %v1659, %v1393
  %v1666 = vmul.f32 %v1655, %v1660
  %v1667 = vadd.f32 %v1665, %v1666
  %v1668 = vtanh.pop %v1667
  %v1669 = vmul.f32 %v1664, %v1668
  %s1670 = scalar_lea.vmem %s4, 40
  %1671 = vst [vmem:[%s1670] sm:$0xff] %v1669
  %s1672 = scalar_lea.vmem %s0, 192
  %v1673 = vld [vmem:[%s1672] sm:$0xff]
  %v1674 = vld [vmem:[%s1672 + $0x8] sm:$0xff]
  %v1675 = vld [vmem:[%s1672 + $0x10] sm:$0xff]
  %v1676 = vld [vmem:[%s1672 + $0x18] sm:$0xff]
  %v1677 = vpack.c.bf16 %v1669, %v1669
  %v1678 = vld [vmem:[%s3] sm:$0xff]
  %v1679 = vld [vmem:[%s3 + $0x8] sm:$0xff]
  %v1680 = vld [vmem:[%s3 + $0x10] sm:$0xff]
  %v1681 = vld [vmem:[%s3 + $0x18] sm:$0xff]
  %v1682 = vld [vmem:[%s3 + $0x20] sm:$0xff]
  %v1683 = vld [vmem:[%s3 + $0x28] sm:$0xff]
  %v1684 = vld [vmem:[%s3 + $0x30] sm:$0xff]
  %v1685 = vld [vmem:[%s3 + $0x38] sm:$0xff]
  %v1686 = vld [vmem:[%s3 + $0x40] sm:$0xff]
  %v1687 = vld [vmem:[%s3 + $0x48] sm:$0xff]
  %v1688 = vld [vmem:[%s3 + $0x50] sm:$0xff]
  %v1689 = vld [vmem:[%s3 + $0x58] sm:$0xff]
  %v1690 = vld [vmem:[%s3 + $0x60] sm:$0xff]
  %v1691 = vld [vmem:[%s3 + $0x68] sm:$0xff]
  %v1692 = vld [vmem:[%s3 + $0x70] sm:$0xff]
  %v1693 = vld [vmem:[%s3 + $0x78] sm:$0xff]
  %v1694 = vld [vmem:[%s3 + $0x80] sm:$0xff]
  %v1695 = vld [vmem:[%s3 + $0x88] sm:$0xff]
  %v1696 = vld [vmem:[%s3 + $0x90] sm:$0xff]
  %v1697 = vld [vmem:[%s3 + $0x98] sm:$0xff]
  %v1698 = vld [vmem:[%s3 + $0xa0] sm:$0xff]
  %v1699 = vld [vmem:[%s3 + $0xa8] sm:$0xff]
  %v1700 = vld [vmem:[%s3 + $0xb0] sm:$0xff]
  %v1701 = vld [vmem:[%s3 + $0xb8] sm:$0xff]
  %v1702 = vld [vmem:[%s3 + $0xc0] sm:$0xff]
  %v1703 = vld [vmem:[%s3 + $0xc8] sm:$0xff]
  %v1704 = vld [vmem:[%s3 + $0xd0] sm:$0xff]
  %v1705 = vld [vmem:[%s3 + $0xd8] sm:$0xff]
  %v1706 = vld [vmem:[%s3 + $0xe0] sm:$0xff]
  %v1707 = vld [vmem:[%s3 + $0xe8] sm:$0xff]
  %v1708 = vld [vmem:[%s3 + $0xf0] sm:$0xff]
  %v1709 = vld [vmem:[%s3 + $0xf8] sm:$0xff]
  %v1742 = vunpack.c.l.b16 %v1678
  %v1743 = vunpack.c.h.b16 %v1678
  %v1744 = vunpack.c.l.b16 %v1679
  %v1745 = vunpack.c.h.b16 %v1679
  %v1746 = vunpack.c.l.b16 %v1680
  %v1747 = vunpack.c.h.b16 %v1680
  %v1748 = vunpack.c.l.b16 %v1681
  %v1749 = vunpack.c.h.b16 %v1681
  %v1750 = vunpack.c.l.b16 %v1682
  %v1751 = vunpack.c.h.b16 %v1682
  %v1752 = vunpack.c.l.b16 %v1683
  %v1753 = vunpack.c.h.b16 %v1683
  %v1754 = vunpack.c.l.b16 %v1684
  %v1755 = vunpack.c.h.b16 %v1684
  %v1756 = vunpack.c.l.b16 %v1685
  %v1757 = vunpack.c.h.b16 %v1685
  %v1758 = vunpack.c.l.b16 %v1686
  %v1759 = vunpack.c.h.b16 %v1686
  %v1760 = vunpack.c.l.b16 %v1687
  %v1761 = vunpack.c.h.b16 %v1687
  %v1762 = vunpack.c.l.b16 %v1688
  %v1763 = vunpack.c.h.b16 %v1688
  %v1764 = vunpack.c.l.b16 %v1689
  %v1765 = vunpack.c.h.b16 %v1689
  %v1766 = vunpack.c.l.b16 %v1690
  %v1767 = vunpack.c.h.b16 %v1690
  %v1768 = vunpack.c.l.b16 %v1691
  %v1769 = vunpack.c.h.b16 %v1691
  %v1770 = vunpack.c.l.b16 %v1692
  %v1771 = vunpack.c.h.b16 %v1692
  %v1772 = vunpack.c.l.b16 %v1693
  %v1773 = vunpack.c.h.b16 %v1693
  %v1774 = vunpack.c.l.b16 %v1694
  %v1775 = vunpack.c.h.b16 %v1694
  %v1776 = vunpack.c.l.b16 %v1695
  %v1777 = vunpack.c.h.b16 %v1695
  %v1778 = vunpack.c.l.b16 %v1696
  %v1779 = vunpack.c.h.b16 %v1696
  %v1780 = vunpack.c.l.b16 %v1697
  %v1781 = vunpack.c.h.b16 %v1697
  %v1782 = vunpack.c.l.b16 %v1698
  %v1783 = vunpack.c.h.b16 %v1698
  %v1784 = vunpack.c.l.b16 %v1699
  %v1785 = vunpack.c.h.b16 %v1699
  %v1786 = vunpack.c.l.b16 %v1700
  %v1787 = vunpack.c.h.b16 %v1700
  %v1788 = vunpack.c.l.b16 %v1701
  %v1789 = vunpack.c.h.b16 %v1701
  %v1790 = vunpack.c.l.b16 %v1702
  %v1791 = vunpack.c.h.b16 %v1702
  %v1792 = vunpack.c.l.b16 %v1703
  %v1793 = vunpack.c.h.b16 %v1703
  %v1794 = vunpack.c.l.b16 %v1704
  %v1795 = vunpack.c.h.b16 %v1704
  %v1796 = vunpack.c.l.b16 %v1705
  %v1797 = vunpack.c.h.b16 %v1705
  %v1798 = vunpack.c.l.b16 %v1706
  %v1799 = vunpack.c.h.b16 %v1706
  %v1800 = vunpack.c.l.b16 %v1707
  %v1801 = vunpack.c.h.b16 %v1707
  %v1802 = vunpack.c.l.b16 %v1708
  %v1803 = vunpack.c.h.b16 %v1708
  %v1804 = vunpack.c.l.b16 %v1709
  %v1805 = vunpack.c.h.b16 %v1709
  %v1806 = vpack.c.b16 %v1746, %v1742
  %v1807 = vpack.c.b16 %v1747, %v1743
  %v1808 = vpack.c.b16 %v1748, %v1744
  %v1809 = vpack.c.b16 %v1749, %v1745
  %v1810 = vpack.c.b16 %v1754, %v1750
  %v1811 = vpack.c.b16 %v1755, %v1751
  %v1812 = vpack.c.b16 %v1756, %v1752
  %v1813 = vpack.c.b16 %v1757, %v1753
  %v1814 = vpack.c.b16 %v1762, %v1758
  %v1815 = vpack.c.b16 %v1763, %v1759
  %v1816 = vpack.c.b16 %v1764, %v1760
  %v1817 = vpack.c.b16 %v1765, %v1761
  %v1818 = vpack.c.b16 %v1770, %v1766
  %v1819 = vpack.c.b16 %v1771, %v1767
  %v1820 = vpack.c.b16 %v1772, %v1768
  %v1821 = vpack.c.b16 %v1773, %v1769
  %v1822 = vpack.c.b16 %v1778, %v1774
  %v1823 = vpack.c.b16 %v1779, %v1775
  %v1824 = vpack.c.b16 %v1780, %v1776
  %v1825 = vpack.c.b16 %v1781, %v1777
  %v1826 = vpack.c.b16 %v1786, %v1782
  %v1827 = vpack.c.b16 %v1787, %v1783
  %v1828 = vpack.c.b16 %v1788, %v1784
  %v1829 = vpack.c.b16 %v1789, %v1785
  %v1830 = vpack.c.b16 %v1794, %v1790
  %v1831 = vpack.c.b16 %v1795, %v1791
  %v1832 = vpack.c.b16 %v1796, %v1792
  %v1833 = vpack.c.b16 %v1797, %v1793
  %v1834 = vpack.c.b16 %v1802, %v1798
  %v1835 = vpack.c.b16 %v1803, %v1799
  %v1836 = vpack.c.b16 %v1804, %v1800
  %v1837 = vpack.c.b16 %v1805, %v1801
  %1870 = vmatpush.bf16.msra.mxu0 %v1834
  %1871 = vmatpush.bf16.msra.mxu0 %v1830
  %1872 = vmatpush.bf16.msra.mxu0 %v1826
  %1873 = vmatpush.bf16.msra.mxu0 %v1822
  %1874 = vmatpush.bf16.msra.mxu0 %v1818
  %1875 = vmatpush.bf16.msra.mxu0 %v1814
  %1876 = vmatpush.bf16.msra.mxu0 %v1810
  %1877 = vmatpush.bf16.msra.mxu0 %v1806
  %1878 = vmatmul.bf16.gmra.mxu0 %v1677
  %v1879 = vpop.f32.mrf.mxu0
  %v1880 = vadd.f32 0.0, %v1879
  %v1881 = vpop.f32.mrf.mxu0
  %1882 = vdwg.mxu0
  %1883 = vmatpush.bf16.msra.mxu0 %v1835
  %1884 = vmatpush.bf16.msra.mxu0 %v1831
  %1885 = vmatpush.bf16.msra.mxu0 %v1827
  %1886 = vmatpush.bf16.msra.mxu0 %v1823
  %1887 = vmatpush.bf16.msra.mxu0 %v1819
  %1888 = vmatpush.bf16.msra.mxu0 %v1815
  %1889 = vmatpush.bf16.msra.mxu0 %v1811
  %1890 = vmatpush.bf16.msra.mxu0 %v1807
  %1891 = vmatmul.bf16.gmra.mxu0 %v1677
  %v1892 = vpop.f32.mrf.mxu0
  %v1893 = vadd.f32 0.0, %v1892
  %v1894 = vpop.f32.mrf.mxu0
  %1895 = vdwg.mxu0
  %1896 = vmatpush.bf16.msra.mxu0 %v1836
  %1897 = vmatpush.bf16.msra.mxu0 %v1832
  %1898 = vmatpush.bf16.msra.mxu0 %v1828
  %1899 = vmatpush.bf16.msra.mxu0 %v1824
  %1900 = vmatpush.bf16.msra.mxu0 %v1820
  %1901 = vmatpush.bf16.msra.mxu0 %v1816
  %1902 = vmatpush.bf16.msra.mxu0 %v1812
  %1903 = vmatpush.bf16.msra.mxu0 %v1808
  %1904 = vmatmul.bf16.gmra.mxu0 %v1677
  %v1905 = vpop.f32.mrf.mxu0
  %v1906 = vadd.f32 0.0, %v1905
  %v1907 = vpop.f32.mrf.mxu0
  %1908 = vdwg.mxu0
  %1909 = vmatpush.bf16.msra.mxu0 %v1837
  %1910 = vmatpush.bf16.msra.mxu0 %v1833
  %1911 = vmatpush.bf16.msra.mxu0 %v1829
  %1912 = vmatpush.bf16.msra.mxu0 %v1825
  %1913 = vmatpush.bf16.msra.mxu0 %v1821
  %1914 = vmatpush.bf16.msra.mxu0 %v1817
  %1915 = vmatpush.bf16.msra.mxu0 %v1813
  %1916 = vmatpush.bf16.msra.mxu0 %v1809
  %1917 = vmatmul.bf16.gmra.mxu0 %v1677
  %v1918 = vpop.f32.mrf.mxu0
  %v1919 = vadd.f32 0.0, %v1918
  %v1920 = vpop.f32.mrf.mxu0
  %1921 = vdwg.mxu0
  %v1922 = vadd.f32 %v1673, %v1880
  %v1923 = vadd.f32 %v1674, %v1893
  %v1924 = vadd.f32 %v1675, %v1906
  %v1925 = vadd.f32 %v1676, %v1919
  %v1926 = vmul.f32 %v1922, 0.5
  %v1927 = vtanh.pop %v1926
  %v1928 = vmul.f32 %v1927, 0.5
  %v1929 = vadd.f32 %v1928, 0.5
  %v1930 = vmul.f32 %v1923, 0.5
  %v1931 = vtanh.pop %v1930
  %v1932 = vmul.f32 %v1931, 0.5
  %v1933 = vadd.f32 %v1932, 0.5
  %v1934 = vtanh.pop %v1924
  %v1935 = vmul.f32 %v1925, 0.5
  %v1936 = vtanh.pop %v1935
  %v1937 = vmul.f32 %v1936, 0.5
  %v1938 = vadd.f32 %v1937, 0.5
  %v1939 = vmul.f32 %v1933, %v1667
  %v1940 = vmul.f32 %v1929, %v1934
  %v1941 = vadd.f32 %v1939, %v1940
  %v1942 = vtanh.pop %v1941
  %v1943 = vmul.f32 %v1938, %v1942
  %s1944 = scalar_lea.vmem %s4, 48
  %1945 = vst [vmem:[%s1944] sm:$0xff] %v1943
  %s1946 = scalar_lea.vmem %s0, 224
  %v1947 = vld [vmem:[%s1946] sm:$0xff]
  %v1948 = vld [vmem:[%s1946 + $0x8] sm:$0xff]
  %v1949 = vld [vmem:[%s1946 + $0x10] sm:$0xff]
  %v1950 = vld [vmem:[%s1946 + $0x18] sm:$0xff]
  %v1951 = vpack.c.bf16 %v1943, %v1943
  %v1952 = vld [vmem:[%s3] sm:$0xff]
  %v1953 = vld [vmem:[%s3 + $0x8] sm:$0xff]
  %v1954 = vld [vmem:[%s3 + $0x10] sm:$0xff]
  %v1955 = vld [vmem:[%s3 + $0x18] sm:$0xff]
  %v1956 = vld [vmem:[%s3 + $0x20] sm:$0xff]
  %v1957 = vld [vmem:[%s3 + $0x28] sm:$0xff]
  %v1958 = vld [vmem:[%s3 + $0x30] sm:$0xff]
  %v1959 = vld [vmem:[%s3 + $0x38] sm:$0xff]
  %v1960 = vld [vmem:[%s3 + $0x40] sm:$0xff]
  %v1961 = vld [vmem:[%s3 + $0x48] sm:$0xff]
  %v1962 = vld [vmem:[%s3 + $0x50] sm:$0xff]
  %v1963 = vld [vmem:[%s3 + $0x58] sm:$0xff]
  %v1964 = vld [vmem:[%s3 + $0x60] sm:$0xff]
  %v1965 = vld [vmem:[%s3 + $0x68] sm:$0xff]
  %v1966 = vld [vmem:[%s3 + $0x70] sm:$0xff]
  %v1967 = vld [vmem:[%s3 + $0x78] sm:$0xff]
  %v1968 = vld [vmem:[%s3 + $0x80] sm:$0xff]
  %v1969 = vld [vmem:[%s3 + $0x88] sm:$0xff]
  %v1970 = vld [vmem:[%s3 + $0x90] sm:$0xff]
  %v1971 = vld [vmem:[%s3 + $0x98] sm:$0xff]
  %v1972 = vld [vmem:[%s3 + $0xa0] sm:$0xff]
  %v1973 = vld [vmem:[%s3 + $0xa8] sm:$0xff]
  %v1974 = vld [vmem:[%s3 + $0xb0] sm:$0xff]
  %v1975 = vld [vmem:[%s3 + $0xb8] sm:$0xff]
  %v1976 = vld [vmem:[%s3 + $0xc0] sm:$0xff]
  %v1977 = vld [vmem:[%s3 + $0xc8] sm:$0xff]
  %v1978 = vld [vmem:[%s3 + $0xd0] sm:$0xff]
  %v1979 = vld [vmem:[%s3 + $0xd8] sm:$0xff]
  %v1980 = vld [vmem:[%s3 + $0xe0] sm:$0xff]
  %v1981 = vld [vmem:[%s3 + $0xe8] sm:$0xff]
  %v1982 = vld [vmem:[%s3 + $0xf0] sm:$0xff]
  %v1983 = vld [vmem:[%s3 + $0xf8] sm:$0xff]
  %v2016 = vunpack.c.l.b16 %v1952
  %v2017 = vunpack.c.h.b16 %v1952
  %v2018 = vunpack.c.l.b16 %v1953
  %v2019 = vunpack.c.h.b16 %v1953
  %v2020 = vunpack.c.l.b16 %v1954
  %v2021 = vunpack.c.h.b16 %v1954
  %v2022 = vunpack.c.l.b16 %v1955
  %v2023 = vunpack.c.h.b16 %v1955
  %v2024 = vunpack.c.l.b16 %v1956
  %v2025 = vunpack.c.h.b16 %v1956
  %v2026 = vunpack.c.l.b16 %v1957
  %v2027 = vunpack.c.h.b16 %v1957
  %v2028 = vunpack.c.l.b16 %v1958
  %v2029 = vunpack.c.h.b16 %v1958
  %v2030 = vunpack.c.l.b16 %v1959
  %v2031 = vunpack.c.h.b16 %v1959
  %v2032 = vunpack.c.l.b16 %v1960
  %v2033 = vunpack.c.h.b16 %v1960
  %v2034 = vunpack.c.l.b16 %v1961
  %v2035 = vunpack.c.h.b16 %v1961
  %v2036 = vunpack.c.l.b16 %v1962
  %v2037 = vunpack.c.h.b16 %v1962
  %v2038 = vunpack.c.l.b16 %v1963
  %v2039 = vunpack.c.h.b16 %v1963
  %v2040 = vunpack.c.l.b16 %v1964
  %v2041 = vunpack.c.h.b16 %v1964
  %v2042 = vunpack.c.l.b16 %v1965
  %v2043 = vunpack.c.h.b16 %v1965
  %v2044 = vunpack.c.l.b16 %v1966
  %v2045 = vunpack.c.h.b16 %v1966
  %v2046 = vunpack.c.l.b16 %v1967
  %v2047 = vunpack.c.h.b16 %v1967
  %v2048 = vunpack.c.l.b16 %v1968
  %v2049 = vunpack.c.h.b16 %v1968
  %v2050 = vunpack.c.l.b16 %v1969
  %v2051 = vunpack.c.h.b16 %v1969
  %v2052 = vunpack.c.l.b16 %v1970
  %v2053 = vunpack.c.h.b16 %v1970
  %v2054 = vunpack.c.l.b16 %v1971
  %v2055 = vunpack.c.h.b16 %v1971
  %v2056 = vunpack.c.l.b16 %v1972
  %v2057 = vunpack.c.h.b16 %v1972
  %v2058 = vunpack.c.l.b16 %v1973
  %v2059 = vunpack.c.h.b16 %v1973
  %v2060 = vunpack.c.l.b16 %v1974
  %v2061 = vunpack.c.h.b16 %v1974
  %v2062 = vunpack.c.l.b16 %v1975
  %v2063 = vunpack.c.h.b16 %v1975
  %v2064 = vunpack.c.l.b16 %v1976
  %v2065 = vunpack.c.h.b16 %v1976
  %v2066 = vunpack.c.l.b16 %v1977
  %v2067 = vunpack.c.h.b16 %v1977
  %v2068 = vunpack.c.l.b16 %v1978
  %v2069 = vunpack.c.h.b16 %v1978
  %v2070 = vunpack.c.l.b16 %v1979
  %v2071 = vunpack.c.h.b16 %v1979
  %v2072 = vunpack.c.l.b16 %v1980
  %v2073 = vunpack.c.h.b16 %v1980
  %v2074 = vunpack.c.l.b16 %v1981
  %v2075 = vunpack.c.h.b16 %v1981
  %v2076 = vunpack.c.l.b16 %v1982
  %v2077 = vunpack.c.h.b16 %v1982
  %v2078 = vunpack.c.l.b16 %v1983
  %v2079 = vunpack.c.h.b16 %v1983
  %v2080 = vpack.c.b16 %v2020, %v2016
  %v2081 = vpack.c.b16 %v2021, %v2017
  %v2082 = vpack.c.b16 %v2022, %v2018
  %v2083 = vpack.c.b16 %v2023, %v2019
  %v2084 = vpack.c.b16 %v2028, %v2024
  %v2085 = vpack.c.b16 %v2029, %v2025
  %v2086 = vpack.c.b16 %v2030, %v2026
  %v2087 = vpack.c.b16 %v2031, %v2027
  %v2088 = vpack.c.b16 %v2036, %v2032
  %v2089 = vpack.c.b16 %v2037, %v2033
  %v2090 = vpack.c.b16 %v2038, %v2034
  %v2091 = vpack.c.b16 %v2039, %v2035
  %v2092 = vpack.c.b16 %v2044, %v2040
  %v2093 = vpack.c.b16 %v2045, %v2041
  %v2094 = vpack.c.b16 %v2046, %v2042
  %v2095 = vpack.c.b16 %v2047, %v2043
  %v2096 = vpack.c.b16 %v2052, %v2048
  %v2097 = vpack.c.b16 %v2053, %v2049
  %v2098 = vpack.c.b16 %v2054, %v2050
  %v2099 = vpack.c.b16 %v2055, %v2051
  %v2100 = vpack.c.b16 %v2060, %v2056
  %v2101 = vpack.c.b16 %v2061, %v2057
  %v2102 = vpack.c.b16 %v2062, %v2058
  %v2103 = vpack.c.b16 %v2063, %v2059
  %v2104 = vpack.c.b16 %v2068, %v2064
  %v2105 = vpack.c.b16 %v2069, %v2065
  %v2106 = vpack.c.b16 %v2070, %v2066
  %v2107 = vpack.c.b16 %v2071, %v2067
  %v2108 = vpack.c.b16 %v2076, %v2072
  %v2109 = vpack.c.b16 %v2077, %v2073
  %v2110 = vpack.c.b16 %v2078, %v2074
  %v2111 = vpack.c.b16 %v2079, %v2075
  %2144 = vmatpush.bf16.msra.mxu0 %v2108
  %2145 = vmatpush.bf16.msra.mxu0 %v2104
  %2146 = vmatpush.bf16.msra.mxu0 %v2100
  %2147 = vmatpush.bf16.msra.mxu0 %v2096
  %2148 = vmatpush.bf16.msra.mxu0 %v2092
  %2149 = vmatpush.bf16.msra.mxu0 %v2088
  %2150 = vmatpush.bf16.msra.mxu0 %v2084
  %2151 = vmatpush.bf16.msra.mxu0 %v2080
  %2152 = vmatmul.bf16.gmra.mxu0 %v1951
  %v2153 = vpop.f32.mrf.mxu0
  %v2154 = vadd.f32 0.0, %v2153
  %v2155 = vpop.f32.mrf.mxu0
  %2156 = vdwg.mxu0
  %2157 = vmatpush.bf16.msra.mxu0 %v2109
  %2158 = vmatpush.bf16.msra.mxu0 %v2105
  %2159 = vmatpush.bf16.msra.mxu0 %v2101
  %2160 = vmatpush.bf16.msra.mxu0 %v2097
  %2161 = vmatpush.bf16.msra.mxu0 %v2093
  %2162 = vmatpush.bf16.msra.mxu0 %v2089
  %2163 = vmatpush.bf16.msra.mxu0 %v2085
  %2164 = vmatpush.bf16.msra.mxu0 %v2081
  %2165 = vmatmul.bf16.gmra.mxu0 %v1951
  %v2166 = vpop.f32.mrf.mxu0
  %v2167 = vadd.f32 0.0, %v2166
  %v2168 = vpop.f32.mrf.mxu0
  %2169 = vdwg.mxu0
  %2170 = vmatpush.bf16.msra.mxu0 %v2110
  %2171 = vmatpush.bf16.msra.mxu0 %v2106
  %2172 = vmatpush.bf16.msra.mxu0 %v2102
  %2173 = vmatpush.bf16.msra.mxu0 %v2098
  %2174 = vmatpush.bf16.msra.mxu0 %v2094
  %2175 = vmatpush.bf16.msra.mxu0 %v2090
  %2176 = vmatpush.bf16.msra.mxu0 %v2086
  %2177 = vmatpush.bf16.msra.mxu0 %v2082
  %2178 = vmatmul.bf16.gmra.mxu0 %v1951
  %v2179 = vpop.f32.mrf.mxu0
  %v2180 = vadd.f32 0.0, %v2179
  %v2181 = vpop.f32.mrf.mxu0
  %2182 = vdwg.mxu0
  %2183 = vmatpush.bf16.msra.mxu0 %v2111
  %2184 = vmatpush.bf16.msra.mxu0 %v2107
  %2185 = vmatpush.bf16.msra.mxu0 %v2103
  %2186 = vmatpush.bf16.msra.mxu0 %v2099
  %2187 = vmatpush.bf16.msra.mxu0 %v2095
  %2188 = vmatpush.bf16.msra.mxu0 %v2091
  %2189 = vmatpush.bf16.msra.mxu0 %v2087
  %2190 = vmatpush.bf16.msra.mxu0 %v2083
  %2191 = vmatmul.bf16.gmra.mxu0 %v1951
  %v2192 = vpop.f32.mrf.mxu0
  %v2193 = vadd.f32 0.0, %v2192
  %v2194 = vpop.f32.mrf.mxu0
  %2195 = vdwg.mxu0
  %v2196 = vadd.f32 %v1947, %v2154
  %v2197 = vadd.f32 %v1948, %v2167
  %v2198 = vadd.f32 %v1949, %v2180
  %v2199 = vadd.f32 %v1950, %v2193
  %v2200 = vmul.f32 %v2196, 0.5
  %v2201 = vtanh.pop %v2200
  %v2202 = vmul.f32 %v2201, 0.5
  %v2203 = vadd.f32 %v2202, 0.5
  %v2204 = vmul.f32 %v2197, 0.5
  %v2205 = vtanh.pop %v2204
  %v2206 = vmul.f32 %v2205, 0.5
  %v2207 = vadd.f32 %v2206, 0.5
  %v2208 = vtanh.pop %v2198
  %v2209 = vmul.f32 %v2199, 0.5
  %v2210 = vtanh.pop %v2209
  %v2211 = vmul.f32 %v2210, 0.5
  %v2212 = vadd.f32 %v2211, 0.5
  %v2213 = vmul.f32 %v2207, %v1941
  %v2214 = vmul.f32 %v2203, %v2208
  %v2215 = vadd.f32 %v2213, %v2214
  %v2216 = vtanh.pop %v2215
  %v2217 = vmul.f32 %v2212, %v2216
  %s2218 = scalar_lea.vmem %s4, 56
  %2219 = vst [vmem:[%s2218] sm:$0xff] %v2217
  %2220 = vst [vmem:[#allocation2] sm:$0xff] %v2217
  %2221 = vst [vmem:[#allocation3] sm:$0xff] %v2215
  // Predicated region
  $region22: #{_rnn_encoder_forward.2} parent=0 // pred_check
    %p2222 = pneg %p20
  $region23: #{_rnn_encoder_forward.2} parent=0 // pred_check_branch
    %2224 = sbr.rel (%p2222) target = $region25
  $region24: #{_rnn_encoder_forward.2} parent=0 // pred_region
    %v2225 = vld [vmem:[#allocation2] sm:$0xff]
    %2226 = vst [vmem:[%s5] sm:$0xff] %v2225
    %v2227 = vld [vmem:[#allocation3] sm:$0xff]
    %2228 = vst [vmem:[%s6] sm:$0xff] %v2227
  $region25: #{_rnn_encoder_forward.2} parent=0 // pred_fallthru
    _
  // Predicated region
  $region26: #{_rnn_encoder_forward.2} parent=0 // pred_check
    _
  $region27: #{_rnn_encoder_forward.2} parent=0 // pred_check_branch
    %2230 = sbr.rel (0) target = $region29
  $region28: #{_rnn_encoder_forward.2} parent=0 // pred_region
    _
  $region29: #{_rnn_encoder_forward.2} parent=0 // pred_fallthru
    _
  // Predicated region
  $region30: #{_rnn_encoder_forward.2} parent=0 // pred_check
    _
  $region31: #{_rnn_encoder_forward.2} parent=0 // pred_check_branch
    %2232 = sbr.rel (0) target = $region33
  $region32: #{_rnn_encoder_forward.2} parent=0 // pred_region
    _
  $region33: #{_rnn_encoder_forward.2} parent=0 // pred_fallthru
    _
  // Predicated region
  $region34: #{_rnn_encoder_forward.2} parent=0 // pred_check
    _
  $region35: #{_rnn_encoder_forward.2} parent=0 // pred_check_branch
    %2234 = sbr.rel (0) target = $region37
  $region36: #{_rnn_encoder_forward.2} parent=0 // pred_region
    _
  $region37: #{_rnn_encoder_forward.2} parent=0 // pred_fallthru
    _
  // Predicated region
  $region38: #{_rnn_encoder_forward.2} parent=0 // pred_check
    _
  $region39: #{_rnn_encoder_forward.2} parent=0 // pred_check_branch
    %2236 = sbr.rel (0) target = $region41
  $region40: #{_rnn_encoder_forward.2} parent=0 // pred_region
    _
  $region41: #{_rnn_encoder_forward.2} parent=0 // pred_fallthru
    _
  // Predicated region
  $region42: #{_rnn_encoder_forward.2} parent=0 // pred_check
    _
  $region43: #{_rnn_encoder_forward.2} parent=0 // pred_check_branch
    %2238 = sbr.rel (0) target = $region45
  $region44: #{_rnn_encoder_forward.2} parent=0 // pred_region
    _
  $region45: #{_rnn_encoder_forward.2} parent=0 // pred_fallthru
    _
  // Predicated region
  $region46: #{_rnn_encoder_forward.2} parent=0 // pred_check
    _
  $region47: #{_rnn_encoder_forward.2} parent=0 // pred_check_branch
    %2240 = sbr.rel (0) target = $region49
  $region48: #{_rnn_encoder_forward.2} parent=0 // pred_region
    _
  $region49: #{_rnn_encoder_forward.2} parent=0 // pred_fallthru
    _

// kernel: _rnn_encoder_forward.3
$region0: #{_rnn_encoder_forward.3}
  #allocation0 [shape = 'u32[]', space=smem, size = 0x4, offset = 0x4, fixed_abs, tag = 'smem constant byte address 0x4 - core index']
  #allocation1 [shape = 'u32[72,128]{1,0:T(1,128)}', space=vmem, size = 0x9000, scoped, tag = 'internal scratch']
  #allocation2 [shape = 'f32[8,128]{1,0:T(8,128)}', space=vmem, size = 0x1000, scoped, tag = 'scratch operand']
  #allocation3 [shape = 'f32[8,128]{1,0:T(8,128)}', space=vmem, size = 0x1000, scoped, tag = 'scratch operand']
  %s0 = inlined_call_operand.vmem [shape: f32[8,8,512], index: 0, kind: input, shape index: {}]
  %s1 = inlined_call_operand.vmem [shape: f32[8,128], index: 1, kind: input, shape index: {}]
  %s2 = inlined_call_operand.vmem [shape: f32[8,128], index: 2, kind: input, shape index: {}]
  %s3 = inlined_call_operand.vmem [shape: bf16[128,512], index: 3, kind: input, shape index: {}]
  %s4 = inlined_call_operand.hbm [shape: f32[8,8,128], index: 4, kind: output, shape index: {0}]
  %s5 = inlined_call_operand.vmem [shape: f32[8,128], index: 5, kind: output, shape index: {1}]
  %s6 = inlined_call_operand.vmem [shape: f32[8,128], index: 6, kind: output, shape index: {2}]
  %7 = xla_tuple %s4, %s5, %s6
  %s8 = sld [smem:[#allocation0]]
  $region50: #{_rnn_encoder_forward.3} parent=0
    _
  %s10 = ssub.s32 1, %s8
  %s11 = scalar_select 0, %s10, %s8
  $region1: #{_rnn_encoder_forward.3} parent=0
    #allocation4 [shape = 'u8[32768]{0}', space=vmem, size = 0x8000, scoped, tag = 'output window, operand 0, single buffered']
    #allocation5 [shape = 's32[1]{0}', space=sflag, size = 0x4, scoped, tag = 'scoped memory for _rnn_encoder_forward.3']
    %12 = vsyncpa [#allocation5], 0
    // Predicated region
    $region2: #{_rnn_encoder_forward.3} parent=1 // pred_check
      _
    $region3: #{_rnn_encoder_forward.3} parent=1 // pred_check_branch
      %14 = sbr.rel (0) target = $region5
    $region4: #{_rnn_encoder_forward.3} parent=1 // pred_region
      _
    $region5: #{_rnn_encoder_forward.3} parent=1 // pred_fallthru
      _
    // Predicated region
    $region6: #{_rnn_encoder_forward.3} parent=1 // pred_check
      _
    $region7: #{_rnn_encoder_forward.3} parent=1 // pred_check_branch
      %16 = sbr.rel (0) target = $region9
    $region8: #{_rnn_encoder_forward.3} parent=1 // pred_region
      _
    $region9: #{_rnn_encoder_forward.3} parent=1 // pred_fallthru
      _
    // Predicated region
    $region10: #{_rnn_encoder_forward.3} parent=1 // pred_check
      _
    $region11: #{_rnn_encoder_forward.3} parent=1 // pred_check_branch
      %18 = sbr.rel (0) target = $region13
    $region12: #{_rnn_encoder_forward.3} parent=1 // pred_region
      _
    $region13: #{_rnn_encoder_forward.3} parent=1 // pred_fallthru
      _
    // Predicated region
    $region14: #{_rnn_encoder_forward.3} parent=1 // pred_check
      _
    $region15: #{_rnn_encoder_forward.3} parent=1 // pred_check_branch
      %20 = sbr.rel (0) target = $region17
    $region16: #{_rnn_encoder_forward.3} parent=1 // pred_region
      _
    $region17: #{_rnn_encoder_forward.3} parent=1 // pred_fallthru
      _
    %p21 = scmp.eq.s32.totalorder 0, 0
    // Predicated region
    $region18: #{_rnn_encoder_forward.3} parent=1 // pred_check
      %p22 = pneg %p21
    $region19: #{_rnn_encoder_forward.3} parent=1 // pred_check_branch
      %24 = sbr.rel (%p22) target = $region21
    $region20: #{_rnn_encoder_forward.3} parent=1 // pred_region
      %v25 = vld [vmem:[%s1] sm:$0xff]
      %26 = vst [vmem:[#allocation2] sm:$0xff] %v25
      %v27 = vld [vmem:[%s2] sm:$0xff]
      %28 = vst [vmem:[#allocation3] sm:$0xff] %v27
    $region21: #{_rnn_encoder_forward.3} parent=1 // pred_fallthru
      _
    %v29 = vld [vmem:[#allocation2] sm:$0xff]
    %v30 = vld [vmem:[#allocation3] sm:$0xff]
    %v31 = vld [vmem:[%s0] sm:$0xff]
    %v32 = vld [vmem:[%s0 + $0x8] sm:$0xff]
    %v33 = vld [vmem:[%s0 + $0x10] sm:$0xff]
    %v34 = vld [vmem:[%s0 + $0x18] sm:$0xff]
    %v35 = vpack.c.bf16 %v29, %v29
    %v36 = vld [vmem:[%s3] sm:$0xff]
    %v37 = vld [vmem:[%s3 + $0x8] sm:$0xff]
    %v38 = vld [vmem:[%s3 + $0x10] sm:$0xff]
    %v39 = vld [vmem:[%s3 + $0x18] sm:$0xff]
    %v40 = vld [vmem:[%s3 + $0x20] sm:$0xff]
    %v41 = vld [vmem:[%s3 + $0x28] sm:$0xff]
    %v42 = vld [vmem:[%s3 + $0x30] sm:$0xff]
    %v43 = vld [vmem:[%s3 + $0x38] sm:$0xff]
    %v44 = vld [vmem:[%s3 + $0x40] sm:$0xff]
    %v45 = vld [vmem:[%s3 + $0x48] sm:$0xff]
    %v46 = vld [vmem:[%s3 + $0x50] sm:$0xff]
    %v47 = vld [vmem:[%s3 + $0x58] sm:$0xff]
    %v48 = vld [vmem:[%s3 + $0x60] sm:$0xff]
    %v49 = vld [vmem:[%s3 + $0x68] sm:$0xff]
    %v50 = vld [vmem:[%s3 + $0x70] sm:$0xff]
    %v51 = vld [vmem:[%s3 + $0x78] sm:$0xff]
    %v52 = vld [vmem:[%s3 + $0x80] sm:$0xff]
    %v53 = vld [vmem:[%s3 + $0x88] sm:$0xff]
    %v54 = vld [vmem:[%s3 + $0x90] sm:$0xff]
    %v55 = vld [vmem:[%s3 + $0x98] sm:$0xff]
    %v56 = vld [vmem:[%s3 + $0xa0] sm:$0xff]
    %v57 = vld [vmem:[%s3 + $0xa8] sm:$0xff]
    %v58 = vld [vmem:[%s3 + $0xb0] sm:$0xff]
    %v59 = vld [vmem:[%s3 + $0xb8] sm:$0xff]
    %v60 = vld [vmem:[%s3 + $0xc0] sm:$0xff]
    %v61 = vld [vmem:[%s3 + $0xc8] sm:$0xff]
    %v62 = vld [vmem:[%s3 + $0xd0] sm:$0xff]
    %v63 = vld [vmem:[%s3 + $0xd8] sm:$0xff]
    %v64 = vld [vmem:[%s3 + $0xe0] sm:$0xff]
    %v65 = vld [vmem:[%s3 + $0xe8] sm:$0xff]
    %v66 = vld [vmem:[%s3 + $0xf0] sm:$0xff]
    %v67 = vld [vmem:[%s3 + $0xf8] sm:$0xff]
    %v100 = vunpack.c.l.b16 %v36
    %v101 = vunpack.c.h.b16 %v36
    %v102 = vunpack.c.l.b16 %v37
    %v103 = vunpack.c.h.b16 %v37
    %v104 = vunpack.c.l.b16 %v38
    %v105 = vunpack.c.h.b16 %v38
    %v106 = vunpack.c.l.b16 %v39
    %v107 = vunpack.c.h.b16 %v39
    %v108 = vunpack.c.l.b16 %v40
    %v109 = vunpack.c.h.b16 %v40
    %v110 = vunpack.c.l.b16 %v41
    %v111 = vunpack.c.h.b16 %v41
    %v112 = vunpack.c.l.b16 %v42
    %v113 = vunpack.c.h.b16 %v42
    %v114 = vunpack.c.l.b16 %v43
    %v115 = vunpack.c.h.b16 %v43
    %v116 = vunpack.c.l.b16 %v44
    %v117 = vunpack.c.h.b16 %v44
    %v118 = vunpack.c.l.b16 %v45
    %v119 = vunpack.c.h.b16 %v45
    %v120 = vunpack.c.l.b16 %v46
    %v121 = vunpack.c.h.b16 %v46
    %v122 = vunpack.c.l.b16 %v47
    %v123 = vunpack.c.h.b16 %v47
    %v124 = vunpack.c.l.b16 %v48
    %v125 = vunpack.c.h.b16 %v48
    %v126 = vunpack.c.l.b16 %v49
    %v127 = vunpack.c.h.b16 %v49
    %v128 = vunpack.c.l.b16 %v50
    %v129 = vunpack.c.h.b16 %v50
    %v130 = vunpack.c.l.b16 %v51
    %v131 = vunpack.c.h.b16 %v51
    %v132 = vunpack.c.l.b16 %v52
    %v133 = vunpack.c.h.b16 %v52
    %v134 = vunpack.c.l.b16 %v53
    %v135 = vunpack.c.h.b16 %v53
    %v136 = vunpack.c.l.b16 %v54
    %v137 = vunpack.c.h.b16 %v54
    %v138 = vunpack.c.l.b16 %v55
    %v139 = vunpack.c.h.b16 %v55
    %v140 = vunpack.c.l.b16 %v56
    %v141 = vunpack.c.h.b16 %v56
    %v142 = vunpack.c.l.b16 %v57
    %v143 = vunpack.c.h.b16 %v57
    %v144 = vunpack.c.l.b16 %v58
    %v145 = vunpack.c.h.b16 %v58
    %v146 = vunpack.c.l.b16 %v59
    %v147 = vunpack.c.h.b16 %v59
    %v148 = vunpack.c.l.b16 %v60
    %v149 = vunpack.c.h.b16 %v60
    %v150 = vunpack.c.l.b16 %v61
    %v151 = vunpack.c.h.b16 %v61
    %v152 = vunpack.c.l.b16 %v62
    %v153 = vunpack.c.h.b16 %v62
    %v154 = vunpack.c.l.b16 %v63
    %v155 = vunpack.c.h.b16 %v63
    %v156 = vunpack.c.l.b16 %v64
    %v157 = vunpack.c.h.b16 %v64
    %v158 = vunpack.c.l.b16 %v65
    %v159 = vunpack.c.h.b16 %v65
    %v160 = vunpack.c.l.b16 %v66
    %v161 = vunpack.c.h.b16 %v66
    %v162 = vunpack.c.l.b16 %v67
    %v163 = vunpack.c.h.b16 %v67
    %v164 = vpack.c.b16 %v104, %v100
    %v165 = vpack.c.b16 %v105, %v101
    %v166 = vpack.c.b16 %v106, %v102
    %v167 = vpack.c.b16 %v107, %v103
    %v168 = vpack.c.b16 %v112, %v108
    %v169 = vpack.c.b16 %v113, %v109
    %v170 = vpack.c.b16 %v114, %v110
    %v171 = vpack.c.b16 %v115, %v111
    %v172 = vpack.c.b16 %v120, %v116
    %v173 = vpack.c.b16 %v121, %v117
    %v174 = vpack.c.b16 %v122, %v118
    %v175 = vpack.c.b16 %v123, %v119
    %v176 = vpack.c.b16 %v128, %v124
    %v177 = vpack.c.b16 %v129, %v125
    %v178 = vpack.c.b16 %v130, %v126
    %v179 = vpack.c.b16 %v131, %v127
    %v180 = vpack.c.b16 %v136, %v132
    %v181 = vpack.c.b16 %v137, %v133
    %v182 = vpack.c.b16 %v138, %v134
    %v183 = vpack.c.b16 %v139, %v135
    %v184 = vpack.c.b16 %v144, %v140
    %v185 = vpack.c.b16 %v145, %v141
    %v186 = vpack.c.b16 %v146, %v142
    %v187 = vpack.c.b16 %v147, %v143
    %v188 = vpack.c.b16 %v152, %v148
    %v189 = vpack.c.b16 %v153, %v149
    %v190 = vpack.c.b16 %v154, %v150
    %v191 = vpack.c.b16 %v155, %v151
    %v192 = vpack.c.b16 %v160, %v156
    %v193 = vpack.c.b16 %v161, %v157
    %v194 = vpack.c.b16 %v162, %v158
    %v195 = vpack.c.b16 %v163, %v159
    %228 = vmatpush.bf16.msra.mxu0 %v192
    %229 = vmatpush.bf16.msra.mxu0 %v188
    %230 = vmatpush.bf16.msra.mxu0 %v184
    %231 = vmatpush.bf16.msra.mxu0 %v180
    %232 = vmatpush.bf16.msra.mxu0 %v176
    %233 = vmatpush.bf16.msra.mxu0 %v172
    %234 = vmatpush.bf16.msra.mxu0 %v168
    %235 = vmatpush.bf16.msra.mxu0 %v164
    %236 = vmatmul.bf16.gmra.mxu0 %v35
    %v237 = vpop.f32.mrf.mxu0
    %v238 = vadd.f32 0.0, %v237
    %v239 = vpop.f32.mrf.mxu0
    %240 = vdwg.mxu0
    %241 = vmatpush.bf16.msra.mxu0 %v193
    %242 = vmatpush.bf16.msra.mxu0 %v189
    %243 = vmatpush.bf16.msra.mxu0 %v185
    %244 = vmatpush.bf16.msra.mxu0 %v181
    %245 = vmatpush.bf16.msra.mxu0 %v177
    %246 = vmatpush.bf16.msra.mxu0 %v173
    %247 = vmatpush.bf16.msra.mxu0 %v169
    %248 = vmatpush.bf16.msra.mxu0 %v165
    %249 = vmatmul.bf16.gmra.mxu0 %v35
    %v250 = vpop.f32.mrf.mxu0
    %v251 = vadd.f32 0.0, %v250
    %v252 = vpop.f32.mrf.mxu0
    %253 = vdwg.mxu0
    %254 = vmatpush.bf16.msra.mxu0 %v194
    %255 = vmatpush.bf16.msra.mxu0 %v190
    %256 = vmatpush.bf16.msra.mxu0 %v186
    %257 = vmatpush.bf16.msra.mxu0 %v182
    %258 = vmatpush.bf16.msra.mxu0 %v178
    %259 = vmatpush.bf16.msra.mxu0 %v174
    %260 = vmatpush.bf16.msra.mxu0 %v170
    %261 = vmatpush.bf16.msra.mxu0 %v166
    %262 = vmatmul.bf16.gmra.mxu0 %v35
    %v263 = vpop.f32.mrf.mxu0
    %v264 = vadd.f32 0.0, %v263
    %v265 = vpop.f32.mrf.mxu0
    %266 = vdwg.mxu0
    %267 = vmatpush.bf16.msra.mxu0 %v195
    %268 = vmatpush.bf16.msra.mxu0 %v191
    %269 = vmatpush.bf16.msra.mxu0 %v187
    %270 = vmatpush.bf16.msra.mxu0 %v183
    %271 = vmatpush.bf16.msra.mxu0 %v179
    %272 = vmatpush.bf16.msra.mxu0 %v175
    %273 = vmatpush.bf16.msra.mxu0 %v171
    %274 = vmatpush.bf16.msra.mxu0 %v167
    %275 = vmatmul.bf16.gmra.mxu0 %v35
    %v276 = vpop.f32.mrf.mxu0
    %v277 = vadd.f32 0.0, %v276
    %v278 = vpop.f32.mrf.mxu0
    %279 = vdwg.mxu0
    %v280 = vadd.f32 %v31, %v238
    %v281 = vadd.f32 %v32, %v251
    %v282 = vadd.f32 %v33, %v264
    %v283 = vadd.f32 %v34, %v277
    %v284 = vmul.f32 %v280, 0.5
    %v285 = vtanh.pop %v284
    %v286 = vmul.f32 %v285, 0.5
    %v287 = vadd.f32 %v286, 0.5
    %v288 = vmul.f32 %v281, 0.5
    %v289 = vtanh.pop %v288
    %v290 = vmul.f32 %v289, 0.5
    %v291 = vadd.f32 %v290, 0.5
    %v292 = vtanh.pop %v282
    %v293 = vmul.f32 %v283, 0.5
    %v294 = vtanh.pop %v293
    %v295 = vmul.f32 %v294, 0.5
    %v296 = vadd.f32 %v295, 0.5
    %v297 = vmul.f32 %v291, %v30
    %v298 = vmul.f32 %v287, %v292
    %v299 = vadd.f32 %v297, %v298
    %v300 = vtanh.pop %v299
    %v301 = vmul.f32 %v296, %v300
    %302 = vst [vmem:[#allocation4] sm:$0xff] %v301
    %s303 = scalar_lea.vmem %s0, 32
    %v304 = vld [vmem:[%s303] sm:$0xff]
    %v305 = vld [vmem:[%s303 + $0x8] sm:$0xff]
    %v306 = vld [vmem:[%s303 + $0x10] sm:$0xff]
    %v307 = vld [vmem:[%s303 + $0x18] sm:$0xff]
    %v308 = vpack.c.bf16 %v301, %v301
    %v309 = vld [vmem:[%s3] sm:$0xff]
    %v310 = vld [vmem:[%s3 + $0x8] sm:$0xff]
    %v311 = vld [vmem:[%s3 + $0x10] sm:$0xff]
    %v312 = vld [vmem:[%s3 + $0x18] sm:$0xff]
    %v313 = vld [vmem:[%s3 + $0x20] sm:$0xff]
    %v314 = vld [vmem:[%s3 + $0x28] sm:$0xff]
    %v315 = vld [vmem:[%s3 + $0x30] sm:$0xff]
    %v316 = vld [vmem:[%s3 + $0x38] sm:$0xff]
    %v317 = vld [vmem:[%s3 + $0x40] sm:$0xff]
    %v318 = vld [vmem:[%s3 + $0x48] sm:$0xff]
    %v319 = vld [vmem:[%s3 + $0x50] sm:$0xff]
    %v320 = vld [vmem:[%s3 + $0x58] sm:$0xff]
    %v321 = vld [vmem:[%s3 + $0x60] sm:$0xff]
    %v322 = vld [vmem:[%s3 + $0x68] sm:$0xff]
    %v323 = vld [vmem:[%s3 + $0x70] sm:$0xff]
    %v324 = vld [vmem:[%s3 + $0x78] sm:$0xff]
    %v325 = vld [vmem:[%s3 + $0x80] sm:$0xff]
    %v326 = vld [vmem:[%s3 + $0x88] sm:$0xff]
    %v327 = vld [vmem:[%s3 + $0x90] sm:$0xff]
    %v328 = vld [vmem:[%s3 + $0x98] sm:$0xff]
    %v329 = vld [vmem:[%s3 + $0xa0] sm:$0xff]
    %v330 = vld [vmem:[%s3 + $0xa8] sm:$0xff]
    %v331 = vld [vmem:[%s3 + $0xb0] sm:$0xff]
    %v332 = vld [vmem:[%s3 + $0xb8] sm:$0xff]
    %v333 = vld [vmem:[%s3 + $0xc0] sm:$0xff]
    %v334 = vld [vmem:[%s3 + $0xc8] sm:$0xff]
    %v335 = vld [vmem:[%s3 + $0xd0] sm:$0xff]
    %v336 = vld [vmem:[%s3 + $0xd8] sm:$0xff]
    %v337 = vld [vmem:[%s3 + $0xe0] sm:$0xff]
    %v338 = vld [vmem:[%s3 + $0xe8] sm:$0xff]
    %v339 = vld [vmem:[%s3 + $0xf0] sm:$0xff]
    %v340 = vld [vmem:[%s3 + $0xf8] sm:$0xff]
    %v373 = vunpack.c.l.b16 %v309
    %v374 = vunpack.c.h.b16 %v309
    %v375 = vunpack.c.l.b16 %v310
    %v376 = vunpack.c.h.b16 %v310
    %v377 = vunpack.c.l.b16 %v311
    %v378 = vunpack.c.h.b16 %v311
    %v379 = vunpack.c.l.b16 %v312
    %v380 = vunpack.c.h.b16 %v312
    %v381 = vunpack.c.l.b16 %v313
    %v382 = vunpack.c.h.b16 %v313
    %v383 = vunpack.c.l.b16 %v314
    %v384 = vunpack.c.h.b16 %v314
    %v385 = vunpack.c.l.b16 %v315
    %v386 = vunpack.c.h.b16 %v315
    %v387 = vunpack.c.l.b16 %v316
    %v388 = vunpack.c.h.b16 %v316
    %v389 = vunpack.c.l.b16 %v317
    %v390 = vunpack.c.h.b16 %v317
    %v391 = vunpack.c.l.b16 %v318
    %v392 = vunpack.c.h.b16 %v318
    %v393 = vunpack.c.l.b16 %v319
    %v394 = vunpack.c.h.b16 %v319
    %v395 = vunpack.c.l.b16 %v320
    %v396 = vunpack.c.h.b16 %v320
    %v397 = vunpack.c.l.b16 %v321
    %v398 = vunpack.c.h.b16 %v321
    %v399 = vunpack.c.l.b16 %v322
    %v400 = vunpack.c.h.b16 %v322
    %v401 = vunpack.c.l.b16 %v323
    %v402 = vunpack.c.h.b16 %v323
    %v403 = vunpack.c.l.b16 %v324
    %v404 = vunpack.c.h.b16 %v324
    %v405 = vunpack.c.l.b16 %v325
    %v406 = vunpack.c.h.b16 %v325
    %v407 = vunpack.c.l.b16 %v326
    %v408 = vunpack.c.h.b16 %v326
    %v409 = vunpack.c.l.b16 %v327
    %v410 = vunpack.c.h.b16 %v327
    %v411 = vunpack.c.l.b16 %v328
    %v412 = vunpack.c.h.b16 %v328
    %v413 = vunpack.c.l.b16 %v329
    %v414 = vunpack.c.h.b16 %v329
    %v415 = vunpack.c.l.b16 %v330
    %v416 = vunpack.c.h.b16 %v330
    %v417 = vunpack.c.l.b16 %v331
    %v418 = vunpack.c.h.b16 %v331
    %v419 = vunpack.c.l.b16 %v332
    %v420 = vunpack.c.h.b16 %v332
    %v421 = vunpack.c.l.b16 %v333
    %v422 = vunpack.c.h.b16 %v333
    %v423 = vunpack.c.l.b16 %v334
    %v424 = vunpack.c.h.b16 %v334
    %v425 = vunpack.c.l.b16 %v335
    %v426 = vunpack.c.h.b16 %v335
    %v427 = vunpack.c.l.b16 %v336
    %v428 = vunpack.c.h.b16 %v336
    %v429 = vunpack.c.l.b16 %v337
    %v430 = vunpack.c.h.b16 %v337
    %v431 = vunpack.c.l.b16 %v338
    %v432 = vunpack.c.h.b16 %v338
    %v433 = vunpack.c.l.b16 %v339
    %v434 = vunpack.c.h.b16 %v339
    %v435 = vunpack.c.l.b16 %v340
    %v436 = vunpack.c.h.b16 %v340
    %v437 = vpack.c.b16 %v377, %v373
    %v438 = vpack.c.b16 %v378, %v374
    %v439 = vpack.c.b16 %v379, %v375
    %v440 = vpack.c.b16 %v380, %v376
    %v441 = vpack.c.b16 %v385, %v381
    %v442 = vpack.c.b16 %v386, %v382
    %v443 = vpack.c.b16 %v387, %v383
    %v444 = vpack.c.b16 %v388, %v384
    %v445 = vpack.c.b16 %v393, %v389
    %v446 = vpack.c.b16 %v394, %v390
    %v447 = vpack.c.b16 %v395, %v391
    %v448 = vpack.c.b16 %v396, %v392
    %v449 = vpack.c.b16 %v401, %v397
    %v450 = vpack.c.b16 %v402, %v398
    %v451 = vpack.c.b16 %v403, %v399
    %v452 = vpack.c.b16 %v404, %v400
    %v453 = vpack.c.b16 %v409, %v405
    %v454 = vpack.c.b16 %v410, %v406
    %v455 = vpack.c.b16 %v411, %v407
    %v456 = vpack.c.b16 %v412, %v408
    %v457 = vpack.c.b16 %v417, %v413
    %v458 = vpack.c.b16 %v418, %v414
    %v459 = vpack.c.b16 %v419, %v415
    %v460 = vpack.c.b16 %v420, %v416
    %v461 = vpack.c.b16 %v425, %v421
    %v462 = vpack.c.b16 %v426, %v422
    %v463 = vpack.c.b16 %v427, %v423
    %v464 = vpack.c.b16 %v428, %v424
    %v465 = vpack.c.b16 %v433, %v429
    %v466 = vpack.c.b16 %v434, %v430
    %v467 = vpack.c.b16 %v435, %v431
    %v468 = vpack.c.b16 %v436, %v432
    %501 = vmatpush.bf16.msra.mxu0 %v465
    %502 = vmatpush.bf16.msra.mxu0 %v461
    %503 = vmatpush.bf16.msra.mxu0 %v457
    %504 = vmatpush.bf16.msra.mxu0 %v453
    %505 = vmatpush.bf16.msra.mxu0 %v449
    %506 = vmatpush.bf16.msra.mxu0 %v445
    %507 = vmatpush.bf16.msra.mxu0 %v441
    %508 = vmatpush.bf16.msra.mxu0 %v437
    %509 = vmatmul.bf16.gmra.mxu0 %v308
    %v510 = vpop.f32.mrf.mxu0
    %v511 = vadd.f32 0.0, %v510
    %v512 = vpop.f32.mrf.mxu0
    %513 = vdwg.mxu0
    %514 = vmatpush.bf16.msra.mxu0 %v466
    %515 = vmatpush.bf16.msra.mxu0 %v462
    %516 = vmatpush.bf16.msra.mxu0 %v458
    %517 = vmatpush.bf16.msra.mxu0 %v454
    %518 = vmatpush.bf16.msra.mxu0 %v450
    %519 = vmatpush.bf16.msra.mxu0 %v446
    %520 = vmatpush.bf16.msra.mxu0 %v442
    %521 = vmatpush.bf16.msra.mxu0 %v438
    %522 = vmatmul.bf16.gmra.mxu0 %v308
    %v523 = vpop.f32.mrf.mxu0
    %v524 = vadd.f32 0.0, %v523
    %v525 = vpop.f32.mrf.mxu0
    %526 = vdwg.mxu0
    %527 = vmatpush.bf16.msra.mxu0 %v467
    %528 = vmatpush.bf16.msra.mxu0 %v463
    %529 = vmatpush.bf16.msra.mxu0 %v459
    %530 = vmatpush.bf16.msra.mxu0 %v455
    %531 = vmatpush.bf16.msra.mxu0 %v451
    %532 = vmatpush.bf16.msra.mxu0 %v447
    %533 = vmatpush.bf16.msra.mxu0 %v443
    %534 = vmatpush.bf16.msra.mxu0 %v439
    %535 = vmatmul.bf16.gmra.mxu0 %v308
    %v536 = vpop.f32.mrf.mxu0
    %v537 = vadd.f32 0.0, %v536
    %v538 = vpop.f32.mrf.mxu0
    %539 = vdwg.mxu0
    %540 = vmatpush.bf16.msra.mxu0 %v468
    %541 = vmatpush.bf16.msra.mxu0 %v464
    %542 = vmatpush.bf16.msra.mxu0 %v460
    %543 = vmatpush.bf16.msra.mxu0 %v456
    %544 = vmatpush.bf16.msra.mxu0 %v452
    %545 = vmatpush.bf16.msra.mxu0 %v448
    %546 = vmatpush.bf16.msra.mxu0 %v444
    %547 = vmatpush.bf16.msra.mxu0 %v440
    %548 = vmatmul.bf16.gmra.mxu0 %v308
    %v549 = vpop.f32.mrf.mxu0
    %v550 = vadd.f32 0.0, %v549
    %v551 = vpop.f32.mrf.mxu0
    %552 = vdwg.mxu0
    %v553 = vadd.f32 %v304, %v511
    %v554 = vadd.f32 %v305, %v524
    %v555 = vadd.f32 %v306, %v537
    %v556 = vadd.f32 %v307, %v550
    %v557 = vmul.f32 %v553, 0.5
    %v558 = vtanh.pop %v557
    %v559 = vmul.f32 %v558, 0.5
    %v560 = vadd.f32 %v559, 0.5
    %v561 = vmul.f32 %v554, 0.5
    %v562 = vtanh.pop %v561
    %v563 = vmul.f32 %v562, 0.5
    %v564 = vadd.f32 %v563, 0.5
    %v565 = vtanh.pop %v555
    %v566 = vmul.f32 %v556, 0.5
    %v567 = vtanh.pop %v566
    %v568 = vmul.f32 %v567, 0.5
    %v569 = vadd.f32 %v568, 0.5
    %v570 = vmul.f32 %v564, %v299
    %v571 = vmul.f32 %v560, %v565
    %v572 = vadd.f32 %v570, %v571
    %v573 = vtanh.pop %v572
    %v574 = vmul.f32 %v569, %v573
    %s575 = scalar_lea.vmem [#allocation4], 8
    %576 = vst [vmem:[%s575] sm:$0xff] %v574
    %s577 = scalar_lea.vmem %s0, 64
    %v578 = vld [vmem:[%s577] sm:$0xff]
    %v579 = vld [vmem:[%s577 + $0x8] sm:$0xff]
    %v580 = vld [vmem:[%s577 + $0x10] sm:$0xff]
    %v581 = vld [vmem:[%s577 + $0x18] sm:$0xff]
    %v582 = vpack.c.bf16 %v574, %v574
    %v583 = vld [vmem:[%s3] sm:$0xff]
    %v584 = vld [vmem:[%s3 + $0x8] sm:$0xff]
    %v585 = vld [vmem:[%s3 + $0x10] sm:$0xff]
    %v586 = vld [vmem:[%s3 + $0x18] sm:$0xff]
    %v587 = vld [vmem:[%s3 + $0x20] sm:$0xff]
    %v588 = vld [vmem:[%s3 + $0x28] sm:$0xff]
    %v589 = vld [vmem:[%s3 + $0x30] sm:$0xff]
    %v590 = vld [vmem:[%s3 + $0x38] sm:$0xff]
    %v591 = vld [vmem:[%s3 + $0x40] sm:$0xff]
    %v592 = vld [vmem:[%s3 + $0x48] sm:$0xff]
    %v593 = vld [vmem:[%s3 + $0x50] sm:$0xff]
    %v594 = vld [vmem:[%s3 + $0x58] sm:$0xff]
    %v595 = vld [vmem:[%s3 + $0x60] sm:$0xff]
    %v596 = vld [vmem:[%s3 + $0x68] sm:$0xff]
    %v597 = vld [vmem:[%s3 + $0x70] sm:$0xff]
    %v598 = vld [vmem:[%s3 + $0x78] sm:$0xff]
    %v599 = vld [vmem:[%s3 + $0x80] sm:$0xff]
    %v600 = vld [vmem:[%s3 + $0x88] sm:$0xff]
    %v601 = vld [vmem:[%s3 + $0x90] sm:$0xff]
    %v602 = vld [vmem:[%s3 + $0x98] sm:$0xff]
    %v603 = vld [vmem:[%s3 + $0xa0] sm:$0xff]
    %v604 = vld [vmem:[%s3 + $0xa8] sm:$0xff]
    %v605 = vld [vmem:[%s3 + $0xb0] sm:$0xff]
    %v606 = vld [vmem:[%s3 + $0xb8] sm:$0xff]
    %v607 = vld [vmem:[%s3 + $0xc0] sm:$0xff]
    %v608 = vld [vmem:[%s3 + $0xc8] sm:$0xff]
    %v609 = vld [vmem:[%s3 + $0xd0] sm:$0xff]
    %v610 = vld [vmem:[%s3 + $0xd8] sm:$0xff]
    %v611 = vld [vmem:[%s3 + $0xe0] sm:$0xff]
    %v612 = vld [vmem:[%s3 + $0xe8] sm:$0xff]
    %v613 = vld [vmem:[%s3 + $0xf0] sm:$0xff]
    %v614 = vld [vmem:[%s3 + $0xf8] sm:$0xff]
    %v647 = vunpack.c.l.b16 %v583
    %v648 = vunpack.c.h.b16 %v583
    %v649 = vunpack.c.l.b16 %v584
    %v650 = vunpack.c.h.b16 %v584
    %v651 = vunpack.c.l.b16 %v585
    %v652 = vunpack.c.h.b16 %v585
    %v653 = vunpack.c.l.b16 %v586
    %v654 = vunpack.c.h.b16 %v586
    %v655 = vunpack.c.l.b16 %v587
    %v656 = vunpack.c.h.b16 %v587
    %v657 = vunpack.c.l.b16 %v588
    %v658 = vunpack.c.h.b16 %v588
    %v659 = vunpack.c.l.b16 %v589
    %v660 = vunpack.c.h.b16 %v589
    %v661 = vunpack.c.l.b16 %v590
    %v662 = vunpack.c.h.b16 %v590
    %v663 = vunpack.c.l.b16 %v591
    %v664 = vunpack.c.h.b16 %v591
    %v665 = vunpack.c.l.b16 %v592
    %v666 = vunpack.c.h.b16 %v592
    %v667 = vunpack.c.l.b16 %v593
    %v668 = vunpack.c.h.b16 %v593
    %v669 = vunpack.c.l.b16 %v594
    %v670 = vunpack.c.h.b16 %v594
    %v671 = vunpack.c.l.b16 %v595
    %v672 = vunpack.c.h.b16 %v595
    %v673 = vunpack.c.l.b16 %v596
    %v674 = vunpack.c.h.b16 %v596
    %v675 = vunpack.c.l.b16 %v597
    %v676 = vunpack.c.h.b16 %v597
    %v677 = vunpack.c.l.b16 %v598
    %v678 = vunpack.c.h.b16 %v598
    %v679 = vunpack.c.l.b16 %v599
    %v680 = vunpack.c.h.b16 %v599
    %v681 = vunpack.c.l.b16 %v600
    %v682 = vunpack.c.h.b16 %v600
    %v683 = vunpack.c.l.b16 %v601
    %v684 = vunpack.c.h.b16 %v601
    %v685 = vunpack.c.l.b16 %v602
    %v686 = vunpack.c.h.b16 %v602
    %v687 = vunpack.c.l.b16 %v603
    %v688 = vunpack.c.h.b16 %v603
    %v689 = vunpack.c.l.b16 %v604
    %v690 = vunpack.c.h.b16 %v604
    %v691 = vunpack.c.l.b16 %v605
    %v692 = vunpack.c.h.b16 %v605
    %v693 = vunpack.c.l.b16 %v606
    %v694 = vunpack.c.h.b16 %v606
    %v695 = vunpack.c.l.b16 %v607
    %v696 = vunpack.c.h.b16 %v607
    %v697 = vunpack.c.l.b16 %v608
    %v698 = vunpack.c.h.b16 %v608
    %v699 = vunpack.c.l.b16 %v609
    %v700 = vunpack.c.h.b16 %v609
    %v701 = vunpack.c.l.b16 %v610
    %v702 = vunpack.c.h.b16 %v610
    %v703 = vunpack.c.l.b16 %v611
    %v704 = vunpack.c.h.b16 %v611
    %v705 = vunpack.c.l.b16 %v612
    %v706 = vunpack.c.h.b16 %v612
    %v707 = vunpack.c.l.b16 %v613
    %v708 = vunpack.c.h.b16 %v613
    %v709 = vunpack.c.l.b16 %v614
    %v710 = vunpack.c.h.b16 %v614
    %v711 = vpack.c.b16 %v651, %v647
    %v712 = vpack.c.b16 %v652, %v648
    %v713 = vpack.c.b16 %v653, %v649
    %v714 = vpack.c.b16 %v654, %v650
    %v715 = vpack.c.b16 %v659, %v655
    %v716 = vpack.c.b16 %v660, %v656
    %v717 = vpack.c.b16 %v661, %v657
    %v718 = vpack.c.b16 %v662, %v658
    %v719 = vpack.c.b16 %v667, %v663
    %v720 = vpack.c.b16 %v668, %v664
    %v721 = vpack.c.b16 %v669, %v665
    %v722 = vpack.c.b16 %v670, %v666
    %v723 = vpack.c.b16 %v675, %v671
    %v724 = vpack.c.b16 %v676, %v672
    %v725 = vpack.c.b16 %v677, %v673
    %v726 = vpack.c.b16 %v678, %v674
    %v727 = vpack.c.b16 %v683, %v679
    %v728 = vpack.c.b16 %v684, %v680
    %v729 = vpack.c.b16 %v685, %v681
    %v730 = vpack.c.b16 %v686, %v682
    %v731 = vpack.c.b16 %v691, %v687
    %v732 = vpack.c.b16 %v692, %v688
    %v733 = vpack.c.b16 %v693, %v689
    %v734 = vpack.c.b16 %v694, %v690
    %v735 = vpack.c.b16 %v699, %v695
    %v736 = vpack.c.b16 %v700, %v696
    %v737 = vpack.c.b16 %v701, %v697
    %v738 = vpack.c.b16 %v702, %v698
    %v739 = vpack.c.b16 %v707, %v703
    %v740 = vpack.c.b16 %v708, %v704
    %v741 = vpack.c.b16 %v709, %v705
    %v742 = vpack.c.b16 %v710, %v706
    %775 = vmatpush.bf16.msra.mxu0 %v739
    %776 = vmatpush.bf16.msra.mxu0 %v735
    %777 = vmatpush.bf16.msra.mxu0 %v731
    %778 = vmatpush.bf16.msra.mxu0 %v727
    %779 = vmatpush.bf16.msra.mxu0 %v723
    %780 = vmatpush.bf16.msra.mxu0 %v719
    %781 = vmatpush.bf16.msra.mxu0 %v715
    %782 = vmatpush.bf16.msra.mxu0 %v711
    %783 = vmatmul.bf16.gmra.mxu0 %v582
    %v784 = vpop.f32.mrf.mxu0
    %v785 = vadd.f32 0.0, %v784
    %v786 = vpop.f32.mrf.mxu0
    %787 = vdwg.mxu0
    %788 = vmatpush.bf16.msra.mxu0 %v740
    %789 = vmatpush.bf16.msra.mxu0 %v736
    %790 = vmatpush.bf16.msra.mxu0 %v732
    %791 = vmatpush.bf16.msra.mxu0 %v728
    %792 = vmatpush.bf16.msra.mxu0 %v724
    %793 = vmatpush.bf16.msra.mxu0 %v720
    %794 = vmatpush.bf16.msra.mxu0 %v716
    %795 = vmatpush.bf16.msra.mxu0 %v712
    %796 = vmatmul.bf16.gmra.mxu0 %v582
    %v797 = vpop.f32.mrf.mxu0
    %v798 = vadd.f32 0.0, %v797
    %v799 = vpop.f32.mrf.mxu0
    %800 = vdwg.mxu0
    %801 = vmatpush.bf16.msra.mxu0 %v741
    %802 = vmatpush.bf16.msra.mxu0 %v737
    %803 = vmatpush.bf16.msra.mxu0 %v733
    %804 = vmatpush.bf16.msra.mxu0 %v729
    %805 = vmatpush.bf16.msra.mxu0 %v725
    %806 = vmatpush.bf16.msra.mxu0 %v721
    %807 = vmatpush.bf16.msra.mxu0 %v717
    %808 = vmatpush.bf16.msra.mxu0 %v713
    %809 = vmatmul.bf16.gmra.mxu0 %v582
    %v810 = vpop.f32.mrf.mxu0
    %v811 = vadd.f32 0.0, %v810
    %v812 = vpop.f32.mrf.mxu0
    %813 = vdwg.mxu0
    %814 = vmatpush.bf16.msra.mxu0 %v742
    %815 = vmatpush.bf16.msra.mxu0 %v738
    %816 = vmatpush.bf16.msra.mxu0 %v734
    %817 = vmatpush.bf16.msra.mxu0 %v730
    %818 = vmatpush.bf16.msra.mxu0 %v726
    %819 = vmatpush.bf16.msra.mxu0 %v722
    %820 = vmatpush.bf16.msra.mxu0 %v718
    %821 = vmatpush.bf16.msra.mxu0 %v714
    %822 = vmatmul.bf16.gmra.mxu0 %v582
    %v823 = vpop.f32.mrf.mxu0
    %v824 = vadd.f32 0.0, %v823
    %v825 = vpop.f32.mrf.mxu0
    %826 = vdwg.mxu0
    %v827 = vadd.f32 %v578, %v785
    %v828 = vadd.f32 %v579, %v798
    %v829 = vadd.f32 %v580, %v811
    %v830 = vadd.f32 %v581, %v824
    %v831 = vmul.f32 %v827, 0.5
    %v832 = vtanh.pop %v831
    %v833 = vmul.f32 %v832, 0.5
    %v834 = vadd.f32 %v833, 0.5
    %v835 = vmul.f32 %v828, 0.5
    %v836 = vtanh.pop %v835
    %v837 = vmul.f32 %v836, 0.5
    %v838 = vadd.f32 %v837, 0.5
    %v839 = vtanh.pop %v829
    %v840 = vmul.f32 %v830, 0.5
    %v841 = vtanh.pop %v840
    %v842 = vmul.f32 %v841, 0.5
    %v843 = vadd.f32 %v842, 0.5
    %v844 = vmul.f32 %v838, %v572
    %v845 = vmul.f32 %v834, %v839
    %v846 = vadd.f32 %v844, %v845
    %v847 = vtanh.pop %v846
    %v848 = vmul.f32 %v843, %v847
    %s849 = scalar_lea.vmem [#allocation4], 16
    %850 = vst [vmem:[%s849] sm:$0xff] %v848
    %s851 = scalar_lea.vmem %s0, 96
    %v852 = vld [vmem:[%s851] sm:$0xff]
    %v853 = vld [vmem:[%s851 + $0x8] sm:$0xff]
    %v854 = vld [vmem:[%s851 + $0x10] sm:$0xff]
    %v855 = vld [vmem:[%s851 + $0x18] sm:$0xff]
    %v856 = vpack.c.bf16 %v848, %v848
    %v857 = vld [vmem:[%s3] sm:$0xff]
    %v858 = vld [vmem:[%s3 + $0x8] sm:$0xff]
    %v859 = vld [vmem:[%s3 + $0x10] sm:$0xff]
    %v860 = vld [vmem:[%s3 + $0x18] sm:$0xff]
    %v861 = vld [vmem:[%s3 + $0x20] sm:$0xff]
    %v862 = vld [vmem:[%s3 + $0x28] sm:$0xff]
    %v863 = vld [vmem:[%s3 + $0x30] sm:$0xff]
    %v864 = vld [vmem:[%s3 + $0x38] sm:$0xff]
    %v865 = vld [vmem:[%s3 + $0x40] sm:$0xff]
    %v866 = vld [vmem:[%s3 + $0x48] sm:$0xff]
    %v867 = vld [vmem:[%s3 + $0x50] sm:$0xff]
    %v868 = vld [vmem:[%s3 + $0x58] sm:$0xff]
    %v869 = vld [vmem:[%s3 + $0x60] sm:$0xff]
    %v870 = vld [vmem:[%s3 + $0x68] sm:$0xff]
    %v871 = vld [vmem:[%s3 + $0x70] sm:$0xff]
    %v872 = vld [vmem:[%s3 + $0x78] sm:$0xff]
    %v873 = vld [vmem:[%s3 + $0x80] sm:$0xff]
    %v874 = vld [vmem:[%s3 + $0x88] sm:$0xff]
    %v875 = vld [vmem:[%s3 + $0x90] sm:$0xff]
    %v876 = vld [vmem:[%s3 + $0x98] sm:$0xff]
    %v877 = vld [vmem:[%s3 + $0xa0] sm:$0xff]
    %v878 = vld [vmem:[%s3 + $0xa8] sm:$0xff]
    %v879 = vld [vmem:[%s3 + $0xb0] sm:$0xff]
    %v880 = vld [vmem:[%s3 + $0xb8] sm:$0xff]
    %v881 = vld [vmem:[%s3 + $0xc0] sm:$0xff]
    %v882 = vld [vmem:[%s3 + $0xc8] sm:$0xff]
    %v883 = vld [vmem:[%s3 + $0xd0] sm:$0xff]
    %v884 = vld [vmem:[%s3 + $0xd8] sm:$0xff]
    %v885 = vld [vmem:[%s3 + $0xe0] sm:$0xff]
    %v886 = vld [vmem:[%s3 + $0xe8] sm:$0xff]
    %v887 = vld [vmem:[%s3 + $0xf0] sm:$0xff]
    %v888 = vld [vmem:[%s3 + $0xf8] sm:$0xff]
    %v921 = vunpack.c.l.b16 %v857
    %v922 = vunpack.c.h.b16 %v857
    %v923 = vunpack.c.l.b16 %v858
    %v924 = vunpack.c.h.b16 %v858
    %v925 = vunpack.c.l.b16 %v859
    %v926 = vunpack.c.h.b16 %v859
    %v927 = vunpack.c.l.b16 %v860
    %v928 = vunpack.c.h.b16 %v860
    %v929 = vunpack.c.l.b16 %v861
    %v930 = vunpack.c.h.b16 %v861
    %v931 = vunpack.c.l.b16 %v862
    %v932 = vunpack.c.h.b16 %v862
    %v933 = vunpack.c.l.b16 %v863
    %v934 = vunpack.c.h.b16 %v863
    %v935 = vunpack.c.l.b16 %v864
    %v936 = vunpack.c.h.b16 %v864
    %v937 = vunpack.c.l.b16 %v865
    %v938 = vunpack.c.h.b16 %v865
    %v939 = vunpack.c.l.b16 %v866
    %v940 = vunpack.c.h.b16 %v866
    %v941 = vunpack.c.l.b16 %v867
    %v942 = vunpack.c.h.b16 %v867
    %v943 = vunpack.c.l.b16 %v868
    %v944 = vunpack.c.h.b16 %v868
    %v945 = vunpack.c.l.b16 %v869
    %v946 = vunpack.c.h.b16 %v869
    %v947 = vunpack.c.l.b16 %v870
    %v948 = vunpack.c.h.b16 %v870
    %v949 = vunpack.c.l.b16 %v871
    %v950 = vunpack.c.h.b16 %v871
    %v951 = vunpack.c.l.b16 %v872
    %v952 = vunpack.c.h.b16 %v872
    %v953 = vunpack.c.l.b16 %v873
    %v954 = vunpack.c.h.b16 %v873
    %v955 = vunpack.c.l.b16 %v874
    %v956 = vunpack.c.h.b16 %v874
    %v957 = vunpack.c.l.b16 %v875
    %v958 = vunpack.c.h.b16 %v875
    %v959 = vunpack.c.l.b16 %v876
    %v960 = vunpack.c.h.b16 %v876
    %v961 = vunpack.c.l.b16 %v877
    %v962 = vunpack.c.h.b16 %v877
    %v963 = vunpack.c.l.b16 %v878
    %v964 = vunpack.c.h.b16 %v878
    %v965 = vunpack.c.l.b16 %v879
    %v966 = vunpack.c.h.b16 %v879
    %v967 = vunpack.c.l.b16 %v880
    %v968 = vunpack.c.h.b16 %v880
    %v969 = vunpack.c.l.b16 %v881
    %v970 = vunpack.c.h.b16 %v881
    %v971 = vunpack.c.l.b16 %v882
    %v972 = vunpack.c.h.b16 %v882
    %v973 = vunpack.c.l.b16 %v883
    %v974 = vunpack.c.h.b16 %v883
    %v975 = vunpack.c.l.b16 %v884
    %v976 = vunpack.c.h.b16 %v884
    %v977 = vunpack.c.l.b16 %v885
    %v978 = vunpack.c.h.b16 %v885
    %v979 = vunpack.c.l.b16 %v886
    %v980 = vunpack.c.h.b16 %v886
    %v981 = vunpack.c.l.b16 %v887
    %v982 = vunpack.c.h.b16 %v887
    %v983 = vunpack.c.l.b16 %v888
    %v984 = vunpack.c.h.b16 %v888
    %v985 = vpack.c.b16 %v925, %v921
    %v986 = vpack.c.b16 %v926, %v922
    %v987 = vpack.c.b16 %v927, %v923
    %v988 = vpack.c.b16 %v928, %v924
    %v989 = vpack.c.b16 %v933, %v929
    %v990 = vpack.c.b16 %v934, %v930
    %v991 = vpack.c.b16 %v935, %v931
    %v992 = vpack.c.b16 %v936, %v932
    %v993 = vpack.c.b16 %v941, %v937
    %v994 = vpack.c.b16 %v942, %v938
    %v995 = vpack.c.b16 %v943, %v939
    %v996 = vpack.c.b16 %v944, %v940
    %v997 = vpack.c.b16 %v949, %v945
    %v998 = vpack.c.b16 %v950, %v946
    %v999 = vpack.c.b16 %v951, %v947
    %v1000 = vpack.c.b16 %v952, %v948
    %v1001 = vpack.c.b16 %v957, %v953
    %v1002 = vpack.c.b16 %v958, %v954
    %v1003 = vpack.c.b16 %v959, %v955
    %v1004 = vpack.c.b16 %v960, %v956
    %v1005 = vpack.c.b16 %v965, %v961
    %v1006 = vpack.c.b16 %v966, %v962
    %v1007 = vpack.c.b16 %v967, %v963
    %v1008 = vpack.c.b16 %v968, %v964
    %v1009 = vpack.c.b16 %v973, %v969
    %v1010 = vpack.c.b16 %v974, %v970
    %v1011 = vpack.c.b16 %v975, %v971
    %v1012 = vpack.c.b16 %v976, %v972
    %v1013 = vpack.c.b16 %v981, %v977
    %v1014 = vpack.c.b16 %v982, %v978
    %v1015 = vpack.c.b16 %v983, %v979
    %v1016 = vpack.c.b16 %v984, %v980
    %1049 = vmatpush.bf16.msra.mxu0 %v1013
    %1050 = vmatpush.bf16.msra.mxu0 %v1009
    %1051 = vmatpush.bf16.msra.mxu0 %v1005
    %1052 = vmatpush.bf16.msra.mxu0 %v1001
    %1053 = vmatpush.bf16.msra.mxu0 %v997
    %1054 = vmatpush.bf16.msra.mxu0 %v993
    %1055 = vmatpush.bf16.msra.mxu0 %v989
    %1056 = vmatpush.bf16.msra.mxu0 %v985
    %1057 = vmatmul.bf16.gmra.mxu0 %v856
    %v1058 = vpop.f32.mrf.mxu0
    %v1059 = vadd.f32 0.0, %v1058
    %v1060 = vpop.f32.mrf.mxu0
    %1061 = vdwg.mxu0
    %1062 = vmatpush.bf16.msra.mxu0 %v1014
    %1063 = vmatpush.bf16.msra.mxu0 %v1010
    %1064 = vmatpush.bf16.msra.mxu0 %v1006
    %1065 = vmatpush.bf16.msra.mxu0 %v1002
    %1066 = vmatpush.bf16.msra.mxu0 %v998
    %1067 = vmatpush.bf16.msra.mxu0 %v994
    %1068 = vmatpush.bf16.msra.mxu0 %v990
    %1069 = vmatpush.bf16.msra.mxu0 %v986
    %1070 = vmatmul.bf16.gmra.mxu0 %v856
    %v1071 = vpop.f32.mrf.mxu0
    %v1072 = vadd.f32 0.0, %v1071
    %v1073 = vpop.f32.mrf.mxu0
    %1074 = vdwg.mxu0
    %1075 = vmatpush.bf16.msra.mxu0 %v1015
    %1076 = vmatpush.bf16.msra.mxu0 %v1011
    %1077 = vmatpush.bf16.msra.mxu0 %v1007
    %1078 = vmatpush.bf16.msra.mxu0 %v1003
    %1079 = vmatpush.bf16.msra.mxu0 %v999
    %1080 = vmatpush.bf16.msra.mxu0 %v995
    %1081 = vmatpush.bf16.msra.mxu0 %v991
    %1082 = vmatpush.bf16.msra.mxu0 %v987
    %1083 = vmatmul.bf16.gmra.mxu0 %v856
    %v1084 = vpop.f32.mrf.mxu0
    %v1085 = vadd.f32 0.0, %v1084
    %v1086 = vpop.f32.mrf.mxu0
    %1087 = vdwg.mxu0
    %1088 = vmatpush.bf16.msra.mxu0 %v1016
    %1089 = vmatpush.bf16.msra.mxu0 %v1012
    %1090 = vmatpush.bf16.msra.mxu0 %v1008
    %1091 = vmatpush.bf16.msra.mxu0 %v1004
    %1092 = vmatpush.bf16.msra.mxu0 %v1000
    %1093 = vmatpush.bf16.msra.mxu0 %v996
    %1094 = vmatpush.bf16.msra.mxu0 %v992
    %1095 = vmatpush.bf16.msra.mxu0 %v988
    %1096 = vmatmul.bf16.gmra.mxu0 %v856
    %v1097 = vpop.f32.mrf.mxu0
    %v1098 = vadd.f32 0.0, %v1097
    %v1099 = vpop.f32.mrf.mxu0
    %1100 = vdwg.mxu0
    %v1101 = vadd.f32 %v852, %v1059
    %v1102 = vadd.f32 %v853, %v1072
    %v1103 = vadd.f32 %v854, %v1085
    %v1104 = vadd.f32 %v855, %v1098
    %v1105 = vmul.f32 %v1101, 0.5
    %v1106 = vtanh.pop %v1105
    %v1107 = vmul.f32 %v1106, 0.5
    %v1108 = vadd.f32 %v1107, 0.5
    %v1109 = vmul.f32 %v1102, 0.5
    %v1110 = vtanh.pop %v1109
    %v1111 = vmul.f32 %v1110, 0.5
    %v1112 = vadd.f32 %v1111, 0.5
    %v1113 = vtanh.pop %v1103
    %v1114 = vmul.f32 %v1104, 0.5
    %v1115 = vtanh.pop %v1114
    %v1116 = vmul.f32 %v1115, 0.5
    %v1117 = vadd.f32 %v1116, 0.5
    %v1118 = vmul.f32 %v1112, %v846
    %v1119 = vmul.f32 %v1108, %v1113
    %v1120 = vadd.f32 %v1118, %v1119
    %v1121 = vtanh.pop %v1120
    %v1122 = vmul.f32 %v1117, %v1121
    %s1123 = scalar_lea.vmem [#allocation4], 24
    %1124 = vst [vmem:[%s1123] sm:$0xff] %v1122
    %s1125 = scalar_lea.vmem %s0, 128
    %v1126 = vld [vmem:[%s1125] sm:$0xff]
    %v1127 = vld [vmem:[%s1125 + $0x8] sm:$0xff]
    %v1128 = vld [vmem:[%s1125 + $0x10] sm:$0xff]
    %v1129 = vld [vmem:[%s1125 + $0x18] sm:$0xff]
    %v1130 = vpack.c.bf16 %v1122, %v1122
    %v1131 = vld [vmem:[%s3] sm:$0xff]
    %v1132 = vld [vmem:[%s3 + $0x8] sm:$0xff]
    %v1133 = vld [vmem:[%s3 + $0x10] sm:$0xff]
    %v1134 = vld [vmem:[%s3 + $0x18] sm:$0xff]
    %v1135 = vld [vmem:[%s3 + $0x20] sm:$0xff]
    %v1136 = vld [vmem:[%s3 + $0x28] sm:$0xff]
    %v1137 = vld [vmem:[%s3 + $0x30] sm:$0xff]
    %v1138 = vld [vmem:[%s3 + $0x38] sm:$0xff]
    %v1139 = vld [vmem:[%s3 + $0x40] sm:$0xff]
    %v1140 = vld [vmem:[%s3 + $0x48] sm:$0xff]
    %v1141 = vld [vmem:[%s3 + $0x50] sm:$0xff]
    %v1142 = vld [vmem:[%s3 + $0x58] sm:$0xff]
    %v1143 = vld [vmem:[%s3 + $0x60] sm:$0xff]
    %v1144 = vld [vmem:[%s3 + $0x68] sm:$0xff]
    %v1145 = vld [vmem:[%s3 + $0x70] sm:$0xff]
    %v1146 = vld [vmem:[%s3 + $0x78] sm:$0xff]
    %v1147 = vld [vmem:[%s3 + $0x80] sm:$0xff]
    %v1148 = vld [vmem:[%s3 + $0x88] sm:$0xff]
    %v1149 = vld [vmem:[%s3 + $0x90] sm:$0xff]
    %v1150 = vld [vmem:[%s3 + $0x98] sm:$0xff]
    %v1151 = vld [vmem:[%s3 + $0xa0] sm:$0xff]
    %v1152 = vld [vmem:[%s3 + $0xa8] sm:$0xff]
    %v1153 = vld [vmem:[%s3 + $0xb0] sm:$0xff]
    %v1154 = vld [vmem:[%s3 + $0xb8] sm:$0xff]
    %v1155 = vld [vmem:[%s3 + $0xc0] sm:$0xff]
    %v1156 = vld [vmem:[%s3 + $0xc8] sm:$0xff]
    %v1157 = vld [vmem:[%s3 + $0xd0] sm:$0xff]
    %v1158 = vld [vmem:[%s3 + $0xd8] sm:$0xff]
    %v1159 = vld [vmem:[%s3 + $0xe0] sm:$0xff]
    %v1160 = vld [vmem:[%s3 + $0xe8] sm:$0xff]
    %v1161 = vld [vmem:[%s3 + $0xf0] sm:$0xff]
    %v1162 = vld [vmem:[%s3 + $0xf8] sm:$0xff]
    %v1195 = vunpack.c.l.b16 %v1131
    %v1196 = vunpack.c.h.b16 %v1131
    %v1197 = vunpack.c.l.b16 %v1132
    %v1198 = vunpack.c.h.b16 %v1132
    %v1199 = vunpack.c.l.b16 %v1133
    %v1200 = vunpack.c.h.b16 %v1133
    %v1201 = vunpack.c.l.b16 %v1134
    %v1202 = vunpack.c.h.b16 %v1134
    %v1203 = vunpack.c.l.b16 %v1135
    %v1204 = vunpack.c.h.b16 %v1135
    %v1205 = vunpack.c.l.b16 %v1136
    %v1206 = vunpack.c.h.b16 %v1136
    %v1207 = vunpack.c.l.b16 %v1137
    %v1208 = vunpack.c.h.b16 %v1137
    %v1209 = vunpack.c.l.b16 %v1138
    %v1210 = vunpack.c.h.b16 %v1138
    %v1211 = vunpack.c.l.b16 %v1139
    %v1212 = vunpack.c.h.b16 %v1139
    %v1213 = vunpack.c.l.b16 %v1140
    %v1214 = vunpack.c.h.b16 %v1140
    %v1215 = vunpack.c.l.b16 %v1141
    %v1216 = vunpack.c.h.b16 %v1141
    %v1217 = vunpack.c.l.b16 %v1142
    %v1218 = vunpack.c.h.b16 %v1142
    %v1219 = vunpack.c.l.b16 %v1143
    %v1220 = vunpack.c.h.b16 %v1143
    %v1221 = vunpack.c.l.b16 %v1144
    %v1222 = vunpack.c.h.b16 %v1144
    %v1223 = vunpack.c.l.b16 %v1145
    %v1224 = vunpack.c.h.b16 %v1145
    %v1225 = vunpack.c.l.b16 %v1146
    %v1226 = vunpack.c.h.b16 %v1146
    %v1227 = vunpack.c.l.b16 %v1147
    %v1228 = vunpack.c.h.b16 %v1147
    %v1229 = vunpack.c.l.b16 %v1148
    %v1230 = vunpack.c.h.b16 %v1148
    %v1231 = vunpack.c.l.b16 %v1149
    %v1232 = vunpack.c.h.b16 %v1149
    %v1233 = vunpack.c.l.b16 %v1150
    %v1234 = vunpack.c.h.b16 %v1150
    %v1235 = vunpack.c.l.b16 %v1151
    %v1236 = vunpack.c.h.b16 %v1151
    %v1237 = vunpack.c.l.b16 %v1152
    %v1238 = vunpack.c.h.b16 %v1152
    %v1239 = vunpack.c.l.b16 %v1153
    %v1240 = vunpack.c.h.b16 %v1153
    %v1241 = vunpack.c.l.b16 %v1154
    %v1242 = vunpack.c.h.b16 %v1154
    %v1243 = vunpack.c.l.b16 %v1155
    %v1244 = vunpack.c.h.b16 %v1155
    %v1245 = vunpack.c.l.b16 %v1156
    %v1246 = vunpack.c.h.b16 %v1156
    %v1247 = vunpack.c.l.b16 %v1157
    %v1248 = vunpack.c.h.b16 %v1157
    %v1249 = vunpack.c.l.b16 %v1158
    %v1250 = vunpack.c.h.b16 %v1158
    %v1251 = vunpack.c.l.b16 %v1159
    %v1252 = vunpack.c.h.b16 %v1159
    %v1253 = vunpack.c.l.b16 %v1160
    %v1254 = vunpack.c.h.b16 %v1160
    %v1255 = vunpack.c.l.b16 %v1161
    %v1256 = vunpack.c.h.b16 %v1161
    %v1257 = vunpack.c.l.b16 %v1162
    %v1258 = vunpack.c.h.b16 %v1162
    %v1259 = vpack.c.b16 %v1199, %v1195
    %v1260 = vpack.c.b16 %v1200, %v1196
    %v1261 = vpack.c.b16 %v1201, %v1197
    %v1262 = vpack.c.b16 %v1202, %v1198
    %v1263 = vpack.c.b16 %v1207, %v1203
    %v1264 = vpack.c.b16 %v1208, %v1204
    %v1265 = vpack.c.b16 %v1209, %v1205
    %v1266 = vpack.c.b16 %v1210, %v1206
    %v1267 = vpack.c.b16 %v1215, %v1211
    %v1268 = vpack.c.b16 %v1216, %v1212
    %v1269 = vpack.c.b16 %v1217, %v1213
    %v1270 = vpack.c.b16 %v1218, %v1214
    %v1271 = vpack.c.b16 %v1223, %v1219
    %v1272 = vpack.c.b16 %v1224, %v1220
    %v1273 = vpack.c.b16 %v1225, %v1221
    %v1274 = vpack.c.b16 %v1226, %v1222
    %v1275 = vpack.c.b16 %v1231, %v1227
    %v1276 = vpack.c.b16 %v1232, %v1228
    %v1277 = vpack.c.b16 %v1233, %v1229
    %v1278 = vpack.c.b16 %v1234, %v1230
    %v1279 = vpack.c.b16 %v1239, %v1235
    %v1280 = vpack.c.b16 %v1240, %v1236
    %v1281 = vpack.c.b16 %v1241, %v1237
    %v1282 = vpack.c.b16 %v1242, %v1238
    %v1283 = vpack.c.b16 %v1247, %v1243
    %v1284 = vpack.c.b16 %v1248, %v1244
    %v1285 = vpack.c.b16 %v1249, %v1245
    %v1286 = vpack.c.b16 %v1250, %v1246
    %v1287 = vpack.c.b16 %v1255, %v1251
    %v1288 = vpack.c.b16 %v1256, %v1252
    %v1289 = vpack.c.b16 %v1257, %v1253
    %v1290 = vpack.c.b16 %v1258, %v1254
    %1323 = vmatpush.bf16.msra.mxu0 %v1287
    %1324 = vmatpush.bf16.msra.mxu0 %v1283
    %1325 = vmatpush.bf16.msra.mxu0 %v1279
    %1326 = vmatpush.bf16.msra.mxu0 %v1275
    %1327 = vmatpush.bf16.msra.mxu0 %v1271
    %1328 = vmatpush.bf16.msra.mxu0 %v1267
    %1329 = vmatpush.bf16.msra.mxu0 %v1263
    %1330 = vmatpush.bf16.msra.mxu0 %v1259
    %1331 = vmatmul.bf16.gmra.mxu0 %v1130
    %v1332 = vpop.f32.mrf.mxu0
    %v1333 = vadd.f32 0.0, %v1332
    %v1334 = vpop.f32.mrf.mxu0
    %1335 = vdwg.mxu0
    %1336 = vmatpush.bf16.msra.mxu0 %v1288
    %1337 = vmatpush.bf16.msra.mxu0 %v1284
    %1338 = vmatpush.bf16.msra.mxu0 %v1280
    %1339 = vmatpush.bf16.msra.mxu0 %v1276
    %1340 = vmatpush.bf16.msra.mxu0 %v1272
    %1341 = vmatpush.bf16.msra.mxu0 %v1268
    %1342 = vmatpush.bf16.msra.mxu0 %v1264
    %1343 = vmatpush.bf16.msra.mxu0 %v1260
    %1344 = vmatmul.bf16.gmra.mxu0 %v1130
    %v1345 = vpop.f32.mrf.mxu0
    %v1346 = vadd.f32 0.0, %v1345
    %v1347 = vpop.f32.mrf.mxu0
    %1348 = vdwg.mxu0
    %1349 = vmatpush.bf16.msra.mxu0 %v1289
    %1350 = vmatpush.bf16.msra.mxu0 %v1285
    %1351 = vmatpush.bf16.msra.mxu0 %v1281
    %1352 = vmatpush.bf16.msra.mxu0 %v1277
    %1353 = vmatpush.bf16.msra.mxu0 %v1273
    %1354 = vmatpush.bf16.msra.mxu0 %v1269
    %1355 = vmatpush.bf16.msra.mxu0 %v1265
    %1356 = vmatpush.bf16.msra.mxu0 %v1261
    %1357 = vmatmul.bf16.gmra.mxu0 %v1130
    %v1358 = vpop.f32.mrf.mxu0
    %v1359 = vadd.f32 0.0, %v1358
    %v1360 = vpop.f32.mrf.mxu0
    %1361 = vdwg.mxu0
    %1362 = vmatpush.bf16.msra.mxu0 %v1290
    %1363 = vmatpush.bf16.msra.mxu0 %v1286
    %1364 = vmatpush.bf16.msra.mxu0 %v1282
    %1365 = vmatpush.bf16.msra.mxu0 %v1278
    %1366 = vmatpush.bf16.msra.mxu0 %v1274
    %1367 = vmatpush.bf16.msra.mxu0 %v1270
    %1368 = vmatpush.bf16.msra.mxu0 %v1266
    %1369 = vmatpush.bf16.msra.mxu0 %v1262
    %1370 = vmatmul.bf16.gmra.mxu0 %v1130
    %v1371 = vpop.f32.mrf.mxu0
    %v1372 = vadd.f32 0.0, %v1371
    %v1373 = vpop.f32.mrf.mxu0
    %1374 = vdwg.mxu0
    %v1375 = vadd.f32 %v1126, %v1333
    %v1376 = vadd.f32 %v1127, %v1346
    %v1377 = vadd.f32 %v1128, %v1359
    %v1378 = vadd.f32 %v1129, %v1372
    %v1379 = vmul.f32 %v1375, 0.5
    %v1380 = vtanh.pop %v1379
    %v1381 = vmul.f32 %v1380, 0.5
    %v1382 = vadd.f32 %v1381, 0.5
    %v1383 = vmul.f32 %v1376, 0.5
    %v1384 = vtanh.pop %v1383
    %v1385 = vmul.f32 %v1384, 0.5
    %v1386 = vadd.f32 %v1385, 0.5
    %v1387 = vtanh.pop %v1377
    %v1388 = vmul.f32 %v1378, 0.5
    %v1389 = vtanh.pop %v1388
    %v1390 = vmul.f32 %v1389, 0.5
    %v1391 = vadd.f32 %v1390, 0.5
    %v1392 = vmul.f32 %v1386, %v1120
    %v1393 = vmul.f32 %v1382, %v1387
    %v1394 = vadd.f32 %v1392, %v1393
    %v1395 = vtanh.pop %v1394
    %v1396 = vmul.f32 %v1391, %v1395
    %s1397 = scalar_lea.vmem [#allocation4], 32
    %1398 = vst [vmem:[%s1397] sm:$0xff] %v1396
    %s1399 = scalar_lea.vmem %s0, 160
    %v1400 = vld [vmem:[%s1399] sm:$0xff]
    %v1401 = vld [vmem:[%s1399 + $0x8] sm:$0xff]
    %v1402 = vld [vmem:[%s1399 + $0x10] sm:$0xff]
    %v1403 = vld [vmem:[%s1399 + $0x18] sm:$0xff]
    %v1404 = vpack.c.bf16 %v1396, %v1396
    %v1405 = vld [vmem:[%s3] sm:$0xff]
    %v1406 = vld [vmem:[%s3 + $0x8] sm:$0xff]
    %v1407 = vld [vmem:[%s3 + $0x10] sm:$0xff]
    %v1408 = vld [vmem:[%s3 + $0x18] sm:$0xff]
    %v1409 = vld [vmem:[%s3 + $0x20] sm:$0xff]
    %v1410 = vld [vmem:[%s3 + $0x28] sm:$0xff]
    %v1411 = vld [vmem:[%s3 + $0x30] sm:$0xff]
    %v1412 = vld [vmem:[%s3 + $0x38] sm:$0xff]
    %v1413 = vld [vmem:[%s3 + $0x40] sm:$0xff]
    %v1414 = vld [vmem:[%s3 + $0x48] sm:$0xff]
    %v1415 = vld [vmem:[%s3 + $0x50] sm:$0xff]
    %v1416 = vld [vmem:[%s3 + $0x58] sm:$0xff]
    %v1417 = vld [vmem:[%s3 + $0x60] sm:$0xff]
    %v1418 = vld [vmem:[%s3 + $0x68] sm:$0xff]
    %v1419 = vld [vmem:[%s3 + $0x70] sm:$0xff]
    %v1420 = vld [vmem:[%s3 + $0x78] sm:$0xff]
    %v1421 = vld [vmem:[%s3 + $0x80] sm:$0xff]
    %v1422 = vld [vmem:[%s3 + $0x88] sm:$0xff]
    %v1423 = vld [vmem:[%s3 + $0x90] sm:$0xff]
    %v1424 = vld [vmem:[%s3 + $0x98] sm:$0xff]
    %v1425 = vld [vmem:[%s3 + $0xa0] sm:$0xff]
    %v1426 = vld [vmem:[%s3 + $0xa8] sm:$0xff]
    %v1427 = vld [vmem:[%s3 + $0xb0] sm:$0xff]
    %v1428 = vld [vmem:[%s3 + $0xb8] sm:$0xff]
    %v1429 = vld [vmem:[%s3 + $0xc0] sm:$0xff]
    %v1430 = vld [vmem:[%s3 + $0xc8] sm:$0xff]
    %v1431 = vld [vmem:[%s3 + $0xd0] sm:$0xff]
    %v1432 = vld [vmem:[%s3 + $0xd8] sm:$0xff]
    %v1433 = vld [vmem:[%s3 + $0xe0] sm:$0xff]
    %v1434 = vld [vmem:[%s3 + $0xe8] sm:$0xff]
    %v1435 = vld [vmem:[%s3 + $0xf0] sm:$0xff]
    %v1436 = vld [vmem:[%s3 + $0xf8] sm:$0xff]
    %v1469 = vunpack.c.l.b16 %v1405
    %v1470 = vunpack.c.h.b16 %v1405
    %v1471 = vunpack.c.l.b16 %v1406
    %v1472 = vunpack.c.h.b16 %v1406
    %v1473 = vunpack.c.l.b16 %v1407
    %v1474 = vunpack.c.h.b16 %v1407
    %v1475 = vunpack.c.l.b16 %v1408
    %v1476 = vunpack.c.h.b16 %v1408
    %v1477 = vunpack.c.l.b16 %v1409
    %v1478 = vunpack.c.h.b16 %v1409
    %v1479 = vunpack.c.l.b16 %v1410
    %v1480 = vunpack.c.h.b16 %v1410
    %v1481 = vunpack.c.l.b16 %v1411
    %v1482 = vunpack.c.h.b16 %v1411
    %v1483 = vunpack.c.l.b16 %v1412
    %v1484 = vunpack.c.h.b16 %v1412
    %v1485 = vunpack.c.l.b16 %v1413
    %v1486 = vunpack.c.h.b16 %v1413
    %v1487 = vunpack.c.l.b16 %v1414
    %v1488 = vunpack.c.h.b16 %v1414
    %v1489 = vunpack.c.l.b16 %v1415
    %v1490 = vunpack.c.h.b16 %v1415
    %v1491 = vunpack.c.l.b16 %v1416
    %v1492 = vunpack.c.h.b16 %v1416
    %v1493 = vunpack.c.l.b16 %v1417
    %v1494 = vunpack.c.h.b16 %v1417
    %v1495 = vunpack.c.l.b16 %v1418
    %v1496 = vunpack.c.h.b16 %v1418
    %v1497 = vunpack.c.l.b16 %v1419
    %v1498 = vunpack.c.h.b16 %v1419
    %v1499 = vunpack.c.l.b16 %v1420
    %v1500 = vunpack.c.h.b16 %v1420
    %v1501 = vunpack.c.l.b16 %v1421
    %v1502 = vunpack.c.h.b16 %v1421
    %v1503 = vunpack.c.l.b16 %v1422
    %v1504 = vunpack.c.h.b16 %v1422
    %v1505 = vunpack.c.l.b16 %v1423
    %v1506 = vunpack.c.h.b16 %v1423
    %v1507 = vunpack.c.l.b16 %v1424
    %v1508 = vunpack.c.h.b16 %v1424
    %v1509 = vunpack.c.l.b16 %v1425
    %v1510 = vunpack.c.h.b16 %v1425
    %v1511 = vunpack.c.l.b16 %v1426
    %v1512 = vunpack.c.h.b16 %v1426
    %v1513 = vunpack.c.l.b16 %v1427
    %v1514 = vunpack.c.h.b16 %v1427
    %v1515 = vunpack.c.l.b16 %v1428
    %v1516 = vunpack.c.h.b16 %v1428
    %v1517 = vunpack.c.l.b16 %v1429
    %v1518 = vunpack.c.h.b16 %v1429
    %v1519 = vunpack.c.l.b16 %v1430
    %v1520 = vunpack.c.h.b16 %v1430
    %v1521 = vunpack.c.l.b16 %v1431
    %v1522 = vunpack.c.h.b16 %v1431
    %v1523 = vunpack.c.l.b16 %v1432
    %v1524 = vunpack.c.h.b16 %v1432
    %v1525 = vunpack.c.l.b16 %v1433
    %v1526 = vunpack.c.h.b16 %v1433
    %v1527 = vunpack.c.l.b16 %v1434
    %v1528 = vunpack.c.h.b16 %v1434
    %v1529 = vunpack.c.l.b16 %v1435
    %v1530 = vunpack.c.h.b16 %v1435
    %v1531 = vunpack.c.l.b16 %v1436
    %v1532 = vunpack.c.h.b16 %v1436
    %v1533 = vpack.c.b16 %v1473, %v1469
    %v1534 = vpack.c.b16 %v1474, %v1470
    %v1535 = vpack.c.b16 %v1475, %v1471
    %v1536 = vpack.c.b16 %v1476, %v1472
    %v1537 = vpack.c.b16 %v1481, %v1477
    %v1538 = vpack.c.b16 %v1482, %v1478
    %v1539 = vpack.c.b16 %v1483, %v1479
    %v1540 = vpack.c.b16 %v1484, %v1480
    %v1541 = vpack.c.b16 %v1489, %v1485
    %v1542 = vpack.c.b16 %v1490, %v1486
    %v1543 = vpack.c.b16 %v1491, %v1487
    %v1544 = vpack.c.b16 %v1492, %v1488
    %v1545 = vpack.c.b16 %v1497, %v1493
    %v1546 = vpack.c.b16 %v1498, %v1494
    %v1547 = vpack.c.b16 %v1499, %v1495
    %v1548 = vpack.c.b16 %v1500, %v1496
    %v1549 = vpack.c.b16 %v1505, %v1501
    %v1550 = vpack.c.b16 %v1506, %v1502
    %v1551 = vpack.c.b16 %v1507, %v1503
    %v1552 = vpack.c.b16 %v1508, %v1504
    %v1553 = vpack.c.b16 %v1513, %v1509
    %v1554 = vpack.c.b16 %v1514, %v1510
    %v1555 = vpack.c.b16 %v1515, %v1511
    %v1556 = vpack.c.b16 %v1516, %v1512
    %v1557 = vpack.c.b16 %v1521, %v1517
    %v1558 = vpack.c.b16 %v1522, %v1518
    %v1559 = vpack.c.b16 %v1523, %v1519
    %v1560 = vpack.c.b16 %v1524, %v1520
    %v1561 = vpack.c.b16 %v1529, %v1525
    %v1562 = vpack.c.b16 %v1530, %v1526
    %v1563 = vpack.c.b16 %v1531, %v1527
    %v1564 = vpack.c.b16 %v1532, %v1528
    %1597 = vmatpush.bf16.msra.mxu0 %v1561
    %1598 = vmatpush.bf16.msra.mxu0 %v1557
    %1599 = vmatpush.bf16.msra.mxu0 %v1553
    %1600 = vmatpush.bf16.msra.mxu0 %v1549
    %1601 = vmatpush.bf16.msra.mxu0 %v1545
    %1602 = vmatpush.bf16.msra.mxu0 %v1541
    %1603 = vmatpush.bf16.msra.mxu0 %v1537
    %1604 = vmatpush.bf16.msra.mxu0 %v1533
    %1605 = vmatmul.bf16.gmra.mxu0 %v1404
    %v1606 = vpop.f32.mrf.mxu0
    %v1607 = vadd.f32 0.0, %v1606
    %v1608 = vpop.f32.mrf.mxu0
    %1609 = vdwg.mxu0
    %1610 = vmatpush.bf16.msra.mxu0 %v1562
    %1611 = vmatpush.bf16.msra.mxu0 %v1558
    %1612 = vmatpush.bf16.msra.mxu0 %v1554
    %1613 = vmatpush.bf16.msra.mxu0 %v1550
    %1614 = vmatpush.bf16.msra.mxu0 %v1546
    %1615 = vmatpush.bf16.msra.mxu0 %v1542
    %1616 = vmatpush.bf16.msra.mxu0 %v1538
    %1617 = vmatpush.bf16.msra.mxu0 %v1534
    %1618 = vmatmul.bf16.gmra.mxu0 %v1404
    %v1619 = vpop.f32.mrf.mxu0
    %v1620 = vadd.f32 0.0, %v1619
    %v1621 = vpop.f32.mrf.mxu0
    %1622 = vdwg.mxu0
    %1623 = vmatpush.bf16.msra.mxu0 %v1563
    %1624 = vmatpush.bf16.msra.mxu0 %v1559
    %1625 = vmatpush.bf16.msra.mxu0 %v1555
    %1626 = vmatpush.bf16.msra.mxu0 %v1551
    %1627 = vmatpush.bf16.msra.mxu0 %v1547
    %1628 = vmatpush.bf16.msra.mxu0 %v1543
    %1629 = vmatpush.bf16.msra.mxu0 %v1539
    %1630 = vmatpush.bf16.msra.mxu0 %v1535
    %1631 = vmatmul.bf16.gmra.mxu0 %v1404
    %v1632 = vpop.f32.mrf.mxu0
    %v1633 = vadd.f32 0.0, %v1632
    %v1634 = vpop.f32.mrf.mxu0
    %1635 = vdwg.mxu0
    %1636 = vmatpush.bf16.msra.mxu0 %v1564
    %1637 = vmatpush.bf16.msra.mxu0 %v1560
    %1638 = vmatpush.bf16.msra.mxu0 %v1556
    %1639 = vmatpush.bf16.msra.mxu0 %v1552
    %1640 = vmatpush.bf16.msra.mxu0 %v1548
    %1641 = vmatpush.bf16.msra.mxu0 %v1544
    %1642 = vmatpush.bf16.msra.mxu0 %v1540
    %1643 = vmatpush.bf16.msra.mxu0 %v1536
    %1644 = vmatmul.bf16.gmra.mxu0 %v1404
    %v1645 = vpop.f32.mrf.mxu0
    %v1646 = vadd.f32 0.0, %v1645
    %v1647 = vpop.f32.mrf.mxu0
    %1648 = vdwg.mxu0
    %v1649 = vadd.f32 %v1400, %v1607
    %v1650 = vadd.f32 %v1401, %v1620
    %v1651 = vadd.f32 %v1402, %v1633
    %v1652 = vadd.f32 %v1403, %v1646
    %v1653 = vmul.f32 %v1649, 0.5
    %v1654 = vtanh.pop %v1653
    %v1655 = vmul.f32 %v1654, 0.5
    %v1656 = vadd.f32 %v1655, 0.5
    %v1657 = vmul.f32 %v1650, 0.5
    %v1658 = vtanh.pop %v1657
    %v1659 = vmul.f32 %v1658, 0.5
    %v1660 = vadd.f32 %v1659, 0.5
    %v1661 = vtanh.pop %v1651
    %v1662 = vmul.f32 %v1652, 0.5
    %v1663 = vtanh.pop %v1662
    %v1664 = vmul.f32 %v1663, 0.5
    %v1665 = vadd.f32 %v1664, 0.5
    %v1666 = vmul.f32 %v1660, %v1394
    %v1667 = vmul.f32 %v1656, %v1661
    %v1668 = vadd.f32 %v1666, %v1667
    %v1669 = vtanh.pop %v1668
    %v1670 = vmul.f32 %v1665, %v1669
    %s1671 = scalar_lea.vmem [#allocation4], 40
    %1672 = vst [vmem:[%s1671] sm:$0xff] %v1670
    %s1673 = scalar_lea.vmem %s0, 192
    %v1674 = vld [vmem:[%s1673] sm:$0xff]
    %v1675 = vld [vmem:[%s1673 + $0x8] sm:$0xff]
    %v1676 = vld [vmem:[%s1673 + $0x10] sm:$0xff]
    %v1677 = vld [vmem:[%s1673 + $0x18] sm:$0xff]
    %v1678 = vpack.c.bf16 %v1670, %v1670
    %v1679 = vld [vmem:[%s3] sm:$0xff]
    %v1680 = vld [vmem:[%s3 + $0x8] sm:$0xff]
    %v1681 = vld [vmem:[%s3 + $0x10] sm:$0xff]
    %v1682 = vld [vmem:[%s3 + $0x18] sm:$0xff]
    %v1683 = vld [vmem:[%s3 + $0x20] sm:$0xff]
    %v1684 = vld [vmem:[%s3 + $0x28] sm:$0xff]
    %v1685 = vld [vmem:[%s3 + $0x30] sm:$0xff]
    %v1686 = vld [vmem:[%s3 + $0x38] sm:$0xff]
    %v1687 = vld [vmem:[%s3 + $0x40] sm:$0xff]
    %v1688 = vld [vmem:[%s3 + $0x48] sm:$0xff]
    %v1689 = vld [vmem:[%s3 + $0x50] sm:$0xff]
    %v1690 = vld [vmem:[%s3 + $0x58] sm:$0xff]
    %v1691 = vld [vmem:[%s3 + $0x60] sm:$0xff]
    %v1692 = vld [vmem:[%s3 + $0x68] sm:$0xff]
    %v1693 = vld [vmem:[%s3 + $0x70] sm:$0xff]
    %v1694 = vld [vmem:[%s3 + $0x78] sm:$0xff]
    %v1695 = vld [vmem:[%s3 + $0x80] sm:$0xff]
    %v1696 = vld [vmem:[%s3 + $0x88] sm:$0xff]
    %v1697 = vld [vmem:[%s3 + $0x90] sm:$0xff]
    %v1698 = vld [vmem:[%s3 + $0x98] sm:$0xff]
    %v1699 = vld [vmem:[%s3 + $0xa0] sm:$0xff]
    %v1700 = vld [vmem:[%s3 + $0xa8] sm:$0xff]
    %v1701 = vld [vmem:[%s3 + $0xb0] sm:$0xff]
    %v1702 = vld [vmem:[%s3 + $0xb8] sm:$0xff]
    %v1703 = vld [vmem:[%s3 + $0xc0] sm:$0xff]
    %v1704 = vld [vmem:[%s3 + $0xc8] sm:$0xff]
    %v1705 = vld [vmem:[%s3 + $0xd0] sm:$0xff]
    %v1706 = vld [vmem:[%s3 + $0xd8] sm:$0xff]
    %v1707 = vld [vmem:[%s3 + $0xe0] sm:$0xff]
    %v1708 = vld [vmem:[%s3 + $0xe8] sm:$0xff]
    %v1709 = vld [vmem:[%s3 + $0xf0] sm:$0xff]
    %v1710 = vld [vmem:[%s3 + $0xf8] sm:$0xff]
    %v1743 = vunpack.c.l.b16 %v1679
    %v1744 = vunpack.c.h.b16 %v1679
    %v1745 = vunpack.c.l.b16 %v1680
    %v1746 = vunpack.c.h.b16 %v1680
    %v1747 = vunpack.c.l.b16 %v1681
    %v1748 = vunpack.c.h.b16 %v1681
    %v1749 = vunpack.c.l.b16 %v1682
    %v1750 = vunpack.c.h.b16 %v1682
    %v1751 = vunpack.c.l.b16 %v1683
    %v1752 = vunpack.c.h.b16 %v1683
    %v1753 = vunpack.c.l.b16 %v1684
    %v1754 = vunpack.c.h.b16 %v1684
    %v1755 = vunpack.c.l.b16 %v1685
    %v1756 = vunpack.c.h.b16 %v1685
    %v1757 = vunpack.c.l.b16 %v1686
    %v1758 = vunpack.c.h.b16 %v1686
    %v1759 = vunpack.c.l.b16 %v1687
    %v1760 = vunpack.c.h.b16 %v1687
    %v1761 = vunpack.c.l.b16 %v1688
    %v1762 = vunpack.c.h.b16 %v1688
    %v1763 = vunpack.c.l.b16 %v1689
    %v1764 = vunpack.c.h.b16 %v1689
    %v1765 = vunpack.c.l.b16 %v1690
    %v1766 = vunpack.c.h.b16 %v1690
    %v1767 = vunpack.c.l.b16 %v1691
    %v1768 = vunpack.c.h.b16 %v1691
    %v1769 = vunpack.c.l.b16 %v1692
    %v1770 = vunpack.c.h.b16 %v1692
    %v1771 = vunpack.c.l.b16 %v1693
    %v1772 = vunpack.c.h.b16 %v1693
    %v1773 = vunpack.c.l.b16 %v1694
    %v1774 = vunpack.c.h.b16 %v1694
    %v1775 = vunpack.c.l.b16 %v1695
    %v1776 = vunpack.c.h.b16 %v1695
    %v1777 = vunpack.c.l.b16 %v1696
    %v1778 = vunpack.c.h.b16 %v1696
    %v1779 = vunpack.c.l.b16 %v1697
    %v1780 = vunpack.c.h.b16 %v1697
    %v1781 = vunpack.c.l.b16 %v1698
    %v1782 = vunpack.c.h.b16 %v1698
    %v1783 = vunpack.c.l.b16 %v1699
    %v1784 = vunpack.c.h.b16 %v1699
    %v1785 = vunpack.c.l.b16 %v1700
    %v1786 = vunpack.c.h.b16 %v1700
    %v1787 = vunpack.c.l.b16 %v1701
    %v1788 = vunpack.c.h.b16 %v1701
    %v1789 = vunpack.c.l.b16 %v1702
    %v1790 = vunpack.c.h.b16 %v1702
    %v1791 = vunpack.c.l.b16 %v1703
    %v1792 = vunpack.c.h.b16 %v1703
    %v1793 = vunpack.c.l.b16 %v1704
    %v1794 = vunpack.c.h.b16 %v1704
    %v1795 = vunpack.c.l.b16 %v1705
    %v1796 = vunpack.c.h.b16 %v1705
    %v1797 = vunpack.c.l.b16 %v1706
    %v1798 = vunpack.c.h.b16 %v1706
    %v1799 = vunpack.c.l.b16 %v1707
    %v1800 = vunpack.c.h.b16 %v1707
    %v1801 = vunpack.c.l.b16 %v1708
    %v1802 = vunpack.c.h.b16 %v1708
    %v1803 = vunpack.c.l.b16 %v1709
    %v1804 = vunpack.c.h.b16 %v1709
    %v1805 = vunpack.c.l.b16 %v1710
    %v1806 = vunpack.c.h.b16 %v1710
    %v1807 = vpack.c.b16 %v1747, %v1743
    %v1808 = vpack.c.b16 %v1748, %v1744
    %v1809 = vpack.c.b16 %v1749, %v1745
    %v1810 = vpack.c.b16 %v1750, %v1746
    %v1811 = vpack.c.b16 %v1755, %v1751
    %v1812 = vpack.c.b16 %v1756, %v1752
    %v1813 = vpack.c.b16 %v1757, %v1753
    %v1814 = vpack.c.b16 %v1758, %v1754
    %v1815 = vpack.c.b16 %v1763, %v1759
    %v1816 = vpack.c.b16 %v1764, %v1760
    %v1817 = vpack.c.b16 %v1765, %v1761
    %v1818 = vpack.c.b16 %v1766, %v1762
    %v1819 = vpack.c.b16 %v1771, %v1767
    %v1820 = vpack.c.b16 %v1772, %v1768
    %v1821 = vpack.c.b16 %v1773, %v1769
    %v1822 = vpack.c.b16 %v1774, %v1770
    %v1823 = vpack.c.b16 %v1779, %v1775
    %v1824 = vpack.c.b16 %v1780, %v1776
    %v1825 = vpack.c.b16 %v1781, %v1777
    %v1826 = vpack.c.b16 %v1782, %v1778
    %v1827 = vpack.c.b16 %v1787, %v1783
    %v1828 = vpack.c.b16 %v1788, %v1784
    %v1829 = vpack.c.b16 %v1789, %v1785
    %v1830 = vpack.c.b16 %v1790, %v1786
    %v1831 = vpack.c.b16 %v1795, %v1791
    %v1832 = vpack.c.b16 %v1796, %v1792
    %v1833 = vpack.c.b16 %v1797, %v1793
    %v1834 = vpack.c.b16 %v1798, %v1794
    %v1835 = vpack.c.b16 %v1803, %v1799
    %v1836 = vpack.c.b16 %v1804, %v1800
    %v1837 = vpack.c.b16 %v1805, %v1801
    %v1838 = vpack.c.b16 %v1806, %v1802
    %1871 = vmatpush.bf16.msra.mxu0 %v1835
    %1872 = vmatpush.bf16.msra.mxu0 %v1831
    %1873 = vmatpush.bf16.msra.mxu0 %v1827
    %1874 = vmatpush.bf16.msra.mxu0 %v1823
    %1875 = vmatpush.bf16.msra.mxu0 %v1819
    %1876 = vmatpush.bf16.msra.mxu0 %v1815
    %1877 = vmatpush.bf16.msra.mxu0 %v1811
    %1878 = vmatpush.bf16.msra.mxu0 %v1807
    %1879 = vmatmul.bf16.gmra.mxu0 %v1678
    %v1880 = vpop.f32.mrf.mxu0
    %v1881 = vadd.f32 0.0, %v1880
    %v1882 = vpop.f32.mrf.mxu0
    %1883 = vdwg.mxu0
    %1884 = vmatpush.bf16.msra.mxu0 %v1836
    %1885 = vmatpush.bf16.msra.mxu0 %v1832
    %1886 = vmatpush.bf16.msra.mxu0 %v1828
    %1887 = vmatpush.bf16.msra.mxu0 %v1824
    %1888 = vmatpush.bf16.msra.mxu0 %v1820
    %1889 = vmatpush.bf16.msra.mxu0 %v1816
    %1890 = vmatpush.bf16.msra.mxu0 %v1812
    %1891 = vmatpush.bf16.msra.mxu0 %v1808
    %1892 = vmatmul.bf16.gmra.mxu0 %v1678
    %v1893 = vpop.f32.mrf.mxu0
    %v1894 = vadd.f32 0.0, %v1893
    %v1895 = vpop.f32.mrf.mxu0
    %1896 = vdwg.mxu0
    %1897 = vmatpush.bf16.msra.mxu0 %v1837
    %1898 = vmatpush.bf16.msra.mxu0 %v1833
    %1899 = vmatpush.bf16.msra.mxu0 %v1829
    %1900 = vmatpush.bf16.msra.mxu0 %v1825
    %1901 = vmatpush.bf16.msra.mxu0 %v1821
    %1902 = vmatpush.bf16.msra.mxu0 %v1817
    %1903 = vmatpush.bf16.msra.mxu0 %v1813
    %1904 = vmatpush.bf16.msra.mxu0 %v1809
    %1905 = vmatmul.bf16.gmra.mxu0 %v1678
    %v1906 = vpop.f32.mrf.mxu0
    %v1907 = vadd.f32 0.0, %v1906
    %v1908 = vpop.f32.mrf.mxu0
    %1909 = vdwg.mxu0
    %1910 = vmatpush.bf16.msra.mxu0 %v1838
    %1911 = vmatpush.bf16.msra.mxu0 %v1834
    %1912 = vmatpush.bf16.msra.mxu0 %v1830
    %1913 = vmatpush.bf16.msra.mxu0 %v1826
    %1914 = vmatpush.bf16.msra.mxu0 %v1822
    %1915 = vmatpush.bf16.msra.mxu0 %v1818
    %1916 = vmatpush.bf16.msra.mxu0 %v1814
    %1917 = vmatpush.bf16.msra.mxu0 %v1810
    %1918 = vmatmul.bf16.gmra.mxu0 %v1678
    %v1919 = vpop.f32.mrf.mxu0
    %v1920 = vadd.f32 0.0, %v1919
    %v1921 = vpop.f32.mrf.mxu0
    %1922 = vdwg.mxu0
    %v1923 = vadd.f32 %v1674, %v1881
    %v1924 = vadd.f32 %v1675, %v1894
    %v1925 = vadd.f32 %v1676, %v1907
    %v1926 = vadd.f32 %v1677, %v1920
    %v1927 = vmul.f32 %v1923, 0.5
    %v1928 = vtanh.pop %v1927
    %v1929 = vmul.f32 %v1928, 0.5
    %v1930 = vadd.f32 %v1929, 0.5
    %v1931 = vmul.f32 %v1924, 0.5
    %v1932 = vtanh.pop %v1931
    %v1933 = vmul.f32 %v1932, 0.5
    %v1934 = vadd.f32 %v1933, 0.5
    %v1935 = vtanh.pop %v1925
    %v1936 = vmul.f32 %v1926, 0.5
    %v1937 = vtanh.pop %v1936
    %v1938 = vmul.f32 %v1937, 0.5
    %v1939 = vadd.f32 %v1938, 0.5
    %v1940 = vmul.f32 %v1934, %v1668
    %v1941 = vmul.f32 %v1930, %v1935
    %v1942 = vadd.f32 %v1940, %v1941
    %v1943 = vtanh.pop %v1942
    %v1944 = vmul.f32 %v1939, %v1943
    %s1945 = scalar_lea.vmem [#allocation4], 48
    %1946 = vst [vmem:[%s1945] sm:$0xff] %v1944
    %s1947 = scalar_lea.vmem %s0, 224
    %v1948 = vld [vmem:[%s1947] sm:$0xff]
    %v1949 = vld [vmem:[%s1947 + $0x8] sm:$0xff]
    %v1950 = vld [vmem:[%s1947 + $0x10] sm:$0xff]
    %v1951 = vld [vmem:[%s1947 + $0x18] sm:$0xff]
    %v1952 = vpack.c.bf16 %v1944, %v1944
    %v1953 = vld [vmem:[%s3] sm:$0xff]
    %v1954 = vld [vmem:[%s3 + $0x8] sm:$0xff]
    %v1955 = vld [vmem:[%s3 + $0x10] sm:$0xff]
    %v1956 = vld [vmem:[%s3 + $0x18] sm:$0xff]
    %v1957 = vld [vmem:[%s3 + $0x20] sm:$0xff]
    %v1958 = vld [vmem:[%s3 + $0x28] sm:$0xff]
    %v1959 = vld [vmem:[%s3 + $0x30] sm:$0xff]
    %v1960 = vld [vmem:[%s3 + $0x38] sm:$0xff]
    %v1961 = vld [vmem:[%s3 + $0x40] sm:$0xff]
    %v1962 = vld [vmem:[%s3 + $0x48] sm:$0xff]
    %v1963 = vld [vmem:[%s3 + $0x50] sm:$0xff]
    %v1964 = vld [vmem:[%s3 + $0x58] sm:$0xff]
    %v1965 = vld [vmem:[%s3 + $0x60] sm:$0xff]
    %v1966 = vld [vmem:[%s3 + $0x68] sm:$0xff]
    %v1967 = vld [vmem:[%s3 + $0x70] sm:$0xff]
    %v1968 = vld [vmem:[%s3 + $0x78] sm:$0xff]
    %v1969 = vld [vmem:[%s3 + $0x80] sm:$0xff]
    %v1970 = vld [vmem:[%s3 + $0x88] sm:$0xff]
    %v1971 = vld [vmem:[%s3 + $0x90] sm:$0xff]
    %v1972 = vld [vmem:[%s3 + $0x98] sm:$0xff]
    %v1973 = vld [vmem:[%s3 + $0xa0] sm:$0xff]
    %v1974 = vld [vmem:[%s3 + $0xa8] sm:$0xff]
    %v1975 = vld [vmem:[%s3 + $0xb0] sm:$0xff]
    %v1976 = vld [vmem:[%s3 + $0xb8] sm:$0xff]
    %v1977 = vld [vmem:[%s3 + $0xc0] sm:$0xff]
    %v1978 = vld [vmem:[%s3 + $0xc8] sm:$0xff]
    %v1979 = vld [vmem:[%s3 + $0xd0] sm:$0xff]
    %v1980 = vld [vmem:[%s3 + $0xd8] sm:$0xff]
    %v1981 = vld [vmem:[%s3 + $0xe0] sm:$0xff]
    %v1982 = vld [vmem:[%s3 + $0xe8] sm:$0xff]
    %v1983 = vld [vmem:[%s3 + $0xf0] sm:$0xff]
    %v1984 = vld [vmem:[%s3 + $0xf8] sm:$0xff]
    %v2017 = vunpack.c.l.b16 %v1953
    %v2018 = vunpack.c.h.b16 %v1953
    %v2019 = vunpack.c.l.b16 %v1954
    %v2020 = vunpack.c.h.b16 %v1954
    %v2021 = vunpack.c.l.b16 %v1955
    %v2022 = vunpack.c.h.b16 %v1955
    %v2023 = vunpack.c.l.b16 %v1956
    %v2024 = vunpack.c.h.b16 %v1956
    %v2025 = vunpack.c.l.b16 %v1957
    %v2026 = vunpack.c.h.b16 %v1957
    %v2027 = vunpack.c.l.b16 %v1958
    %v2028 = vunpack.c.h.b16 %v1958
    %v2029 = vunpack.c.l.b16 %v1959
    %v2030 = vunpack.c.h.b16 %v1959
    %v2031 = vunpack.c.l.b16 %v1960
    %v2032 = vunpack.c.h.b16 %v1960
    %v2033 = vunpack.c.l.b16 %v1961
    %v2034 = vunpack.c.h.b16 %v1961
    %v2035 = vunpack.c.l.b16 %v1962
    %v2036 = vunpack.c.h.b16 %v1962
    %v2037 = vunpack.c.l.b16 %v1963
    %v2038 = vunpack.c.h.b16 %v1963
    %v2039 = vunpack.c.l.b16 %v1964
    %v2040 = vunpack.c.h.b16 %v1964
    %v2041 = vunpack.c.l.b16 %v1965
    %v2042 = vunpack.c.h.b16 %v1965
    %v2043 = vunpack.c.l.b16 %v1966
    %v2044 = vunpack.c.h.b16 %v1966
    %v2045 = vunpack.c.l.b16 %v1967
    %v2046 = vunpack.c.h.b16 %v1967
    %v2047 = vunpack.c.l.b16 %v1968
    %v2048 = vunpack.c.h.b16 %v1968
    %v2049 = vunpack.c.l.b16 %v1969
    %v2050 = vunpack.c.h.b16 %v1969
    %v2051 = vunpack.c.l.b16 %v1970
    %v2052 = vunpack.c.h.b16 %v1970
    %v2053 = vunpack.c.l.b16 %v1971
    %v2054 = vunpack.c.h.b16 %v1971
    %v2055 = vunpack.c.l.b16 %v1972
    %v2056 = vunpack.c.h.b16 %v1972
    %v2057 = vunpack.c.l.b16 %v1973
    %v2058 = vunpack.c.h.b16 %v1973
    %v2059 = vunpack.c.l.b16 %v1974
    %v2060 = vunpack.c.h.b16 %v1974
    %v2061 = vunpack.c.l.b16 %v1975
    %v2062 = vunpack.c.h.b16 %v1975
    %v2063 = vunpack.c.l.b16 %v1976
    %v2064 = vunpack.c.h.b16 %v1976
    %v2065 = vunpack.c.l.b16 %v1977
    %v2066 = vunpack.c.h.b16 %v1977
    %v2067 = vunpack.c.l.b16 %v1978
    %v2068 = vunpack.c.h.b16 %v1978
    %v2069 = vunpack.c.l.b16 %v1979
    %v2070 = vunpack.c.h.b16 %v1979
    %v2071 = vunpack.c.l.b16 %v1980
    %v2072 = vunpack.c.h.b16 %v1980
    %v2073 = vunpack.c.l.b16 %v1981
    %v2074 = vunpack.c.h.b16 %v1981
    %v2075 = vunpack.c.l.b16 %v1982
    %v2076 = vunpack.c.h.b16 %v1982
    %v2077 = vunpack.c.l.b16 %v1983
    %v2078 = vunpack.c.h.b16 %v1983
    %v2079 = vunpack.c.l.b16 %v1984
    %v2080 = vunpack.c.h.b16 %v1984
    %v2081 = vpack.c.b16 %v2021, %v2017
    %v2082 = vpack.c.b16 %v2022, %v2018
    %v2083 = vpack.c.b16 %v2023, %v2019
    %v2084 = vpack.c.b16 %v2024, %v2020
    %v2085 = vpack.c.b16 %v2029, %v2025
    %v2086 = vpack.c.b16 %v2030, %v2026
    %v2087 = vpack.c.b16 %v2031, %v2027
    %v2088 = vpack.c.b16 %v2032, %v2028
    %v2089 = vpack.c.b16 %v2037, %v2033
    %v2090 = vpack.c.b16 %v2038, %v2034
    %v2091 = vpack.c.b16 %v2039, %v2035
    %v2092 = vpack.c.b16 %v2040, %v2036
    %v2093 = vpack.c.b16 %v2045, %v2041
    %v2094 = vpack.c.b16 %v2046, %v2042
    %v2095 = vpack.c.b16 %v2047, %v2043
    %v2096 = vpack.c.b16 %v2048, %v2044
    %v2097 = vpack.c.b16 %v2053, %v2049
    %v2098 = vpack.c.b16 %v2054, %v2050
    %v2099 = vpack.c.b16 %v2055, %v2051
    %v2100 = vpack.c.b16 %v2056, %v2052
    %v2101 = vpack.c.b16 %v2061, %v2057
    %v2102 = vpack.c.b16 %v2062, %v2058
    %v2103 = vpack.c.b16 %v2063, %v2059
    %v2104 = vpack.c.b16 %v2064, %v2060
    %v2105 = vpack.c.b16 %v2069, %v2065
    %v2106 = vpack.c.b16 %v2070, %v2066
    %v2107 = vpack.c.b16 %v2071, %v2067
    %v2108 = vpack.c.b16 %v2072, %v2068
    %v2109 = vpack.c.b16 %v2077, %v2073
    %v2110 = vpack.c.b16 %v2078, %v2074
    %v2111 = vpack.c.b16 %v2079, %v2075
    %v2112 = vpack.c.b16 %v2080, %v2076
    %2145 = vmatpush.bf16.msra.mxu0 %v2109
    %2146 = vmatpush.bf16.msra.mxu0 %v2105
    %2147 = vmatpush.bf16.msra.mxu0 %v2101
    %2148 = vmatpush.bf16.msra.mxu0 %v2097
    %2149 = vmatpush.bf16.msra.mxu0 %v2093
    %2150 = vmatpush.bf16.msra.mxu0 %v2089
    %2151 = vmatpush.bf16.msra.mxu0 %v2085
    %2152 = vmatpush.bf16.msra.mxu0 %v2081
    %2153 = vmatmul.bf16.gmra.mxu0 %v1952
    %v2154 = vpop.f32.mrf.mxu0
    %v2155 = vadd.f32 0.0, %v2154
    %v2156 = vpop.f32.mrf.mxu0
    %2157 = vdwg.mxu0
    %2158 = vmatpush.bf16.msra.mxu0 %v2110
    %2159 = vmatpush.bf16.msra.mxu0 %v2106
    %2160 = vmatpush.bf16.msra.mxu0 %v2102
    %2161 = vmatpush.bf16.msra.mxu0 %v2098
    %2162 = vmatpush.bf16.msra.mxu0 %v2094
    %2163 = vmatpush.bf16.msra.mxu0 %v2090
    %2164 = vmatpush.bf16.msra.mxu0 %v2086
    %2165 = vmatpush.bf16.msra.mxu0 %v2082
    %2166 = vmatmul.bf16.gmra.mxu0 %v1952
    %v2167 = vpop.f32.mrf.mxu0
    %v2168 = vadd.f32 0.0, %v2167
    %v2169 = vpop.f32.mrf.mxu0
    %2170 = vdwg.mxu0
    %2171 = vmatpush.bf16.msra.mxu0 %v2111
    %2172 = vmatpush.bf16.msra.mxu0 %v2107
    %2173 = vmatpush.bf16.msra.mxu0 %v2103
    %2174 = vmatpush.bf16.msra.mxu0 %v2099
    %2175 = vmatpush.bf16.msra.mxu0 %v2095
    %2176 = vmatpush.bf16.msra.mxu0 %v2091
    %2177 = vmatpush.bf16.msra.mxu0 %v2087
    %2178 = vmatpush.bf16.msra.mxu0 %v2083
    %2179 = vmatmul.bf16.gmra.mxu0 %v1952
    %v2180 = vpop.f32.mrf.mxu0
    %v2181 = vadd.f32 0.0, %v2180
    %v2182 = vpop.f32.mrf.mxu0
    %2183 = vdwg.mxu0
    %2184 = vmatpush.bf16.msra.mxu0 %v2112
    %2185 = vmatpush.bf16.msra.mxu0 %v2108
    %2186 = vmatpush.bf16.msra.mxu0 %v2104
    %2187 = vmatpush.bf16.msra.mxu0 %v2100
    %2188 = vmatpush.bf16.msra.mxu0 %v2096
    %2189 = vmatpush.bf16.msra.mxu0 %v2092
    %2190 = vmatpush.bf16.msra.mxu0 %v2088
    %2191 = vmatpush.bf16.msra.mxu0 %v2084
    %2192 = vmatmul.bf16.gmra.mxu0 %v1952
    %v2193 = vpop.f32.mrf.mxu0
    %v2194 = vadd.f32 0.0, %v2193
    %v2195 = vpop.f32.mrf.mxu0
    %2196 = vdwg.mxu0
    %v2197 = vadd.f32 %v1948, %v2155
    %v2198 = vadd.f32 %v1949, %v2168
    %v2199 = vadd.f32 %v1950, %v2181
    %v2200 = vadd.f32 %v1951, %v2194
    %v2201 = vmul.f32 %v2197, 0.5
    %v2202 = vtanh.pop %v2201
    %v2203 = vmul.f32 %v2202, 0.5
    %v2204 = vadd.f32 %v2203, 0.5
    %v2205 = vmul.f32 %v2198, 0.5
    %v2206 = vtanh.pop %v2205
    %v2207 = vmul.f32 %v2206, 0.5
    %v2208 = vadd.f32 %v2207, 0.5
    %v2209 = vtanh.pop %v2199
    %v2210 = vmul.f32 %v2200, 0.5
    %v2211 = vtanh.pop %v2210
    %v2212 = vmul.f32 %v2211, 0.5
    %v2213 = vadd.f32 %v2212, 0.5
    %v2214 = vmul.f32 %v2208, %v1942
    %v2215 = vmul.f32 %v2204, %v2209
    %v2216 = vadd.f32 %v2214, %v2215
    %v2217 = vtanh.pop %v2216
    %v2218 = vmul.f32 %v2213, %v2217
    %s2219 = scalar_lea.vmem [#allocation4], 56
    %2220 = vst [vmem:[%s2219] sm:$0xff] %v2218
    %2221 = vst [vmem:[#allocation2] sm:$0xff] %v2218
    %2222 = vst [vmem:[#allocation3] sm:$0xff] %v2216
    // Predicated region
    $region22: #{_rnn_encoder_forward.3} parent=1 // pred_check
      %p2223 = pneg %p21
    $region23: #{_rnn_encoder_forward.3} parent=1 // pred_check_branch
      %2225 = sbr.rel (%p2223) target = $region25
    $region24: #{_rnn_encoder_forward.3} parent=1 // pred_region
      %v2226 = vld [vmem:[#allocation2] sm:$0xff]
      %2227 = vst [vmem:[%s5] sm:$0xff] %v2226
      %v2228 = vld [vmem:[#allocation3] sm:$0xff]
      %2229 = vst [vmem:[%s6] sm:$0xff] %v2228
    $region25: #{_rnn_encoder_forward.3} parent=1 // pred_fallthru
      _
    // Predicated region
    $region26: #{_rnn_encoder_forward.3} parent=1 // pred_check
      _
    $region27: #{_rnn_encoder_forward.3} parent=1 // pred_check_branch
      %2231 = sbr.rel (0) target = $region29
    $region28: #{_rnn_encoder_forward.3} parent=1 // pred_region
      %2233 = vsyncadd [#allocation5], 0
      %s2234 = sshll.u32 [#allocation4], 4
      %s2235 = int_to_ptr.vmem [resolvable:$true] %s2234
      %s2236 = sshll.u32 %s4, 4
      %s2237 = int_to_ptr.hbm [resolvable:$true] %s2236
      %2242 = dma.vmem_to_hbm [thread:$0]  %s2235, 1024, %s2237, [#allocation5], 128, 128, 8
    $region29: #{_rnn_encoder_forward.3} parent=1 // pred_fallthru
      _
    // Predicated region
    $region30: #{_rnn_encoder_forward.3} parent=1 // pred_check
      _
    $region31: #{_rnn_encoder_forward.3} parent=1 // pred_check_branch
      %2244 = sbr.rel (0) target = $region33
    $region32: #{_rnn_encoder_forward.3} parent=1 // pred_region
      _
    $region33: #{_rnn_encoder_forward.3} parent=1 // pred_fallthru
      _
    // Predicated region
    $region34: #{_rnn_encoder_forward.3} parent=1 // pred_check
      _
    $region35: #{_rnn_encoder_forward.3} parent=1 // pred_check_branch
      %2246 = sbr.rel (0) target = $region37
    $region36: #{_rnn_encoder_forward.3} parent=1 // pred_region
      _
    $region37: #{_rnn_encoder_forward.3} parent=1 // pred_fallthru
      _
    // Predicated region
    $region38: #{_rnn_encoder_forward.3} parent=1 // pred_check
      _
    $region39: #{_rnn_encoder_forward.3} parent=1 // pred_check_branch
      %2248 = sbr.rel (0) target = $region41
    $region40: #{_rnn_encoder_forward.3} parent=1 // pred_region
      %2250 = dma.done [#allocation5], 1024
    $region41: #{_rnn_encoder_forward.3} parent=1 // pred_fallthru
      _
    // Predicated region
    $region42: #{_rnn_encoder_forward.3} parent=1 // pred_check
      _
    $region43: #{_rnn_encoder_forward.3} parent=1 // pred_check_branch
      %2252 = sbr.rel (0) target = $region45
    $region44: #{_rnn_encoder_forward.3} parent=1 // pred_region
      _
    $region45: #{_rnn_encoder_forward.3} parent=1 // pred_fallthru
      _
    // Predicated region
    $region46: #{_rnn_encoder_forward.3} parent=1 // pred_check
      _
    $region47: #{_rnn_encoder_forward.3} parent=1 // pred_check_branch
      %2254 = sbr.rel (0) target = $region49
    $region48: #{_rnn_encoder_forward.3} parent=1 // pred_region
      _
    $region49: #{_rnn_encoder_forward.3} parent=1 // pred_fallthru
      _
    %2255 = vsyncpa [#allocation5], 1

// kernel: _rnn_encoder_forward.2
$region0: #{_rnn_encoder_forward.2}
  #allocation0 [shape = 'u32[]', space=smem, size = 0x4, offset = 0x4, fixed_abs, tag = 'smem constant byte address 0x4 - core index']
  #allocation1 [shape = 'u32[72,128]{1,0:T(1,128)}', space=vmem, size = 0x9000, scoped, tag = 'internal scratch']
  #allocation2 [shape = 'f32[8,128]{1,0:T(8,128)}', space=vmem, size = 0x1000, scoped, tag = 'scratch operand']
  #allocation3 [shape = 'f32[8,128]{1,0:T(8,128)}', space=vmem, size = 0x1000, scoped, tag = 'scratch operand']
  %s0 = inlined_call_operand.vmem [shape: f32[8,8,512], index: 0, kind: input, shape index: {}]
  %s1 = inlined_call_operand.vmem [shape: f32[8,128], index: 1, kind: input, shape index: {}]
  %s2 = inlined_call_operand.vmem [shape: f32[8,128], index: 2, kind: input, shape index: {}]
  %s3 = inlined_call_operand.vmem [shape: bf16[128,512], index: 3, kind: input, shape index: {}]
  %s4 = inlined_call_operand.vmem [shape: f32[8,8,128], index: 4, kind: output, shape index: {0}]
  %s5 = inlined_call_operand.vmem [shape: f32[8,128], index: 5, kind: output, shape index: {1}]
  %s6 = inlined_call_operand.vmem [shape: f32[8,128], index: 6, kind: output, shape index: {2}]
  %7 = xla_tuple %s4, %s5, %s6
  %s8 = sld [smem:[#allocation0]]
  $region50: #{_rnn_encoder_forward.2} parent=0
    _
  %s10 = ssub.s32 1, %s8
  %s11 = scalar_select 0, %s10, %s8
  // Predicated region
  $region2: #{_rnn_encoder_forward.2} parent=0 // pred_check
    _
  $region3: #{_rnn_encoder_forward.2} parent=0 // pred_check_branch
    %13 = sbr.rel (0) target = $region5
  $region4: #{_rnn_encoder_forward.2} parent=0 // pred_region
    _
  $region5: #{_rnn_encoder_forward.2} parent=0 // pred_fallthru
    _
  // Predicated region
  $region6: #{_rnn_encoder_forward.2} parent=0 // pred_check
    _
  $region7: #{_rnn_encoder_forward.2} parent=0 // pred_check_branch
    %15 = sbr.rel (0) target = $region9
  $region8: #{_rnn_encoder_forward.2} parent=0 // pred_region
    _
  $region9: #{_rnn_encoder_forward.2} parent=0 // pred_fallthru
    _
  // Predicated region
  $region10: #{_rnn_encoder_forward.2} parent=0 // pred_check
    _
  $region11: #{_rnn_encoder_forward.2} parent=0 // pred_check_branch
    %17 = sbr.rel (0) target = $region13
  $region12: #{_rnn_encoder_forward.2} parent=0 // pred_region
    _
  $region13: #{_rnn_encoder_forward.2} parent=0 // pred_fallthru
    _
  // Predicated region
  $region14: #{_rnn_encoder_forward.2} parent=0 // pred_check
    _
  $region15: #{_rnn_encoder_forward.2} parent=0 // pred_check_branch
    %19 = sbr.rel (0) target = $region17
  $region16: #{_rnn_encoder_forward.2} parent=0 // pred_region
    _
  $region17: #{_rnn_encoder_forward.2} parent=0 // pred_fallthru
    _
  %p20 = scmp.eq.s32.totalorder 0, 0
  // Predicated region
  $region18: #{_rnn_encoder_forward.2} parent=0 // pred_check
    %p21 = pneg %p20
  $region19: #{_rnn_encoder_forward.2} parent=0 // pred_check_branch
    %23 = sbr.rel (%p21) target = $region21
  $region20: #{_rnn_encoder_forward.2} parent=0 // pred_region
    %v24 = vld [vmem:[%s1] sm:$0xff]
    %25 = vst [vmem:[#allocation2] sm:$0xff] %v24
    %v26 = vld [vmem:[%s2] sm:$0xff]
    %27 = vst [vmem:[#allocation3] sm:$0xff] %v26
  $region21: #{_rnn_encoder_forward.2} parent=0 // pred_fallthru
    _
  %v28 = vld [vmem:[#allocation2] sm:$0xff]
  %v29 = vld [vmem:[#allocation3] sm:$0xff]
  %v30 = vld [vmem:[%s0] sm:$0xff]
  %v31 = vld [vmem:[%s0 + $0x8] sm:$0xff]
  %v32 = vld [vmem:[%s0 + $0x10] sm:$0xff]
  %v33 = vld [vmem:[%s0 + $0x18] sm:$0xff]
  %v34 = vpack.c.bf16 %v28, %v28
  %v35 = vld [vmem:[%s3] sm:$0xff]
  %v36 = vld [vmem:[%s3 + $0x8] sm:$0xff]
  %v37 = vld [vmem:[%s3 + $0x10] sm:$0xff]
  %v38 = vld [vmem:[%s3 + $0x18] sm:$0xff]
  %v39 = vld [vmem:[%s3 + $0x20] sm:$0xff]
  %v40 = vld [vmem:[%s3 + $0x28] sm:$0xff]
  %v41 = vld [vmem:[%s3 + $0x30] sm:$0xff]
  %v42 = vld [vmem:[%s3 + $0x38] sm:$0xff]
  %v43 = vld [vmem:[%s3 + $0x40] sm:$0xff]
  %v44 = vld [vmem:[%s3 + $0x48] sm:$0xff]
  %v45 = vld [vmem:[%s3 + $0x50] sm:$0xff]
  %v46 = vld [vmem:[%s3 + $0x58] sm:$0xff]
  %v47 = vld [vmem:[%s3 + $0x60] sm:$0xff]
  %v48 = vld [vmem:[%s3 + $0x68] sm:$0xff]
  %v49 = vld [vmem:[%s3 + $0x70] sm:$0xff]
  %v50 = vld [vmem:[%s3 + $0x78] sm:$0xff]
  %v51 = vld [vmem:[%s3 + $0x80] sm:$0xff]
  %v52 = vld [vmem:[%s3 + $0x88] sm:$0xff]
  %v53 = vld [vmem:[%s3 + $0x90] sm:$0xff]
  %v54 = vld [vmem:[%s3 + $0x98] sm:$0xff]
  %v55 = vld [vmem:[%s3 + $0xa0] sm:$0xff]
  %v56 = vld [vmem:[%s3 + $0xa8] sm:$0xff]
  %v57 = vld [vmem:[%s3 + $0xb0] sm:$0xff]
  %v58 = vld [vmem:[%s3 + $0xb8] sm:$0xff]
  %v59 = vld [vmem:[%s3 + $0xc0] sm:$0xff]
  %v60 = vld [vmem:[%s3 + $0xc8] sm:$0xff]
  %v61 = vld [vmem:[%s3 + $0xd0] sm:$0xff]
  %v62 = vld [vmem:[%s3 + $0xd8] sm:$0xff]
  %v63 = vld [vmem:[%s3 + $0xe0] sm:$0xff]
  %v64 = vld [vmem:[%s3 + $0xe8] sm:$0xff]
  %v65 = vld [vmem:[%s3 + $0xf0] sm:$0xff]
  %v66 = vld [vmem:[%s3 + $0xf8] sm:$0xff]
  %v99 = vunpack.c.l.b16 %v35
  %v100 = vunpack.c.h.b16 %v35
  %v101 = vunpack.c.l.b16 %v36
  %v102 = vunpack.c.h.b16 %v36
  %v103 = vunpack.c.l.b16 %v37
  %v104 = vunpack.c.h.b16 %v37
  %v105 = vunpack.c.l.b16 %v38
  %v106 = vunpack.c.h.b16 %v38
  %v107 = vunpack.c.l.b16 %v39
  %v108 = vunpack.c.h.b16 %v39
  %v109 = vunpack.c.l.b16 %v40
  %v110 = vunpack.c.h.b16 %v40
  %v111 = vunpack.c.l.b16 %v41
  %v112 = vunpack.c.h.b16 %v41
  %v113 = vunpack.c.l.b16 %v42
  %v114 = vunpack.c.h.b16 %v42
  %v115 = vunpack.c.l.b16 %v43
  %v116 = vunpack.c.h.b16 %v43
  %v117 = vunpack.c.l.b16 %v44
  %v118 = vunpack.c.h.b16 %v44
  %v119 = vunpack.c.l.b16 %v45
  %v120 = vunpack.c.h.b16 %v45
  %v121 = vunpack.c.l.b16 %v46
  %v122 = vunpack.c.h.b16 %v46
  %v123 = vunpack.c.l.b16 %v47
  %v124 = vunpack.c.h.b16 %v47
  %v125 = vunpack.c.l.b16 %v48
  %v126 = vunpack.c.h.b16 %v48
  %v127 = vunpack.c.l.b16 %v49
  %v128 = vunpack.c.h.b16 %v49
  %v129 = vunpack.c.l.b16 %v50
  %v130 = vunpack.c.h.b16 %v50
  %v131 = vunpack.c.l.b16 %v51
  %v132 = vunpack.c.h.b16 %v51
  %v133 = vunpack.c.l.b16 %v52
  %v134 = vunpack.c.h.b16 %v52
  %v135 = vunpack.c.l.b16 %v53
  %v136 = vunpack.c.h.b16 %v53
  %v137 = vunpack.c.l.b16 %v54
  %v138 = vunpack.c.h.b16 %v54
  %v139 = vunpack.c.l.b16 %v55
  %v140 = vunpack.c.h.b16 %v55
  %v141 = vunpack.c.l.b16 %v56
  %v142 = vunpack.c.h.b16 %v56
  %v143 = vunpack.c.l.b16 %v57
  %v144 = vunpack.c.h.b16 %v57
  %v145 = vunpack.c.l.b16 %v58
  %v146 = vunpack.c.h.b16 %v58
  %v147 = vunpack.c.l.b16 %v59
  %v148 = vunpack.c.h.b16 %v59
  %v149 = vunpack.c.l.b16 %v60
  %v150 = vunpack.c.h.b16 %v60
  %v151 = vunpack.c.l.b16 %v61
  %v152 = vunpack.c.h.b16 %v61
  %v153 = vunpack.c.l.b16 %v62
  %v154 = vunpack.c.h.b16 %v62
  %v155 = vunpack.c.l.b16 %v63
  %v156 = vunpack.c.h.b16 %v63
  %v157 = vunpack.c.l.b16 %v64
  %v158 = vunpack.c.h.b16 %v64
  %v159 = vunpack.c.l.b16 %v65
  %v160 = vunpack.c.h.b16 %v65
  %v161 = vunpack.c.l.b16 %v66
  %v162 = vunpack.c.h.b16 %v66
  %v163 = vpack.c.b16 %v103, %v99
  %v164 = vpack.c.b16 %v104, %v100
  %v165 = vpack.c.b16 %v105, %v101
  %v166 = vpack.c.b16 %v106, %v102
  %v167 = vpack.c.b16 %v111, %v107
  %v168 = vpack.c.b16 %v112, %v108
  %v169 = vpack.c.b16 %v113, %v109
  %v170 = vpack.c.b16 %v114, %v110
  %v171 = vpack.c.b16 %v119, %v115
  %v172 = vpack.c.b16 %v120, %v116
  %v173 = vpack.c.b16 %v121, %v117
  %v174 = vpack.c.b16 %v122, %v118
  %v175 = vpack.c.b16 %v127, %v123
  %v176 = vpack.c.b16 %v128, %v124
  %v177 = vpack.c.b16 %v129, %v125
  %v178 = vpack.c.b16 %v130, %v126
  %v179 = vpack.c.b16 %v135, %v131
  %v180 = vpack.c.b16 %v136, %v132
  %v181 = vpack.c.b16 %v137, %v133
  %v182 = vpack.c.b16 %v138, %v134
  %v183 = vpack.c.b16 %v143, %v139
  %v184 = vpack.c.b16 %v144, %v140
  %v185 = vpack.c.b16 %v145, %v141
  %v186 = vpack.c.b16 %v146, %v142
  %v187 = vpack.c.b16 %v151, %v147
  %v188 = vpack.c.b16 %v152, %v148
  %v189 = vpack.c.b16 %v153, %v149
  %v190 = vpack.c.b16 %v154, %v150
  %v191 = vpack.c.b16 %v159, %v155
  %v192 = vpack.c.b16 %v160, %v156
  %v193 = vpack.c.b16 %v161, %v157
  %v194 = vpack.c.b16 %v162, %v158
  %227 = vmatpush.bf16.msra.mxu0 %v191
  %228 = vmatpush.bf16.msra.mxu0 %v187
  %229 = vmatpush.bf16.msra.mxu0 %v183
  %230 = vmatpush.bf16.msra.mxu0 %v179
  %231 = vmatpush.bf16.msra.mxu0 %v175
  %232 = vmatpush.bf16.msra.mxu0 %v171
  %233 = vmatpush.bf16.msra.mxu0 %v167
  %234 = vmatpush.bf16.msra.mxu0 %v163
  %235 = vmatmul.bf16.gmra.mxu0 %v34
  %v236 = vpop.f32.mrf.mxu0
  %v237 = vadd.f32 0.0, %v236
  %v238 = vpop.f32.mrf.mxu0
  %239 = vdwg.mxu0
  %240 = vmatpush.bf16.msra.mxu0 %v192
  %241 = vmatpush.bf16.msra.mxu0 %v188
  %242 = vmatpush.bf16.msra.mxu0 %v184
  %243 = vmatpush.bf16.msra.mxu0 %v180
  %244 = vmatpush.bf16.msra.mxu0 %v176
  %245 = vmatpush.bf16.msra.mxu0 %v172
  %246 = vmatpush.bf16.msra.mxu0 %v168
  %247 = vmatpush.bf16.msra.mxu0 %v164
  %248 = vmatmul.bf16.gmra.mxu0 %v34
  %v249 = vpop.f32.mrf.mxu0
  %v250 = vadd.f32 0.0, %v249
  %v251 = vpop.f32.mrf.mxu0
  %252 = vdwg.mxu0
  %253 = vmatpush.bf16.msra.mxu0 %v193
  %254 = vmatpush.bf16.msra.mxu0 %v189
  %255 = vmatpush.bf16.msra.mxu0 %v185
  %256 = vmatpush.bf16.msra.mxu0 %v181
  %257 = vmatpush.bf16.msra.mxu0 %v177
  %258 = vmatpush.bf16.msra.mxu0 %v173
  %259 = vmatpush.bf16.msra.mxu0 %v169
  %260 = vmatpush.bf16.msra.mxu0 %v165
  %261 = vmatmul.bf16.gmra.mxu0 %v34
  %v262 = vpop.f32.mrf.mxu0
  %v263 = vadd.f32 0.0, %v262
  %v264 = vpop.f32.mrf.mxu0
  %265 = vdwg.mxu0
  %266 = vmatpush.bf16.msra.mxu0 %v194
  %267 = vmatpush.bf16.msra.mxu0 %v190
  %268 = vmatpush.bf16.msra.mxu0 %v186
  %269 = vmatpush.bf16.msra.mxu0 %v182
  %270 = vmatpush.bf16.msra.mxu0 %v178
  %271 = vmatpush.bf16.msra.mxu0 %v174
  %272 = vmatpush.bf16.msra.mxu0 %v170
  %273 = vmatpush.bf16.msra.mxu0 %v166
  %274 = vmatmul.bf16.gmra.mxu0 %v34
  %v275 = vpop.f32.mrf.mxu0
  %v276 = vadd.f32 0.0, %v275
  %v277 = vpop.f32.mrf.mxu0
  %278 = vdwg.mxu0
  %v279 = vadd.f32 %v30, %v237
  %v280 = vadd.f32 %v31, %v250
  %v281 = vadd.f32 %v32, %v263
  %v282 = vadd.f32 %v33, %v276
  %v283 = vmul.f32 %v279, 0.5
  %v284 = vtanh.pop %v283
  %v285 = vmul.f32 %v284, 0.5
  %v286 = vadd.f32 %v285, 0.5
  %v287 = vmul.f32 %v280, 0.5
  %v288 = vtanh.pop %v287
  %v289 = vmul.f32 %v288, 0.5
  %v290 = vadd.f32 %v289, 0.5
  %v291 = vtanh.pop %v281
  %v292 = vmul.f32 %v282, 0.5
  %v293 = vtanh.pop %v292
  %v294 = vmul.f32 %v293, 0.5
  %v295 = vadd.f32 %v294, 0.5
  %v296 = vmul.f32 %v290, %v29
  %v297 = vmul.f32 %v286, %v291
  %v298 = vadd.f32 %v296, %v297
  %v299 = vtanh.pop %v298
  %v300 = vmul.f32 %v295, %v299
  %301 = vst [vmem:[%s4] sm:$0xff] %v300
  %s302 = scalar_lea.vmem %s0, 32
  %v303 = vld [vmem:[%s302] sm:$0xff]
  %v304 = vld [vmem:[%s302 + $0x8] sm:$0xff]
  %v305 = vld [vmem:[%s302 + $0x10] sm:$0xff]
  %v306 = vld [vmem:[%s302 + $0x18] sm:$0xff]
  %v307 = vpack.c.bf16 %v300, %v300
  %v308 = vld [vmem:[%s3] sm:$0xff]
  %v309 = vld [vmem:[%s3 + $0x8] sm:$0xff]
  %v310 = vld [vmem:[%s3 + $0x10] sm:$0xff]
  %v311 = vld [vmem:[%s3 + $0x18] sm:$0xff]
  %v312 = vld [vmem:[%s3 + $0x20] sm:$0xff]
  %v313 = vld [vmem:[%s3 + $0x28] sm:$0xff]
  %v314 = vld [vmem:[%s3 + $0x30] sm:$0xff]
  %v315 = vld [vmem:[%s3 + $0x38] sm:$0xff]
  %v316 = vld [vmem:[%s3 + $0x40] sm:$0xff]
  %v317 = vld [vmem:[%s3 + $0x48] sm:$0xff]
  %v318 = vld [vmem:[%s3 + $0x50] sm:$0xff]
  %v319 = vld [vmem:[%s3 + $0x58] sm:$0xff]
  %v320 = vld [vmem:[%s3 + $0x60] sm:$0xff]
  %v321 = vld [vmem:[%s3 + $0x68] sm:$0xff]
  %v322 = vld [vmem:[%s3 + $0x70] sm:$0xff]
  %v323 = vld [vmem:[%s3 + $0x78] sm:$0xff]
  %v324 = vld [vmem:[%s3 + $0x80] sm:$0xff]
  %v325 = vld [vmem:[%s3 + $0x88] sm:$0xff]
  %v326 = vld [vmem:[%s3 + $0x90] sm:$0xff]
  %v327 = vld [vmem:[%s3 + $0x98] sm:$0xff]
  %v328 = vld [vmem:[%s3 + $0xa0] sm:$0xff]
  %v329 = vld [vmem:[%s3 + $0xa8] sm:$0xff]
  %v330 = vld [vmem:[%s3 + $0xb0] sm:$0xff]
  %v331 = vld [vmem:[%s3 + $0xb8] sm:$0xff]
  %v332 = vld [vmem:[%s3 + $0xc0] sm:$0xff]
  %v333 = vld [vmem:[%s3 + $0xc8] sm:$0xff]
  %v334 = vld [vmem:[%s3 + $0xd0] sm:$0xff]
  %v335 = vld [vmem:[%s3 + $0xd8] sm:$0xff]
  %v336 = vld [vmem:[%s3 + $0xe0] sm:$0xff]
  %v337 = vld [vmem:[%s3 + $0xe8] sm:$0xff]
  %v338 = vld [vmem:[%s3 + $0xf0] sm:$0xff]
  %v339 = vld [vmem:[%s3 + $0xf8] sm:$0xff]
  %v372 = vunpack.c.l.b16 %v308
  %v373 = vunpack.c.h.b16 %v308
  %v374 = vunpack.c.l.b16 %v309
  %v375 = vunpack.c.h.b16 %v309
  %v376 = vunpack.c.l.b16 %v310
  %v377 = vunpack.c.h.b16 %v310
  %v378 = vunpack.c.l.b16 %v311
  %v379 = vunpack.c.h.b16 %v311
  %v380 = vunpack.c.l.b16 %v312
  %v381 = vunpack.c.h.b16 %v312
  %v382 = vunpack.c.l.b16 %v313
  %v383 = vunpack.c.h.b16 %v313
  %v384 = vunpack.c.l.b16 %v314
  %v385 = vunpack.c.h.b16 %v314
  %v386 = vunpack.c.l.b16 %v315
  %v387 = vunpack.c.h.b16 %v315
  %v388 = vunpack.c.l.b16 %v316
  %v389 = vunpack.c.h.b16 %v316
  %v390 = vunpack.c.l.b16 %v317
  %v391 = vunpack.c.h.b16 %v317
  %v392 = vunpack.c.l.b16 %v318
  %v393 = vunpack.c.h.b16 %v318
  %v394 = vunpack.c.l.b16 %v319
  %v395 = vunpack.c.h.b16 %v319
  %v396 = vunpack.c.l.b16 %v320
  %v397 = vunpack.c.h.b16 %v320
  %v398 = vunpack.c.l.b16 %v321
  %v399 = vunpack.c.h.b16 %v321
  %v400 = vunpack.c.l.b16 %v322
  %v401 = vunpack.c.h.b16 %v322
  %v402 = vunpack.c.l.b16 %v323
  %v403 = vunpack.c.h.b16 %v323
  %v404 = vunpack.c.l.b16 %v324
  %v405 = vunpack.c.h.b16 %v324
  %v406 = vunpack.c.l.b16 %v325
  %v407 = vunpack.c.h.b16 %v325
  %v408 = vunpack.c.l.b16 %v326
  %v409 = vunpack.c.h.b16 %v326
  %v410 = vunpack.c.l.b16 %v327
  %v411 = vunpack.c.h.b16 %v327
  %v412 = vunpack.c.l.b16 %v328
  %v413 = vunpack.c.h.b16 %v328
  %v414 = vunpack.c.l.b16 %v329
  %v415 = vunpack.c.h.b16 %v329
  %v416 = vunpack.c.l.b16 %v330
  %v417 = vunpack.c.h.b16 %v330
  %v418 = vunpack.c.l.b16 %v331
  %v419 = vunpack.c.h.b16 %v331
  %v420 = vunpack.c.l.b16 %v332
  %v421 = vunpack.c.h.b16 %v332
  %v422 = vunpack.c.l.b16 %v333
  %v423 = vunpack.c.h.b16 %v333
  %v424 = vunpack.c.l.b16 %v334
  %v425 = vunpack.c.h.b16 %v334
  %v426 = vunpack.c.l.b16 %v335
  %v427 = vunpack.c.h.b16 %v335
  %v428 = vunpack.c.l.b16 %v336
  %v429 = vunpack.c.h.b16 %v336
  %v430 = vunpack.c.l.b16 %v337
  %v431 = vunpack.c.h.b16 %v337
  %v432 = vunpack.c.l.b16 %v338
  %v433 = vunpack.c.h.b16 %v338
  %v434 = vunpack.c.l.b16 %v339
  %v435 = vunpack.c.h.b16 %v339
  %v436 = vpack.c.b16 %v376, %v372
  %v437 = vpack.c.b16 %v377, %v373
  %v438 = vpack.c.b16 %v378, %v374
  %v439 = vpack.c.b16 %v379, %v375
  %v440 = vpack.c.b16 %v384, %v380
  %v441 = vpack.c.b16 %v385, %v381
  %v442 = vpack.c.b16 %v386, %v382
  %v443 = vpack.c.b16 %v387, %v383
  %v444 = vpack.c.b16 %v392, %v388
  %v445 = vpack.c.b16 %v393, %v389
  %v446 = vpack.c.b16 %v394, %v390
  %v447 = vpack.c.b16 %v395, %v391
  %v448 = vpack.c.b16 %v400, %v396
  %v449 = vpack.c.b16 %v401, %v397
  %v450 = vpack.c.b16 %v402, %v398
  %v451 = vpack.c.b16 %v403, %v399
  %v452 = vpack.c.b16 %v408, %v404
  %v453 = vpack.c.b16 %v409, %v405
  %v454 = vpack.c.b16 %v410, %v406
  %v455 = vpack.c.b16 %v411, %v407
  %v456 = vpack.c.b16 %v416, %v412
  %v457 = vpack.c.b16 %v417, %v413
  %v458 = vpack.c.b16 %v418, %v414
  %v459 = vpack.c.b16 %v419, %v415
  %v460 = vpack.c.b16 %v424, %v420
  %v461 = vpack.c.b16 %v425, %v421
  %v462 = vpack.c.b16 %v426, %v422
  %v463 = vpack.c.b16 %v427, %v423
  %v464 = vpack.c.b16 %v432, %v428
  %v465 = vpack.c.b16 %v433, %v429
  %v466 = vpack.c.b16 %v434, %v430
  %v467 = vpack.c.b16 %v435, %v431
  %500 = vmatpush.bf16.msra.mxu0 %v464
  %501 = vmatpush.bf16.msra.mxu0 %v460
  %502 = vmatpush.bf16.msra.mxu0 %v456
  %503 = vmatpush.bf16.msra.mxu0 %v452
  %504 = vmatpush.bf16.msra.mxu0 %v448
  %505 = vmatpush.bf16.msra.mxu0 %v444
  %506 = vmatpush.bf16.msra.mxu0 %v440
  %507 = vmatpush.bf16.msra.mxu0 %v436
  %508 = vmatmul.bf16.gmra.mxu0 %v307
  %v509 = vpop.f32.mrf.mxu0
  %v510 = vadd.f32 0.0, %v509
  %v511 = vpop.f32.mrf.mxu0
  %512 = vdwg.mxu0
  %513 = vmatpush.bf16.msra.mxu0 %v465
  %514 = vmatpush.bf16.msra.mxu0 %v461
  %515 = vmatpush.bf16.msra.mxu0 %v457
  %516 = vmatpush.bf16.msra.mxu0 %v453
  %517 = vmatpush.bf16.msra.mxu0 %v449
  %518 = vmatpush.bf16.msra.mxu0 %v445
  %519 = vmatpush.bf16.msra.mxu0 %v441
  %520 = vmatpush.bf16.msra.mxu0 %v437
  %521 = vmatmul.bf16.gmra.mxu0 %v307
  %v522 = vpop.f32.mrf.mxu0
  %v523 = vadd.f32 0.0, %v522
  %v524 = vpop.f32.mrf.mxu0
  %525 = vdwg.mxu0
  %526 = vmatpush.bf16.msra.mxu0 %v466
  %527 = vmatpush.bf16.msra.mxu0 %v462
  %528 = vmatpush.bf16.msra.mxu0 %v458
  %529 = vmatpush.bf16.msra.mxu0 %v454
  %530 = vmatpush.bf16.msra.mxu0 %v450
  %531 = vmatpush.bf16.msra.mxu0 %v446
  %532 = vmatpush.bf16.msra.mxu0 %v442
  %533 = vmatpush.bf16.msra.mxu0 %v438
  %534 = vmatmul.bf16.gmra.mxu0 %v307
  %v535 = vpop.f32.mrf.mxu0
  %v536 = vadd.f32 0.0, %v535
  %v537 = vpop.f32.mrf.mxu0
  %538 = vdwg.mxu0
  %539 = vmatpush.bf16.msra.mxu0 %v467
  %540 = vmatpush.bf16.msra.mxu0 %v463
  %541 = vmatpush.bf16.msra.mxu0 %v459
  %542 = vmatpush.bf16.msra.mxu0 %v455
  %543 = vmatpush.bf16.msra.mxu0 %v451
  %544 = vmatpush.bf16.msra.mxu0 %v447
  %545 = vmatpush.bf16.msra.mxu0 %v443
  %546 = vmatpush.bf16.msra.mxu0 %v439
  %547 = vmatmul.bf16.gmra.mxu0 %v307
  %v548 = vpop.f32.mrf.mxu0
  %v549 = vadd.f32 0.0, %v548
  %v550 = vpop.f32.mrf.mxu0
  %551 = vdwg.mxu0
  %v552 = vadd.f32 %v303, %v510
  %v553 = vadd.f32 %v304, %v523
  %v554 = vadd.f32 %v305, %v536
  %v555 = vadd.f32 %v306, %v549
  %v556 = vmul.f32 %v552, 0.5
  %v557 = vtanh.pop %v556
  %v558 = vmul.f32 %v557, 0.5
  %v559 = vadd.f32 %v558, 0.5
  %v560 = vmul.f32 %v553, 0.5
  %v561 = vtanh.pop %v560
  %v562 = vmul.f32 %v561, 0.5
  %v563 = vadd.f32 %v562, 0.5
  %v564 = vtanh.pop %v554
  %v565 = vmul.f32 %v555, 0.5
  %v566 = vtanh.pop %v565
  %v567 = vmul.f32 %v566, 0.5
  %v568 = vadd.f32 %v567, 0.5
  %v569 = vmul.f32 %v563, %v298
  %v570 = vmul.f32 %v559, %v564
  %v571 = vadd.f32 %v569, %v570
  %v572 = vtanh.pop %v571
  %v573 = vmul.f32 %v568, %v572
  %s574 = scalar_lea.vmem %s4, 8
  %575 = vst [vmem:[%s574] sm:$0xff] %v573
  %s576 = scalar_lea.vmem %s0, 64
  %v577 = vld [vmem:[%s576] sm:$0xff]
  %v578 = vld [vmem:[%s576 + $0x8] sm:$0xff]
  %v579 = vld [vmem:[%s576 + $0x10] sm:$0xff]
  %v580 = vld [vmem:[%s576 + $0x18] sm:$0xff]
  %v581 = vpack.c.bf16 %v573, %v573
  %v582 = vld [vmem:[%s3] sm:$0xff]
  %v583 = vld [vmem:[%s3 + $0x8] sm:$0xff]
  %v584 = vld [vmem:[%s3 + $0x10] sm:$0xff]
  %v585 = vld [vmem:[%s3 + $0x18] sm:$0xff]
  %v586 = vld [vmem:[%s3 + $0x20] sm:$0xff]
  %v587 = vld [vmem:[%s3 + $0x28] sm:$0xff]
  %v588 = vld [vmem:[%s3 + $0x30] sm:$0xff]
  %v589 = vld [vmem:[%s3 + $0x38] sm:$0xff]
  %v590 = vld [vmem:[%s3 + $0x40] sm:$0xff]
  %v591 = vld [vmem:[%s3 + $0x48] sm:$0xff]
  %v592 = vld [vmem:[%s3 + $0x50] sm:$0xff]
  %v593 = vld [vmem:[%s3 + $0x58] sm:$0xff]
  %v594 = vld [vmem:[%s3 + $0x60] sm:$0xff]
  %v595 = vld [vmem:[%s3 + $0x68] sm:$0xff]
  %v596 = vld [vmem:[%s3 + $0x70] sm:$0xff]
  %v597 = vld [vmem:[%s3 + $0x78] sm:$0xff]
  %v598 = vld [vmem:[%s3 + $0x80] sm:$0xff]
  %v599 = vld [vmem:[%s3 + $0x88] sm:$0xff]
  %v600 = vld [vmem:[%s3 + $0x90] sm:$0xff]
  %v601 = vld [vmem:[%s3 + $0x98] sm:$0xff]
  %v602 = vld [vmem:[%s3 + $0xa0] sm:$0xff]
  %v603 = vld [vmem:[%s3 + $0xa8] sm:$0xff]
  %v604 = vld [vmem:[%s3 + $0xb0] sm:$0xff]
  %v605 = vld [vmem:[%s3 + $0xb8] sm:$0xff]
  %v606 = vld [vmem:[%s3 + $0xc0] sm:$0xff]
  %v607 = vld [vmem:[%s3 + $0xc8] sm:$0xff]
  %v608 = vld [vmem:[%s3 + $0xd0] sm:$0xff]
  %v609 = vld [vmem:[%s3 + $0xd8] sm:$0xff]
  %v610 = vld [vmem:[%s3 + $0xe0] sm:$0xff]
  %v611 = vld [vmem:[%s3 + $0xe8] sm:$0xff]
  %v612 = vld [vmem:[%s3 + $0xf0] sm:$0xff]
  %v613 = vld [vmem:[%s3 + $0xf8] sm:$0xff]
  %v646 = vunpack.c.l.b16 %v582
  %v647 = vunpack.c.h.b16 %v582
  %v648 = vunpack.c.l.b16 %v583
  %v649 = vunpack.c.h.b16 %v583
  %v650 = vunpack.c.l.b16 %v584
  %v651 = vunpack.c.h.b16 %v584
  %v652 = vunpack.c.l.b16 %v585
  %v653 = vunpack.c.h.b16 %v585
  %v654 = vunpack.c.l.b16 %v586
  %v655 = vunpack.c.h.b16 %v586
  %v656 = vunpack.c.l.b16 %v587
  %v657 = vunpack.c.h.b16 %v587
  %v658 = vunpack.c.l.b16 %v588
  %v659 = vunpack.c.h.b16 %v588
  %v660 = vunpack.c.l.b16 %v589
  %v661 = vunpack.c.h.b16 %v589
  %v662 = vunpack.c.l.b16 %v590
  %v663 = vunpack.c.h.b16 %v590
  %v664 = vunpack.c.l.b16 %v591
  %v665 = vunpack.c.h.b16 %v591
  %v666 = vunpack.c.l.b16 %v592
  %v667 = vunpack.c.h.b16 %v592
  %v668 = vunpack.c.l.b16 %v593
  %v669 = vunpack.c.h.b16 %v593
  %v670 = vunpack.c.l.b16 %v594
  %v671 = vunpack.c.h.b16 %v594
  %v672 = vunpack.c.l.b16 %v595
  %v673 = vunpack.c.h.b16 %v595
  %v674 = vunpack.c.l.b16 %v596
  %v675 = vunpack.c.h.b16 %v596
  %v676 = vunpack.c.l.b16 %v597
  %v677 = vunpack.c.h.b16 %v597
  %v678 = vunpack.c.l.b16 %v598
  %v679 = vunpack.c.h.b16 %v598
  %v680 = vunpack.c.l.b16 %v599
  %v681 = vunpack.c.h.b16 %v599
  %v682 = vunpack.c.l.b16 %v600
  %v683 = vunpack.c.h.b16 %v600
  %v684 = vunpack.c.l.b16 %v601
  %v685 = vunpack.c.h.b16 %v601
  %v686 = vunpack.c.l.b16 %v602
  %v687 = vunpack.c.h.b16 %v602
  %v688 = vunpack.c.l.b16 %v603
  %v689 = vunpack.c.h.b16 %v603
  %v690 = vunpack.c.l.b16 %v604
  %v691 = vunpack.c.h.b16 %v604
  %v692 = vunpack.c.l.b16 %v605
  %v693 = vunpack.c.h.b16 %v605
  %v694 = vunpack.c.l.b16 %v606
  %v695 = vunpack.c.h.b16 %v606
  %v696 = vunpack.c.l.b16 %v607
  %v697 = vunpack.c.h.b16 %v607
  %v698 = vunpack.c.l.b16 %v608
  %v699 = vunpack.c.h.b16 %v608
  %v700 = vunpack.c.l.b16 %v609
  %v701 = vunpack.c.h.b16 %v609
  %v702 = vunpack.c.l.b16 %v610
  %v703 = vunpack.c.h.b16 %v610
  %v704 = vunpack.c.l.b16 %v611
  %v705 = vunpack.c.h.b16 %v611
  %v706 = vunpack.c.l.b16 %v612
  %v707 = vunpack.c.h.b16 %v612
  %v708 = vunpack.c.l.b16 %v613
  %v709 = vunpack.c.h.b16 %v613
  %v710 = vpack.c.b16 %v650, %v646
  %v711 = vpack.c.b16 %v651, %v647
  %v712 = vpack.c.b16 %v652, %v648
  %v713 = vpack.c.b16 %v653, %v649
  %v714 = vpack.c.b16 %v658, %v654
  %v715 = vpack.c.b16 %v659, %v655
  %v716 = vpack.c.b16 %v660, %v656
  %v717 = vpack.c.b16 %v661, %v657
  %v718 = vpack.c.b16 %v666, %v662
  %v719 = vpack.c.b16 %v667, %v663
  %v720 = vpack.c.b16 %v668, %v664
  %v721 = vpack.c.b16 %v669, %v665
  %v722 = vpack.c.b16 %v674, %v670
  %v723 = vpack.c.b16 %v675, %v671
  %v724 = vpack.c.b16 %v676, %v672
  %v725 = vpack.c.b16 %v677, %v673
  %v726 = vpack.c.b16 %v682, %v678
  %v727 = vpack.c.b16 %v683, %v679
  %v728 = vpack.c.b16 %v684, %v680
  %v729 = vpack.c.b16 %v685, %v681
  %v730 = vpack.c.b16 %v690, %v686
  %v731 = vpack.c.b16 %v691, %v687
  %v732 = vpack.c.b16 %v692, %v688
  %v733 = vpack.c.b16 %v693, %v689
  %v734 = vpack.c.b16 %v698, %v694
  %v735 = vpack.c.b16 %v699, %v695
  %v736 = vpack.c.b16 %v700, %v696
  %v737 = vpack.c.b16 %v701, %v697
  %v738 = vpack.c.b16 %v706, %v702
  %v739 = vpack.c.b16 %v707, %v703
  %v740 = vpack.c.b16 %v708, %v704
  %v741 = vpack.c.b16 %v709, %v705
  %774 = vmatpush.bf16.msra.mxu0 %v738
  %775 = vmatpush.bf16.msra.mxu0 %v734
  %776 = vmatpush.bf16.msra.mxu0 %v730
  %777 = vmatpush.bf16.msra.mxu0 %v726
  %778 = vmatpush.bf16.msra.mxu0 %v722
  %779 = vmatpush.bf16.msra.mxu0 %v718
  %780 = vmatpush.bf16.msra.mxu0 %v714
  %781 = vmatpush.bf16.msra.mxu0 %v710
  %782 = vmatmul.bf16.gmra.mxu0 %v581
  %v783 = vpop.f32.mrf.mxu0
  %v784 = vadd.f32 0.0, %v783
  %v785 = vpop.f32.mrf.mxu0
  %786 = vdwg.mxu0
  %787 = vmatpush.bf16.msra.mxu0 %v739
  %788 = vmatpush.bf16.msra.mxu0 %v735
  %789 = vmatpush.bf16.msra.mxu0 %v731
  %790 = vmatpush.bf16.msra.mxu0 %v727
  %791 = vmatpush.bf16.msra.mxu0 %v723
  %792 = vmatpush.bf16.msra.mxu0 %v719
  %793 = vmatpush.bf16.msra.mxu0 %v715
  %794 = vmatpush.bf16.msra.mxu0 %v711
  %795 = vmatmul.bf16.gmra.mxu0 %v581
  %v796 = vpop.f32.mrf.mxu0
  %v797 = vadd.f32 0.0, %v796
  %v798 = vpop.f32.mrf.mxu0
  %799 = vdwg.mxu0
  %800 = vmatpush.bf16.msra.mxu0 %v740
  %801 = vmatpush.bf16.msra.mxu0 %v736
  %802 = vmatpush.bf16.msra.mxu0 %v732
  %803 = vmatpush.bf16.msra.mxu0 %v728
  %804 = vmatpush.bf16.msra.mxu0 %v724
  %805 = vmatpush.bf16.msra.mxu0 %v720
  %806 = vmatpush.bf16.msra.mxu0 %v716
  %807 = vmatpush.bf16.msra.mxu0 %v712
  %808 = vmatmul.bf16.gmra.mxu0 %v581
  %v809 = vpop.f32.mrf.mxu0
  %v810 = vadd.f32 0.0, %v809
  %v811 = vpop.f32.mrf.mxu0
  %812 = vdwg.mxu0
  %813 = vmatpush.bf16.msra.mxu0 %v741
  %814 = vmatpush.bf16.msra.mxu0 %v737
  %815 = vmatpush.bf16.msra.mxu0 %v733
  %816 = vmatpush.bf16.msra.mxu0 %v729
  %817 = vmatpush.bf16.msra.mxu0 %v725
  %818 = vmatpush.bf16.msra.mxu0 %v721
  %819 = vmatpush.bf16.msra.mxu0 %v717
  %820 = vmatpush.bf16.msra.mxu0 %v713
  %821 = vmatmul.bf16.gmra.mxu0 %v581
  %v822 = vpop.f32.mrf.mxu0
  %v823 = vadd.f32 0.0, %v822
  %v824 = vpop.f32.mrf.mxu0
  %825 = vdwg.mxu0
  %v826 = vadd.f32 %v577, %v784
  %v827 = vadd.f32 %v578, %v797
  %v828 = vadd.f32 %v579, %v810
  %v829 = vadd.f32 %v580, %v823
  %v830 = vmul.f32 %v826, 0.5
  %v831 = vtanh.pop %v830
  %v832 = vmul.f32 %v831, 0.5
  %v833 = vadd.f32 %v832, 0.5
  %v834 = vmul.f32 %v827, 0.5
  %v835 = vtanh.pop %v834
  %v836 = vmul.f32 %v835, 0.5
  %v837 = vadd.f32 %v836, 0.5
  %v838 = vtanh.pop %v828
  %v839 = vmul.f32 %v829, 0.5
  %v840 = vtanh.pop %v839
  %v841 = vmul.f32 %v840, 0.5
  %v842 = vadd.f32 %v841, 0.5
  %v843 = vmul.f32 %v837, %v571
  %v844 = vmul.f32 %v833, %v838
  %v845 = vadd.f32 %v843, %v844
  %v846 = vtanh.pop %v845
  %v847 = vmul.f32 %v842, %v846
  %s848 = scalar_lea.vmem %s4, 16
  %849 = vst [vmem:[%s848] sm:$0xff] %v847
  %s850 = scalar_lea.vmem %s0, 96
  %v851 = vld [vmem:[%s850] sm:$0xff]
  %v852 = vld [vmem:[%s850 + $0x8] sm:$0xff]
  %v853 = vld [vmem:[%s850 + $0x10] sm:$0xff]
  %v854 = vld [vmem:[%s850 + $0x18] sm:$0xff]
  %v855 = vpack.c.bf16 %v847, %v847
  %v856 = vld [vmem:[%s3] sm:$0xff]
  %v857 = vld [vmem:[%s3 + $0x8] sm:$0xff]
  %v858 = vld [vmem:[%s3 + $0x10] sm:$0xff]
  %v859 = vld [vmem:[%s3 + $0x18] sm:$0xff]
  %v860 = vld [vmem:[%s3 + $0x20] sm:$0xff]
  %v861 = vld [vmem:[%s3 + $0x28] sm:$0xff]
  %v862 = vld [vmem:[%s3 + $0x30] sm:$0xff]
  %v863 = vld [vmem:[%s3 + $0x38] sm:$0xff]
  %v864 = vld [vmem:[%s3 + $0x40] sm:$0xff]
  %v865 = vld [vmem:[%s3 + $0x48] sm:$0xff]
  %v866 = vld [vmem:[%s3 + $0x50] sm:$0xff]
  %v867 = vld [vmem:[%s3 + $0x58] sm:$0xff]
  %v868 = vld [vmem:[%s3 + $0x60] sm:$0xff]
  %v869 = vld [vmem:[%s3 + $0x68] sm:$0xff]
  %v870 = vld [vmem:[%s3 + $0x70] sm:$0xff]
  %v871 = vld [vmem:[%s3 + $0x78] sm:$0xff]
  %v872 = vld [vmem:[%s3 + $0x80] sm:$0xff]
  %v873 = vld [vmem:[%s3 + $0x88] sm:$0xff]
  %v874 = vld [vmem:[%s3 + $0x90] sm:$0xff]
  %v875 = vld [vmem:[%s3 + $0x98] sm:$0xff]
  %v876 = vld [vmem:[%s3 + $0xa0] sm:$0xff]
  %v877 = vld [vmem:[%s3 + $0xa8] sm:$0xff]
  %v878 = vld [vmem:[%s3 + $0xb0] sm:$0xff]
  %v879 = vld [vmem:[%s3 + $0xb8] sm:$0xff]
  %v880 = vld [vmem:[%s3 + $0xc0] sm:$0xff]
  %v881 = vld [vmem:[%s3 + $0xc8] sm:$0xff]
  %v882 = vld [vmem:[%s3 + $0xd0] sm:$0xff]
  %v883 = vld [vmem:[%s3 + $0xd8] sm:$0xff]
  %v884 = vld [vmem:[%s3 + $0xe0] sm:$0xff]
  %v885 = vld [vmem:[%s3 + $0xe8] sm:$0xff]
  %v886 = vld [vmem:[%s3 + $0xf0] sm:$0xff]
  %v887 = vld [vmem:[%s3 + $0xf8] sm:$0xff]
  %v920 = vunpack.c.l.b16 %v856
  %v921 = vunpack.c.h.b16 %v856
  %v922 = vunpack.c.l.b16 %v857
  %v923 = vunpack.c.h.b16 %v857
  %v924 = vunpack.c.l.b16 %v858
  %v925 = vunpack.c.h.b16 %v858
  %v926 = vunpack.c.l.b16 %v859
  %v927 = vunpack.c.h.b16 %v859
  %v928 = vunpack.c.l.b16 %v860
  %v929 = vunpack.c.h.b16 %v860
  %v930 = vunpack.c.l.b16 %v861
  %v931 = vunpack.c.h.b16 %v861
  %v932 = vunpack.c.l.b16 %v862
  %v933 = vunpack.c.h.b16 %v862
  %v934 = vunpack.c.l.b16 %v863
  %v935 = vunpack.c.h.b16 %v863
  %v936 = vunpack.c.l.b16 %v864
  %v937 = vunpack.c.h.b16 %v864
  %v938 = vunpack.c.l.b16 %v865
  %v939 = vunpack.c.h.b16 %v865
  %v940 = vunpack.c.l.b16 %v866
  %v941 = vunpack.c.h.b16 %v866
  %v942 = vunpack.c.l.b16 %v867
  %v943 = vunpack.c.h.b16 %v867
  %v944 = vunpack.c.l.b16 %v868
  %v945 = vunpack.c.h.b16 %v868
  %v946 = vunpack.c.l.b16 %v869
  %v947 = vunpack.c.h.b16 %v869
  %v948 = vunpack.c.l.b16 %v870
  %v949 = vunpack.c.h.b16 %v870
  %v950 = vunpack.c.l.b16 %v871
  %v951 = vunpack.c.h.b16 %v871
  %v952 = vunpack.c.l.b16 %v872
  %v953 = vunpack.c.h.b16 %v872
  %v954 = vunpack.c.l.b16 %v873
  %v955 = vunpack.c.h.b16 %v873
  %v956 = vunpack.c.l.b16 %v874
  %v957 = vunpack.c.h.b16 %v874
  %v958 = vunpack.c.l.b16 %v875
  %v959 = vunpack.c.h.b16 %v875
  %v960 = vunpack.c.l.b16 %v876
  %v961 = vunpack.c.h.b16 %v876
  %v962 = vunpack.c.l.b16 %v877
  %v963 = vunpack.c.h.b16 %v877
  %v964 = vunpack.c.l.b16 %v878
  %v965 = vunpack.c.h.b16 %v878
  %v966 = vunpack.c.l.b16 %v879
  %v967 = vunpack.c.h.b16 %v879
  %v968 = vunpack.c.l.b16 %v880
  %v969 = vunpack.c.h.b16 %v880
  %v970 = vunpack.c.l.b16 %v881
  %v971 = vunpack.c.h.b16 %v881
  %v972 = vunpack.c.l.b16 %v882
  %v973 = vunpack.c.h.b16 %v882
  %v974 = vunpack.c.l.b16 %v883
  %v975 = vunpack.c.h.b16 %v883
  %v976 = vunpack.c.l.b16 %v884
  %v977 = vunpack.c.h.b16 %v884
  %v978 = vunpack.c.l.b16 %v885
  %v979 = vunpack.c.h.b16 %v885
  %v980 = vunpack.c.l.b16 %v886
  %v981 = vunpack.c.h.b16 %v886
  %v982 = vunpack.c.l.b16 %v887
  %v983 = vunpack.c.h.b16 %v887
  %v984 = vpack.c.b16 %v924, %v920
  %v985 = vpack.c.b16 %v925, %v921
  %v986 = vpack.c.b16 %v926, %v922
  %v987 = vpack.c.b16 %v927, %v923
  %v988 = vpack.c.b16 %v932, %v928
  %v989 = vpack.c.b16 %v933, %v929
  %v990 = vpack.c.b16 %v934, %v930
  %v991 = vpack.c.b16 %v935, %v931
  %v992 = vpack.c.b16 %v940, %v936
  %v993 = vpack.c.b16 %v941, %v937
  %v994 = vpack.c.b16 %v942, %v938
  %v995 = vpack.c.b16 %v943, %v939
  %v996 = vpack.c.b16 %v948, %v944
  %v997 = vpack.c.b16 %v949, %v945
  %v998 = vpack.c.b16 %v950, %v946
  %v999 = vpack.c.b16 %v951, %v947
  %v1000 = vpack.c.b16 %v956, %v952
  %v1001 = vpack.c.b16 %v957, %v953
  %v1002 = vpack.c.b16 %v958, %v954
  %v1003 = vpack.c.b16 %v959, %v955
  %v1004 = vpack.c.b16 %v964, %v960
  %v1005 = vpack.c.b16 %v965, %v961
  %v1006 = vpack.c.b16 %v966, %v962
  %v1007 = vpack.c.b16 %v967, %v963
  %v1008 = vpack.c.b16 %v972, %v968
  %v1009 = vpack.c.b16 %v973, %v969
  %v1010 = vpack.c.b16 %v974, %v970
  %v1011 = vpack.c.b16 %v975, %v971
  %v1012 = vpack.c.b16 %v980, %v976
  %v1013 = vpack.c.b16 %v981, %v977
  %v1014 = vpack.c.b16 %v982, %v978
  %v1015 = vpack.c.b16 %v983, %v979
  %1048 = vmatpush.bf16.msra.mxu0 %v1012
  %1049 = vmatpush.bf16.msra.mxu0 %v1008
  %1050 = vmatpush.bf16.msra.mxu0 %v1004
  %1051 = vmatpush.bf16.msra.mxu0 %v1000
  %1052 = vmatpush.bf16.msra.mxu0 %v996
  %1053 = vmatpush.bf16.msra.mxu0 %v992
  %1054 = vmatpush.bf16.msra.mxu0 %v988
  %1055 = vmatpush.bf16.msra.mxu0 %v984
  %1056 = vmatmul.bf16.gmra.mxu0 %v855
  %v1057 = vpop.f32.mrf.mxu0
  %v1058 = vadd.f32 0.0, %v1057
  %v1059 = vpop.f32.mrf.mxu0
  %1060 = vdwg.mxu0
  %1061 = vmatpush.bf16.msra.mxu0 %v1013
  %1062 = vmatpush.bf16.msra.mxu0 %v1009
  %1063 = vmatpush.bf16.msra.mxu0 %v1005
  %1064 = vmatpush.bf16.msra.mxu0 %v1001
  %1065 = vmatpush.bf16.msra.mxu0 %v997
  %1066 = vmatpush.bf16.msra.mxu0 %v993
  %1067 = vmatpush.bf16.msra.mxu0 %v989
  %1068 = vmatpush.bf16.msra.mxu0 %v985
  %1069 = vmatmul.bf16.gmra.mxu0 %v855
  %v1070 = vpop.f32.mrf.mxu0
  %v1071 = vadd.f32 0.0, %v1070
  %v1072 = vpop.f32.mrf.mxu0
  %1073 = vdwg.mxu0
  %1074 = vmatpush.bf16.msra.mxu0 %v1014
  %1075 = vmatpush.bf16.msra.mxu0 %v1010
  %1076 = vmatpush.bf16.msra.mxu0 %v1006
  %1077 = vmatpush.bf16.msra.mxu0 %v1002
  %1078 = vmatpush.bf16.msra.mxu0 %v998
  %1079 = vmatpush.bf16.msra.mxu0 %v994
  %1080 = vmatpush.bf16.msra.mxu0 %v990
  %1081 = vmatpush.bf16.msra.mxu0 %v986
  %1082 = vmatmul.bf16.gmra.mxu0 %v855
  %v1083 = vpop.f32.mrf.mxu0
  %v1084 = vadd.f32 0.0, %v1083
  %v1085 = vpop.f32.mrf.mxu0
  %1086 = vdwg.mxu0
  %1087 = vmatpush.bf16.msra.mxu0 %v1015
  %1088 = vmatpush.bf16.msra.mxu0 %v1011
  %1089 = vmatpush.bf16.msra.mxu0 %v1007
  %1090 = vmatpush.bf16.msra.mxu0 %v1003
  %1091 = vmatpush.bf16.msra.mxu0 %v999
  %1092 = vmatpush.bf16.msra.mxu0 %v995
  %1093 = vmatpush.bf16.msra.mxu0 %v991
  %1094 = vmatpush.bf16.msra.mxu0 %v987
  %1095 = vmatmul.bf16.gmra.mxu0 %v855
  %v1096 = vpop.f32.mrf.mxu0
  %v1097 = vadd.f32 0.0, %v1096
  %v1098 = vpop.f32.mrf.mxu0
  %1099 = vdwg.mxu0
  %v1100 = vadd.f32 %v851, %v1058
  %v1101 = vadd.f32 %v852, %v1071
  %v1102 = vadd.f32 %v853, %v1084
  %v1103 = vadd.f32 %v854, %v1097
  %v1104 = vmul.f32 %v1100, 0.5
  %v1105 = vtanh.pop %v1104
  %v1106 = vmul.f32 %v1105, 0.5
  %v1107 = vadd.f32 %v1106, 0.5
  %v1108 = vmul.f32 %v1101, 0.5
  %v1109 = vtanh.pop %v1108
  %v1110 = vmul.f32 %v1109, 0.5
  %v1111 = vadd.f32 %v1110, 0.5
  %v1112 = vtanh.pop %v1102
  %v1113 = vmul.f32 %v1103, 0.5
  %v1114 = vtanh.pop %v1113
  %v1115 = vmul.f32 %v1114, 0.5
  %v1116 = vadd.f32 %v1115, 0.5
  %v1117 = vmul.f32 %v1111, %v845
  %v1118 = vmul.f32 %v1107, %v1112
  %v1119 = vadd.f32 %v1117, %v1118
  %v1120 = vtanh.pop %v1119
  %v1121 = vmul.f32 %v1116, %v1120
  %s1122 = scalar_lea.vmem %s4, 24
  %1123 = vst [vmem:[%s1122] sm:$0xff] %v1121
  %s1124 = scalar_lea.vmem %s0, 128
  %v1125 = vld [vmem:[%s1124] sm:$0xff]
  %v1126 = vld [vmem:[%s1124 + $0x8] sm:$0xff]
  %v1127 = vld [vmem:[%s1124 + $0x10] sm:$0xff]
  %v1128 = vld [vmem:[%s1124 + $0x18] sm:$0xff]
  %v1129 = vpack.c.bf16 %v1121, %v1121
  %v1130 = vld [vmem:[%s3] sm:$0xff]
  %v1131 = vld [vmem:[%s3 + $0x8] sm:$0xff]
  %v1132 = vld [vmem:[%s3 + $0x10] sm:$0xff]
  %v1133 = vld [vmem:[%s3 + $0x18] sm:$0xff]
  %v1134 = vld [vmem:[%s3 + $0x20] sm:$0xff]
  %v1135 = vld [vmem:[%s3 + $0x28] sm:$0xff]
  %v1136 = vld [vmem:[%s3 + $0x30] sm:$0xff]
  %v1137 = vld [vmem:[%s3 + $0x38] sm:$0xff]
  %v1138 = vld [vmem:[%s3 + $0x40] sm:$0xff]
  %v1139 = vld [vmem:[%s3 + $0x48] sm:$0xff]
  %v1140 = vld [vmem:[%s3 + $0x50] sm:$0xff]
  %v1141 = vld [vmem:[%s3 + $0x58] sm:$0xff]
  %v1142 = vld [vmem:[%s3 + $0x60] sm:$0xff]
  %v1143 = vld [vmem:[%s3 + $0x68] sm:$0xff]
  %v1144 = vld [vmem:[%s3 + $0x70] sm:$0xff]
  %v1145 = vld [vmem:[%s3 + $0x78] sm:$0xff]
  %v1146 = vld [vmem:[%s3 + $0x80] sm:$0xff]
  %v1147 = vld [vmem:[%s3 + $0x88] sm:$0xff]
  %v1148 = vld [vmem:[%s3 + $0x90] sm:$0xff]
  %v1149 = vld [vmem:[%s3 + $0x98] sm:$0xff]
  %v1150 = vld [vmem:[%s3 + $0xa0] sm:$0xff]
  %v1151 = vld [vmem:[%s3 + $0xa8] sm:$0xff]
  %v1152 = vld [vmem:[%s3 + $0xb0] sm:$0xff]
  %v1153 = vld [vmem:[%s3 + $0xb8] sm:$0xff]
  %v1154 = vld [vmem:[%s3 + $0xc0] sm:$0xff]
  %v1155 = vld [vmem:[%s3 + $0xc8] sm:$0xff]
  %v1156 = vld [vmem:[%s3 + $0xd0] sm:$0xff]
  %v1157 = vld [vmem:[%s3 + $0xd8] sm:$0xff]
  %v1158 = vld [vmem:[%s3 + $0xe0] sm:$0xff]
  %v1159 = vld [vmem:[%s3 + $0xe8] sm:$0xff]
  %v1160 = vld [vmem:[%s3 + $0xf0] sm:$0xff]
  %v1161 = vld [vmem:[%s3 + $0xf8] sm:$0xff]
  %v1194 = vunpack.c.l.b16 %v1130
  %v1195 = vunpack.c.h.b16 %v1130
  %v1196 = vunpack.c.l.b16 %v1131
  %v1197 = vunpack.c.h.b16 %v1131
  %v1198 = vunpack.c.l.b16 %v1132
  %v1199 = vunpack.c.h.b16 %v1132
  %v1200 = vunpack.c.l.b16 %v1133
  %v1201 = vunpack.c.h.b16 %v1133
  %v1202 = vunpack.c.l.b16 %v1134
  %v1203 = vunpack.c.h.b16 %v1134
  %v1204 = vunpack.c.l.b16 %v1135
  %v1205 = vunpack.c.h.b16 %v1135
  %v1206 = vunpack.c.l.b16 %v1136
  %v1207 = vunpack.c.h.b16 %v1136
  %v1208 = vunpack.c.l.b16 %v1137
  %v1209 = vunpack.c.h.b16 %v1137
  %v1210 = vunpack.c.l.b16 %v1138
  %v1211 = vunpack.c.h.b16 %v1138
  %v1212 = vunpack.c.l.b16 %v1139
  %v1213 = vunpack.c.h.b16 %v1139
  %v1214 = vunpack.c.l.b16 %v1140
  %v1215 = vunpack.c.h.b16 %v1140
  %v1216 = vunpack.c.l.b16 %v1141
  %v1217 = vunpack.c.h.b16 %v1141
  %v1218 = vunpack.c.l.b16 %v1142
  %v1219 = vunpack.c.h.b16 %v1142
  %v1220 = vunpack.c.l.b16 %v1143
  %v1221 = vunpack.c.h.b16 %v1143
  %v1222 = vunpack.c.l.b16 %v1144
  %v1223 = vunpack.c.h.b16 %v1144
  %v1224 = vunpack.c.l.b16 %v1145
  %v1225 = vunpack.c.h.b16 %v1145
  %v1226 = vunpack.c.l.b16 %v1146
  %v1227 = vunpack.c.h.b16 %v1146
  %v1228 = vunpack.c.l.b16 %v1147
  %v1229 = vunpack.c.h.b16 %v1147
  %v1230 = vunpack.c.l.b16 %v1148
  %v1231 = vunpack.c.h.b16 %v1148
  %v1232 = vunpack.c.l.b16 %v1149
  %v1233 = vunpack.c.h.b16 %v1149
  %v1234 = vunpack.c.l.b16 %v1150
  %v1235 = vunpack.c.h.b16 %v1150
  %v1236 = vunpack.c.l.b16 %v1151
  %v1237 = vunpack.c.h.b16 %v1151
  %v1238 = vunpack.c.l.b16 %v1152
  %v1239 = vunpack.c.h.b16 %v1152
  %v1240 = vunpack.c.l.b16 %v1153
  %v1241 = vunpack.c.h.b16 %v1153
  %v1242 = vunpack.c.l.b16 %v1154
  %v1243 = vunpack.c.h.b16 %v1154
  %v1244 = vunpack.c.l.b16 %v1155
  %v1245 = vunpack.c.h.b16 %v1155
  %v1246 = vunpack.c.l.b16 %v1156
  %v1247 = vunpack.c.h.b16 %v1156
  %v1248 = vunpack.c.l.b16 %v1157
  %v1249 = vunpack.c.h.b16 %v1157
  %v1250 = vunpack.c.l.b16 %v1158
  %v1251 = vunpack.c.h.b16 %v1158
  %v1252 = vunpack.c.l.b16 %v1159
  %v1253 = vunpack.c.h.b16 %v1159
  %v1254 = vunpack.c.l.b16 %v1160
  %v1255 = vunpack.c.h.b16 %v1160
  %v1256 = vunpack.c.l.b16 %v1161
  %v1257 = vunpack.c.h.b16 %v1161
  %v1258 = vpack.c.b16 %v1198, %v1194
  %v1259 = vpack.c.b16 %v1199, %v1195
  %v1260 = vpack.c.b16 %v1200, %v1196
  %v1261 = vpack.c.b16 %v1201, %v1197
  %v1262 = vpack.c.b16 %v1206, %v1202
  %v1263 = vpack.c.b16 %v1207, %v1203
  %v1264 = vpack.c.b16 %v1208, %v1204
  %v1265 = vpack.c.b16 %v1209, %v1205
  %v1266 = vpack.c.b16 %v1214, %v1210
  %v1267 = vpack.c.b16 %v1215, %v1211
  %v1268 = vpack.c.b16 %v1216, %v1212
  %v1269 = vpack.c.b16 %v1217, %v1213
  %v1270 = vpack.c.b16 %v1222, %v1218
  %v1271 = vpack.c.b16 %v1223, %v1219
  %v1272 = vpack.c.b16 %v1224, %v1220
  %v1273 = vpack.c.b16 %v1225, %v1221
  %v1274 = vpack.c.b16 %v1230, %v1226
  %v1275 = vpack.c.b16 %v1231, %v1227
  %v1276 = vpack.c.b16 %v1232, %v1228
  %v1277 = vpack.c.b16 %v1233, %v1229
  %v1278 = vpack.c.b16 %v1238, %v1234
  %v1279 = vpack.c.b16 %v1239, %v1235
  %v1280 = vpack.c.b16 %v1240, %v1236
  %v1281 = vpack.c.b16 %v1241, %v1237
  %v1282 = vpack.c.b16 %v1246, %v1242
  %v1283 = vpack.c.b16 %v1247, %v1243
  %v1284 = vpack.c.b16 %v1248, %v1244
  %v1285 = vpack.c.b16 %v1249, %v1245
  %v1286 = vpack.c.b16 %v1254, %v1250
  %v1287 = vpack.c.b16 %v1255, %v1251
  %v1288 = vpack.c.b16 %v1256, %v1252
  %v1289 = vpack.c.b16 %v1257, %v1253
  %1322 = vmatpush.bf16.msra.mxu0 %v1286
  %1323 = vmatpush.bf16.msra.mxu0 %v1282
  %1324 = vmatpush.bf16.msra.mxu0 %v1278
  %1325 = vmatpush.bf16.msra.mxu0 %v1274
  %1326 = vmatpush.bf16.msra.mxu0 %v1270
  %1327 = vmatpush.bf16.msra.mxu0 %v1266
  %1328 = vmatpush.bf16.msra.mxu0 %v1262
  %1329 = vmatpush.bf16.msra.mxu0 %v1258
  %1330 = vmatmul.bf16.gmra.mxu0 %v1129
  %v1331 = vpop.f32.mrf.mxu0
  %v1332 = vadd.f32 0.0, %v1331
  %v1333 = vpop.f32.mrf.mxu0
  %1334 = vdwg.mxu0
  %1335 = vmatpush.bf16.msra.mxu0 %v1287
  %1336 = vmatpush.bf16.msra.mxu0 %v1283
  %1337 = vmatpush.bf16.msra.mxu0 %v1279
  %1338 = vmatpush.bf16.msra.mxu0 %v1275
  %1339 = vmatpush.bf16.msra.mxu0 %v1271
  %1340 = vmatpush.bf16.msra.mxu0 %v1267
  %1341 = vmatpush.bf16.msra.mxu0 %v1263
  %1342 = vmatpush.bf16.msra.mxu0 %v1259
  %1343 = vmatmul.bf16.gmra.mxu0 %v1129
  %v1344 = vpop.f32.mrf.mxu0
  %v1345 = vadd.f32 0.0, %v1344
  %v1346 = vpop.f32.mrf.mxu0
  %1347 = vdwg.mxu0
  %1348 = vmatpush.bf16.msra.mxu0 %v1288
  %1349 = vmatpush.bf16.msra.mxu0 %v1284
  %1350 = vmatpush.bf16.msra.mxu0 %v1280
  %1351 = vmatpush.bf16.msra.mxu0 %v1276
  %1352 = vmatpush.bf16.msra.mxu0 %v1272
  %1353 = vmatpush.bf16.msra.mxu0 %v1268
  %1354 = vmatpush.bf16.msra.mxu0 %v1264
  %1355 = vmatpush.bf16.msra.mxu0 %v1260
  %1356 = vmatmul.bf16.gmra.mxu0 %v1129
  %v1357 = vpop.f32.mrf.mxu0
  %v1358 = vadd.f32 0.0, %v1357
  %v1359 = vpop.f32.mrf.mxu0
  %1360 = vdwg.mxu0
  %1361 = vmatpush.bf16.msra.mxu0 %v1289
  %1362 = vmatpush.bf16.msra.mxu0 %v1285
  %1363 = vmatpush.bf16.msra.mxu0 %v1281
  %1364 = vmatpush.bf16.msra.mxu0 %v1277
  %1365 = vmatpush.bf16.msra.mxu0 %v1273
  %1366 = vmatpush.bf16.msra.mxu0 %v1269
  %1367 = vmatpush.bf16.msra.mxu0 %v1265
  %1368 = vmatpush.bf16.msra.mxu0 %v1261
  %1369 = vmatmul.bf16.gmra.mxu0 %v1129
  %v1370 = vpop.f32.mrf.mxu0
  %v1371 = vadd.f32 0.0, %v1370
  %v1372 = vpop.f32.mrf.mxu0
  %1373 = vdwg.mxu0
  %v1374 = vadd.f32 %v1125, %v1332
  %v1375 = vadd.f32 %v1126, %v1345
  %v1376 = vadd.f32 %v1127, %v1358
  %v1377 = vadd.f32 %v1128, %v1371
  %v1378 = vmul.f32 %v1374, 0.5
  %v1379 = vtanh.pop %v1378
  %v1380 = vmul.f32 %v1379, 0.5
  %v1381 = vadd.f32 %v1380, 0.5
  %v1382 = vmul.f32 %v1375, 0.5
  %v1383 = vtanh.pop %v1382
  %v1384 = vmul.f32 %v1383, 0.5
  %v1385 = vadd.f32 %v1384, 0.5
  %v1386 = vtanh.pop %v1376
  %v1387 = vmul.f32 %v1377, 0.5
  %v1388 = vtanh.pop %v1387
  %v1389 = vmul.f32 %v1388, 0.5
  %v1390 = vadd.f32 %v1389, 0.5
  %v1391 = vmul.f32 %v1385, %v1119
  %v1392 = vmul.f32 %v1381, %v1386
  %v1393 = vadd.f32 %v1391, %v1392
  %v1394 = vtanh.pop %v1393
  %v1395 = vmul.f32 %v1390, %v1394
  %s1396 = scalar_lea.vmem %s4, 32
  %1397 = vst [vmem:[%s1396] sm:$0xff] %v1395
  %s1398 = scalar_lea.vmem %s0, 160
  %v1399 = vld [vmem:[%s1398] sm:$0xff]
  %v1400 = vld [vmem:[%s1398 + $0x8] sm:$0xff]
  %v1401 = vld [vmem:[%s1398 + $0x10] sm:$0xff]
  %v1402 = vld [vmem:[%s1398 + $0x18] sm:$0xff]
  %v1403 = vpack.c.bf16 %v1395, %v1395
  %v1404 = vld [vmem:[%s3] sm:$0xff]
  %v1405 = vld [vmem:[%s3 + $0x8] sm:$0xff]
  %v1406 = vld [vmem:[%s3 + $0x10] sm:$0xff]
  %v1407 = vld [vmem:[%s3 + $0x18] sm:$0xff]
  %v1408 = vld [vmem:[%s3 + $0x20] sm:$0xff]
  %v1409 = vld [vmem:[%s3 + $0x28] sm:$0xff]
  %v1410 = vld [vmem:[%s3 + $0x30] sm:$0xff]
  %v1411 = vld [vmem:[%s3 + $0x38] sm:$0xff]
  %v1412 = vld [vmem:[%s3 + $0x40] sm:$0xff]
  %v1413 = vld [vmem:[%s3 + $0x48] sm:$0xff]
  %v1414 = vld [vmem:[%s3 + $0x50] sm:$0xff]
  %v1415 = vld [vmem:[%s3 + $0x58] sm:$0xff]
  %v1416 = vld [vmem:[%s3 + $0x60] sm:$0xff]
  %v1417 = vld [vmem:[%s3 + $0x68] sm:$0xff]
  %v1418 = vld [vmem:[%s3 + $0x70] sm:$0xff]
  %v1419 = vld [vmem:[%s3 + $0x78] sm:$0xff]
  %v1420 = vld [vmem:[%s3 + $0x80] sm:$0xff]
  %v1421 = vld [vmem:[%s3 + $0x88] sm:$0xff]
  %v1422 = vld [vmem:[%s3 + $0x90] sm:$0xff]
  %v1423 = vld [vmem:[%s3 + $0x98] sm:$0xff]
  %v1424 = vld [vmem:[%s3 + $0xa0] sm:$0xff]
  %v1425 = vld [vmem:[%s3 + $0xa8] sm:$0xff]
  %v1426 = vld [vmem:[%s3 + $0xb0] sm:$0xff]
  %v1427 = vld [vmem:[%s3 + $0xb8] sm:$0xff]
  %v1428 = vld [vmem:[%s3 + $0xc0] sm:$0xff]
  %v1429 = vld [vmem:[%s3 + $0xc8] sm:$0xff]
  %v1430 = vld [vmem:[%s3 + $0xd0] sm:$0xff]
  %v1431 = vld [vmem:[%s3 + $0xd8] sm:$0xff]
  %v1432 = vld [vmem:[%s3 + $0xe0] sm:$0xff]
  %v1433 = vld [vmem:[%s3 + $0xe8] sm:$0xff]
  %v1434 = vld [vmem:[%s3 + $0xf0] sm:$0xff]
  %v1435 = vld [vmem:[%s3 + $0xf8] sm:$0xff]
  %v1468 = vunpack.c.l.b16 %v1404
  %v1469 = vunpack.c.h.b16 %v1404
  %v1470 = vunpack.c.l.b16 %v1405
  %v1471 = vunpack.c.h.b16 %v1405
  %v1472 = vunpack.c.l.b16 %v1406
  %v1473 = vunpack.c.h.b16 %v1406
  %v1474 = vunpack.c.l.b16 %v1407
  %v1475 = vunpack.c.h.b16 %v1407
  %v1476 = vunpack.c.l.b16 %v1408
  %v1477 = vunpack.c.h.b16 %v1408
  %v1478 = vunpack.c.l.b16 %v1409
  %v1479 = vunpack.c.h.b16 %v1409
  %v1480 = vunpack.c.l.b16 %v1410
  %v1481 = vunpack.c.h.b16 %v1410
  %v1482 = vunpack.c.l.b16 %v1411
  %v1483 = vunpack.c.h.b16 %v1411
  %v1484 = vunpack.c.l.b16 %v1412
  %v1485 = vunpack.c.h.b16 %v1412
  %v1486 = vunpack.c.l.b16 %v1413
  %v1487 = vunpack.c.h.b16 %v1413
  %v1488 = vunpack.c.l.b16 %v1414
  %v1489 = vunpack.c.h.b16 %v1414
  %v1490 = vunpack.c.l.b16 %v1415
  %v1491 = vunpack.c.h.b16 %v1415
  %v1492 = vunpack.c.l.b16 %v1416
  %v1493 = vunpack.c.h.b16 %v1416
  %v1494 = vunpack.c.l.b16 %v1417
  %v1495 = vunpack.c.h.b16 %v1417
  %v1496 = vunpack.c.l.b16 %v1418
  %v1497 = vunpack.c.h.b16 %v1418
  %v1498 = vunpack.c.l.b16 %v1419
  %v1499 = vunpack.c.h.b16 %v1419
  %v1500 = vunpack.c.l.b16 %v1420
  %v1501 = vunpack.c.h.b16 %v1420
  %v1502 = vunpack.c.l.b16 %v1421
  %v1503 = vunpack.c.h.b16 %v1421
  %v1504 = vunpack.c.l.b16 %v1422
  %v1505 = vunpack.c.h.b16 %v1422
  %v1506 = vunpack.c.l.b16 %v1423
  %v1507 = vunpack.c.h.b16 %v1423
  %v1508 = vunpack.c.l.b16 %v1424
  %v1509 = vunpack.c.h.b16 %v1424
  %v1510 = vunpack.c.l.b16 %v1425
  %v1511 = vunpack.c.h.b16 %v1425
  %v1512 = vunpack.c.l.b16 %v1426
  %v1513 = vunpack.c.h.b16 %v1426
  %v1514 = vunpack.c.l.b16 %v1427
  %v1515 = vunpack.c.h.b16 %v1427
  %v1516 = vunpack.c.l.b16 %v1428
  %v1517 = vunpack.c.h.b16 %v1428
  %v1518 = vunpack.c.l.b16 %v1429
  %v1519 = vunpack.c.h.b16 %v1429
  %v1520 = vunpack.c.l.b16 %v1430
  %v1521 = vunpack.c.h.b16 %v1430
  %v1522 = vunpack.c.l.b16 %v1431
  %v1523 = vunpack.c.h.b16 %v1431
  %v1524 = vunpack.c.l.b16 %v1432
  %v1525 = vunpack.c.h.b16 %v1432
  %v1526 = vunpack.c.l.b16 %v1433
  %v1527 = vunpack.c.h.b16 %v1433
  %v1528 = vunpack.c.l.b16 %v1434
  %v1529 = vunpack.c.h.b16 %v1434
  %v1530 = vunpack.c.l.b16 %v1435
  %v1531 = vunpack.c.h.b16 %v1435
  %v1532 = vpack.c.b16 %v1472, %v1468
  %v1533 = vpack.c.b16 %v1473, %v1469
  %v1534 = vpack.c.b16 %v1474, %v1470
  %v1535 = vpack.c.b16 %v1475, %v1471
  %v1536 = vpack.c.b16 %v1480, %v1476
  %v1537 = vpack.c.b16 %v1481, %v1477
  %v1538 = vpack.c.b16 %v1482, %v1478
  %v1539 = vpack.c.b16 %v1483, %v1479
  %v1540 = vpack.c.b16 %v1488, %v1484
  %v1541 = vpack.c.b16 %v1489, %v1485
  %v1542 = vpack.c.b16 %v1490, %v1486
  %v1543 = vpack.c.b16 %v1491, %v1487
  %v1544 = vpack.c.b16 %v1496, %v1492
  %v1545 = vpack.c.b16 %v1497, %v1493
  %v1546 = vpack.c.b16 %v1498, %v1494
  %v1547 = vpack.c.b16 %v1499, %v1495
  %v1548 = vpack.c.b16 %v1504, %v1500
  %v1549 = vpack.c.b16 %v1505, %v1501
  %v1550 = vpack.c.b16 %v1506, %v1502
  %v1551 = vpack.c.b16 %v1507, %v1503
  %v1552 = vpack.c.b16 %v1512, %v1508
  %v1553 = vpack.c.b16 %v1513, %v1509
  %v1554 = vpack.c.b16 %v1514, %v1510
  %v1555 = vpack.c.b16 %v1515, %v1511
  %v1556 = vpack.c.b16 %v1520, %v1516
  %v1557 = vpack.c.b16 %v1521, %v1517
  %v1558 = vpack.c.b16 %v1522, %v1518
  %v1559 = vpack.c.b16 %v1523, %v1519
  %v1560 = vpack.c.b16 %v1528, %v1524
  %v1561 = vpack.c.b16 %v1529, %v1525
  %v1562 = vpack.c.b16 %v1530, %v1526
  %v1563 = vpack.c.b16 %v1531, %v1527
  %1596 = vmatpush.bf16.msra.mxu0 %v1560
  %1597 = vmatpush.bf16.msra.mxu0 %v1556
  %1598 = vmatpush.bf16.msra.mxu0 %v1552
  %1599 = vmatpush.bf16.msra.mxu0 %v1548
  %1600 = vmatpush.bf16.msra.mxu0 %v1544
  %1601 = vmatpush.bf16.msra.mxu0 %v1540
  %1602 = vmatpush.bf16.msra.mxu0 %v1536
  %1603 = vmatpush.bf16.msra.mxu0 %v1532
  %1604 = vmatmul.bf16.gmra.mxu0 %v1403
  %v1605 = vpop.f32.mrf.mxu0
  %v1606 = vadd.f32 0.0, %v1605
  %v1607 = vpop.f32.mrf.mxu0
  %1608 = vdwg.mxu0
  %1609 = vmatpush.bf16.msra.mxu0 %v1561
  %1610 = vmatpush.bf16.msra.mxu0 %v1557
  %1611 = vmatpush.bf16.msra.mxu0 %v1553
  %1612 = vmatpush.bf16.msra.mxu0 %v1549
  %1613 = vmatpush.bf16.msra.mxu0 %v1545
  %1614 = vmatpush.bf16.msra.mxu0 %v1541
  %1615 = vmatpush.bf16.msra.mxu0 %v1537
  %1616 = vmatpush.bf16.msra.mxu0 %v1533
  %1617 = vmatmul.bf16.gmra.mxu0 %v1403
  %v1618 = vpop.f32.mrf.mxu0
  %v1619 = vadd.f32 0.0, %v1618
  %v1620 = vpop.f32.mrf.mxu0
  %1621 = vdwg.mxu0
  %1622 = vmatpush.bf16.msra.mxu0 %v1562
  %1623 = vmatpush.bf16.msra.mxu0 %v1558
  %1624 = vmatpush.bf16.msra.mxu0 %v1554
  %1625 = vmatpush.bf16.msra.mxu0 %v1550
  %1626 = vmatpush.bf16.msra.mxu0 %v1546
  %1627 = vmatpush.bf16.msra.mxu0 %v1542
  %1628 = vmatpush.bf16.msra.mxu0 %v1538
  %1629 = vmatpush.bf16.msra.mxu0 %v1534
  %1630 = vmatmul.bf16.gmra.mxu0 %v1403
  %v1631 = vpop.f32.mrf.mxu0
  %v1632 = vadd.f32 0.0, %v1631
  %v1633 = vpop.f32.mrf.mxu0
  %1634 = vdwg.mxu0
  %1635 = vmatpush.bf16.msra.mxu0 %v1563
  %1636 = vmatpush.bf16.msra.mxu0 %v1559
  %1637 = vmatpush.bf16.msra.mxu0 %v1555
  %1638 = vmatpush.bf16.msra.mxu0 %v1551
  %1639 = vmatpush.bf16.msra.mxu0 %v1547
  %1640 = vmatpush.bf16.msra.mxu0 %v1543
  %1641 = vmatpush.bf16.msra.mxu0 %v1539
  %1642 = vmatpush.bf16.msra.mxu0 %v1535
  %1643 = vmatmul.bf16.gmra.mxu0 %v1403
  %v1644 = vpop.f32.mrf.mxu0
  %v1645 = vadd.f32 0.0, %v1644
  %v1646 = vpop.f32.mrf.mxu0
  %1647 = vdwg.mxu0
  %v1648 = vadd.f32 %v1399, %v1606
  %v1649 = vadd.f32 %v1400, %v1619
  %v1650 = vadd.f32 %v1401, %v1632
  %v1651 = vadd.f32 %v1402, %v1645
  %v1652 = vmul.f32 %v1648, 0.5
  %v1653 = vtanh.pop %v1652
  %v1654 = vmul.f32 %v1653, 0.5
  %v1655 = vadd.f32 %v1654, 0.5
  %v1656 = vmul.f32 %v1649, 0.5
  %v1657 = vtanh.pop %v1656
  %v1658 = vmul.f32 %v1657, 0.5
  %v1659 = vadd.f32 %v1658, 0.5
  %v1660 = vtanh.pop %v1650
  %v1661 = vmul.f32 %v1651, 0.5
  %v1662 = vtanh.pop %v1661
  %v1663 = vmul.f32 %v1662, 0.5
  %v1664 = vadd.f32 %v1663, 0.5
  %v1665 = vmul.f32 %v1659, %v1393
  %v1666 = vmul.f32 %v1655, %v1660
  %v1667 = vadd.f32 %v1665, %v1666
  %v1668 = vtanh.pop %v1667
  %v1669 = vmul.f32 %v1664, %v1668
  %s1670 = scalar_lea.vmem %s4, 40
  %1671 = vst [vmem:[%s1670] sm:$0xff] %v1669
  %s1672 = scalar_lea.vmem %s0, 192
  %v1673 = vld [vmem:[%s1672] sm:$0xff]
  %v1674 = vld [vmem:[%s1672 + $0x8] sm:$0xff]
  %v1675 = vld [vmem:[%s1672 + $0x10] sm:$0xff]
  %v1676 = vld [vmem:[%s1672 + $0x18] sm:$0xff]
  %v1677 = vpack.c.bf16 %v1669, %v1669
  %v1678 = vld [vmem:[%s3] sm:$0xff]
  %v1679 = vld [vmem:[%s3 + $0x8] sm:$0xff]
  %v1680 = vld [vmem:[%s3 + $0x10] sm:$0xff]
  %v1681 = vld [vmem:[%s3 + $0x18] sm:$0xff]
  %v1682 = vld [vmem:[%s3 + $0x20] sm:$0xff]
  %v1683 = vld [vmem:[%s3 + $0x28] sm:$0xff]
  %v1684 = vld [vmem:[%s3 + $0x30] sm:$0xff]
  %v1685 = vld [vmem:[%s3 + $0x38] sm:$0xff]
  %v1686 = vld [vmem:[%s3 + $0x40] sm:$0xff]
  %v1687 = vld [vmem:[%s3 + $0x48] sm:$0xff]
  %v1688 = vld [vmem:[%s3 + $0x50] sm:$0xff]
  %v1689 = vld [vmem:[%s3 + $0x58] sm:$0xff]
  %v1690 = vld [vmem:[%s3 + $0x60] sm:$0xff]
  %v1691 = vld [vmem:[%s3 + $0x68] sm:$0xff]
  %v1692 = vld [vmem:[%s3 + $0x70] sm:$0xff]
  %v1693 = vld [vmem:[%s3 + $0x78] sm:$0xff]
  %v1694 = vld [vmem:[%s3 + $0x80] sm:$0xff]
  %v1695 = vld [vmem:[%s3 + $0x88] sm:$0xff]
  %v1696 = vld [vmem:[%s3 + $0x90] sm:$0xff]
  %v1697 = vld [vmem:[%s3 + $0x98] sm:$0xff]
  %v1698 = vld [vmem:[%s3 + $0xa0] sm:$0xff]
  %v1699 = vld [vmem:[%s3 + $0xa8] sm:$0xff]
  %v1700 = vld [vmem:[%s3 + $0xb0] sm:$0xff]
  %v1701 = vld [vmem:[%s3 + $0xb8] sm:$0xff]
  %v1702 = vld [vmem:[%s3 + $0xc0] sm:$0xff]
  %v1703 = vld [vmem:[%s3 + $0xc8] sm:$0xff]
  %v1704 = vld [vmem:[%s3 + $0xd0] sm:$0xff]
  %v1705 = vld [vmem:[%s3 + $0xd8] sm:$0xff]
  %v1706 = vld [vmem:[%s3 + $0xe0] sm:$0xff]
  %v1707 = vld [vmem:[%s3 + $0xe8] sm:$0xff]
  %v1708 = vld [vmem:[%s3 + $0xf0] sm:$0xff]
  %v1709 = vld [vmem:[%s3 + $0xf8] sm:$0xff]
  %v1742 = vunpack.c.l.b16 %v1678
  %v1743 = vunpack.c.h.b16 %v1678
  %v1744 = vunpack.c.l.b16 %v1679
  %v1745 = vunpack.c.h.b16 %v1679
  %v1746 = vunpack.c.l.b16 %v1680
  %v1747 = vunpack.c.h.b16 %v1680
  %v1748 = vunpack.c.l.b16 %v1681
  %v1749 = vunpack.c.h.b16 %v1681
  %v1750 = vunpack.c.l.b16 %v1682
  %v1751 = vunpack.c.h.b16 %v1682
  %v1752 = vunpack.c.l.b16 %v1683
  %v1753 = vunpack.c.h.b16 %v1683
  %v1754 = vunpack.c.l.b16 %v1684
  %v1755 = vunpack.c.h.b16 %v1684
  %v1756 = vunpack.c.l.b16 %v1685
  %v1757 = vunpack.c.h.b16 %v1685
  %v1758 = vunpack.c.l.b16 %v1686
  %v1759 = vunpack.c.h.b16 %v1686
  %v1760 = vunpack.c.l.b16 %v1687
  %v1761 = vunpack.c.h.b16 %v1687
  %v1762 = vunpack.c.l.b16 %v1688
  %v1763 = vunpack.c.h.b16 %v1688
  %v1764 = vunpack.c.l.b16 %v1689
  %v1765 = vunpack.c.h.b16 %v1689
  %v1766 = vunpack.c.l.b16 %v1690
  %v1767 = vunpack.c.h.b16 %v1690
  %v1768 = vunpack.c.l.b16 %v1691
  %v1769 = vunpack.c.h.b16 %v1691
  %v1770 = vunpack.c.l.b16 %v1692
  %v1771 = vunpack.c.h.b16 %v1692
  %v1772 = vunpack.c.l.b16 %v1693
  %v1773 = vunpack.c.h.b16 %v1693
  %v1774 = vunpack.c.l.b16 %v1694
  %v1775 = vunpack.c.h.b16 %v1694
  %v1776 = vunpack.c.l.b16 %v1695
  %v1777 = vunpack.c.h.b16 %v1695
  %v1778 = vunpack.c.l.b16 %v1696
  %v1779 = vunpack.c.h.b16 %v1696
  %v1780 = vunpack.c.l.b16 %v1697
  %v1781 = vunpack.c.h.b16 %v1697
  %v1782 = vunpack.c.l.b16 %v1698
  %v1783 = vunpack.c.h.b16 %v1698
  %v1784 = vunpack.c.l.b16 %v1699
  %v1785 = vunpack.c.h.b16 %v1699
  %v1786 = vunpack.c.l.b16 %v1700
  %v1787 = vunpack.c.h.b16 %v1700
  %v1788 = vunpack.c.l.b16 %v1701
  %v1789 = vunpack.c.h.b16 %v1701
  %v1790 = vunpack.c.l.b16 %v1702
  %v1791 = vunpack.c.h.b16 %v1702
  %v1792 = vunpack.c.l.b16 %v1703
  %v1793 = vunpack.c.h.b16 %v1703
  %v1794 = vunpack.c.l.b16 %v1704
  %v1795 = vunpack.c.h.b16 %v1704
  %v1796 = vunpack.c.l.b16 %v1705
  %v1797 = vunpack.c.h.b16 %v1705
  %v1798 = vunpack.c.l.b16 %v1706
  %v1799 = vunpack.c.h.b16 %v1706
  %v1800 = vunpack.c.l.b16 %v1707
  %v1801 = vunpack.c.h.b16 %v1707
  %v1802 = vunpack.c.l.b16 %v1708
  %v1803 = vunpack.c.h.b16 %v1708
  %v1804 = vunpack.c.l.b16 %v1709
  %v1805 = vunpack.c.h.b16 %v1709
  %v1806 = vpack.c.b16 %v1746, %v1742
  %v1807 = vpack.c.b16 %v1747, %v1743
  %v1808 = vpack.c.b16 %v1748, %v1744
  %v1809 = vpack.c.b16 %v1749, %v1745
  %v1810 = vpack.c.b16 %v1754, %v1750
  %v1811 = vpack.c.b16 %v1755, %v1751
  %v1812 = vpack.c.b16 %v1756, %v1752
  %v1813 = vpack.c.b16 %v1757, %v1753
  %v1814 = vpack.c.b16 %v1762, %v1758
  %v1815 = vpack.c.b16 %v1763, %v1759
  %v1816 = vpack.c.b16 %v1764, %v1760
  %v1817 = vpack.c.b16 %v1765, %v1761
  %v1818 = vpack.c.b16 %v1770, %v1766
  %v1819 = vpack.c.b16 %v1771, %v1767
  %v1820 = vpack.c.b16 %v1772, %v1768
  %v1821 = vpack.c.b16 %v1773, %v1769
  %v1822 = vpack.c.b16 %v1778, %v1774
  %v1823 = vpack.c.b16 %v1779, %v1775
  %v1824 = vpack.c.b16 %v1780, %v1776
  %v1825 = vpack.c.b16 %v1781, %v1777
  %v1826 = vpack.c.b16 %v1786, %v1782
  %v1827 = vpack.c.b16 %v1787, %v1783
  %v1828 = vpack.c.b16 %v1788, %v1784
  %v1829 = vpack.c.b16 %v1789, %v1785
  %v1830 = vpack.c.b16 %v1794, %v1790
  %v1831 = vpack.c.b16 %v1795, %v1791
  %v1832 = vpack.c.b16 %v1796, %v1792
  %v1833 = vpack.c.b16 %v1797, %v1793
  %v1834 = vpack.c.b16 %v1802, %v1798
  %v1835 = vpack.c.b16 %v1803, %v1799
  %v1836 = vpack.c.b16 %v1804, %v1800
  %v1837 = vpack.c.b16 %v1805, %v1801
  %1870 = vmatpush.bf16.msra.mxu0 %v1834
  %1871 = vmatpush.bf16.msra.mxu0 %v1830
  %1872 = vmatpush.bf16.msra.mxu0 %v1826
  %1873 = vmatpush.bf16.msra.mxu0 %v1822
  %1874 = vmatpush.bf16.msra.mxu0 %v1818
  %1875 = vmatpush.bf16.msra.mxu0 %v1814
  %1876 = vmatpush.bf16.msra.mxu0 %v1810
  %1877 = vmatpush.bf16.msra.mxu0 %v1806
  %1878 = vmatmul.bf16.gmra.mxu0 %v1677
  %v1879 = vpop.f32.mrf.mxu0
  %v1880 = vadd.f32 0.0, %v1879
  %v1881 = vpop.f32.mrf.mxu0
  %1882 = vdwg.mxu0
  %1883 = vmatpush.bf16.msra.mxu0 %v1835
  %1884 = vmatpush.bf16.msra.mxu0 %v1831
  %1885 = vmatpush.bf16.msra.mxu0 %v1827
  %1886 = vmatpush.bf16.msra.mxu0 %v1823
  %1887 = vmatpush.bf16.msra.mxu0 %v1819
  %1888 = vmatpush.bf16.msra.mxu0 %v1815
  %1889 = vmatpush.bf16.msra.mxu0 %v1811
  %1890 = vmatpush.bf16.msra.mxu0 %v1807
  %1891 = vmatmul.bf16.gmra.mxu0 %v1677
  %v1892 = vpop.f32.mrf.mxu0
  %v1893 = vadd.f32 0.0, %v1892
  %v1894 = vpop.f32.mrf.mxu0
  %1895 = vdwg.mxu0
  %1896 = vmatpush.bf16.msra.mxu0 %v1836
  %1897 = vmatpush.bf16.msra.mxu0 %v1832
  %1898 = vmatpush.bf16.msra.mxu0 %v1828
  %1899 = vmatpush.bf16.msra.mxu0 %v1824
  %1900 = vmatpush.bf16.msra.mxu0 %v1820
  %1901 = vmatpush.bf16.msra.mxu0 %v1816
  %1902 = vmatpush.bf16.msra.mxu0 %v1812
  %1903 = vmatpush.bf16.msra.mxu0 %v1808
  %1904 = vmatmul.bf16.gmra.mxu0 %v1677
  %v1905 = vpop.f32.mrf.mxu0
  %v1906 = vadd.f32 0.0, %v1905
  %v1907 = vpop.f32.mrf.mxu0
  %1908 = vdwg.mxu0
  %1909 = vmatpush.bf16.msra.mxu0 %v1837
  %1910 = vmatpush.bf16.msra.mxu0 %v1833
  %1911 = vmatpush.bf16.msra.mxu0 %v1829
  %1912 = vmatpush.bf16.msra.mxu0 %v1825
  %1913 = vmatpush.bf16.msra.mxu0 %v1821
  %1914 = vmatpush.bf16.msra.mxu0 %v1817
  %1915 = vmatpush.bf16.msra.mxu0 %v1813
  %1916 = vmatpush.bf16.msra.mxu0 %v1809
  %1917 = vmatmul.bf16.gmra.mxu0 %v1677
  %v1918 = vpop.f32.mrf.mxu0
  %v1919 = vadd.f32 0.0, %v1918
  %v1920 = vpop.f32.mrf.mxu0
  %1921 = vdwg.mxu0
  %v1922 = vadd.f32 %v1673, %v1880
  %v1923 = vadd.f32 %v1674, %v1893
  %v1924 = vadd.f32 %v1675, %v1906
  %v1925 = vadd.f32 %v1676, %v1919
  %v1926 = vmul.f32 %v1922, 0.5
  %v1927 = vtanh.pop %v1926
  %v1928 = vmul.f32 %v1927, 0.5
  %v1929 = vadd.f32 %v1928, 0.5
  %v1930 = vmul.f32 %v1923, 0.5
  %v1931 = vtanh.pop %v1930
  %v1932 = vmul.f32 %v1931, 0.5
  %v1933 = vadd.f32 %v1932, 0.5
  %v1934 = vtanh.pop %v1924
  %v1935 = vmul.f32 %v1925, 0.5
  %v1936 = vtanh.pop %v1935
  %v1937 = vmul.f32 %v1936, 0.5
  %v1938 = vadd.f32 %v1937, 0.5
  %v1939 = vmul.f32 %v1933, %v1667
  %v1940 = vmul.f32 %v1929, %v1934
  %v1941 = vadd.f32 %v1939, %v1940
  %v1942 = vtanh.pop %v1941
  %v1943 = vmul.f32 %v1938, %v1942
  %s1944 = scalar_lea.vmem %s4, 48
  %1945 = vst [vmem:[%s1944] sm:$0xff] %v1943
  %s1946 = scalar_lea.vmem %s0, 224
  %v1947 = vld [vmem:[%s1946] sm:$0xff]
  %v1948 = vld [vmem:[%s1946 + $0x8] sm:$0xff]
  %v1949 = vld [vmem:[%s1946 + $0x10] sm:$0xff]
  %v1950 = vld [vmem:[%s1946 + $0x18] sm:$0xff]
  %v1951 = vpack.c.bf16 %v1943, %v1943
  %v1952 = vld [vmem:[%s3] sm:$0xff]
  %v1953 = vld [vmem:[%s3 + $0x8] sm:$0xff]
  %v1954 = vld [vmem:[%s3 + $0x10] sm:$0xff]
  %v1955 = vld [vmem:[%s3 + $0x18] sm:$0xff]
  %v1956 = vld [vmem:[%s3 + $0x20] sm:$0xff]
  %v1957 = vld [vmem:[%s3 + $0x28] sm:$0xff]
  %v1958 = vld [vmem:[%s3 + $0x30] sm:$0xff]
  %v1959 = vld [vmem:[%s3 + $0x38] sm:$0xff]
  %v1960 = vld [vmem:[%s3 + $0x40] sm:$0xff]
  %v1961 = vld [vmem:[%s3 + $0x48] sm:$0xff]
  %v1962 = vld [vmem:[%s3 + $0x50] sm:$0xff]
  %v1963 = vld [vmem:[%s3 + $0x58] sm:$0xff]
  %v1964 = vld [vmem:[%s3 + $0x60] sm:$0xff]
  %v1965 = vld [vmem:[%s3 + $0x68] sm:$0xff]
  %v1966 = vld [vmem:[%s3 + $0x70] sm:$0xff]
  %v1967 = vld [vmem:[%s3 + $0x78] sm:$0xff]
  %v1968 = vld [vmem:[%s3 + $0x80] sm:$0xff]
  %v1969 = vld [vmem:[%s3 + $0x88] sm:$0xff]
  %v1970 = vld [vmem:[%s3 + $0x90] sm:$0xff]
  %v1971 = vld [vmem:[%s3 + $0x98] sm:$0xff]
  %v1972 = vld [vmem:[%s3 + $0xa0] sm:$0xff]
  %v1973 = vld [vmem:[%s3 + $0xa8] sm:$0xff]
  %v1974 = vld [vmem:[%s3 + $0xb0] sm:$0xff]
  %v1975 = vld [vmem:[%s3 + $0xb8] sm:$0xff]
  %v1976 = vld [vmem:[%s3 + $0xc0] sm:$0xff]
  %v1977 = vld [vmem:[%s3 + $0xc8] sm:$0xff]
  %v1978 = vld [vmem:[%s3 + $0xd0] sm:$0xff]
  %v1979 = vld [vmem:[%s3 + $0xd8] sm:$0xff]
  %v1980 = vld [vmem:[%s3 + $0xe0] sm:$0xff]
  %v1981 = vld [vmem:[%s3 + $0xe8] sm:$0xff]
  %v1982 = vld [vmem:[%s3 + $0xf0] sm:$0xff]
  %v1983 = vld [vmem:[%s3 + $0xf8] sm:$0xff]
  %v2016 = vunpack.c.l.b16 %v1952
  %v2017 = vunpack.c.h.b16 %v1952
  %v2018 = vunpack.c.l.b16 %v1953
  %v2019 = vunpack.c.h.b16 %v1953
  %v2020 = vunpack.c.l.b16 %v1954
  %v2021 = vunpack.c.h.b16 %v1954
  %v2022 = vunpack.c.l.b16 %v1955
  %v2023 = vunpack.c.h.b16 %v1955
  %v2024 = vunpack.c.l.b16 %v1956
  %v2025 = vunpack.c.h.b16 %v1956
  %v2026 = vunpack.c.l.b16 %v1957
  %v2027 = vunpack.c.h.b16 %v1957
  %v2028 = vunpack.c.l.b16 %v1958
  %v2029 = vunpack.c.h.b16 %v1958
  %v2030 = vunpack.c.l.b16 %v1959
  %v2031 = vunpack.c.h.b16 %v1959
  %v2032 = vunpack.c.l.b16 %v1960
  %v2033 = vunpack.c.h.b16 %v1960
  %v2034 = vunpack.c.l.b16 %v1961
  %v2035 = vunpack.c.h.b16 %v1961
  %v2036 = vunpack.c.l.b16 %v1962
  %v2037 = vunpack.c.h.b16 %v1962
  %v2038 = vunpack.c.l.b16 %v1963
  %v2039 = vunpack.c.h.b16 %v1963
  %v2040 = vunpack.c.l.b16 %v1964
  %v2041 = vunpack.c.h.b16 %v1964
  %v2042 = vunpack.c.l.b16 %v1965
  %v2043 = vunpack.c.h.b16 %v1965
  %v2044 = vunpack.c.l.b16 %v1966
  %v2045 = vunpack.c.h.b16 %v1966
  %v2046 = vunpack.c.l.b16 %v1967
  %v2047 = vunpack.c.h.b16 %v1967
  %v2048 = vunpack.c.l.b16 %v1968
  %v2049 = vunpack.c.h.b16 %v1968
  %v2050 = vunpack.c.l.b16 %v1969
  %v2051 = vunpack.c.h.b16 %v1969
  %v2052 = vunpack.c.l.b16 %v1970
  %v2053 = vunpack.c.h.b16 %v1970
  %v2054 = vunpack.c.l.b16 %v1971
  %v2055 = vunpack.c.h.b16 %v1971
  %v2056 = vunpack.c.l.b16 %v1972
  %v2057 = vunpack.c.h.b16 %v1972
  %v2058 = vunpack.c.l.b16 %v1973
  %v2059 = vunpack.c.h.b16 %v1973
  %v2060 = vunpack.c.l.b16 %v1974
  %v2061 = vunpack.c.h.b16 %v1974
  %v2062 = vunpack.c.l.b16 %v1975
  %v2063 = vunpack.c.h.b16 %v1975
  %v2064 = vunpack.c.l.b16 %v1976
  %v2065 = vunpack.c.h.b16 %v1976
  %v2066 = vunpack.c.l.b16 %v1977
  %v2067 = vunpack.c.h.b16 %v1977
  %v2068 = vunpack.c.l.b16 %v1978
  %v2069 = vunpack.c.h.b16 %v1978
  %v2070 = vunpack.c.l.b16 %v1979
  %v2071 = vunpack.c.h.b16 %v1979
  %v2072 = vunpack.c.l.b16 %v1980
  %v2073 = vunpack.c.h.b16 %v1980
  %v2074 = vunpack.c.l.b16 %v1981
  %v2075 = vunpack.c.h.b16 %v1981
  %v2076 = vunpack.c.l.b16 %v1982
  %v2077 = vunpack.c.h.b16 %v1982
  %v2078 = vunpack.c.l.b16 %v1983
  %v2079 = vunpack.c.h.b16 %v1983
  %v2080 = vpack.c.b16 %v2020, %v2016
  %v2081 = vpack.c.b16 %v2021, %v2017
  %v2082 = vpack.c.b16 %v2022, %v2018
  %v2083 = vpack.c.b16 %v2023, %v2019
  %v2084 = vpack.c.b16 %v2028, %v2024
  %v2085 = vpack.c.b16 %v2029, %v2025
  %v2086 = vpack.c.b16 %v2030, %v2026
  %v2087 = vpack.c.b16 %v2031, %v2027
  %v2088 = vpack.c.b16 %v2036, %v2032
  %v2089 = vpack.c.b16 %v2037, %v2033
  %v2090 = vpack.c.b16 %v2038, %v2034
  %v2091 = vpack.c.b16 %v2039, %v2035
  %v2092 = vpack.c.b16 %v2044, %v2040
  %v2093 = vpack.c.b16 %v2045, %v2041
  %v2094 = vpack.c.b16 %v2046, %v2042
  %v2095 = vpack.c.b16 %v2047, %v2043
  %v2096 = vpack.c.b16 %v2052, %v2048
  %v2097 = vpack.c.b16 %v2053, %v2049
  %v2098 = vpack.c.b16 %v2054, %v2050
  %v2099 = vpack.c.b16 %v2055, %v2051
  %v2100 = vpack.c.b16 %v2060, %v2056
  %v2101 = vpack.c.b16 %v2061, %v2057
  %v2102 = vpack.c.b16 %v2062, %v2058
  %v2103 = vpack.c.b16 %v2063, %v2059
  %v2104 = vpack.c.b16 %v2068, %v2064
  %v2105 = vpack.c.b16 %v2069, %v2065
  %v2106 = vpack.c.b16 %v2070, %v2066
  %v2107 = vpack.c.b16 %v2071, %v2067
  %v2108 = vpack.c.b16 %v2076, %v2072
  %v2109 = vpack.c.b16 %v2077, %v2073
  %v2110 = vpack.c.b16 %v2078, %v2074
  %v2111 = vpack.c.b16 %v2079, %v2075
  %2144 = vmatpush.bf16.msra.mxu0 %v2108
  %2145 = vmatpush.bf16.msra.mxu0 %v2104
  %2146 = vmatpush.bf16.msra.mxu0 %v2100
  %2147 = vmatpush.bf16.msra.mxu0 %v2096
  %2148 = vmatpush.bf16.msra.mxu0 %v2092
  %2149 = vmatpush.bf16.msra.mxu0 %v2088
  %2150 = vmatpush.bf16.msra.mxu0 %v2084
  %2151 = vmatpush.bf16.msra.mxu0 %v2080
  %2152 = vmatmul.bf16.gmra.mxu0 %v1951
  %v2153 = vpop.f32.mrf.mxu0
  %v2154 = vadd.f32 0.0, %v2153
  %v2155 = vpop.f32.mrf.mxu0
  %2156 = vdwg.mxu0
  %2157 = vmatpush.bf16.msra.mxu0 %v2109
  %2158 = vmatpush.bf16.msra.mxu0 %v2105
  %2159 = vmatpush.bf16.msra.mxu0 %v2101
  %2160 = vmatpush.bf16.msra.mxu0 %v2097
  %2161 = vmatpush.bf16.msra.mxu0 %v2093
  %2162 = vmatpush.bf16.msra.mxu0 %v2089
  %2163 = vmatpush.bf16.msra.mxu0 %v2085
  %2164 = vmatpush.bf16.msra.mxu0 %v2081
  %2165 = vmatmul.bf16.gmra.mxu0 %v1951
  %v2166 = vpop.f32.mrf.mxu0
  %v2167 = vadd.f32 0.0, %v2166
  %v2168 = vpop.f32.mrf.mxu0
  %2169 = vdwg.mxu0
  %2170 = vmatpush.bf16.msra.mxu0 %v2110
  %2171 = vmatpush.bf16.msra.mxu0 %v2106
  %2172 = vmatpush.bf16.msra.mxu0 %v2102
  %2173 = vmatpush.bf16.msra.mxu0 %v2098
  %2174 = vmatpush.bf16.msra.mxu0 %v2094
  %2175 = vmatpush.bf16.msra.mxu0 %v2090
  %2176 = vmatpush.bf16.msra.mxu0 %v2086
  %2177 = vmatpush.bf16.msra.mxu0 %v2082
  %2178 = vmatmul.bf16.gmra.mxu0 %v1951
  %v2179 = vpop.f32.mrf.mxu0
  %v2180 = vadd.f32 0.0, %v2179
  %v2181 = vpop.f32.mrf.mxu0
  %2182 = vdwg.mxu0
  %2183 = vmatpush.bf16.msra.mxu0 %v2111
  %2184 = vmatpush.bf16.msra.mxu0 %v2107
  %2185 = vmatpush.bf16.msra.mxu0 %v2103
  %2186 = vmatpush.bf16.msra.mxu0 %v2099
  %2187 = vmatpush.bf16.msra.mxu0 %v2095
  %2188 = vmatpush.bf16.msra.mxu0 %v2091
  %2189 = vmatpush.bf16.msra.mxu0 %v2087
  %2190 = vmatpush.bf16.msra.mxu0 %v2083
  %2191 = vmatmul.bf16.gmra.mxu0 %v1951
  %v2192 = vpop.f32.mrf.mxu0
  %v2193 = vadd.f32 0.0, %v2192
  %v2194 = vpop.f32.mrf.mxu0
  %2195 = vdwg.mxu0
  %v2196 = vadd.f32 %v1947, %v2154
  %v2197 = vadd.f32 %v1948, %v2167
  %v2198 = vadd.f32 %v1949, %v2180
  %v2199 = vadd.f32 %v1950, %v2193
  %v2200 = vmul.f32 %v2196, 0.5
  %v2201 = vtanh.pop %v2200
  %v2202 = vmul.f32 %v2201, 0.5
  %v2203 = vadd.f32 %v2202, 0.5
  %v2204 = vmul.f32 %v2197, 0.5
  %v2205 = vtanh.pop %v2204
  %v2206 = vmul.f32 %v2205, 0.5
  %v2207 = vadd.f32 %v2206, 0.5
  %v2208 = vtanh.pop %v2198
  %v2209 = vmul.f32 %v2199, 0.5
  %v2210 = vtanh.pop %v2209
  %v2211 = vmul.f32 %v2210, 0.5
  %v2212 = vadd.f32 %v2211, 0.5
  %v2213 = vmul.f32 %v2207, %v1941
  %v2214 = vmul.f32 %v2203, %v2208
  %v2215 = vadd.f32 %v2213, %v2214
  %v2216 = vtanh.pop %v2215
  %v2217 = vmul.f32 %v2212, %v2216
  %s2218 = scalar_lea.vmem %s4, 56
  %2219 = vst [vmem:[%s2218] sm:$0xff] %v2217
  %2220 = vst [vmem:[#allocation2] sm:$0xff] %v2217
  %2221 = vst [vmem:[#allocation3] sm:$0xff] %v2215
  // Predicated region
  $region22: #{_rnn_encoder_forward.2} parent=0 // pred_check
    %p2222 = pneg %p20
  $region23: #{_rnn_encoder_forward.2} parent=0 // pred_check_branch
    %2224 = sbr.rel (%p2222) target = $region25
  $region24: #{_rnn_encoder_forward.2} parent=0 // pred_region
    %v2225 = vld [vmem:[#allocation2] sm:$0xff]
    %2226 = vst [vmem:[%s5] sm:$0xff] %v2225
    %v2227 = vld [vmem:[#allocation3] sm:$0xff]
    %2228 = vst [vmem:[%s6] sm:$0xff] %v2227
  $region25: #{_rnn_encoder_forward.2} parent=0 // pred_fallthru
    _
  // Predicated region
  $region26: #{_rnn_encoder_forward.2} parent=0 // pred_check
    _
  $region27: #{_rnn_encoder_forward.2} parent=0 // pred_check_branch
    %2230 = sbr.rel (0) target = $region29
  $region28: #{_rnn_encoder_forward.2} parent=0 // pred_region
    _
  $region29: #{_rnn_encoder_forward.2} parent=0 // pred_fallthru
    _
  // Predicated region
  $region30: #{_rnn_encoder_forward.2} parent=0 // pred_check
    _
  $region31: #{_rnn_encoder_forward.2} parent=0 // pred_check_branch
    %2232 = sbr.rel (0) target = $region33
  $region32: #{_rnn_encoder_forward.2} parent=0 // pred_region
    _
  $region33: #{_rnn_encoder_forward.2} parent=0 // pred_fallthru
    _
  // Predicated region
  $region34: #{_rnn_encoder_forward.2} parent=0 // pred_check
    _
  $region35: #{_rnn_encoder_forward.2} parent=0 // pred_check_branch
    %2234 = sbr.rel (0) target = $region37
  $region36: #{_rnn_encoder_forward.2} parent=0 // pred_region
    _
  $region37: #{_rnn_encoder_forward.2} parent=0 // pred_fallthru
    _
  // Predicated region
  $region38: #{_rnn_encoder_forward.2} parent=0 // pred_check
    _
  $region39: #{_rnn_encoder_forward.2} parent=0 // pred_check_branch
    %2236 = sbr.rel (0) target = $region41
  $region40: #{_rnn_encoder_forward.2} parent=0 // pred_region
    _
  $region41: #{_rnn_encoder_forward.2} parent=0 // pred_fallthru
    _
  // Predicated region
  $region42: #{_rnn_encoder_forward.2} parent=0 // pred_check
    _
  $region43: #{_rnn_encoder_forward.2} parent=0 // pred_check_branch
    %2238 = sbr.rel (0) target = $region45
  $region44: #{_rnn_encoder_forward.2} parent=0 // pred_region
    _
  $region45: #{_rnn_encoder_forward.2} parent=0 // pred_fallthru
    _
  // Predicated region
  $region46: #{_rnn_encoder_forward.2} parent=0 // pred_check
    _
  $region47: #{_rnn_encoder_forward.2} parent=0 // pred_check_branch
    %2240 = sbr.rel (0) target = $region49
  $region48: #{_rnn_encoder_forward.2} parent=0 // pred_region
    _
  $region49: #{_rnn_encoder_forward.2} parent=0 // pred_fallthru
    _

// kernel: _rnn_encoder_forward.3
$region0: #{_rnn_encoder_forward.3}
  #allocation0 [shape = 'u32[]', space=smem, size = 0x4, offset = 0x4, fixed_abs, tag = 'smem constant byte address 0x4 - core index']
  #allocation1 [shape = 'u32[72,128]{1,0:T(1,128)}', space=vmem, size = 0x9000, scoped, tag = 'internal scratch']
  #allocation2 [shape = 'f32[8,128]{1,0:T(8,128)}', space=vmem, size = 0x1000, scoped, tag = 'scratch operand']
  #allocation3 [shape = 'f32[8,128]{1,0:T(8,128)}', space=vmem, size = 0x1000, scoped, tag = 'scratch operand']
  %s0 = inlined_call_operand.vmem [shape: f32[8,8,512], index: 0, kind: input, shape index: {}]
  %s1 = inlined_call_operand.vmem [shape: f32[8,128], index: 1, kind: input, shape index: {}]
  %s2 = inlined_call_operand.vmem [shape: f32[8,128], index: 2, kind: input, shape index: {}]
  %s3 = inlined_call_operand.vmem [shape: bf16[128,512], index: 3, kind: input, shape index: {}]
  %s4 = inlined_call_operand.hbm [shape: f32[8,8,128], index: 4, kind: output, shape index: {0}]
  %s5 = inlined_call_operand.vmem [shape: f32[8,128], index: 5, kind: output, shape index: {1}]
  %s6 = inlined_call_operand.vmem [shape: f32[8,128], index: 6, kind: output, shape index: {2}]
  %7 = xla_tuple %s4, %s5, %s6
  %s8 = sld [smem:[#allocation0]]
  $region50: #{_rnn_encoder_forward.3} parent=0
    _
  %s10 = ssub.s32 1, %s8
  %s11 = scalar_select 0, %s10, %s8
  $region1: #{_rnn_encoder_forward.3} parent=0
    #allocation4 [shape = 'u8[32768]{0}', space=vmem, size = 0x8000, scoped, tag = 'output window, operand 0, single buffered']
    #allocation5 [shape = 's32[1]{0}', space=sflag, size = 0x4, scoped, tag = 'scoped memory for _rnn_encoder_forward.3']
    %12 = vsyncpa [#allocation5], 0
    // Predicated region
    $region2: #{_rnn_encoder_forward.3} parent=1 // pred_check
      _
    $region3: #{_rnn_encoder_forward.3} parent=1 // pred_check_branch
      %14 = sbr.rel (0) target = $region5
    $region4: #{_rnn_encoder_forward.3} parent=1 // pred_region
      _
    $region5: #{_rnn_encoder_forward.3} parent=1 // pred_fallthru
      _
    // Predicated region
    $region6: #{_rnn_encoder_forward.3} parent=1 // pred_check
      _
    $region7: #{_rnn_encoder_forward.3} parent=1 // pred_check_branch
      %16 = sbr.rel (0) target = $region9
    $region8: #{_rnn_encoder_forward.3} parent=1 // pred_region
      _
    $region9: #{_rnn_encoder_forward.3} parent=1 // pred_fallthru
      _
    // Predicated region
    $region10: #{_rnn_encoder_forward.3} parent=1 // pred_check
      _
    $region11: #{_rnn_encoder_forward.3} parent=1 // pred_check_branch
      %18 = sbr.rel (0) target = $region13
    $region12: #{_rnn_encoder_forward.3} parent=1 // pred_region
      _
    $region13: #{_rnn_encoder_forward.3} parent=1 // pred_fallthru
      _
    // Predicated region
    $region14: #{_rnn_encoder_forward.3} parent=1 // pred_check
      _
    $region15: #{_rnn_encoder_forward.3} parent=1 // pred_check_branch
      %20 = sbr.rel (0) target = $region17
    $region16: #{_rnn_encoder_forward.3} parent=1 // pred_region
      _
    $region17: #{_rnn_encoder_forward.3} parent=1 // pred_fallthru
      _
    %p21 = scmp.eq.s32.totalorder 0, 0
    // Predicated region
    $region18: #{_rnn_encoder_forward.3} parent=1 // pred_check
      %p22 = pneg %p21
    $region19: #{_rnn_encoder_forward.3} parent=1 // pred_check_branch
      %24 = sbr.rel (%p22) target = $region21
    $region20: #{_rnn_encoder_forward.3} parent=1 // pred_region
      %v25 = vld [vmem:[%s1] sm:$0xff]
      %26 = vst [vmem:[#allocation2] sm:$0xff] %v25
      %v27 = vld [vmem:[%s2] sm:$0xff]
      %28 = vst [vmem:[#allocation3] sm:$0xff] %v27
    $region21: #{_rnn_encoder_forward.3} parent=1 // pred_fallthru
      _
    %v29 = vld [vmem:[#allocation2] sm:$0xff]
    %v30 = vld [vmem:[#allocation3] sm:$0xff]
    %v31 = vld [vmem:[%s0] sm:$0xff]
    %v32 = vld [vmem:[%s0 + $0x8] sm:$0xff]
    %v33 = vld [vmem:[%s0 + $0x10] sm:$0xff]
    %v34 = vld [vmem:[%s0 + $0x18] sm:$0xff]
    %v35 = vpack.c.bf16 %v29, %v29
    %v36 = vld [vmem:[%s3] sm:$0xff]
    %v37 = vld [vmem:[%s3 + $0x8] sm:$0xff]
    %v38 = vld [vmem:[%s3 + $0x10] sm:$0xff]
    %v39 = vld [vmem:[%s3 + $0x18] sm:$0xff]
    %v40 = vld [vmem:[%s3 + $0x20] sm:$0xff]
    %v41 = vld [vmem:[%s3 + $0x28] sm:$0xff]
    %v42 = vld [vmem:[%s3 + $0x30] sm:$0xff]
    %v43 = vld [vmem:[%s3 + $0x38] sm:$0xff]
    %v44 = vld [vmem:[%s3 + $0x40] sm:$0xff]
    %v45 = vld [vmem:[%s3 + $0x48] sm:$0xff]
    %v46 = vld [vmem:[%s3 + $0x50] sm:$0xff]
    %v47 = vld [vmem:[%s3 + $0x58] sm:$0xff]
    %v48 = vld [vmem:[%s3 + $0x60] sm:$0xff]
    %v49 = vld [vmem:[%s3 + $0x68] sm:$0xff]
    %v50 = vld [vmem:[%s3 + $0x70] sm:$0xff]
    %v51 = vld [vmem:[%s3 + $0x78] sm:$0xff]
    %v52 = vld [vmem:[%s3 + $0x80] sm:$0xff]
    %v53 = vld [vmem:[%s3 + $0x88] sm:$0xff]
    %v54 = vld [vmem:[%s3 + $0x90] sm:$0xff]
    %v55 = vld [vmem:[%s3 + $0x98] sm:$0xff]
    %v56 = vld [vmem:[%s3 + $0xa0] sm:$0xff]
    %v57 = vld [vmem:[%s3 + $0xa8] sm:$0xff]
    %v58 = vld [vmem:[%s3 + $0xb0] sm:$0xff]
    %v59 = vld [vmem:[%s3 + $0xb8] sm:$0xff]
    %v60 = vld [vmem:[%s3 + $0xc0] sm:$0xff]
    %v61 = vld [vmem:[%s3 + $0xc8] sm:$0xff]
    %v62 = vld [vmem:[%s3 + $0xd0] sm:$0xff]
    %v63 = vld [vmem:[%s3 + $0xd8] sm:$0xff]
    %v64 = vld [vmem:[%s3 + $0xe0] sm:$0xff]
    %v65 = vld [vmem:[%s3 + $0xe8] sm:$0xff]
    %v66 = vld [vmem:[%s3 + $0xf0] sm:$0xff]
    %v67 = vld [vmem:[%s3 + $0xf8] sm:$0xff]
    %v100 = vunpack.c.l.b16 %v36
    %v101 = vunpack.c.h.b16 %v36
    %v102 = vunpack.c.l.b16 %v37
    %v103 = vunpack.c.h.b16 %v37
    %v104 = vunpack.c.l.b16 %v38
    %v105 = vunpack.c.h.b16 %v38
    %v106 = vunpack.c.l.b16 %v39
    %v107 = vunpack.c.h.b16 %v39
    %v108 = vunpack.c.l.b16 %v40
    %v109 = vunpack.c.h.b16 %v40
    %v110 = vunpack.c.l.b16 %v41
    %v111 = vunpack.c.h.b16 %v41
    %v112 = vunpack.c.l.b16 %v42
    %v113 = vunpack.c.h.b16 %v42
    %v114 = vunpack.c.l.b16 %v43
    %v115 = vunpack.c.h.b16 %v43
    %v116 = vunpack.c.l.b16 %v44
    %v117 = vunpack.c.h.b16 %v44
    %v118 = vunpack.c.l.b16 %v45
    %v119 = vunpack.c.h.b16 %v45
    %v120 = vunpack.c.l.b16 %v46
    %v121 = vunpack.c.h.b16 %v46
    %v122 = vunpack.c.l.b16 %v47
    %v123 = vunpack.c.h.b16 %v47
    %v124 = vunpack.c.l.b16 %v48
    %v125 = vunpack.c.h.b16 %v48
    %v126 = vunpack.c.l.b16 %v49
    %v127 = vunpack.c.h.b16 %v49
    %v128 = vunpack.c.l.b16 %v50
    %v129 = vunpack.c.h.b16 %v50
    %v130 = vunpack.c.l.b16 %v51
    %v131 = vunpack.c.h.b16 %v51
    %v132 = vunpack.c.l.b16 %v52
    %v133 = vunpack.c.h.b16 %v52
    %v134 = vunpack.c.l.b16 %v53
    %v135 = vunpack.c.h.b16 %v53
    %v136 = vunpack.c.l.b16 %v54
    %v137 = vunpack.c.h.b16 %v54
    %v138 = vunpack.c.l.b16 %v55
    %v139 = vunpack.c.h.b16 %v55
    %v140 = vunpack.c.l.b16 %v56
    %v141 = vunpack.c.h.b16 %v56
    %v142 = vunpack.c.l.b16 %v57
    %v143 = vunpack.c.h.b16 %v57
    %v144 = vunpack.c.l.b16 %v58
    %v145 = vunpack.c.h.b16 %v58
    %v146 = vunpack.c.l.b16 %v59
    %v147 = vunpack.c.h.b16 %v59
    %v148 = vunpack.c.l.b16 %v60
    %v149 = vunpack.c.h.b16 %v60
    %v150 = vunpack.c.l.b16 %v61
    %v151 = vunpack.c.h.b16 %v61
    %v152 = vunpack.c.l.b16 %v62
    %v153 = vunpack.c.h.b16 %v62
    %v154 = vunpack.c.l.b16 %v63
    %v155 = vunpack.c.h.b16 %v63
    %v156 = vunpack.c.l.b16 %v64
    %v157 = vunpack.c.h.b16 %v64
    %v158 = vunpack.c.l.b16 %v65
    %v159 = vunpack.c.h.b16 %v65
    %v160 = vunpack.c.l.b16 %v66
    %v161 = vunpack.c.h.b16 %v66
    %v162 = vunpack.c.l.b16 %v67
    %v163 = vunpack.c.h.b16 %v67
    %v164 = vpack.c.b16 %v104, %v100
    %v165 = vpack.c.b16 %v105, %v101
    %v166 = vpack.c.b16 %v106, %v102
    %v167 = vpack.c.b16 %v107, %v103
    %v168 = vpack.c.b16 %v112, %v108
    %v169 = vpack.c.b16 %v113, %v109
    %v170 = vpack.c.b16 %v114, %v110
    %v171 = vpack.c.b16 %v115, %v111
    %v172 = vpack.c.b16 %v120, %v116
    %v173 = vpack.c.b16 %v121, %v117
    %v174 = vpack.c.b16 %v122, %v118
    %v175 = vpack.c.b16 %v123, %v119
    %v176 = vpack.c.b16 %v128, %v124
    %v177 = vpack.c.b16 %v129, %v125
    %v178 = vpack.c.b16 %v130, %v126
    %v179 = vpack.c.b16 %v131, %v127
    %v180 = vpack.c.b16 %v136, %v132
    %v181 = vpack.c.b16 %v137, %v133
    %v182 = vpack.c.b16 %v138, %v134
    %v183 = vpack.c.b16 %v139, %v135
    %v184 = vpack.c.b16 %v144, %v140
    %v185 = vpack.c.b16 %v145, %v141
    %v186 = vpack.c.b16 %v146, %v142
    %v187 = vpack.c.b16 %v147, %v143
    %v188 = vpack.c.b16 %v152, %v148
    %v189 = vpack.c.b16 %v153, %v149
    %v190 = vpack.c.b16 %v154, %v150
    %v191 = vpack.c.b16 %v155, %v151
    %v192 = vpack.c.b16 %v160, %v156
    %v193 = vpack.c.b16 %v161, %v157
    %v194 = vpack.c.b16 %v162, %v158
    %v195 = vpack.c.b16 %v163, %v159
    %228 = vmatpush.bf16.msra.mxu0 %v192
    %229 = vmatpush.bf16.msra.mxu0 %v188
    %230 = vmatpush.bf16.msra.mxu0 %v184
    %231 = vmatpush.bf16.msra.mxu0 %v180
    %232 = vmatpush.bf16.msra.mxu0 %v176
    %233 = vmatpush.bf16.msra.mxu0 %v172
    %234 = vmatpush.bf16.msra.mxu0 %v168
    %235 = vmatpush.bf16.msra.mxu0 %v164
    %236 = vmatmul.bf16.gmra.mxu0 %v35
    %v237 = vpop.f32.mrf.mxu0
    %v238 = vadd.f32 0.0, %v237
    %v239 = vpop.f32.mrf.mxu0
    %240 = vdwg.mxu0
    %241 = vmatpush.bf16.msra.mxu0 %v193
    %242 = vmatpush.bf16.msra.mxu0 %v189
    %243 = vmatpush.bf16.msra.mxu0 %v185
    %244 = vmatpush.bf16.msra.mxu0 %v181
    %245 = vmatpush.bf16.msra.mxu0 %v177
    %246 = vmatpush.bf16.msra.mxu0 %v173
    %247 = vmatpush.bf16.msra.mxu0 %v169
    %248 = vmatpush.bf16.msra.mxu0 %v165
    %249 = vmatmul.bf16.gmra.mxu0 %v35
    %v250 = vpop.f32.mrf.mxu0
    %v251 = vadd.f32 0.0, %v250
    %v252 = vpop.f32.mrf.mxu0
    %253 = vdwg.mxu0
    %254 = vmatpush.bf16.msra.mxu0 %v194
    %255 = vmatpush.bf16.msra.mxu0 %v190
    %256 = vmatpush.bf16.msra.mxu0 %v186
    %257 = vmatpush.bf16.msra.mxu0 %v182
    %258 = vmatpush.bf16.msra.mxu0 %v178
    %259 = vmatpush.bf16.msra.mxu0 %v174
    %260 = vmatpush.bf16.msra.mxu0 %v170
    %261 = vmatpush.bf16.msra.mxu0 %v166
    %262 = vmatmul.bf16.gmra.mxu0 %v35
    %v263 = vpop.f32.mrf.mxu0
    %v264 = vadd.f32 0.0, %v263
    %v265 = vpop.f32.mrf.mxu0
    %266 = vdwg.mxu0
    %267 = vmatpush.bf16.msra.mxu0 %v195
    %268 = vmatpush.bf16.msra.mxu0 %v191
    %269 = vmatpush.bf16.msra.mxu0 %v187
    %270 = vmatpush.bf16.msra.mxu0 %v183
    %271 = vmatpush.bf16.msra.mxu0 %v179
    %272 = vmatpush.bf16.msra.mxu0 %v175
    %273 = vmatpush.bf16.msra.mxu0 %v171
    %274 = vmatpush.bf16.msra.mxu0 %v167
    %275 = vmatmul.bf16.gmra.mxu0 %v35
    %v276 = vpop.f32.mrf.mxu0
    %v277 = vadd.f32 0.0, %v276
    %v278 = vpop.f32.mrf.mxu0
    %279 = vdwg.mxu0
    %v280 = vadd.f32 %v31, %v238
    %v281 = vadd.f32 %v32, %v251
    %v282 = vadd.f32 %v33, %v264
    %v283 = vadd.f32 %v34, %v277
    %v284 = vmul.f32 %v280, 0.5
    %v285 = vtanh.pop %v284
    %v286 = vmul.f32 %v285, 0.5
    %v287 = vadd.f32 %v286, 0.5
    %v288 = vmul.f32 %v281, 0.5
    %v289 = vtanh.pop %v288
    %v290 = vmul.f32 %v289, 0.5
    %v291 = vadd.f32 %v290, 0.5
    %v292 = vtanh.pop %v282
    %v293 = vmul.f32 %v283, 0.5
    %v294 = vtanh.pop %v293
    %v295 = vmul.f32 %v294, 0.5
    %v296 = vadd.f32 %v295, 0.5
    %v297 = vmul.f32 %v291, %v30
    %v298 = vmul.f32 %v287, %v292
    %v299 = vadd.f32 %v297, %v298
    %v300 = vtanh.pop %v299
    %v301 = vmul.f32 %v296, %v300
    %302 = vst [vmem:[#allocation4] sm:$0xff] %v301
    %s303 = scalar_lea.vmem %s0, 32
    %v304 = vld [vmem:[%s303] sm:$0xff]
    %v305 = vld [vmem:[%s303 + $0x8] sm:$0xff]
    %v306 = vld [vmem:[%s303 + $0x10] sm:$0xff]
    %v307 = vld [vmem:[%s303 + $0x18] sm:$0xff]
    %v308 = vpack.c.bf16 %v301, %v301
    %v309 = vld [vmem:[%s3] sm:$0xff]
    %v310 = vld [vmem:[%s3 + $0x8] sm:$0xff]
    %v311 = vld [vmem:[%s3 + $0x10] sm:$0xff]
    %v312 = vld [vmem:[%s3 + $0x18] sm:$0xff]
    %v313 = vld [vmem:[%s3 + $0x20] sm:$0xff]
    %v314 = vld [vmem:[%s3 + $0x28] sm:$0xff]
    %v315 = vld [vmem:[%s3 + $0x30] sm:$0xff]
    %v316 = vld [vmem:[%s3 + $0x38] sm:$0xff]
    %v317 = vld [vmem:[%s3 + $0x40] sm:$0xff]
    %v318 = vld [vmem:[%s3 + $0x48] sm:$0xff]
    %v319 = vld [vmem:[%s3 + $0x50] sm:$0xff]
    %v320 = vld [vmem:[%s3 + $0x58] sm:$0xff]
    %v321 = vld [vmem:[%s3 + $0x60] sm:$0xff]
    %v322 = vld [vmem:[%s3 + $0x68] sm:$0xff]
    %v323 = vld [vmem:[%s3 + $0x70] sm:$0xff]
    %v324 = vld [vmem:[%s3 + $0x78] sm:$0xff]
    %v325 = vld [vmem:[%s3 + $0x80] sm:$0xff]
    %v326 = vld [vmem:[%s3 + $0x88] sm:$0xff]
    %v327 = vld [vmem:[%s3 + $0x90] sm:$0xff]
    %v328 = vld [vmem:[%s3 + $0x98] sm:$0xff]
    %v329 = vld [vmem:[%s3 + $0xa0] sm:$0xff]
    %v330 = vld [vmem:[%s3 + $0xa8] sm:$0xff]
    %v331 = vld [vmem:[%s3 + $0xb0] sm:$0xff]
    %v332 = vld [vmem:[%s3 + $0xb8] sm:$0xff]
    %v333 = vld [vmem:[%s3 + $0xc0] sm:$0xff]
    %v334 = vld [vmem:[%s3 + $0xc8] sm:$0xff]
    %v335 = vld [vmem:[%s3 + $0xd0] sm:$0xff]
    %v336 = vld [vmem:[%s3 + $0xd8] sm:$0xff]
    %v337 = vld [vmem:[%s3 + $0xe0] sm:$0xff]
    %v338 = vld [vmem:[%s3 + $0xe8] sm:$0xff]
    %v339 = vld [vmem:[%s3 + $0xf0] sm:$0xff]
    %v340 = vld [vmem:[%s3 + $0xf8] sm:$0xff]
    %v373 = vunpack.c.l.b16 %v309
    %v374 = vunpack.c.h.b16 %v309
    %v375 = vunpack.c.l.b16 %v310
    %v376 = vunpack.c.h.b16 %v310
    %v377 = vunpack.c.l.b16 %v311
    %v378 = vunpack.c.h.b16 %v311
    %v379 = vunpack.c.l.b16 %v312
    %v380 = vunpack.c.h.b16 %v312
    %v381 = vunpack.c.l.b16 %v313
    %v382 = vunpack.c.h.b16 %v313
    %v383 = vunpack.c.l.b16 %v314
    %v384 = vunpack.c.h.b16 %v314
    %v385 = vunpack.c.l.b16 %v315
    %v386 = vunpack.c.h.b16 %v315
    %v387 = vunpack.c.l.b16 %v316
    %v388 = vunpack.c.h.b16 %v316
    %v389 = vunpack.c.l.b16 %v317
    %v390 = vunpack.c.h.b16 %v317
    %v391 = vunpack.c.l.b16 %v318
    %v392 = vunpack.c.h.b16 %v318
    %v393 = vunpack.c.l.b16 %v319
    %v394 = vunpack.c.h.b16 %v319
    %v395 = vunpack.c.l.b16 %v320
    %v396 = vunpack.c.h.b16 %v320
    %v397 = vunpack.c.l.b16 %v321
    %v398 = vunpack.c.h.b16 %v321
    %v399 = vunpack.c.l.b16 %v322
    %v400 = vunpack.c.h.b16 %v322
    %v401 = vunpack.c.l.b16 %v323
    %v402 = vunpack.c.h.b16 %v323
    %v403 = vunpack.c.l.b16 %v324
    %v404 = vunpack.c.h.b16 %v324
    %v405 = vunpack.c.l.b16 %v325
    %v406 = vunpack.c.h.b16 %v325
    %v407 = vunpack.c.l.b16 %v326
    %v408 = vunpack.c.h.b16 %v326
    %v409 = vunpack.c.l.b16 %v327
    %v410 = vunpack.c.h.b16 %v327
    %v411 = vunpack.c.l.b16 %v328
    %v412 = vunpack.c.h.b16 %v328
    %v413 = vunpack.c.l.b16 %v329
    %v414 = vunpack.c.h.b16 %v329
    %v415 = vunpack.c.l.b16 %v330
    %v416 = vunpack.c.h.b16 %v330
    %v417 = vunpack.c.l.b16 %v331
    %v418 = vunpack.c.h.b16 %v331
    %v419 = vunpack.c.l.b16 %v332
    %v420 = vunpack.c.h.b16 %v332
    %v421 = vunpack.c.l.b16 %v333
    %v422 = vunpack.c.h.b16 %v333
    %v423 = vunpack.c.l.b16 %v334
    %v424 = vunpack.c.h.b16 %v334
    %v425 = vunpack.c.l.b16 %v335
    %v426 = vunpack.c.h.b16 %v335
    %v427 = vunpack.c.l.b16 %v336
    %v428 = vunpack.c.h.b16 %v336
    %v429 = vunpack.c.l.b16 %v337
    %v430 = vunpack.c.h.b16 %v337
    %v431 = vunpack.c.l.b16 %v338
    %v432 = vunpack.c.h.b16 %v338
    %v433 = vunpack.c.l.b16 %v339
    %v434 = vunpack.c.h.b16 %v339
    %v435 = vunpack.c.l.b16 %v340
    %v436 = vunpack.c.h.b16 %v340
    %v437 = vpack.c.b16 %v377, %v373
    %v438 = vpack.c.b16 %v378, %v374
    %v439 = vpack.c.b16 %v379, %v375
    %v440 = vpack.c.b16 %v380, %v376
    %v441 = vpack.c.b16 %v385, %v381
    %v442 = vpack.c.b16 %v386, %v382
    %v443 = vpack.c.b16 %v387, %v383
    %v444 = vpack.c.b16 %v388, %v384
    %v445 = vpack.c.b16 %v393, %v389
    %v446 = vpack.c.b16 %v394, %v390
    %v447 = vpack.c.b16 %v395, %v391
    %v448 = vpack.c.b16 %v396, %v392
    %v449 = vpack.c.b16 %v401, %v397
    %v450 = vpack.c.b16 %v402, %v398
    %v451 = vpack.c.b16 %v403, %v399
    %v452 = vpack.c.b16 %v404, %v400
    %v453 = vpack.c.b16 %v409, %v405
    %v454 = vpack.c.b16 %v410, %v406
    %v455 = vpack.c.b16 %v411, %v407
    %v456 = vpack.c.b16 %v412, %v408
    %v457 = vpack.c.b16 %v417, %v413
    %v458 = vpack.c.b16 %v418, %v414
    %v459 = vpack.c.b16 %v419, %v415
    %v460 = vpack.c.b16 %v420, %v416
    %v461 = vpack.c.b16 %v425, %v421
    %v462 = vpack.c.b16 %v426, %v422
    %v463 = vpack.c.b16 %v427, %v423
    %v464 = vpack.c.b16 %v428, %v424
    %v465 = vpack.c.b16 %v433, %v429
    %v466 = vpack.c.b16 %v434, %v430
    %v467 = vpack.c.b16 %v435, %v431
    %v468 = vpack.c.b16 %v436, %v432
    %501 = vmatpush.bf16.msra.mxu0 %v465
    %502 = vmatpush.bf16.msra.mxu0 %v461
    %503 = vmatpush.bf16.msra.mxu0 %v457
    %504 = vmatpush.bf16.msra.mxu0 %v453
    %505 = vmatpush.bf16.msra.mxu0 %v449
    %506 = vmatpush.bf16.msra.mxu0 %v445
    %507 = vmatpush.bf16.msra.mxu0 %v441
    %508 = vmatpush.bf16.msra.mxu0 %v437
    %509 = vmatmul.bf16.gmra.mxu0 %v308
    %v510 = vpop.f32.mrf.mxu0
    %v511 = vadd.f32 0.0, %v510
    %v512 = vpop.f32.mrf.mxu0
    %513 = vdwg.mxu0
    %514 = vmatpush.bf16.msra.mxu0 %v466
    %515 = vmatpush.bf16.msra.mxu0 %v462
    %516 = vmatpush.bf16.msra.mxu0 %v458
    %517 = vmatpush.bf16.msra.mxu0 %v454
    %518 = vmatpush.bf16.msra.mxu0 %v450
    %519 = vmatpush.bf16.msra.mxu0 %v446
    %520 = vmatpush.bf16.msra.mxu0 %v442
    %521 = vmatpush.bf16.msra.mxu0 %v438
    %522 = vmatmul.bf16.gmra.mxu0 %v308
    %v523 = vpop.f32.mrf.mxu0
    %v524 = vadd.f32 0.0, %v523
    %v525 = vpop.f32.mrf.mxu0
    %526 = vdwg.mxu0
    %527 = vmatpush.bf16.msra.mxu0 %v467
    %528 = vmatpush.bf16.msra.mxu0 %v463
    %529 = vmatpush.bf16.msra.mxu0 %v459
    %530 = vmatpush.bf16.msra.mxu0 %v455
    %531 = vmatpush.bf16.msra.mxu0 %v451
    %532 = vmatpush.bf16.msra.mxu0 %v447
    %533 = vmatpush.bf16.msra.mxu0 %v443
    %534 = vmatpush.bf16.msra.mxu0 %v439
    %535 = vmatmul.bf16.gmra.mxu0 %v308
    %v536 = vpop.f32.mrf.mxu0
    %v537 = vadd.f32 0.0, %v536
    %v538 = vpop.f32.mrf.mxu0
    %539 = vdwg.mxu0
    %540 = vmatpush.bf16.msra.mxu0 %v468
    %541 = vmatpush.bf16.msra.mxu0 %v464
    %542 = vmatpush.bf16.msra.mxu0 %v460
    %543 = vmatpush.bf16.msra.mxu0 %v456
    %544 = vmatpush.bf16.msra.mxu0 %v452
    %545 = vmatpush.bf16.msra.mxu0 %v448
    %546 = vmatpush.bf16.msra.mxu0 %v444
    %547 = vmatpush.bf16.msra.mxu0 %v440
    %548 = vmatmul.bf16.gmra.mxu0 %v308
    %v549 = vpop.f32.mrf.mxu0
    %v550 = vadd.f32 0.0, %v549
    %v551 = vpop.f32.mrf.mxu0
    %552 = vdwg.mxu0
    %v553 = vadd.f32 %v304, %v511
    %v554 = vadd.f32 %v305, %v524
    %v555 = vadd.f32 %v306, %v537
    %v556 = vadd.f32 %v307, %v550
    %v557 = vmul.f32 %v553, 0.5
    %v558 = vtanh.pop %v557
    %v559 = vmul.f32 %v558, 0.5
    %v560 = vadd.f32 %v559, 0.5
    %v561 = vmul.f32 %v554, 0.5
    %v562 = vtanh.pop %v561
    %v563 = vmul.f32 %v562, 0.5
    %v564 = vadd.f32 %v563, 0.5
    %v565 = vtanh.pop %v555
    %v566 = vmul.f32 %v556, 0.5
    %v567 = vtanh.pop %v566
    %v568 = vmul.f32 %v567, 0.5
    %v569 = vadd.f32 %v568, 0.5
    %v570 = vmul.f32 %v564, %v299
    %v571 = vmul.f32 %v560, %v565
    %v572 = vadd.f32 %v570, %v571
    %v573 = vtanh.pop %v572
    %v574 = vmul.f32 %v569, %v573
    %s575 = scalar_lea.vmem [#allocation4], 8
    %576 = vst [vmem:[%s575] sm:$0xff] %v574
    %s577 = scalar_lea.vmem %s0, 64
    %v578 = vld [vmem:[%s577] sm:$0xff]
    %v579 = vld [vmem:[%s577 + $0x8] sm:$0xff]
    %v580 = vld [vmem:[%s577 + $0x10] sm:$0xff]
    %v581 = vld [vmem:[%s577 + $0x18] sm:$0xff]
    %v582 = vpack.c.bf16 %v574, %v574
    %v583 = vld [vmem:[%s3] sm:$0xff]
    %v584 = vld [vmem:[%s3 + $0x8] sm:$0xff]
    %v585 = vld [vmem:[%s3 + $0x10] sm:$0xff]
    %v586 = vld [vmem:[%s3 + $0x18] sm:$0xff]
    %v587 = vld [vmem:[%s3 + $0x20] sm:$0xff]
    %v588 = vld [vmem:[%s3 + $0x28] sm:$0xff]
    %v589 = vld [vmem:[%s3 + $0x30] sm:$0xff]
    %v590 = vld [vmem:[%s3 + $0x38] sm:$0xff]
    %v591 = vld [vmem:[%s3 + $0x40] sm:$0xff]
    %v592 = vld [vmem:[%s3 + $0x48] sm:$0xff]
    %v593 = vld [vmem:[%s3 + $0x50] sm:$0xff]
    %v594 = vld [vmem:[%s3 + $0x58] sm:$0xff]
    %v595 = vld [vmem:[%s3 + $0x60] sm:$0xff]
    %v596 = vld [vmem:[%s3 + $0x68] sm:$0xff]
    %v597 = vld [vmem:[%s3 + $0x70] sm:$0xff]
    %v598 = vld [vmem:[%s3 + $0x78] sm:$0xff]
    %v599 = vld [vmem:[%s3 + $0x80] sm:$0xff]
    %v600 = vld [vmem:[%s3 + $0x88] sm:$0xff]
    %v601 = vld [vmem:[%s3 + $0x90] sm:$0xff]
    %v602 = vld [vmem:[%s3 + $0x98] sm:$0xff]
    %v603 = vld [vmem:[%s3 + $0xa0] sm:$0xff]
    %v604 = vld [vmem:[%s3 + $0xa8] sm:$0xff]
    %v605 = vld [vmem:[%s3 + $0xb0] sm:$0xff]
    %v606 = vld [vmem:[%s3 + $0xb8] sm:$0xff]
    %v607 = vld [vmem:[%s3 + $0xc0] sm:$0xff]
    %v608 = vld [vmem:[%s3 + $0xc8] sm:$0xff]
    %v609 = vld [vmem:[%s3 + $0xd0] sm:$0xff]
    %v610 = vld [vmem:[%s3 + $0xd8] sm:$0xff]
    %v611 = vld [vmem:[%s3 + $0xe0] sm:$0xff]
    %v612 = vld [vmem:[%s3 + $0xe8] sm:$0xff]
    %v613 = vld [vmem:[%s3 + $0xf0] sm:$0xff]
    %v614 = vld [vmem:[%s3 + $0xf8] sm:$0xff]
    %v647 = vunpack.c.l.b16 %v583
    %v648 = vunpack.c.h.b16 %v583
    %v649 = vunpack.c.l.b16 %v584
    %v650 = vunpack.c.h.b16 %v584
    %v651 = vunpack.c.l.b16 %v585
    %v652 = vunpack.c.h.b16 %v585
    %v653 = vunpack.c.l.b16 %v586
    %v654 = vunpack.c.h.b16 %v586
    %v655 = vunpack.c.l.b16 %v587
    %v656 = vunpack.c.h.b16 %v587
    %v657 = vunpack.c.l.b16 %v588
    %v658 = vunpack.c.h.b16 %v588
    %v659 = vunpack.c.l.b16 %v589
    %v660 = vunpack.c.h.b16 %v589
    %v661 = vunpack.c.l.b16 %v590
    %v662 = vunpack.c.h.b16 %v590
    %v663 = vunpack.c.l.b16 %v591
    %v664 = vunpack.c.h.b16 %v591
    %v665 = vunpack.c.l.b16 %v592
    %v666 = vunpack.c.h.b16 %v592
    %v667 = vunpack.c.l.b16 %v593
    %v668 = vunpack.c.h.b16 %v593
    %v669 = vunpack.c.l.b16 %v594
    %v670 = vunpack.c.h.b16 %v594
    %v671 = vunpack.c.l.b16 %v595
    %v672 = vunpack.c.h.b16 %v595
    %v673 = vunpack.c.l.b16 %v596
    %v674 = vunpack.c.h.b16 %v596
    %v675 = vunpack.c.l.b16 %v597
    %v676 = vunpack.c.h.b16 %v597
    %v677 = vunpack.c.l.b16 %v598
    %v678 = vunpack.c.h.b16 %v598
    %v679 = vunpack.c.l.b16 %v599
    %v680 = vunpack.c.h.b16 %v599
    %v681 = vunpack.c.l.b16 %v600
    %v682 = vunpack.c.h.b16 %v600
    %v683 = vunpack.c.l.b16 %v601
    %v684 = vunpack.c.h.b16 %v601
    %v685 = vunpack.c.l.b16 %v602
    %v686 = vunpack.c.h.b16 %v602
    %v687 = vunpack.c.l.b16 %v603
    %v688 = vunpack.c.h.b16 %v603
    %v689 = vunpack.c.l.b16 %v604
    %v690 = vunpack.c.h.b16 %v604
    %v691 = vunpack.c.l.b16 %v605
    %v692 = vunpack.c.h.b16 %v605
    %v693 = vunpack.c.l.b16 %v606
    %v694 = vunpack.c.h.b16 %v606
    %v695 = vunpack.c.l.b16 %v607
    %v696 = vunpack.c.h.b16 %v607
    %v697 = vunpack.c.l.b16 %v608
    %v698 = vunpack.c.h.b16 %v608
    %v699 = vunpack.c.l.b16 %v609
    %v700 = vunpack.c.h.b16 %v609
    %v701 = vunpack.c.l.b16 %v610
    %v702 = vunpack.c.h.b16 %v610
    %v703 = vunpack.c.l.b16 %v611
    %v704 = vunpack.c.h.b16 %v611
    %v705 = vunpack.c.l.b16 %v612
    %v706 = vunpack.c.h.b16 %v612
    %v707 = vunpack.c.l.b16 %v613
    %v708 = vunpack.c.h.b16 %v613
    %v709 = vunpack.c.l.b16 %v614
    %v710 = vunpack.c.h.b16 %v614
    %v711 = vpack.c.b16 %v651, %v647
    %v712 = vpack.c.b16 %v652, %v648
    %v713 = vpack.c.b16 %v653, %v649
    %v714 = vpack.c.b16 %v654, %v650
    %v715 = vpack.c.b16 %v659, %v655
    %v716 = vpack.c.b16 %v660, %v656
    %v717 = vpack.c.b16 %v661, %v657
    %v718 = vpack.c.b16 %v662, %v658
    %v719 = vpack.c.b16 %v667, %v663
    %v720 = vpack.c.b16 %v668, %v664
    %v721 = vpack.c.b16 %v669, %v665
    %v722 = vpack.c.b16 %v670, %v666
    %v723 = vpack.c.b16 %v675, %v671
    %v724 = vpack.c.b16 %v676, %v672
    %v725 = vpack.c.b16 %v677, %v673
    %v726 = vpack.c.b16 %v678, %v674
    %v727 = vpack.c.b16 %v683, %v679
    %v728 = vpack.c.b16 %v684, %v680
    %v729 = vpack.c.b16 %v685, %v681
    %v730 = vpack.c.b16 %v686, %v682
    %v731 = vpack.c.b16 %v691, %v687
    %v732 = vpack.c.b16 %v692, %v688
    %v733 = vpack.c.b16 %v693, %v689
    %v734 = vpack.c.b16 %v694, %v690
    %v735 = vpack.c.b16 %v699, %v695
    %v736 = vpack.c.b16 %v700, %v696
    %v737 = vpack.c.b16 %v701, %v697
    %v738 = vpack.c.b16 %v702, %v698
    %v739 = vpack.c.b16 %v707, %v703
    %v740 = vpack.c.b16 %v708, %v704
    %v741 = vpack.c.b16 %v709, %v705
    %v742 = vpack.c.b16 %v710, %v706
    %775 = vmatpush.bf16.msra.mxu0 %v739
    %776 = vmatpush.bf16.msra.mxu0 %v735
    %777 = vmatpush.bf16.msra.mxu0 %v731
    %778 = vmatpush.bf16.msra.mxu0 %v727
    %779 = vmatpush.bf16.msra.mxu0 %v723
    %780 = vmatpush.bf16.msra.mxu0 %v719
    %781 = vmatpush.bf16.msra.mxu0 %v715
    %782 = vmatpush.bf16.msra.mxu0 %v711
    %783 = vmatmul.bf16.gmra.mxu0 %v582
    %v784 = vpop.f32.mrf.mxu0
    %v785 = vadd.f32 0.0, %v784
    %v786 = vpop.f32.mrf.mxu0
    %787 = vdwg.mxu0
    %788 = vmatpush.bf16.msra.mxu0 %v740
    %789 = vmatpush.bf16.msra.mxu0 %v736
    %790 = vmatpush.bf16.msra.mxu0 %v732
    %791 = vmatpush.bf16.msra.mxu0 %v728
    %792 = vmatpush.bf16.msra.mxu0 %v724
    %793 = vmatpush.bf16.msra.mxu0 %v720
    %794 = vmatpush.bf16.msra.mxu0 %v716
    %795 = vmatpush.bf16.msra.mxu0 %v712
    %796 = vmatmul.bf16.gmra.mxu0 %v582
    %v797 = vpop.f32.mrf.mxu0
    %v798 = vadd.f32 0.0, %v797
    %v799 = vpop.f32.mrf.mxu0
    %800 = vdwg.mxu0
    %801 = vmatpush.bf16.msra.mxu0 %v741
    %802 = vmatpush.bf16.msra.mxu0 %v737
    %803 = vmatpush.bf16.msra.mxu0 %v733
    %804 = vmatpush.bf16.msra.mxu0 %v729
    %805 = vmatpush.bf16.msra.mxu0 %v725
    %806 = vmatpush.bf16.msra.mxu0 %v721
    %807 = vmatpush.bf16.msra.mxu0 %v717
    %808 = vmatpush.bf16.msra.mxu0 %v713
    %809 = vmatmul.bf16.gmra.mxu0 %v582
    %v810 = vpop.f32.mrf.mxu0
    %v811 = vadd.f32 0.0, %v810
    %v812 = vpop.f32.mrf.mxu0
    %813 = vdwg.mxu0
    %814 = vmatpush.bf16.msra.mxu0 %v742
    %815 = vmatpush.bf16.msra.mxu0 %v738
    %816 = vmatpush.bf16.msra.mxu0 %v734
    %817 = vmatpush.bf16.msra.mxu0 %v730
    %818 = vmatpush.bf16.msra.mxu0 %v726
    %819 = vmatpush.bf16.msra.mxu0 %v722
    %820 = vmatpush.bf16.msra.mxu0 %v718
    %821 = vmatpush.bf16.msra.mxu0 %v714
    %822 = vmatmul.bf16.gmra.mxu0 %v582
    %v823 = vpop.f32.mrf.mxu0
    %v824 = vadd.f32 0.0, %v823
    %v825 = vpop.f32.mrf.mxu0
    %826 = vdwg.mxu0
    %v827 = vadd.f32 %v578, %v785
    %v828 = vadd.f32 %v579, %v798
    %v829 = vadd.f32 %v580, %v811
    %v830 = vadd.f32 %v581, %v824
    %v831 = vmul.f32 %v827, 0.5
    %v832 = vtanh.pop %v831
    %v833 = vmul.f32 %v832, 0.5
    %v834 = vadd.f32 %v833, 0.5
    %v835 = vmul.f32 %v828, 0.5
    %v836 = vtanh.pop %v835
    %v837 = vmul.f32 %v836, 0.5
    %v838 = vadd.f32 %v837, 0.5
    %v839 = vtanh.pop %v829
    %v840 = vmul.f32 %v830, 0.5
    %v841 = vtanh.pop %v840
    %v842 = vmul.f32 %v841, 0.5
    %v843 = vadd.f32 %v842, 0.5
    %v844 = vmul.f32 %v838, %v572
    %v845 = vmul.f32 %v834, %v839
    %v846 = vadd.f32 %v844, %v845
    %v847 = vtanh.pop %v846
    %v848 = vmul.f32 %v843, %v847
    %s849 = scalar_lea.vmem [#allocation4], 16
    %850 = vst [vmem:[%s849] sm:$0xff] %v848
    %s851 = scalar_lea.vmem %s0, 96
    %v852 = vld [vmem:[%s851] sm:$0xff]
    %v853 = vld [vmem:[%s851 + $0x8] sm:$0xff]
    %v854 = vld [vmem:[%s851 + $0x10] sm:$0xff]
    %v855 = vld [vmem:[%s851 + $0x18] sm:$0xff]
    %v856 = vpack.c.bf16 %v848, %v848
    %v857 = vld [vmem:[%s3] sm:$0xff]
    %v858 = vld [vmem:[%s3 + $0x8] sm:$0xff]
    %v859 = vld [vmem:[%s3 + $0x10] sm:$0xff]
    %v860 = vld [vmem:[%s3 + $0x18] sm:$0xff]
    %v861 = vld [vmem:[%s3 + $0x20] sm:$0xff]
    %v862 = vld [vmem:[%s3 + $0x28] sm:$0xff]
    %v863 = vld [vmem:[%s3 + $0x30] sm:$0xff]
    %v864 = vld [vmem:[%s3 + $0x38] sm:$0xff]
    %v865 = vld [vmem:[%s3 + $0x40] sm:$0xff]
    %v866 = vld [vmem:[%s3 + $0x48] sm:$0xff]
    %v867 = vld [vmem:[%s3 + $0x50] sm:$0xff]
    %v868 = vld [vmem:[%s3 + $0x58] sm:$0xff]
    %v869 = vld [vmem:[%s3 + $0x60] sm:$0xff]
    %v870 = vld [vmem:[%s3 + $0x68] sm:$0xff]
    %v871 = vld [vmem:[%s3 + $0x70] sm:$0xff]
    %v872 = vld [vmem:[%s3 + $0x78] sm:$0xff]
    %v873 = vld [vmem:[%s3 + $0x80] sm:$0xff]
    %v874 = vld [vmem:[%s3 + $0x88] sm:$0xff]
    %v875 = vld [vmem:[%s3 + $0x90] sm:$0xff]
    %v876 = vld [vmem:[%s3 + $0x98] sm:$0xff]
    %v877 = vld [vmem:[%s3 + $0xa0] sm:$0xff]
    %v878 = vld [vmem:[%s3 + $0xa8] sm:$0xff]
    %v879 = vld [vmem:[%s3 + $0xb0] sm:$0xff]
    %v880 = vld [vmem:[%s3 + $0xb8] sm:$0xff]
    %v881 = vld [vmem:[%s3 + $0xc0] sm:$0xff]
    %v882 = vld [vmem:[%s3 + $0xc8] sm:$0xff]
    %v883 = vld [vmem:[%s3 + $0xd0] sm:$0xff]
    %v884 = vld [vmem:[%s3 + $0xd8] sm:$0xff]
    %v885 = vld [vmem:[%s3 + $0xe0] sm:$0xff]
    %v886 = vld [vmem:[%s3 + $0xe8] sm:$0xff]
    %v887 = vld [vmem:[%s3 + $0xf0] sm:$0xff]
    %v888 = vld [vmem:[%s3 + $0xf8] sm:$0xff]
    %v921 = vunpack.c.l.b16 %v857
    %v922 = vunpack.c.h.b16 %v857
    %v923 = vunpack.c.l.b16 %v858
    %v924 = vunpack.c.h.b16 %v858
    %v925 = vunpack.c.l.b16 %v859
    %v926 = vunpack.c.h.b16 %v859
    %v927 = vunpack.c.l.b16 %v860
    %v928 = vunpack.c.h.b16 %v860
    %v929 = vunpack.c.l.b16 %v861
    %v930 = vunpack.c.h.b16 %v861
    %v931 = vunpack.c.l.b16 %v862
    %v932 = vunpack.c.h.b16 %v862
    %v933 = vunpack.c.l.b16 %v863
    %v934 = vunpack.c.h.b16 %v863
    %v935 = vunpack.c.l.b16 %v864
    %v936 = vunpack.c.h.b16 %v864
    %v937 = vunpack.c.l.b16 %v865
    %v938 = vunpack.c.h.b16 %v865
    %v939 = vunpack.c.l.b16 %v866
    %v940 = vunpack.c.h.b16 %v866
    %v941 = vunpack.c.l.b16 %v867
    %v942 = vunpack.c.h.b16 %v867
    %v943 = vunpack.c.l.b16 %v868
    %v944 = vunpack.c.h.b16 %v868
    %v945 = vunpack.c.l.b16 %v869
    %v946 = vunpack.c.h.b16 %v869
    %v947 = vunpack.c.l.b16 %v870
    %v948 = vunpack.c.h.b16 %v870
    %v949 = vunpack.c.l.b16 %v871
    %v950 = vunpack.c.h.b16 %v871
    %v951 = vunpack.c.l.b16 %v872
    %v952 = vunpack.c.h.b16 %v872
    %v953 = vunpack.c.l.b16 %v873
    %v954 = vunpack.c.h.b16 %v873
    %v955 = vunpack.c.l.b16 %v874
    %v956 = vunpack.c.h.b16 %v874
    %v957 = vunpack.c.l.b16 %v875
    %v958 = vunpack.c.h.b16 %v875
    %v959 = vunpack.c.l.b16 %v876
    %v960 = vunpack.c.h.b16 %v876
    %v961 = vunpack.c.l.b16 %v877
    %v962 = vunpack.c.h.b16 %v877
    %v963 = vunpack.c.l.b16 %v878
    %v964 = vunpack.c.h.b16 %v878
    %v965 = vunpack.c.l.b16 %v879
    %v966 = vunpack.c.h.b16 %v879
    %v967 = vunpack.c.l.b16 %v880
    %v968 = vunpack.c.h.b16 %v880
    %v969 = vunpack.c.l.b16 %v881
    %v970 = vunpack.c.h.b16 %v881
    %v971 = vunpack.c.l.b16 %v882
    %v972 = vunpack.c.h.b16 %v882
    %v973 = vunpack.c.l.b16 %v883
    %v974 = vunpack.c.h.b16 %v883
    %v975 = vunpack.c.l.b16 %v884
    %v976 = vunpack.c.h.b16 %v884
    %v977 = vunpack.c.l.b16 %v885
    %v978 = vunpack.c.h.b16 %v885
    %v979 = vunpack.c.l.b16 %v886
    %v980 = vunpack.c.h.b16 %v886
    %v981 = vunpack.c.l.b16 %v887
    %v982 = vunpack.c.h.b16 %v887
    %v983 = vunpack.c.l.b16 %v888
    %v984 = vunpack.c.h.b16 %v888
    %v985 = vpack.c.b16 %v925, %v921
    %v986 = vpack.c.b16 %v926, %v922
    %v987 = vpack.c.b16 %v927, %v923
    %v988 = vpack.c.b16 %v928, %v924
    %v989 = vpack.c.b16 %v933, %v929
    %v990 = vpack.c.b16 %v934, %v930
    %v991 = vpack.c.b16 %v935, %v931
    %v992 = vpack.c.b16 %v936, %v932
    %v993 = vpack.c.b16 %v941, %v937
    %v994 = vpack.c.b16 %v942, %v938
    %v995 = vpack.c.b16 %v943, %v939
    %v996 = vpack.c.b16 %v944, %v940
    %v997 = vpack.c.b16 %v949, %v945
    %v998 = vpack.c.b16 %v950, %v946
    %v999 = vpack.c.b16 %v951, %v947
    %v1000 = vpack.c.b16 %v952, %v948
    %v1001 = vpack.c.b16 %v957, %v953
    %v1002 = vpack.c.b16 %v958, %v954
    %v1003 = vpack.c.b16 %v959, %v955
    %v1004 = vpack.c.b16 %v960, %v956
    %v1005 = vpack.c.b16 %v965, %v961
    %v1006 = vpack.c.b16 %v966, %v962
    %v1007 = vpack.c.b16 %v967, %v963
    %v1008 = vpack.c.b16 %v968, %v964
    %v1009 = vpack.c.b16 %v973, %v969
    %v1010 = vpack.c.b16 %v974, %v970
    %v1011 = vpack.c.b16 %v975, %v971
    %v1012 = vpack.c.b16 %v976, %v972
    %v1013 = vpack.c.b16 %v981, %v977
    %v1014 = vpack.c.b16 %v982, %v978
    %v1015 = vpack.c.b16 %v983, %v979
    %v1016 = vpack.c.b16 %v984, %v980
    %1049 = vmatpush.bf16.msra.mxu0 %v1013
    %1050 = vmatpush.bf16.msra.mxu0 %v1009
    %1051 = vmatpush.bf16.msra.mxu0 %v1005
    %1052 = vmatpush.bf16.msra.mxu0 %v1001
    %1053 = vmatpush.bf16.msra.mxu0 %v997
    %1054 = vmatpush.bf16.msra.mxu0 %v993
    %1055 = vmatpush.bf16.msra.mxu0 %v989
    %1056 = vmatpush.bf16.msra.mxu0 %v985
    %1057 = vmatmul.bf16.gmra.mxu0 %v856
    %v1058 = vpop.f32.mrf.mxu0
    %v1059 = vadd.f32 0.0, %v1058
    %v1060 = vpop.f32.mrf.mxu0
    %1061 = vdwg.mxu0
    %1062 = vmatpush.bf16.msra.mxu0 %v1014
    %1063 = vmatpush.bf16.msra.mxu0 %v1010
    %1064 = vmatpush.bf16.msra.mxu0 %v1006
    %1065 = vmatpush.bf16.msra.mxu0 %v1002
    %1066 = vmatpush.bf16.msra.mxu0 %v998
    %1067 = vmatpush.bf16.msra.mxu0 %v994
    %1068 = vmatpush.bf16.msra.mxu0 %v990
    %1069 = vmatpush.bf16.msra.mxu0 %v986
    %1070 = vmatmul.bf16.gmra.mxu0 %v856
    %v1071 = vpop.f32.mrf.mxu0
    %v1072 = vadd.f32 0.0, %v1071
    %v1073 = vpop.f32.mrf.mxu0
    %1074 = vdwg.mxu0
    %1075 = vmatpush.bf16.msra.mxu0 %v1015
    %1076 = vmatpush.bf16.msra.mxu0 %v1011
    %1077 = vmatpush.bf16.msra.mxu0 %v1007
    %1078 = vmatpush.bf16.msra.mxu0 %v1003
    %1079 = vmatpush.bf16.msra.mxu0 %v999
    %1080 = vmatpush.bf16.msra.mxu0 %v995
    %1081 = vmatpush.bf16.msra.mxu0 %v991
    %1082 = vmatpush.bf16.msra.mxu0 %v987
    %1083 = vmatmul.bf16.gmra.mxu0 %v856
    %v1084 = vpop.f32.mrf.mxu0
    %v1085 = vadd.f32 0.0, %v1084
    %v1086 = vpop.f32.mrf.mxu0
    %1087 = vdwg.mxu0
    %1088 = vmatpush.bf16.msra.mxu0 %v1016
    %1089 = vmatpush.bf16.msra.mxu0 %v1012
    %1090 = vmatpush.bf16.msra.mxu0 %v1008
    %1091 = vmatpush.bf16.msra.mxu0 %v1004
    %1092 = vmatpush.bf16.msra.mxu0 %v1000
    %1093 = vmatpush.bf16.msra.mxu0 %v996
    %1094 = vmatpush.bf16.msra.mxu0 %v992
    %1095 = vmatpush.bf16.msra.mxu0 %v988
    %1096 = vmatmul.bf16.gmra.mxu0 %v856
    %v1097 = vpop.f32.mrf.mxu0
    %v1098 = vadd.f32 0.0, %v1097
    %v1099 = vpop.f32.mrf.mxu0
    %1100 = vdwg.mxu0
    %v1101 = vadd.f32 %v852, %v1059
    %v1102 = vadd.f32 %v853, %v1072
    %v1103 = vadd.f32 %v854, %v1085
    %v1104 = vadd.f32 %v855, %v1098
    %v1105 = vmul.f32 %v1101, 0.5
    %v1106 = vtanh.pop %v1105
    %v1107 = vmul.f32 %v1106, 0.5
    %v1108 = vadd.f32 %v1107, 0.5
    %v1109 = vmul.f32 %v1102, 0.5
    %v1110 = vtanh.pop %v1109
    %v1111 = vmul.f32 %v1110, 0.5
    %v1112 = vadd.f32 %v1111, 0.5
    %v1113 = vtanh.pop %v1103
    %v1114 = vmul.f32 %v1104, 0.5
    %v1115 = vtanh.pop %v1114
    %v1116 = vmul.f32 %v1115, 0.5
    %v1117 = vadd.f32 %v1116, 0.5
    %v1118 = vmul.f32 %v1112, %v846
    %v1119 = vmul.f32 %v1108, %v1113
    %v1120 = vadd.f32 %v1118, %v1119
    %v1121 = vtanh.pop %v1120
    %v1122 = vmul.f32 %v1117, %v1121
    %s1123 = scalar_lea.vmem [#allocation4], 24
    %1124 = vst [vmem:[%s1123] sm:$0xff] %v1122
    %s1125 = scalar_lea.vmem %s0, 128
    %v1126 = vld [vmem:[%s1125] sm:$0xff]
    %v1127 = vld [vmem:[%s1125 + $0x8] sm:$0xff]
    %v1128 = vld [vmem:[%s1125 + $0x10] sm:$0xff]
    %v1129 = vld [vmem:[%s1125 + $0x18] sm:$0xff]
    %v1130 = vpack.c.bf16 %v1122, %v1122
    %v1131 = vld [vmem:[%s3] sm:$0xff]
    %v1132 = vld [vmem:[%s3 + $0x8] sm:$0xff]
    %v1133 = vld [vmem:[%s3 + $0x10] sm:$0xff]
    %v1134 = vld [vmem:[%s3 + $0x18] sm:$0xff]
    %v1135 = vld [vmem:[%s3 + $0x20] sm:$0xff]
    %v1136 = vld [vmem:[%s3 + $0x28] sm:$0xff]
    %v1137 = vld [vmem:[%s3 + $0x30] sm:$0xff]
    %v1138 = vld [vmem:[%s3 + $0x38] sm:$0xff]
    %v1139 = vld [vmem:[%s3 + $0x40] sm:$0xff]
    %v1140 = vld [vmem:[%s3 + $0x48] sm:$0xff]
    %v1141 = vld [vmem:[%s3 + $0x50] sm:$0xff]
    %v1142 = vld [vmem:[%s3 + $0x58] sm:$0xff]
    %v1143 = vld [vmem:[%s3 + $0x60] sm:$0xff]
    %v1144 = vld [vmem:[%s3 + $0x68] sm:$0xff]
    %v1145 = vld [vmem:[%s3 + $0x70] sm:$0xff]
    %v1146 = vld [vmem:[%s3 + $0x78] sm:$0xff]
    %v1147 = vld [vmem:[%s3 + $0x80] sm:$0xff]
    %v1148 = vld [vmem:[%s3 + $0x88] sm:$0xff]
    %v1149 = vld [vmem:[%s3 + $0x90] sm:$0xff]
    %v1150 = vld [vmem:[%s3 + $0x98] sm:$0xff]
    %v1151 = vld [vmem:[%s3 + $0xa0] sm:$0xff]
    %v1152 = vld [vmem:[%s3 + $0xa8] sm:$0xff]
    %v1153 = vld [vmem:[%s3 + $0xb0] sm:$0xff]
    %v1154 = vld [vmem:[%s3 + $0xb8] sm:$0xff]
    %v1155 = vld [vmem:[%s3 + $0xc0] sm:$0xff]
    %v1156 = vld [vmem:[%s3 + $0xc8] sm:$0xff]
    %v1157 = vld [vmem:[%s3 + $0xd0] sm:$0xff]
    %v1158 = vld [vmem:[%s3 + $0xd8] sm:$0xff]
    %v1159 = vld [vmem:[%s3 + $0xe0] sm:$0xff]
    %v1160 = vld [vmem:[%s3 + $0xe8] sm:$0xff]
    %v1161 = vld [vmem:[%s3 + $0xf0] sm:$0xff]
    %v1162 = vld [vmem:[%s3 + $0xf8] sm:$0xff]
    %v1195 = vunpack.c.l.b16 %v1131
    %v1196 = vunpack.c.h.b16 %v1131
    %v1197 = vunpack.c.l.b16 %v1132
    %v1198 = vunpack.c.h.b16 %v1132
    %v1199 = vunpack.c.l.b16 %v1133
    %v1200 = vunpack.c.h.b16 %v1133
    %v1201 = vunpack.c.l.b16 %v1134
    %v1202 = vunpack.c.h.b16 %v1134
    %v1203 = vunpack.c.l.b16 %v1135
    %v1204 = vunpack.c.h.b16 %v1135
    %v1205 = vunpack.c.l.b16 %v1136
    %v1206 = vunpack.c.h.b16 %v1136
    %v1207 = vunpack.c.l.b16 %v1137
    %v1208 = vunpack.c.h.b16 %v1137
    %v1209 = vunpack.c.l.b16 %v1138
    %v1210 = vunpack.c.h.b16 %v1138
    %v1211 = vunpack.c.l.b16 %v1139
    %v1212 = vunpack.c.h.b16 %v1139
    %v1213 = vunpack.c.l.b16 %v1140
    %v1214 = vunpack.c.h.b16 %v1140
    %v1215 = vunpack.c.l.b16 %v1141
    %v1216 = vunpack.c.h.b16 %v1141
    %v1217 = vunpack.c.l.b16 %v1142
    %v1218 = vunpack.c.h.b16 %v1142
    %v1219 = vunpack.c.l.b16 %v1143
    %v1220 = vunpack.c.h.b16 %v1143
    %v1221 = vunpack.c.l.b16 %v1144
    %v1222 = vunpack.c.h.b16 %v1144
    %v1223 = vunpack.c.l.b16 %v1145
    %v1224 = vunpack.c.h.b16 %v1145
    %v1225 = vunpack.c.l.b16 %v1146
    %v1226 = vunpack.c.h.b16 %v1146
    %v1227 = vunpack.c.l.b16 %v1147
    %v1228 = vunpack.c.h.b16 %v1147
    %v1229 = vunpack.c.l.b16 %v1148
    %v1230 = vunpack.c.h.b16 %v1148
    %v1231 = vunpack.c.l.b16 %v1149
    %v1232 = vunpack.c.h.b16 %v1149
    %v1233 = vunpack.c.l.b16 %v1150
    %v1234 = vunpack.c.h.b16 %v1150
    %v1235 = vunpack.c.l.b16 %v1151
    %v1236 = vunpack.c.h.b16 %v1151
    %v1237 = vunpack.c.l.b16 %v1152
    %v1238 = vunpack.c.h.b16 %v1152
    %v1239 = vunpack.c.l.b16 %v1153
    %v1240 = vunpack.c.h.b16 %v1153
    %v1241 = vunpack.c.l.b16 %v1154
    %v1242 = vunpack.c.h.b16 %v1154
    %v1243 = vunpack.c.l.b16 %v1155
    %v1244 = vunpack.c.h.b16 %v1155
    %v1245 = vunpack.c.l.b16 %v1156
    %v1246 = vunpack.c.h.b16 %v1156
    %v1247 = vunpack.c.l.b16 %v1157
    %v1248 = vunpack.c.h.b16 %v1157
    %v1249 = vunpack.c.l.b16 %v1158
    %v1250 = vunpack.c.h.b16 %v1158
    %v1251 = vunpack.c.l.b16 %v1159
    %v1252 = vunpack.c.h.b16 %v1159
    %v1253 = vunpack.c.l.b16 %v1160
    %v1254 = vunpack.c.h.b16 %v1160
    %v1255 = vunpack.c.l.b16 %v1161
    %v1256 = vunpack.c.h.b16 %v1161
    %v1257 = vunpack.c.l.b16 %v1162
    %v1258 = vunpack.c.h.b16 %v1162
    %v1259 = vpack.c.b16 %v1199, %v1195
    %v1260 = vpack.c.b16 %v1200, %v1196
    %v1261 = vpack.c.b16 %v1201, %v1197
    %v1262 = vpack.c.b16 %v1202, %v1198
    %v1263 = vpack.c.b16 %v1207, %v1203
    %v1264 = vpack.c.b16 %v1208, %v1204
    %v1265 = vpack.c.b16 %v1209, %v1205
    %v1266 = vpack.c.b16 %v1210, %v1206
    %v1267 = vpack.c.b16 %v1215, %v1211
    %v1268 = vpack.c.b16 %v1216, %v1212
    %v1269 = vpack.c.b16 %v1217, %v1213
    %v1270 = vpack.c.b16 %v1218, %v1214
    %v1271 = vpack.c.b16 %v1223, %v1219
    %v1272 = vpack.c.b16 %v1224, %v1220
    %v1273 = vpack.c.b16 %v1225, %v1221
    %v1274 = vpack.c.b16 %v1226, %v1222
    %v1275 = vpack.c.b16 %v1231, %v1227
    %v1276 = vpack.c.b16 %v1232, %v1228
    %v1277 = vpack.c.b16 %v1233, %v1229
    %v1278 = vpack.c.b16 %v1234, %v1230
    %v1279 = vpack.c.b16 %v1239, %v1235
    %v1280 = vpack.c.b16 %v1240, %v1236
    %v1281 = vpack.c.b16 %v1241, %v1237
    %v1282 = vpack.c.b16 %v1242, %v1238
    %v1283 = vpack.c.b16 %v1247, %v1243
    %v1284 = vpack.c.b16 %v1248, %v1244
    %v1285 = vpack.c.b16 %v1249, %v1245
    %v1286 = vpack.c.b16 %v1250, %v1246
    %v1287 = vpack.c.b16 %v1255, %v1251
    %v1288 = vpack.c.b16 %v1256, %v1252
    %v1289 = vpack.c.b16 %v1257, %v1253
    %v1290 = vpack.c.b16 %v1258, %v1254
    %1323 = vmatpush.bf16.msra.mxu0 %v1287
    %1324 = vmatpush.bf16.msra.mxu0 %v1283
    %1325 = vmatpush.bf16.msra.mxu0 %v1279
    %1326 = vmatpush.bf16.msra.mxu0 %v1275
    %1327 = vmatpush.bf16.msra.mxu0 %v1271
    %1328 = vmatpush.bf16.msra.mxu0 %v1267
    %1329 = vmatpush.bf16.msra.mxu0 %v1263
    %1330 = vmatpush.bf16.msra.mxu0 %v1259
    %1331 = vmatmul.bf16.gmra.mxu0 %v1130
    %v1332 = vpop.f32.mrf.mxu0
    %v1333 = vadd.f32 0.0, %v1332
    %v1334 = vpop.f32.mrf.mxu0
    %1335 = vdwg.mxu0
    %1336 = vmatpush.bf16.msra.mxu0 %v1288
    %1337 = vmatpush.bf16.msra.mxu0 %v1284
    %1338 = vmatpush.bf16.msra.mxu0 %v1280
    %1339 = vmatpush.bf16.msra.mxu0 %v1276
    %1340 = vmatpush.bf16.msra.mxu0 %v1272
    %1341 = vmatpush.bf16.msra.mxu0 %v1268
    %1342 = vmatpush.bf16.msra.mxu0 %v1264
    %1343 = vmatpush.bf16.msra.mxu0 %v1260
    %1344 = vmatmul.bf16.gmra.mxu0 %v1130
    %v1345 = vpop.f32.mrf.mxu0
    %v1346 = vadd.f32 0.0, %v1345
    %v1347 = vpop.f32.mrf.mxu0
    %1348 = vdwg.mxu0
    %1349 = vmatpush.bf16.msra.mxu0 %v1289
    %1350 = vmatpush.bf16.msra.mxu0 %v1285
    %1351 = vmatpush.bf16.msra.mxu0 %v1281
    %1352 = vmatpush.bf16.msra.mxu0 %v1277
    %1353 = vmatpush.bf16.msra.mxu0 %v1273
    %1354 = vmatpush.bf16.msra.mxu0 %v1269
    %1355 = vmatpush.bf16.msra.mxu0 %v1265
    %1356 = vmatpush.bf16.msra.mxu0 %v1261
    %1357 = vmatmul.bf16.gmra.mxu0 %v1130
    %v1358 = vpop.f32.mrf.mxu0
    %v1359 = vadd.f32 0.0, %v1358
    %v1360 = vpop.f32.mrf.mxu0
    %1361 = vdwg.mxu0
    %1362 = vmatpush.bf16.msra.mxu0 %v1290
    %1363 = vmatpush.bf16.msra.mxu0 %v1286
    %1364 = vmatpush.bf16.msra.mxu0 %v1282
    %1365 = vmatpush.bf16.msra.mxu0 %v1278
    %1366 = vmatpush.bf16.msra.mxu0 %v1274
    %1367 = vmatpush.bf16.msra.mxu0 %v1270
    %1368 = vmatpush.bf16.msra.mxu0 %v1266
    %1369 = vmatpush.bf16.msra.mxu0 %v1262
    %1370 = vmatmul.bf16.gmra.mxu0 %v1130
    %v1371 = vpop.f32.mrf.mxu0
    %v1372 = vadd.f32 0.0, %v1371
    %v1373 = vpop.f32.mrf.mxu0
    %1374 = vdwg.mxu0
    %v1375 = vadd.f32 %v1126, %v1333
    %v1376 = vadd.f32 %v1127, %v1346
    %v1377 = vadd.f32 %v1128, %v1359
    %v1378 = vadd.f32 %v1129, %v1372
    %v1379 = vmul.f32 %v1375, 0.5
    %v1380 = vtanh.pop %v1379
    %v1381 = vmul.f32 %v1380, 0.5
    %v1382 = vadd.f32 %v1381, 0.5
    %v1383 = vmul.f32 %v1376, 0.5
    %v1384 = vtanh.pop %v1383
    %v1385 = vmul.f32 %v1384, 0.5
    %v1386 = vadd.f32 %v1385, 0.5
    %v1387 = vtanh.pop %v1377
    %v1388 = vmul.f32 %v1378, 0.5
    %v1389 = vtanh.pop %v1388
    %v1390 = vmul.f32 %v1389, 0.5
    %v1391 = vadd.f32 %v1390, 0.5
    %v1392 = vmul.f32 %v1386, %v1120
    %v1393 = vmul.f32 %v1382, %v1387
    %v1394 = vadd.f32 %v1392, %v1393
    %v1395 = vtanh.pop %v1394
    %v1396 = vmul.f32 %v1391, %v1395
    %s1397 = scalar_lea.vmem [#allocation4], 32
    %1398 = vst [vmem:[%s1397] sm:$0xff] %v1396
    %s1399 = scalar_lea.vmem %s0, 160
    %v1400 = vld [vmem:[%s1399] sm:$0xff]
    %v1401 = vld [vmem:[%s1399 + $0x8] sm:$0xff]
    %v1402 = vld [vmem:[%s1399 + $0x10] sm:$0xff]
    %v1403 = vld [vmem:[%s1399 + $0x18] sm:$0xff]
    %v1404 = vpack.c.bf16 %v1396, %v1396
    %v1405 = vld [vmem:[%s3] sm:$0xff]
    %v1406 = vld [vmem:[%s3 + $0x8] sm:$0xff]
    %v1407 = vld [vmem:[%s3 + $0x10] sm:$0xff]
    %v1408 = vld [vmem:[%s3 + $0x18] sm:$0xff]
    %v1409 = vld [vmem:[%s3 + $0x20] sm:$0xff]
    %v1410 = vld [vmem:[%s3 + $0x28] sm:$0xff]
    %v1411 = vld [vmem:[%s3 + $0x30] sm:$0xff]
    %v1412 = vld [vmem:[%s3 + $0x38] sm:$0xff]
    %v1413 = vld [vmem:[%s3 + $0x40] sm:$0xff]
    %v1414 = vld [vmem:[%s3 + $0x48] sm:$0xff]
    %v1415 = vld [vmem:[%s3 + $0x50] sm:$0xff]
    %v1416 = vld [vmem:[%s3 + $0x58] sm:$0xff]
    %v1417 = vld [vmem:[%s3 + $0x60] sm:$0xff]
    %v1418 = vld [vmem:[%s3 + $0x68] sm:$0xff]
    %v1419 = vld [vmem:[%s3 + $0x70] sm:$0xff]
    %v1420 = vld [vmem:[%s3 + $0x78] sm:$0xff]
    %v1421 = vld [vmem:[%s3 + $0x80] sm:$0xff]
    %v1422 = vld [vmem:[%s3 + $0x88] sm:$0xff]
    %v1423 = vld [vmem:[%s3 + $0x90] sm:$0xff]
    %v1424 = vld [vmem:[%s3 + $0x98] sm:$0xff]
    %v1425 = vld [vmem:[%s3 + $0xa0] sm:$0xff]
    %v1426 = vld [vmem:[%s3 + $0xa8] sm:$0xff]
    %v1427 = vld [vmem:[%s3 + $0xb0] sm:$0xff]
    %v1428 = vld [vmem:[%s3 + $0xb8] sm:$0xff]
    %v1429 = vld [vmem:[%s3 + $0xc0] sm:$0xff]
    %v1430 = vld [vmem:[%s3 + $0xc8] sm:$0xff]
    %v1431 = vld [vmem:[%s3 + $0xd0] sm:$0xff]
    %v1432 = vld [vmem:[%s3 + $0xd8] sm:$0xff]
    %v1433 = vld [vmem:[%s3 + $0xe0] sm:$0xff]
    %v1434 = vld [vmem:[%s3 + $0xe8] sm:$0xff]
    %v1435 = vld [vmem:[%s3 + $0xf0] sm:$0xff]
    %v1436 = vld [vmem:[%s3 + $0xf8] sm:$0xff]
    %v1469 = vunpack.c.l.b16 %v1405
    %v1470 = vunpack.c.h.b16 %v1405
    %v1471 = vunpack.c.l.b16 %v1406
    %v1472 = vunpack.c.h.b16 %v1406
    %v1473 = vunpack.c.l.b16 %v1407
    %v1474 = vunpack.c.h.b16 %v1407
    %v1475 = vunpack.c.l.b16 %v1408
    %v1476 = vunpack.c.h.b16 %v1408
    %v1477 = vunpack.c.l.b16 %v1409
    %v1478 = vunpack.c.h.b16 %v1409
    %v1479 = vunpack.c.l.b16 %v1410
    %v1480 = vunpack.c.h.b16 %v1410
    %v1481 = vunpack.c.l.b16 %v1411
    %v1482 = vunpack.c.h.b16 %v1411
    %v1483 = vunpack.c.l.b16 %v1412
    %v1484 = vunpack.c.h.b16 %v1412
    %v1485 = vunpack.c.l.b16 %v1413
    %v1486 = vunpack.c.h.b16 %v1413
    %v1487 = vunpack.c.l.b16 %v1414
    %v1488 = vunpack.c.h.b16 %v1414
    %v1489 = vunpack.c.l.b16 %v1415
    %v1490 = vunpack.c.h.b16 %v1415
    %v1491 = vunpack.c.l.b16 %v1416
    %v1492 = vunpack.c.h.b16 %v1416
    %v1493 = vunpack.c.l.b16 %v1417
    %v1494 = vunpack.c.h.b16 %v1417
    %v1495 = vunpack.c.l.b16 %v1418
    %v1496 = vunpack.c.h.b16 %v1418
    %v1497 = vunpack.c.l.b16 %v1419
    %v1498 = vunpack.c.h.b16 %v1419
    %v1499 = vunpack.c.l.b16 %v1420
    %v1500 = vunpack.c.h.b16 %v1420
    %v1501 = vunpack.c.l.b16 %v1421
    %v1502 = vunpack.c.h.b16 %v1421
    %v1503 = vunpack.c.l.b16 %v1422
    %v1504 = vunpack.c.h.b16 %v1422
    %v1505 = vunpack.c.l.b16 %v1423
    %v1506 = vunpack.c.h.b16 %v1423
    %v1507 = vunpack.c.l.b16 %v1424
    %v1508 = vunpack.c.h.b16 %v1424
    %v1509 = vunpack.c.l.b16 %v1425
    %v1510 = vunpack.c.h.b16 %v1425
    %v1511 = vunpack.c.l.b16 %v1426
    %v1512 = vunpack.c.h.b16 %v1426
    %v1513 = vunpack.c.l.b16 %v1427
    %v1514 = vunpack.c.h.b16 %v1427
    %v1515 = vunpack.c.l.b16 %v1428
    %v1516 = vunpack.c.h.b16 %v1428
    %v1517 = vunpack.c.l.b16 %v1429
    %v1518 = vunpack.c.h.b16 %v1429
    %v1519 = vunpack.c.l.b16 %v1430
    %v1520 = vunpack.c.h.b16 %v1430
    %v1521 = vunpack.c.l.b16 %v1431
    %v1522 = vunpack.c.h.b16 %v1431
    %v1523 = vunpack.c.l.b16 %v1432
    %v1524 = vunpack.c.h.b16 %v1432
    %v1525 = vunpack.c.l.b16 %v1433
    %v1526 = vunpack.c.h.b16 %v1433
    %v1527 = vunpack.c.l.b16 %v1434
    %v1528 = vunpack.c.h.b16 %v1434
    %v1529 = vunpack.c.l.b16 %v1435
    %v1530 = vunpack.c.h.b16 %v1435
    %v1531 = vunpack.c.l.b16 %v1436
    %v1532 = vunpack.c.h.b16 %v1436
    %v1533 = vpack.c.b16 %v1473, %v1469
    %v1534 = vpack.c.b16 %v1474, %v1470
    %v1535 = vpack.c.b16 %v1475, %v1471
    %v1536 = vpack.c.b16 %v1476, %v1472
    %v1537 = vpack.c.b16 %v1481, %v1477
    %v1538 = vpack.c.b16 %v1482, %v1478
    %v1539 = vpack.c.b16 %v1483, %v1479
    %v1540 = vpack.c.b16 %v1484, %v1480
    %v1541 = vpack.c.b16 %v1489, %v1485
    %v1542 = vpack.c.b16 %v1490, %v1486
    %v1543 = vpack.c.b16 %v1491, %v1487
    %v1544 = vpack.c.b16 %v1492, %v1488
    %v1545 = vpack.c.b16 %v1497, %v1493
    %v1546 = vpack.c.b16 %v1498, %v1494
    %v1547 = vpack.c.b16 %v1499, %v1495
    %v1548 = vpack.c.b16 %v1500, %v1496
    %v1549 = vpack.c.b16 %v1505, %v1501
    %v1550 = vpack.c.b16 %v1506, %v1502
    %v1551 = vpack.c.b16 %v1507, %v1503
    %v1552 = vpack.c.b16 %v1508, %v1504
    %v1553 = vpack.c.b16 %v1513, %v1509
    %v1554 = vpack.c.b16 %v1514, %v1510
    %v1555 = vpack.c.b16 %v1515, %v1511
    %v1556 = vpack.c.b16 %v1516, %v1512
    %v1557 = vpack.c.b16 %v1521, %v1517
    %v1558 = vpack.c.b16 %v1522, %v1518
    %v1559 = vpack.c.b16 %v1523, %v1519
    %v1560 = vpack.c.b16 %v1524, %v1520
    %v1561 = vpack.c.b16 %v1529, %v1525
    %v1562 = vpack.c.b16 %v1530, %v1526
    %v1563 = vpack.c.b16 %v1531, %v1527
    %v1564 = vpack.c.b16 %v1532, %v1528
    %1597 = vmatpush.bf16.msra.mxu0 %v1561
    %1598 = vmatpush.bf16.msra.mxu0 %v1557
    %1599 = vmatpush.bf16.msra.mxu0 %v1553
    %1600 = vmatpush.bf16.msra.mxu0 %v1549
    %1601 = vmatpush.bf16.msra.mxu0 %v1545
    %1602 = vmatpush.bf16.msra.mxu0 %v1541
    %1603 = vmatpush.bf16.msra.mxu0 %v1537
    %1604 = vmatpush.bf16.msra.mxu0 %v1533
    %1605 = vmatmul.bf16.gmra.mxu0 %v1404
    %v1606 = vpop.f32.mrf.mxu0
    %v1607 = vadd.f32 0.0, %v1606
    %v1608 = vpop.f32.mrf.mxu0
    %1609 = vdwg.mxu0
    %1610 = vmatpush.bf16.msra.mxu0 %v1562
    %1611 = vmatpush.bf16.msra.mxu0 %v1558
    %1612 = vmatpush.bf16.msra.mxu0 %v1554
    %1613 = vmatpush.bf16.msra.mxu0 %v1550
    %1614 = vmatpush.bf16.msra.mxu0 %v1546
    %1615 = vmatpush.bf16.msra.mxu0 %v1542
    %1616 = vmatpush.bf16.msra.mxu0 %v1538
    %1617 = vmatpush.bf16.msra.mxu0 %v1534
    %1618 = vmatmul.bf16.gmra.mxu0 %v1404
    %v1619 = vpop.f32.mrf.mxu0
    %v1620 = vadd.f32 0.0, %v1619
    %v1621 = vpop.f32.mrf.mxu0
    %1622 = vdwg.mxu0
    %1623 = vmatpush.bf16.msra.mxu0 %v1563
    %1624 = vmatpush.bf16.msra.mxu0 %v1559
    %1625 = vmatpush.bf16.msra.mxu0 %v1555
    %1626 = vmatpush.bf16.msra.mxu0 %v1551
    %1627 = vmatpush.bf16.msra.mxu0 %v1547
    %1628 = vmatpush.bf16.msra.mxu0 %v1543
    %1629 = vmatpush.bf16.msra.mxu0 %v1539
    %1630 = vmatpush.bf16.msra.mxu0 %v1535
    %1631 = vmatmul.bf16.gmra.mxu0 %v1404
    %v1632 = vpop.f32.mrf.mxu0
    %v1633 = vadd.f32 0.0, %v1632
    %v1634 = vpop.f32.mrf.mxu0
    %1635 = vdwg.mxu0
    %1636 = vmatpush.bf16.msra.mxu0 %v1564
    %1637 = vmatpush.bf16.msra.mxu0 %v1560
    %1638 = vmatpush.bf16.msra.mxu0 %v1556
    %1639 = vmatpush.bf16.msra.mxu0 %v1552
    %1640 = vmatpush.bf16.msra.mxu0 %v1548
    %1641 = vmatpush.bf16.msra.mxu0 %v1544
    %1642 = vmatpush.bf16.msra.mxu0 %v1540
    %1643 = vmatpush.bf16.msra.mxu0 %v1536
    %1644 = vmatmul.bf16.gmra.mxu0 %v1404
    %v1645 = vpop.f32.mrf.mxu0
    %v1646 = vadd.f32 0.0, %v1645
    %v1647 = vpop.f32.mrf.mxu0
    %1648 = vdwg.mxu0
    %v1649 = vadd.f32 %v1400, %v1607
    %v1650 = vadd.f32 %v1401, %v1620
    %v1651 = vadd.f32 %v1402, %v1633
    %v1652 = vadd.f32 %v1403, %v1646
    %v1653 = vmul.f32 %v1649, 0.5
    %v1654 = vtanh.pop %v1653
    %v1655 = vmul.f32 %v1654, 0.5
    %v1656 = vadd.f32 %v1655, 0.5
    %v1657 = vmul.f32 %v1650, 0.5
    %v1658 = vtanh.pop %v1657
    %v1659 = vmul.f32 %v1658, 0.5
    %v1660 = vadd.f32 %v1659, 0.5
    %v1661 = vtanh.pop %v1651
    %v1662 = vmul.f32 %v1652, 0.5
    %v1663 = vtanh.pop %v1662
    %v1664 = vmul.f32 %v1663, 0.5
    %v1665 = vadd.f32 %v1664, 0.5
    %v1666 = vmul.f32 %v1660, %v1394
    %v1667 = vmul.f32 %v1656, %v1661
    %v1668 = vadd.f32 %v1666, %v1667
    %v1669 = vtanh.pop %v1668
    %v1670 = vmul.f32 %v1665, %v1669
    %s1671 = scalar_lea.vmem [#allocation4], 40
    %1672 = vst [vmem:[%s1671] sm:$0xff] %v1670
    %s1673 = scalar_lea.vmem %s0, 192
    %v1674 = vld [vmem:[%s1673] sm:$0xff]
    %v1675 = vld [vmem:[%s1673 + $0x8] sm:$0xff]
    %v1676 = vld [vmem:[%s1673 + $0x10] sm:$0xff]
    %v1677 = vld [vmem:[%s1673 + $0x18] sm:$0xff]
    %v1678 = vpack.c.bf16 %v1670, %v1670
    %v1679 = vld [vmem:[%s3] sm:$0xff]
    %v1680 = vld [vmem:[%s3 + $0x8] sm:$0xff]
    %v1681 = vld [vmem:[%s3 + $0x10] sm:$0xff]
    %v1682 = vld [vmem:[%s3 + $0x18] sm:$0xff]
    %v1683 = vld [vmem:[%s3 + $0x20] sm:$0xff]
    %v1684 = vld [vmem:[%s3 + $0x28] sm:$0xff]
    %v1685 = vld [vmem:[%s3 + $0x30] sm:$0xff]
    %v1686 = vld [vmem:[%s3 + $0x38] sm:$0xff]
    %v1687 = vld [vmem:[%s3 + $0x40] sm:$0xff]
    %v1688 = vld [vmem:[%s3 + $0x48] sm:$0xff]
    %v1689 = vld [vmem:[%s3 + $0x50] sm:$0xff]
    %v1690 = vld [vmem:[%s3 + $0x58] sm:$0xff]
    %v1691 = vld [vmem:[%s3 + $0x60] sm:$0xff]
    %v1692 = vld [vmem:[%s3 + $0x68] sm:$0xff]
    %v1693 = vld [vmem:[%s3 + $0x70] sm:$0xff]
    %v1694 = vld [vmem:[%s3 + $0x78] sm:$0xff]
    %v1695 = vld [vmem:[%s3 + $0x80] sm:$0xff]
    %v1696 = vld [vmem:[%s3 + $0x88] sm:$0xff]
    %v1697 = vld [vmem:[%s3 + $0x90] sm:$0xff]
    %v1698 = vld [vmem:[%s3 + $0x98] sm:$0xff]
    %v1699 = vld [vmem:[%s3 + $0xa0] sm:$0xff]
    %v1700 = vld [vmem:[%s3 + $0xa8] sm:$0xff]
    %v1701 = vld [vmem:[%s3 + $0xb0] sm:$0xff]
    %v1702 = vld [vmem:[%s3 + $0xb8] sm:$0xff]
    %v1703 = vld [vmem:[%s3 + $0xc0] sm:$0xff]
    %v1704 = vld [vmem:[%s3 + $0xc8] sm:$0xff]
    %v1705 = vld [vmem:[%s3 + $0xd0] sm:$0xff]
    %v1706 = vld [vmem:[%s3 + $0xd8] sm:$0xff]
    %v1707 = vld [vmem:[%s3 + $0xe0] sm:$0xff]
    %v1708 = vld [vmem:[%s3 + $0xe8] sm:$0xff]
    %v1709 = vld [vmem:[%s3 + $0xf0] sm:$0xff]
    %v1710 = vld [vmem:[%s3 + $0xf8] sm:$0xff]
    %v1743 = vunpack.c.l.b16 %v1679
    %v1744 = vunpack.c.h.b16 %v1679
    %v1745 = vunpack.c.l.b16 %v1680
    %v1746 = vunpack.c.h.b16 %v1680
    %v1747 = vunpack.c.l.b16 %v1681
    %v1748 = vunpack.c.h.b16 %v1681
    %v1749 = vunpack.c.l.b16 %v1682
    %v1750 = vunpack.c.h.b16 %v1682
    %v1751 = vunpack.c.l.b16 %v1683
    %v1752 = vunpack.c.h.b16 %v1683
    %v1753 = vunpack.c.l.b16 %v1684
    %v1754 = vunpack.c.h.b16 %v1684
    %v1755 = vunpack.c.l.b16 %v1685
    %v1756 = vunpack.c.h.b16 %v1685
    %v1757 = vunpack.c.l.b16 %v1686
    %v1758 = vunpack.c.h.b16 %v1686
    %v1759 = vunpack.c.l.b16 %v1687
    %v1760 = vunpack.c.h.b16 %v1687
    %v1761 = vunpack.c.l.b16 %v1688
    %v1762 = vunpack.c.h.b16 %v1688
    %v1763 = vunpack.c.l.b16 %v1689
    %v1764 = vunpack.c.h.b16 %v1689
    %v1765 = vunpack.c.l.b16 %v1690
    %v1766 = vunpack.c.h.b16 %v1690
    %v1767 = vunpack.c.l.b16 %v1691
    %v1768 = vunpack.c.h.b16 %v1691
    %v1769 = vunpack.c.l.b16 %v1692
    %v1770 = vunpack.c.h.b16 %v1692
    %v1771 = vunpack.c.l.b16 %v1693
    %v1772 = vunpack.c.h.b16 %v1693
    %v1773 = vunpack.c.l.b16 %v1694
    %v1774 = vunpack.c.h.b16 %v1694
    %v1775 = vunpack.c.l.b16 %v1695
    %v1776 = vunpack.c.h.b16 %v1695
    %v1777 = vunpack.c.l.b16 %v1696
    %v1778 = vunpack.c.h.b16 %v1696
    %v1779 = vunpack.c.l.b16 %v1697
    %v1780 = vunpack.c.h.b16 %v1697
    %v1781 = vunpack.c.l.b16 %v1698
    %v1782 = vunpack.c.h.b16 %v1698
    %v1783 = vunpack.c.l.b16 %v1699
    %v1784 = vunpack.c.h.b16 %v1699
    %v1785 = vunpack.c.l.b16 %v1700
    %v1786 = vunpack.c.h.b16 %v1700
    %v1787 = vunpack.c.l.b16 %v1701
    %v1788 = vunpack.c.h.b16 %v1701
    %v1789 = vunpack.c.l.b16 %v1702
    %v1790 = vunpack.c.h.b16 %v1702
    %v1791 = vunpack.c.l.b16 %v1703
    %v1792 = vunpack.c.h.b16 %v1703
    %v1793 = vunpack.c.l.b16 %v1704
    %v1794 = vunpack.c.h.b16 %v1704
    %v1795 = vunpack.c.l.b16 %v1705
    %v1796 = vunpack.c.h.b16 %v1705
    %v1797 = vunpack.c.l.b16 %v1706
    %v1798 = vunpack.c.h.b16 %v1706
    %v1799 = vunpack.c.l.b16 %v1707
    %v1800 = vunpack.c.h.b16 %v1707
    %v1801 = vunpack.c.l.b16 %v1708
    %v1802 = vunpack.c.h.b16 %v1708
    %v1803 = vunpack.c.l.b16 %v1709
    %v1804 = vunpack.c.h.b16 %v1709
    %v1805 = vunpack.c.l.b16 %v1710
    %v1806 = vunpack.c.h.b16 %v1710
    %v1807 = vpack.c.b16 %v1747, %v1743
    %v1808 = vpack.c.b16 %v1748, %v1744
    %v1809 = vpack.c.b16 %v1749, %v1745
    %v1810 = vpack.c.b16 %v1750, %v1746
    %v1811 = vpack.c.b16 %v1755, %v1751
    %v1812 = vpack.c.b16 %v1756, %v1752
    %v1813 = vpack.c.b16 %v1757, %v1753
    %v1814 = vpack.c.b16 %v1758, %v1754
    %v1815 = vpack.c.b16 %v1763, %v1759
    %v1816 = vpack.c.b16 %v1764, %v1760
    %v1817 = vpack.c.b16 %v1765, %v1761
    %v1818 = vpack.c.b16 %v1766, %v1762
    %v1819 = vpack.c.b16 %v1771, %v1767
    %v1820 = vpack.c.b16 %v1772, %v1768
    %v1821 = vpack.c.b16 %v1773, %v1769
    %v1822 = vpack.c.b16 %v1774, %v1770
    %v1823 = vpack.c.b16 %v1779, %v1775
    %v1824 = vpack.c.b16 %v1780, %v1776
    %v1825 = vpack.c.b16 %v1781, %v1777
    %v1826 = vpack.c.b16 %v1782, %v1778
    %v1827 = vpack.c.b16 %v1787, %v1783
    %v1828 = vpack.c.b16 %v1788, %v1784
    %v1829 = vpack.c.b16 %v1789, %v1785
    %v1830 = vpack.c.b16 %v1790, %v1786
    %v1831 = vpack.c.b16 %v1795, %v1791
    %v1832 = vpack.c.b16 %v1796, %v1792
    %v1833 = vpack.c.b16 %v1797, %v1793
    %v1834 = vpack.c.b16 %v1798, %v1794
    %v1835 = vpack.c.b16 %v1803, %v1799
    %v1836 = vpack.c.b16 %v1804, %v1800
    %v1837 = vpack.c.b16 %v1805, %v1801
    %v1838 = vpack.c.b16 %v1806, %v1802
    %1871 = vmatpush.bf16.msra.mxu0 %v1835
    %1872 = vmatpush.bf16.msra.mxu0 %v1831
    %1873 = vmatpush.bf16.msra.mxu0 %v1827
    %1874 = vmatpush.bf16.msra.mxu0 %v1823
    %1875 = vmatpush.bf16.msra.mxu0 %v1819
    %1876 = vmatpush.bf16.msra.mxu0 %v1815
    %1877 = vmatpush.bf16.msra.mxu0 %v1811
    %1878 = vmatpush.bf16.msra.mxu0 %v1807
    %1879 = vmatmul.bf16.gmra.mxu0 %v1678
    %v1880 = vpop.f32.mrf.mxu0
    %v1881 = vadd.f32 0.0, %v1880
    %v1882 = vpop.f32.mrf.mxu0
    %1883 = vdwg.mxu0
    %1884 = vmatpush.bf16.msra.mxu0 %v1836
    %1885 = vmatpush.bf16.msra.mxu0 %v1832
    %1886 = vmatpush.bf16.msra.mxu0 %v1828
    %1887 = vmatpush.bf16.msra.mxu0 %v1824
    %1888 = vmatpush.bf16.msra.mxu0 %v1820
    %1889 = vmatpush.bf16.msra.mxu0 %v1816
    %1890 = vmatpush.bf16.msra.mxu0 %v1812
    %1891 = vmatpush.bf16.msra.mxu0 %v1808
    %1892 = vmatmul.bf16.gmra.mxu0 %v1678
    %v1893 = vpop.f32.mrf.mxu0
    %v1894 = vadd.f32 0.0, %v1893
    %v1895 = vpop.f32.mrf.mxu0
    %1896 = vdwg.mxu0
    %1897 = vmatpush.bf16.msra.mxu0 %v1837
    %1898 = vmatpush.bf16.msra.mxu0 %v1833
    %1899 = vmatpush.bf16.msra.mxu0 %v1829
    %1900 = vmatpush.bf16.msra.mxu0 %v1825
    %1901 = vmatpush.bf16.msra.mxu0 %v1821
    %1902 = vmatpush.bf16.msra.mxu0 %v1817
    %1903 = vmatpush.bf16.msra.mxu0 %v1813
    %1904 = vmatpush.bf16.msra.mxu0 %v1809
    %1905 = vmatmul.bf16.gmra.mxu0 %v1678
    %v1906 = vpop.f32.mrf.mxu0
    %v1907 = vadd.f32 0.0, %v1906
    %v1908 = vpop.f32.mrf.mxu0
    %1909 = vdwg.mxu0
    %1910 = vmatpush.bf16.msra.mxu0 %v1838
    %1911 = vmatpush.bf16.msra.mxu0 %v1834
    %1912 = vmatpush.bf16.msra.mxu0 %v1830
    %1913 = vmatpush.bf16.msra.mxu0 %v1826
    %1914 = vmatpush.bf16.msra.mxu0 %v1822
    %1915 = vmatpush.bf16.msra.mxu0 %v1818
    %1916 = vmatpush.bf16.msra.mxu0 %v1814
    %1917 = vmatpush.bf16.msra.mxu0 %v1810
    %1918 = vmatmul.bf16.gmra.mxu0 %v1678
    %v1919 = vpop.f32.mrf.mxu0
    %v1920 = vadd.f32 0.0, %v1919
    %v1921 = vpop.f32.mrf.mxu0
    %1922 = vdwg.mxu0
    %v1923 = vadd.f32 %v1674, %v1881
    %v1924 = vadd.f32 %v1675, %v1894
    %v1925 = vadd.f32 %v1676, %v1907
    %v1926 = vadd.f32 %v1677, %v1920
    %v1927 = vmul.f32 %v1923, 0.5
    %v1928 = vtanh.pop %v1927
    %v1929 = vmul.f32 %v1928, 0.5
    %v1930 = vadd.f32 %v1929, 0.5
    %v1931 = vmul.f32 %v1924, 0.5
    %v1932 = vtanh.pop %v1931
    %v1933 = vmul.f32 %v1932, 0.5
    %v1934 = vadd.f32 %v1933, 0.5
    %v1935 = vtanh.pop %v1925
    %v1936 = vmul.f32 %v1926, 0.5
    %v1937 = vtanh.pop %v1936
    %v1938 = vmul.f32 %v1937, 0.5
    %v1939 = vadd.f32 %v1938, 0.5
    %v1940 = vmul.f32 %v1934, %v1668
    %v1941 = vmul.f32 %v1930, %v1935
    %v1942 = vadd.f32 %v1940, %v1941
    %v1943 = vtanh.pop %v1942
    %v1944 = vmul.f32 %v1939, %v1943
    %s1945 = scalar_lea.vmem [#allocation4], 48
    %1946 = vst [vmem:[%s1945] sm:$0xff] %v1944
    %s1947 = scalar_lea.vmem %s0, 224
    %v1948 = vld [vmem:[%s1947] sm:$0xff]
    %v1949 = vld [vmem:[%s1947 + $0x8] sm:$0xff]
    %v1950 = vld [vmem:[%s1947 + $0x10] sm:$0xff]
    %v1951 = vld [vmem:[%s1947 + $0x18] sm:$0xff]
    %v1952 = vpack.c.bf16 %v1944, %v1944
    %v1953 = vld [vmem:[%s3] sm:$0xff]
    %v1954 = vld [vmem:[%s3 + $0x8] sm:$0xff]
    %v1955 = vld [vmem:[%s3 + $0x10] sm:$0xff]
    %v1956 = vld [vmem:[%s3 + $0x18] sm:$0xff]
    %v1957 = vld [vmem:[%s3 + $0x20] sm:$0xff]
    %v1958 = vld [vmem:[%s3 + $0x28] sm:$0xff]
    %v1959 = vld [vmem:[%s3 + $0x30] sm:$0xff]
    %v1960 = vld [vmem:[%s3 + $0x38] sm:$0xff]
    %v1961 = vld [vmem:[%s3 + $0x40] sm:$0xff]
    %v1962 = vld [vmem:[%s3 + $0x48] sm:$0xff]
    %v1963 = vld [vmem:[%s3 + $0x50] sm:$0xff]
    %v1964 = vld [vmem:[%s3 + $0x58] sm:$0xff]
    %v1965 = vld [vmem:[%s3 + $0x60] sm:$0xff]
    %v1966 = vld [vmem:[%s3 + $0x68] sm:$0xff]
    %v1967 = vld [vmem:[%s3 + $0x70] sm:$0xff]
    %v1968 = vld [vmem:[%s3 + $0x78] sm:$0xff]
    %v1969 = vld [vmem:[%s3 + $0x80] sm:$0xff]
    %v1970 = vld [vmem:[%s3 + $0x88] sm:$0xff]
    %v1971 = vld [vmem:[%s3 + $0x90] sm:$0xff]
    %v1972 = vld [vmem:[%s3 + $0x98] sm:$0xff]
    %v1973 = vld [vmem:[%s3 + $0xa0] sm:$0xff]
    %v1974 = vld [vmem:[%s3 + $0xa8] sm:$0xff]
    %v1975 = vld [vmem:[%s3 + $0xb0] sm:$0xff]
    %v1976 = vld [vmem:[%s3 + $0xb8] sm:$0xff]
    %v1977 = vld [vmem:[%s3 + $0xc0] sm:$0xff]
    %v1978 = vld [vmem:[%s3 + $0xc8] sm:$0xff]
    %v1979 = vld [vmem:[%s3 + $0xd0] sm:$0xff]
    %v1980 = vld [vmem:[%s3 + $0xd8] sm:$0xff]
    %v1981 = vld [vmem:[%s3 + $0xe0] sm:$0xff]
    %v1982 = vld [vmem:[%s3 + $0xe8] sm:$0xff]
    %v1983 = vld [vmem:[%s3 + $0xf0] sm:$0xff]
    %v1984 = vld [vmem:[%s3 + $0xf8] sm:$0xff]
    %v2017 = vunpack.c.l.b16 %v1953
    %v2018 = vunpack.c.h.b16 %v1953
    %v2019 = vunpack.c.l.b16 %v1954
    %v2020 = vunpack.c.h.b16 %v1954
    %v2021 = vunpack.c.l.b16 %v1955
    %v2022 = vunpack.c.h.b16 %v1955
    %v2023 = vunpack.c.l.b16 %v1956
    %v2024 = vunpack.c.h.b16 %v1956
    %v2025 = vunpack.c.l.b16 %v1957
    %v2026 = vunpack.c.h.b16 %v1957
    %v2027 = vunpack.c.l.b16 %v1958
    %v2028 = vunpack.c.h.b16 %v1958
    %v2029 = vunpack.c.l.b16 %v1959
    %v2030 = vunpack.c.h.b16 %v1959
    %v2031 = vunpack.c.l.b16 %v1960
    %v2032 = vunpack.c.h.b16 %v1960
    %v2033 = vunpack.c.l.b16 %v1961
    %v2034 = vunpack.c.h.b16 %v1961
    %v2035 = vunpack.c.l.b16 %v1962
    %v2036 = vunpack.c.h.b16 %v1962
    %v2037 = vunpack.c.l.b16 %v1963
    %v2038 = vunpack.c.h.b16 %v1963
    %v2039 = vunpack.c.l.b16 %v1964
    %v2040 = vunpack.c.h.b16 %v1964
    %v2041 = vunpack.c.l.b16 %v1965
    %v2042 = vunpack.c.h.b16 %v1965
    %v2043 = vunpack.c.l.b16 %v1966
    %v2044 = vunpack.c.h.b16 %v1966
    %v2045 = vunpack.c.l.b16 %v1967
    %v2046 = vunpack.c.h.b16 %v1967
    %v2047 = vunpack.c.l.b16 %v1968
    %v2048 = vunpack.c.h.b16 %v1968
    %v2049 = vunpack.c.l.b16 %v1969
    %v2050 = vunpack.c.h.b16 %v1969
    %v2051 = vunpack.c.l.b16 %v1970
    %v2052 = vunpack.c.h.b16 %v1970
    %v2053 = vunpack.c.l.b16 %v1971
    %v2054 = vunpack.c.h.b16 %v1971
    %v2055 = vunpack.c.l.b16 %v1972
    %v2056 = vunpack.c.h.b16 %v1972
    %v2057 = vunpack.c.l.b16 %v1973
    %v2058 = vunpack.c.h.b16 %v1973
    %v2059 = vunpack.c.l.b16 %v1974
    %v2060 = vunpack.c.h.b16 %v1974
    %v2061 = vunpack.c.l.b16 %v1975
    %v2062 = vunpack.c.h.b16 %v1975
    %v2063 = vunpack.c.l.b16 %v1976
    %v2064 = vunpack.c.h.b16 %v1976
    %v2065 = vunpack.c.l.b16 %v1977
    %v2066 = vunpack.c.h.b16 %v1977
    %v2067 = vunpack.c.l.b16 %v1978
    %v2068 = vunpack.c.h.b16 %v1978
    %v2069 = vunpack.c.l.b16 %v1979
    %v2070 = vunpack.c.h.b16 %v1979
    %v2071 = vunpack.c.l.b16 %v1980
    %v2072 = vunpack.c.h.b16 %v1980
    %v2073 = vunpack.c.l.b16 %v1981
    %v2074 = vunpack.c.h.b16 %v1981
    %v2075 = vunpack.c.l.b16 %v1982
    %v2076 = vunpack.c.h.b16 %v1982
    %v2077 = vunpack.c.l.b16 %v1983
    %v2078 = vunpack.c.h.b16 %v1983
    %v2079 = vunpack.c.l.b16 %v1984
    %v2080 = vunpack.c.h.b16 %v1984
    %v2081 = vpack.c.b16 %v2021, %v2017
    %v2082 = vpack.c.b16 %v2022, %v2018
    %v2083 = vpack.c.b16 %v2023, %v2019
    %v2084 = vpack.c.b16 %v2024, %v2020
    %v2085 = vpack.c.b16 %v2029, %v2025
    %v2086 = vpack.c.b16 %v2030, %v2026
    %v2087 = vpack.c.b16 %v2031, %v2027
    %v2088 = vpack.c.b16 %v2032, %v2028
    %v2089 = vpack.c.b16 %v2037, %v2033
    %v2090 = vpack.c.b16 %v2038, %v2034
    %v2091 = vpack.c.b16 %v2039, %v2035
    %v2092 = vpack.c.b16 %v2040, %v2036
    %v2093 = vpack.c.b16 %v2045, %v2041
    %v2094 = vpack.c.b16 %v2046, %v2042
    %v2095 = vpack.c.b16 %v2047, %v2043
    %v2096 = vpack.c.b16 %v2048, %v2044
    %v2097 = vpack.c.b16 %v2053, %v2049
    %v2098 = vpack.c.b16 %v2054, %v2050
    %v2099 = vpack.c.b16 %v2055, %v2051
    %v2100 = vpack.c.b16 %v2056, %v2052
    %v2101 = vpack.c.b16 %v2061, %v2057
    %v2102 = vpack.c.b16 %v2062, %v2058
    %v2103 = vpack.c.b16 %v2063, %v2059
    %v2104 = vpack.c.b16 %v2064, %v2060
    %v2105 = vpack.c.b16 %v2069, %v2065
    %v2106 = vpack.c.b16 %v2070, %v2066
    %v2107 = vpack.c.b16 %v2071, %v2067
    %v2108 = vpack.c.b16 %v2072, %v2068
    %v2109 = vpack.c.b16 %v2077, %v2073
    %v2110 = vpack.c.b16 %v2078, %v2074
    %v2111 = vpack.c.b16 %v2079, %v2075
    %v2112 = vpack.c.b16 %v2080, %v2076
    %2145 = vmatpush.bf16.msra.mxu0 %v2109
    %2146 = vmatpush.bf16.msra.mxu0 %v2105
    %2147 = vmatpush.bf16.msra.mxu0 %v2101
    %2148 = vmatpush.bf16.msra.mxu0 %v2097
    %2149 = vmatpush.bf16.msra.mxu0 %v2093
    %2150 = vmatpush.bf16.msra.mxu0 %v2089
    %2151 = vmatpush.bf16.msra.mxu0 %v2085
    %2152 = vmatpush.bf16.msra.mxu0 %v2081
    %2153 = vmatmul.bf16.gmra.mxu0 %v1952
    %v2154 = vpop.f32.mrf.mxu0
    %v2155 = vadd.f32 0.0, %v2154
    %v2156 = vpop.f32.mrf.mxu0
    %2157 = vdwg.mxu0
    %2158 = vmatpush.bf16.msra.mxu0 %v2110
    %2159 = vmatpush.bf16.msra.mxu0 %v2106
    %2160 = vmatpush.bf16.msra.mxu0 %v2102
    %2161 = vmatpush.bf16.msra.mxu0 %v2098
    %2162 = vmatpush.bf16.msra.mxu0 %v2094
    %2163 = vmatpush.bf16.msra.mxu0 %v2090
    %2164 = vmatpush.bf16.msra.mxu0 %v2086
    %2165 = vmatpush.bf16.msra.mxu0 %v2082
    %2166 = vmatmul.bf16.gmra.mxu0 %v1952
    %v2167 = vpop.f32.mrf.mxu0
    %v2168 = vadd.f32 0.0, %v2167
    %v2169 = vpop.f32.mrf.mxu0
    %2170 = vdwg.mxu0
    %2171 = vmatpush.bf16.msra.mxu0 %v2111
    %2172 = vmatpush.bf16.msra.mxu0 %v2107
    %2173 = vmatpush.bf16.msra.mxu0 %v2103
    %2174 = vmatpush.bf16.msra.mxu0 %v2099
    %2175 = vmatpush.bf16.msra.mxu0 %v2095
    %2176 = vmatpush.bf16.msra.mxu0 %v2091
    %2177 = vmatpush.bf16.msra.mxu0 %v2087
    %2178 = vmatpush.bf16.msra.mxu0 %v2083
    %2179 = vmatmul.bf16.gmra.mxu0 %v1952
    %v2180 = vpop.f32.mrf.mxu0
    %v2181 = vadd.f32 0.0, %v2180
    %v2182 = vpop.f32.mrf.mxu0
    %2183 = vdwg.mxu0
    %2184 = vmatpush.bf16.msra.mxu0 %v2112
    %2185 = vmatpush.bf16.msra.mxu0 %v2108
    %2186 = vmatpush.bf16.msra.mxu0 %v2104
    %2187 = vmatpush.bf16.msra.mxu0 %v2100
    %2188 = vmatpush.bf16.msra.mxu0 %v2096
    %2189 = vmatpush.bf16.msra.mxu0 %v2092
    %2190 = vmatpush.bf16.msra.mxu0 %v2088
    %2191 = vmatpush.bf16.msra.mxu0 %v2084
    %2192 = vmatmul.bf16.gmra.mxu0 %v1952
    %v2193 = vpop.f32.mrf.mxu0
    %v2194 = vadd.f32 0.0, %v2193
    %v2195 = vpop.f32.mrf.mxu0
    %2196 = vdwg.mxu0
    %v2197 = vadd.f32 %v1948, %v2155
    %v2198 = vadd.f32 %v1949, %v2168
    %v2199 = vadd.f32 %v1950, %v2181
    %v2200 = vadd.f32 %v1951, %v2194
    %v2201 = vmul.f32 %v2197, 0.5
    %v2202 = vtanh.pop %v2201
    %v2203 = vmul.f32 %v2202, 0.5
    %v2204 = vadd.f32 %v2203, 0.5
    %v2205 = vmul.f32 %v2198, 0.5
    %v2206 = vtanh.pop %v2205
    %v2207 = vmul.f32 %v2206, 0.5
    %v2208 = vadd.f32 %v2207, 0.5
    %v2209 = vtanh.pop %v2199
    %v2210 = vmul.f32 %v2200, 0.5
    %v2211 = vtanh.pop %v2210
    %v2212 = vmul.f32 %v2211, 0.5
    %v2213 = vadd.f32 %v2212, 0.5
    %v2214 = vmul.f32 %v2208, %v1942
    %v2215 = vmul.f32 %v2204, %v2209
    %v2216 = vadd.f32 %v2214, %v2215
    %v2217 = vtanh.pop %v2216
    %v2218 = vmul.f32 %v2213, %v2217
    %s2219 = scalar_lea.vmem [#allocation4], 56
    %2220 = vst [vmem:[%s2219] sm:$0xff] %v2218
    %2221 = vst [vmem:[#allocation2] sm:$0xff] %v2218
    %2222 = vst [vmem:[#allocation3] sm:$0xff] %v2216
    // Predicated region
    $region22: #{_rnn_encoder_forward.3} parent=1 // pred_check
      %p2223 = pneg %p21
    $region23: #{_rnn_encoder_forward.3} parent=1 // pred_check_branch
      %2225 = sbr.rel (%p2223) target = $region25
    $region24: #{_rnn_encoder_forward.3} parent=1 // pred_region
      %v2226 = vld [vmem:[#allocation2] sm:$0xff]
      %2227 = vst [vmem:[%s5] sm:$0xff] %v2226
      %v2228 = vld [vmem:[#allocation3] sm:$0xff]
      %2229 = vst [vmem:[%s6] sm:$0xff] %v2228
    $region25: #{_rnn_encoder_forward.3} parent=1 // pred_fallthru
      _
    // Predicated region
    $region26: #{_rnn_encoder_forward.3} parent=1 // pred_check
      _
    $region27: #{_rnn_encoder_forward.3} parent=1 // pred_check_branch
      %2231 = sbr.rel (0) target = $region29
    $region28: #{_rnn_encoder_forward.3} parent=1 // pred_region
      %2233 = vsyncadd [#allocation5], 0
      %s2234 = sshll.u32 [#allocation4], 4
      %s2235 = int_to_ptr.vmem [resolvable:$true] %s2234
      %s2236 = sshll.u32 %s4, 4
      %s2237 = int_to_ptr.hbm [resolvable:$true] %s2236
      %2242 = dma.vmem_to_hbm [thread:$0]  %s2235, 1024, %s2237, [#allocation5], 128, 128, 8
    $region29: #{_rnn_encoder_forward.3} parent=1 // pred_fallthru
      _
    // Predicated region
    $region30: #{_rnn_encoder_forward.3} parent=1 // pred_check
      _
    $region31: #{_rnn_encoder_forward.3} parent=1 // pred_check_branch
      %2244 = sbr.rel (0) target = $region33
    $region32: #{_rnn_encoder_forward.3} parent=1 // pred_region
      _
    $region33: #{_rnn_encoder_forward.3} parent=1 // pred_fallthru
      _
    // Predicated region
    $region34: #{_rnn_encoder_forward.3} parent=1 // pred_check
      _
    $region35: #{_rnn_encoder_forward.3} parent=1 // pred_check_branch
      %2246 = sbr.rel (0) target = $region37
    $region36: #{_rnn_encoder_forward.3} parent=1 // pred_region
      _
    $region37: #{_rnn_encoder_forward.3} parent=1 // pred_fallthru
      _
    // Predicated region
    $region38: #{_rnn_encoder_forward.3} parent=1 // pred_check
      _
    $region39: #{_rnn_encoder_forward.3} parent=1 // pred_check_branch
      %2248 = sbr.rel (0) target = $region41
    $region40: #{_rnn_encoder_forward.3} parent=1 // pred_region
      %2250 = dma.done [#allocation5], 1024
    $region41: #{_rnn_encoder_forward.3} parent=1 // pred_fallthru
      _
    // Predicated region
    $region42: #{_rnn_encoder_forward.3} parent=1 // pred_check
      _
    $region43: #{_rnn_encoder_forward.3} parent=1 // pred_check_branch
      %2252 = sbr.rel (0) target = $region45
    $region44: #{_rnn_encoder_forward.3} parent=1 // pred_region
      _
    $region45: #{_rnn_encoder_forward.3} parent=1 // pred_fallthru
      _
    // Predicated region
    $region46: #{_rnn_encoder_forward.3} parent=1 // pred_check
      _
    $region47: #{_rnn_encoder_forward.3} parent=1 // pred_check_branch
      %2254 = sbr.rel (0) target = $region49
    $region48: #{_rnn_encoder_forward.3} parent=1 // pred_region
      _
    $region49: #{_rnn_encoder_forward.3} parent=1 // pred_fallthru
      _
    %2255 = vsyncpa [#allocation5], 1

</llo_original>
